<compile_context>
chip_gen: v7x
topology: tpu7x:2x2x1
jax: 0.10.0
libtpu: 0.0.40
codegen_flags: <defaults>
</compile_context>

<pallas_src>
import math
from functools import partial
from typing import NamedTuple

import jax
import jax.numpy as jnp
from jax.experimental import pallas as pl
from jax.experimental.pallas import tpu as pltpu

LANE = 128
SUBLANE = 8
VMEM_LIMIT = 32 * 1024 * 1024      # explicit scoped-VMEM budget, safe on v5e/v6e/v7x


def _round_up(x, m):
    return (x + m - 1) // m * m


# ----------------------------------------------------------------------------
# Static (hashable) model config, kept out of the jitted pytree
# ----------------------------------------------------------------------------

class ConvCfg(NamedTuple):
    kh: int
    kw: int
    padding: int
    cout: int


class HeadCfg(NamedTuple):
    num_classes: int


class ModelCfg(NamedTuple):
    conv1: ConvCfg
    conv2: ConvCfg
    conv3: ConvCfg
    head: HeadCfg


# ----------------------------------------------------------------------------
# LoRA effective-weight composition (already in conv-consumable layout)
# ----------------------------------------------------------------------------

def _lora_weight_kernel(w_ref, b_ref, a_ref, o_ref):
    # W_eff[s, c, o] = W[s, c, o] + sum_r B[s, c, r] * A[r, o]
    delta = jnp.dot(b_ref[0], a_ref[...], preferred_element_type=jnp.float32)
    o_ref[0] = (w_ref[0].astype(jnp.float32) + delta).astype(o_ref.dtype)


def lora_effective_weight(w_t, b_t, a_t):
    """w_t: (kh*kw, Cp, Op) bf16, b_t: (kh*kw, Cp, rp) f32, a_t: (rp, Op) f32."""
    S, Cp, Op = w_t.shape
    rp = a_t.shape[0]
    tc = 256 if Cp % 256 == 0 else 128
    to = 256 if Op % 256 == 0 else 128
    grid = (S, Cp // tc, Op // to)
    return pl.pallas_call(
        _lora_weight_kernel,
        out_shape=jax.ShapeDtypeStruct((S, Cp, Op), jnp.bfloat16),
        grid=grid,
        in_specs=[
            pl.BlockSpec((1, tc, to), lambda s, c, o: (s, c, o)),
            pl.BlockSpec((1, tc, rp), lambda s, c, o: (s, c, 0)),
            pl.BlockSpec((rp, to), lambda s, c, o: (0, o)),
        ],
        out_specs=pl.BlockSpec((1, tc, to), lambda s, c, o: (s, c, o)),
        compiler_params=pltpu.CompilerParams(
            dimension_semantics=("parallel", "parallel", "parallel"),
            vmem_limit_bytes=VMEM_LIMIT,
        ),
    )(w_t, b_t, a_t)


# ----------------------------------------------------------------------------
# LoRAConv2d forward: no materialized im2col
# ----------------------------------------------------------------------------

def _conv_taps(x_ref, w_ref, *, kh, kw, wc, m):
    """Sum of kh*kw shifted matmuls (each tap = contiguous row window)."""
    part = None
    for i in range(kh):
        for j in range(kw):
            s = i * wc + j
            contrib = jnp.dot(x_ref[s:s + m, :], w_ref[i * kw + j],
                              preferred_element_type=jnp.float32)
            part = contrib if part is None else part + contrib
    return part


def _lora_conv_kernel_direct(x_ref, w_ref, b_ref, o_ref, *, kh, kw, wc, m):
    # Single Cin chunk: no accumulator scratch, store the tile directly.
    part = _conv_taps(x_ref, w_ref, kh=kh, kw=kw, wc=wc, m=m)
    o_ref[...] = (part + b_ref[...]).astype(o_ref.dtype)


def _lora_conv_kernel_ktiled(x_ref, w_ref, b_ref, o_ref, acc_ref, *, kh, kw, wc, m):
    part = _conv_taps(x_ref, w_ref, kh=kh, kw=kw, wc=wc, m=m)
    c_idx = pl.program_id(2)

    @pl.when(c_idx == 0)
    def _():
        acc_ref[...] = part                      # init with first partial (no memset)

    @pl.when(c_idx > 0)
    def _():
        acc_ref[...] += part

    @pl.when(c_idx == pl.num_programs(2) - 1)
    def _():
        o_ref[...] = (acc_ref[...] + b_ref[...]).astype(o_ref.dtype)


def lora_conv2d_nhwc(x, w, cfg: ConvCfg):
    """x: (B, H, W, Cp) bf16, channel-padded.  Returns (B, H_out, W_out, Op) bf16."""
    Bsz, H, W, Cp = x.shape
    kh, kw, pad = cfg.kh, cfg.kw, cfg.padding

    # Compose W_eff = W + A@B on-device, in the layout the conv kernel consumes.
    w_eff = lora_effective_weight(w["w_t"], w["b_t"], w["a_t"])
    S, Cp_w, Op = w_eff.shape
    assert Cp_w == Cp, (Cp_w, Cp)

    Hc, Wc = H + 2 * pad, W + 2 * pad
    H_out, W_out = Hc - kh + 1, Wc - kw + 1
    M = H_out * Wc                   # compute full-width row strips; trim later

    # Spatial zero-pad + flatten (H, W) so every conv tap is one contiguous
    # row window -> no 9x im2col blowup written to / read from HBM.
    xp = jnp.pad(x, ((0, 0), (pad, pad), (pad, pad), (0, 0)))
    xflat = xp.reshape(Bsz, Hc * Wc, Cp)
    if kw > 1:
        xflat = jnp.pad(xflat, ((0, 0), (0, kw - 1), (0, 0)))   # tap overrun guard
    rows_in = xflat.shape[1]

    tn = 256 if Op % 256 == 0 else 128
    if Cp <= 512:
        ck = Cp
    else:
        ck = 512 if Cp % 512 == 0 else (256 if Cp % 256 == 0 else 128)
    n_ck = Cp // ck
    grid = (Bsz, Op // tn, n_ck)              # reduction (Cin chunks) last

    if n_ck == 1:
        kernel = partial(_lora_conv_kernel_direct, kh=kh, kw=kw, wc=Wc, m=M)
        scratch = []
    else:
        kernel = partial(_lora_conv_kernel_ktiled, kh=kh, kw=kw, wc=Wc, m=M)
        scratch = [pltpu.VMEM((M, tn), jnp.float32)]

    out = pl.pallas_call(
        kernel,
        out_shape=jax.ShapeDtypeStruct((Bsz, M, Op), jnp.bfloat16),
        grid=grid,
        in_specs=[
            pl.BlockSpec((None, rows_in, ck), lambda b, o, c: (b, 0, c)),
            pl.BlockSpec((S, ck, tn), lambda b, o, c: (0, c, o)),
            pl.BlockSpec((1, tn), lambda b, o, c: (0, o)),
        ],
        out_specs=pl.BlockSpec((None, M, tn), lambda b, o, c: (b, 0, o)),
        scratch_shapes=scratch,
        compiler_params=pltpu.CompilerParams(
            dimension_semantics=("parallel", "parallel", "arbitrary"),
            vmem_limit_bytes=VMEM_LIMIT,
        ),
    )(xflat, w_eff, w["bias"])

    # (B, M, Op) -> (B, H_out, Wc, Op), drop the kw-1 overrun columns.
    return out.reshape(Bsz, H_out, Wc, Op)[:, :, :W_out, :]


# ----------------------------------------------------------------------------
# Head: projection -> fc fused into one K-tiled pallas_call
# ----------------------------------------------------------------------------

def _head_kernel(x_ref, w1_ref, b1_ref, w2_ref, b2_ref, o_ref, acc_ref):
    k = pl.program_id(1)
    contrib = jnp.dot(x_ref[...], w1_ref[...], preferred_element_type=jnp.float32)

    @pl.when(k == 0)
    def _():
        acc_ref[...] = contrib                   # init with first partial (no memset)

    @pl.when(k > 0)
    def _():
        acc_ref[...] += contrib

    @pl.when(k == pl.num_programs(1) - 1)
    def _():
        h = (acc_ref[...] + b1_ref[...]).astype(jnp.bfloat16)   # projection out
        logits = jnp.dot(h, w2_ref[...],
                         preferred_element_type=jnp.float32) + b2_ref[...]
        o_ref[...] = logits.astype(o_ref.dtype)


def head_forward(x, w, cfg: HeadCfg):
    """x: (B, E).  Fused projection -> fc (both affine, no nonlinearity between)."""
    Bsz, E = x.shape
    Ep, Pp = w["w1_t"].shape
    Np = w["w2_t"].shape[1]

    tm = min(256, _round_up(Bsz, SUBLANE))
    Mp = _round_up(Bsz, tm)
    tk = 512 if Ep % 512 == 0 else (256 if Ep % 256 == 0 else 128)

    xb = jnp.pad(x.astype(jnp.bfloat16), ((0, Mp - Bsz), (0, Ep - E)))
    grid = (Mp // tm, Ep // tk)

    out = pl.pallas_call(
        _head_kernel,
        out_shape=jax.ShapeDtypeStruct((Mp, Np), jnp.float32),
        grid=grid,
        in_specs=[
            pl.BlockSpec((tm, tk), lambda i, k: (i, k)),
            pl.BlockSpec((tk, Pp), lambda i, k: (k, 0)),
            pl.BlockSpec((1, Pp), lambda i, k: (0, 0)),
            pl.BlockSpec((Pp, Np), lambda i, k: (0, 0)),
            pl.BlockSpec((1, Np), lambda i, k: (0, 0)),
        ],
        out_specs=pl.BlockSpec((tm, Np), lambda i, k: (i, 0)),
        scratch_shapes=[pltpu.VMEM((tm, Pp), jnp.float32)],
        compiler_params=pltpu.CompilerParams(
            dimension_semantics=("parallel", "arbitrary"),
            vmem_limit_bytes=VMEM_LIMIT,
        ),
    )(xb, w["w1_t"], w["b1"], w["w2_t"], w["b2"])

    return out[:Bsz, :cfg.num_classes]


# ----------------------------------------------------------------------------
# Init (PyTorch-equivalent) + one-time layout preparation (pad/transpose/cast)
# ----------------------------------------------------------------------------

def _kaiming_uniform_a_sqrt5(key, shape, fan_in):
    bound = 1.0 / math.sqrt(fan_in)
    return jax.random.uniform(key, shape, jnp.float32, -bound, bound)


def init_lora_conv(key, cin, cout, k, pad, r=4):
    k_w, k_b, k_a = jax.random.split(key, 3)
    fan_in = cin * k * k
    return {
        "weight": _kaiming_uniform_a_sqrt5(k_w, (cout, cin, k, k), fan_in),
        "bias": _kaiming_uniform_a_sqrt5(k_b, (cout,), fan_in),
        "A": _kaiming_uniform_a_sqrt5(k_a, (cout, r, 1, 1), r),  # kaiming_uniform_(a=sqrt(5))
        "B": jnp.zeros((r, cin, k, k), jnp.float32),             # init.zeros_
        "padding": pad,
    }


def init_linear(key, in_dim, out_dim):
    k_w, k_b = jax.random.split(key)
    bound = 1.0 / math.sqrt(in_dim)
    return {
        "weight": jax.random.uniform(k_w, (out_dim, in_dim), jnp.float32, -bound, bound),
        "bias": jax.random.uniform(k_b, (out_dim,), jnp.float32, -bound, bound),
    }


def _prepare_lora_conv(raw):
    W, A, Bm, bias = raw["weight"], raw["A"], raw["B"], raw["bias"]
    O, Cin, kh, kw = W.shape
    r = A.shape[1]
    Cp, Op, rp = _round_up(Cin, LANE), _round_up(O, LANE), _round_up(r, SUBLANE)
    # base weight -> (kh*kw, Cp, Op) bf16 (the layout the conv kernel consumes)
    w_t = jnp.transpose(W, (2, 3, 1, 0)).reshape(kh * kw, Cin, O)
    w_t = jnp.pad(w_t, ((0, 0), (0, Cp - Cin), (0, Op - O))).astype(jnp.bfloat16)
    # LoRA B -> (kh*kw, Cp, rp) f32; LoRA A -> (rp, Op) f32
    b_t = jnp.transpose(Bm, (2, 3, 1, 0)).reshape(kh * kw, Cin, r)
    b_t = jnp.pad(b_t, ((0, 0), (0, Cp - Cin), (0, rp - r))).astype(jnp.float32)
    a_t = jnp.pad(A.reshape(O, r).T, ((0, rp - r), (0, Op - O))).astype(jnp.float32)
    bias_p = jnp.pad(bias, (0, Op - O)).reshape(1, Op).astype(jnp.float32)
    arrays = {"w_t": w_t, "b_t": b_t, "a_t": a_t, "bias": bias_p}
    return arrays, ConvCfg(kh=kh, kw=kw, padding=raw["padding"], cout=O)


def _prepare_head(proj, fc):
    P, E = proj["weight"].shape
    N = fc["weight"].shape[0]
    Ep, Pp, Np = _round_up(E, LANE), _round_up(P, LANE), _round_up(N, LANE)
    arrays = {
        "w1_t": jnp.pad(proj["weight"].T, ((0, Ep - E), (0, Pp - P))).astype(jnp.bfloat16),
        "b1": jnp.pad(proj["bias"], (0, Pp - P)).reshape(1, Pp).astype(jnp.float32),
        "w2_t": jnp.pad(fc["weight"].T, ((0, Pp - P), (0, Np - N))).astype(jnp.bfloat16),
        "b2": jnp.pad(fc["bias"], (0, Np - N)).reshape(1, Np).astype(jnp.float32),
    }
    return arrays, HeadCfg(num_classes=N)


def init_clip_with_lora(key, cin, cmid, cout, H, W, proj_dim, num_classes):
    ks = jax.random.split(key, 5)
    c1, cfg1 = _prepare_lora_conv(init_lora_conv(ks[0], cin, cmid, k=1, pad=0))
    c2, cfg2 = _prepare_lora_conv(init_lora_conv(ks[1], cmid, cmid, k=3, pad=1))
    c3, cfg3 = _prepare_lora_conv(init_lora_conv(ks[2], cmid, cout, k=1, pad=0))
    hd, cfgh = _prepare_head(init_linear(ks[3], cout * H * W, proj_dim),
                             init_linear(ks[4], proj_dim, num_classes))
    params = {"conv1": c1, "conv2": c2, "conv3": c3, "head": hd}
    cfg = ModelCfg(conv1=cfg1, conv2=cfg2, conv3=cfg3, head=cfgh)
    return params, cfg


# ----------------------------------------------------------------------------
# CLIPWithLoRA.forward
# ----------------------------------------------------------------------------

def clip_with_lora_forward(params, images_nchw, *, cfg: ModelCfg):
    # NCHW (PyTorch) -> NHWC (channels on the lane axis), bf16, pad channels once.
    x = jnp.transpose(images_nchw, (0, 2, 3, 1)).astype(jnp.bfloat16)
    cin_pad = params["conv1"]["w_t"].shape[1]
    x = jnp.pad(x, ((0, 0), (0, 0), (0, 0), (0, cin_pad - x.shape[-1])))

    # clip_model stub: LoRA-rewired bottleneck block (conv1 -> conv2 -> conv3).
    x = lora_conv2d_nhwc(x, params["conv1"], cfg.conv1)
    x = lora_conv2d_nhwc(x, params["conv2"], cfg.conv2)
    x = lora_conv2d_nhwc(x, params["conv3"], cfg.conv3)

    # Drop channel padding; NHWC -> NCHW so flatten(start_dim=1) matches PyTorch.
    x = x[..., :cfg.conv3.cout]
    x = jnp.transpose(x, (0, 3, 1, 2))
    x = x.reshape(x.shape[0], -1)                        # outputs.flatten(1)

    # projection -> fc, fused into one Pallas call.
    return head_forward(x, params["head"], cfg.head)


# ----------------------------------------------------------------------------

if __name__ == "__main__":
    key = jax.random.PRNGKey(0)
    k_params, k_img = jax.random.split(key)

    Bsz, Cin, H, W = 2, 4, 16, 16
    Cmid, Cout = 8, 8
    proj_dim, num_classes = 32, 10

    params, cfg = init_clip_with_lora(
        k_params, Cin, Cmid, Cout, H, W, proj_dim, num_classes)
    images = jax.random.normal(k_img, (Bsz, Cin, H, W), jnp.float32)   # NCHW

    fwd = jax.jit(clip_with_lora_forward, static_argnames=("cfg",))
    out = jax.block_until_ready(fwd(params, images, cfg=cfg))
    assert out.shape == (Bsz, num_classes), out.shape
    print("KERNEL_OK")
</pallas_src>

<mosaic_0001>
module attributes {stable_mosaic.version = 11 : i64} {
  func.func @_lora_weight_kernel(%arg0: i32, %arg1: i32, %arg2: i32, %arg3: memref<1x128x128xbf16, #tpu.memory_space<vmem>>, %arg4: memref<1x128x8xf32, #tpu.memory_space<vmem>>, %arg5: memref<8x128xf32, #tpu.memory_space<vmem>>, %arg6: memref<1x128x128xbf16, #tpu.memory_space<vmem>>) attributes {dimension_semantics = [#tpu.dimension_semantics<parallel>, #tpu.dimension_semantics<parallel>, #tpu.dimension_semantics<parallel>], iteration_bounds = array<i64: 1, 1, 1>, scalar_prefetch = 0 : i64, scratch_operands = 0 : i64, tpu.core_type = #tpu.core_type<tc>, window_params = [{transform_indices = @transform_0, window_bounds = array<i64: 1, 128, 128>}, {transform_indices = @transform_1, window_bounds = array<i64: 1, 128, 8>}, {transform_indices = @transform_2, window_bounds = array<i64: 8, 128>}, {transform_indices = @transform_3, window_bounds = array<i64: 1, 128, 128>}]} {
    %c0 = arith.constant 0 : index
    %c0_0 = arith.constant 0 : index
    %c0_1 = arith.constant 0 : index
    %0 = vector.load %arg4[%c0, %c0_0, %c0_1] : memref<1x128x8xf32, #tpu.memory_space<vmem>>, vector<1x128x8xf32>
    %1 = vector.shape_cast %0 : vector<1x128x8xf32> to vector<128x8xf32>
    %c0_2 = arith.constant 0 : index
    %c0_3 = arith.constant 0 : index
    %2 = vector.load %arg5[%c0_2, %c0_3] : memref<8x128xf32, #tpu.memory_space<vmem>>, vector<8x128xf32>
    %cst = arith.constant dense<0.000000e+00> : vector<128x128xf32>
    %3 = tpu.matmul %1, %2, %cst {dimension_numbers = #tpu.dot_dimension_numbers<[1], [0], [0], [1], [0, 0, 1, 1], [], []>} : vector<128x8xf32>, vector<8x128xf32>, vector<128x128xf32> -> vector<128x128xf32>
    %c0_4 = arith.constant 0 : index
    %c0_5 = arith.constant 0 : index
    %c0_6 = arith.constant 0 : index
    %4 = vector.load %arg3[%c0_4, %c0_5, %c0_6] : memref<1x128x128xbf16, #tpu.memory_space<vmem>>, vector<1x128x128xbf16>
    %5 = vector.shape_cast %4 : vector<1x128x128xbf16> to vector<128x128xbf16>
    %6 = arith.extf %5 : vector<128x128xbf16> to vector<128x128xf32>
    %7 = arith.addf %6, %3 : vector<128x128xf32>
    %8 = arith.truncf %7 : vector<128x128xf32> to vector<128x128xbf16>
    %c0_7 = arith.constant 0 : index
    %c0_8 = arith.constant 0 : index
    %c0_9 = arith.constant 0 : index
    %9 = vector.load %arg6[%c0_7, %c0_8, %c0_9] : memref<1x128x128xbf16, #tpu.memory_space<vmem>>, vector<1x128x128xbf16>
    %10 = vector.shape_cast %9 : vector<1x128x128xbf16> to vector<128x128xbf16>
    %11 = vector.shape_cast %8 : vector<128x128xbf16> to vector<1x128x128xbf16>
    tpu.vector_store %arg6[%c0_7, %c0_8, %c0_9], %11 {strides = array<i32>} : memref<1x128x128xbf16, #tpu.memory_space<vmem>>, vector<1x128x128xbf16>,
    return
  }
  func.func @transform_0(%arg0: i32, %arg1: i32, %arg2: i32) -> (i32, i32, i32) {
    %c0_i32 = arith.constant 0 : i32
    return %arg0, %arg1, %arg2 : i32, i32, i32
  }
  func.func @transform_1(%arg0: i32, %arg1: i32, %arg2: i32) -> (i32, i32, i32) {
    %c0_i32 = arith.constant 0 : i32
    %c0_i32_0 = arith.constant 0 : i32
    return %arg0, %arg1, %c0_i32 : i32, i32, i32
  }
  func.func @transform_2(%arg0: i32, %arg1: i32, %arg2: i32) -> (i32, i32) {
    %c0_i32 = arith.constant 0 : i32
    %c0_i32_0 = arith.constant 0 : i32
    return %c0_i32, %arg2 : i32, i32
  }
  func.func @transform_3(%arg0: i32, %arg1: i32, %arg2: i32) -> (i32, i32, i32) {
    %c0_i32 = arith.constant 0 : i32
    return %arg0, %arg1, %arg2 : i32, i32, i32
  }
}

module attributes {stable_mosaic.version = 11 : i64} {
  func.func @_lora_conv_kernel_direct(%arg0: i32, %arg1: i32, %arg2: i32, %arg3: memref<1x256x128xbf16, #tpu.memory_space<vmem>>, %arg4: memref<1x128x128xbf16, #tpu.memory_space<vmem>>, %arg5: memref<1x128xf32, #tpu.memory_space<vmem>>, %arg6: memref<1x256x128xbf16, #tpu.memory_space<vmem>>) attributes {dimension_semantics = [#tpu.dimension_semantics<parallel>, #tpu.dimension_semantics<parallel>, #tpu.dimension_semantics<arbitrary>], iteration_bounds = array<i64: 2, 1, 1>, scalar_prefetch = 0 : i64, scratch_operands = 0 : i64, tpu.core_type = #tpu.core_type<tc>, window_params = [{transform_indices = @transform_0, window_bounds = array<i64: 1, 256, 128>}, {transform_indices = @transform_1, window_bounds = array<i64: 1, 128, 128>}, {transform_indices = @transform_2, window_bounds = array<i64: 1, 128>}, {transform_indices = @transform_3, window_bounds = array<i64: 1, 256, 128>}]} {
    %c0 = arith.constant 0 : index
    %c0_0 = arith.constant 0 : index
    %c0_1 = arith.constant 0 : index
    %0 = vector.load %arg3[%c0, %c0_0, %c0_1] : memref<1x256x128xbf16, #tpu.memory_space<vmem>>, vector<1x256x128xbf16>
    %1 = vector.shape_cast %0 : vector<1x256x128xbf16> to vector<256x128xbf16>
    %c0_2 = arith.constant 0 : index
    %c0_3 = arith.constant 0 : index
    %c0_4 = arith.constant 0 : index
    %2 = vector.load %arg4[%c0_2, %c0_3, %c0_4] : memref<1x128x128xbf16, #tpu.memory_space<vmem>>, vector<1x128x128xbf16>
    %3 = vector.shape_cast %2 : vector<1x128x128xbf16> to vector<128x128xbf16>
    %cst = arith.constant dense<0.000000e+00> : vector<256x128xf32>
    %4 = tpu.matmul %1, %3, %cst {dimension_numbers = #tpu.dot_dimension_numbers<[1], [0], [0], [1], [0, 0, 1, 1], [], []>} : vector<256x128xbf16>, vector<128x128xbf16>, vector<256x128xf32> -> vector<256x128xf32>
    %c0_5 = arith.constant 0 : index
    %c0_6 = arith.constant 0 : index
    %5 = vector.load %arg5[%c0_5, %c0_6] : memref<1x128xf32, #tpu.memory_space<vmem>>, vector<1x128xf32>
    %6 = vector.broadcast %5 : vector<1x128xf32> to vector<256x128xf32>
    %7 = arith.addf %4, %6 : vector<256x128xf32>
    %8 = arith.truncf %7 : vector<256x128xf32> to vector<256x128xbf16>
    %c0_7 = arith.constant 0 : index
    %c0_8 = arith.constant 0 : index
    %c0_9 = arith.constant 0 : index
    %9 = vector.load %arg6[%c0_7, %c0_8, %c0_9] : memref<1x256x128xbf16, #tpu.memory_space<vmem>>, vector<1x256x128xbf16>
    %10 = vector.shape_cast %9 : vector<1x256x128xbf16> to vector<256x128xbf16>
    %11 = vector.shape_cast %8 : vector<256x128xbf16> to vector<1x256x128xbf16>
    tpu.vector_store %arg6[%c0_7, %c0_8, %c0_9], %11 {strides = array<i32>} : memref<1x256x128xbf16, #tpu.memory_space<vmem>>, vector<1x256x128xbf16>,
    return
  }
  func.func @transform_0(%arg0: i32, %arg1: i32, %arg2: i32) -> (i32, i32, i32) {
    %c0_i32 = arith.constant 0 : i32
    %c0_i32_0 = arith.constant 0 : i32
    return %arg0, %c0_i32, %arg2 : i32, i32, i32
  }
  func.func @transform_1(%arg0: i32, %arg1: i32, %arg2: i32) -> (i32, i32, i32) {
    %c0_i32 = arith.constant 0 : i32
    %c0_i32_0 = arith.constant 0 : i32
    return %c0_i32, %arg2, %arg1 : i32, i32, i32
  }
  func.func @transform_2(%arg0: i32, %arg1: i32, %arg2: i32) -> (i32, i32) {
    %c0_i32 = arith.constant 0 : i32
    %c0_i32_0 = arith.constant 0 : i32
    return %c0_i32, %arg1 : i32, i32
  }
  func.func @transform_3(%arg0: i32, %arg1: i32, %arg2: i32) -> (i32, i32, i32) {
    %c0_i32 = arith.constant 0 : i32
    %c0_i32_0 = arith.constant 0 : i32
    return %arg0, %c0_i32, %arg1 : i32, i32, i32
  }
}

module attributes {stable_mosaic.version = 11 : i64} {
  func.func @_lora_weight_kernel(%arg0: i32, %arg1: i32, %arg2: i32, %arg3: memref<1x128x128xbf16, #tpu.memory_space<vmem>>, %arg4: memref<1x128x8xf32, #tpu.memory_space<vmem>>, %arg5: memref<8x128xf32, #tpu.memory_space<vmem>>, %arg6: memref<1x128x128xbf16, #tpu.memory_space<vmem>>) attributes {dimension_semantics = [#tpu.dimension_semantics<parallel>, #tpu.dimension_semantics<parallel>, #tpu.dimension_semantics<parallel>], iteration_bounds = array<i64: 9, 1, 1>, scalar_prefetch = 0 : i64, scratch_operands = 0 : i64, tpu.core_type = #tpu.core_type<tc>, window_params = [{transform_indices = @transform_0, window_bounds = array<i64: 1, 128, 128>}, {transform_indices = @transform_1, window_bounds = array<i64: 1, 128, 8>}, {transform_indices = @transform_2, window_bounds = array<i64: 8, 128>}, {transform_indices = @transform_3, window_bounds = array<i64: 1, 128, 128>}]} {
    %c0 = arith.constant 0 : index
    %c0_0 = arith.constant 0 : index
    %c0_1 = arith.constant 0 : index
    %0 = vector.load %arg4[%c0, %c0_0, %c0_1] : memref<1x128x8xf32, #tpu.memory_space<vmem>>, vector<1x128x8xf32>
    %1 = vector.shape_cast %0 : vector<1x128x8xf32> to vector<128x8xf32>
    %c0_2 = arith.constant 0 : index
    %c0_3 = arith.constant 0 : index
    %2 = vector.load %arg5[%c0_2, %c0_3] : memref<8x128xf32, #tpu.memory_space<vmem>>, vector<8x128xf32>
    %cst = arith.constant dense<0.000000e+00> : vector<128x128xf32>
    %3 = tpu.matmul %1, %2, %cst {dimension_numbers = #tpu.dot_dimension_numbers<[1], [0], [0], [1], [0, 0, 1, 1], [], []>} : vector<128x8xf32>, vector<8x128xf32>, vector<128x128xf32> -> vector<128x128xf32>
    %c0_4 = arith.constant 0 : index
    %c0_5 = arith.constant 0 : index
    %c0_6 = arith.constant 0 : index
    %4 = vector.load %arg3[%c0_4, %c0_5, %c0_6] : memref<1x128x128xbf16, #tpu.memory_space<vmem>>, vector<1x128x128xbf16>
    %5 = vector.shape_cast %4 : vector<1x128x128xbf16> to vector<128x128xbf16>
    %6 = arith.extf %5 : vector<128x128xbf16> to vector<128x128xf32>
    %7 = arith.addf %6, %3 : vector<128x128xf32>
    %8 = arith.truncf %7 : vector<128x128xf32> to vector<128x128xbf16>
    %c0_7 = arith.constant 0 : index
    %c0_8 = arith.constant 0 : index
    %c0_9 = arith.constant 0 : index
    %9 = vector.load %arg6[%c0_7, %c0_8, %c0_9] : memref<1x128x128xbf16, #tpu.memory_space<vmem>>, vector<1x128x128xbf16>
    %10 = vector.shape_cast %9 : vector<1x128x128xbf16> to vector<128x128xbf16>
    %11 = vector.shape_cast %8 : vector<128x128xbf16> to vector<1x128x128xbf16>
    tpu.vector_store %arg6[%c0_7, %c0_8, %c0_9], %11 {strides = array<i32>} : memref<1x128x128xbf16, #tpu.memory_space<vmem>>, vector<1x128x128xbf16>,
    return
  }
  func.func @transform_0(%arg0: i32, %arg1: i32, %arg2: i32) -> (i32, i32, i32) {
    %c0_i32 = arith.constant 0 : i32
    return %arg0, %arg1, %arg2 : i32, i32, i32
  }
  func.func @transform_1(%arg0: i32, %arg1: i32, %arg2: i32) -> (i32, i32, i32) {
    %c0_i32 = arith.constant 0 : i32
    %c0_i32_0 = arith.constant 0 : i32
    return %arg0, %arg1, %c0_i32 : i32, i32, i32
  }
  func.func @transform_2(%arg0: i32, %arg1: i32, %arg2: i32) -> (i32, i32) {
    %c0_i32 = arith.constant 0 : i32
    %c0_i32_0 = arith.constant 0 : i32
    return %c0_i32, %arg2 : i32, i32
  }
  func.func @transform_3(%arg0: i32, %arg1: i32, %arg2: i32) -> (i32, i32, i32) {
    %c0_i32 = arith.constant 0 : i32
    return %arg0, %arg1, %arg2 : i32, i32, i32
  }
}

module attributes {stable_mosaic.version = 11 : i64} {
  func.func @_lora_conv_kernel_direct(%arg0: i32, %arg1: i32, %arg2: i32, %arg3: memref<1x326x128xbf16, #tpu.memory_space<vmem>>, %arg4: memref<9x128x128xbf16, #tpu.memory_space<vmem>>, %arg5: memref<1x128xf32, #tpu.memory_space<vmem>>, %arg6: memref<1x288x128xbf16, #tpu.memory_space<vmem>>) attributes {dimension_semantics = [#tpu.dimension_semantics<parallel>, #tpu.dimension_semantics<parallel>, #tpu.dimension_semantics<arbitrary>], iteration_bounds = array<i64: 2, 1, 1>, scalar_prefetch = 0 : i64, scratch_operands = 0 : i64, tpu.core_type = #tpu.core_type<tc>, window_params = [{transform_indices = @transform_0, window_bounds = array<i64: 1, 326, 128>}, {transform_indices = @transform_1, window_bounds = array<i64: 9, 128, 128>}, {transform_indices = @transform_2, window_bounds = array<i64: 1, 128>}, {transform_indices = @transform_3, window_bounds = array<i64: 1, 288, 128>}]} {
    %c0 = arith.constant 0 : index
    %c0_0 = arith.constant 0 : index
    %c0_1 = arith.constant 0 : index
    %0 = vector.load %arg3[%c0, %c0_0, %c0_1] : memref<1x326x128xbf16, #tpu.memory_space<vmem>>, vector<1x288x128xbf16>
    %1 = vector.shape_cast %0 : vector<1x288x128xbf16> to vector<288x128xbf16>
    %c0_2 = arith.constant 0 : index
    %c0_3 = arith.constant 0 : index
    %c0_4 = arith.constant 0 : index
    %2 = vector.load %arg4[%c0_2, %c0_3, %c0_4] : memref<9x128x128xbf16, #tpu.memory_space<vmem>>, vector<1x128x128xbf16>
    %3 = vector.shape_cast %2 : vector<1x128x128xbf16> to vector<128x128xbf16>
    %cst = arith.constant dense<0.000000e+00> : vector<288x128xf32>
    %4 = tpu.matmul %1, %3, %cst {dimension_numbers = #tpu.dot_dimension_numbers<[1], [0], [0], [1], [0, 0, 1, 1], [], []>} : vector<288x128xbf16>, vector<128x128xbf16>, vector<288x128xf32> -> vector<288x128xf32>
    %c0_5 = arith.constant 0 : index
    %c1 = arith.constant 1 : index
    %c0_6 = arith.constant 0 : index
    %5 = vector.load %arg3[%c0_5, %c1, %c0_6] : memref<1x326x128xbf16, #tpu.memory_space<vmem>>, vector<1x288x128xbf16>
    %6 = vector.shape_cast %5 : vector<1x288x128xbf16> to vector<288x128xbf16>
    %c1_7 = arith.constant 1 : index
    %c0_8 = arith.constant 0 : index
    %c0_9 = arith.constant 0 : index
    %7 = vector.load %arg4[%c1_7, %c0_8, %c0_9] : memref<9x128x128xbf16, #tpu.memory_space<vmem>>, vector<1x128x128xbf16>
    %8 = vector.shape_cast %7 : vector<1x128x128xbf16> to vector<128x128xbf16>
    %cst_10 = arith.constant dense<0.000000e+00> : vector<288x128xf32>
    %9 = tpu.matmul %6, %8, %cst_10 {dimension_numbers = #tpu.dot_dimension_numbers<[1], [0], [0], [1], [0, 0, 1, 1], [], []>} : vector<288x128xbf16>, vector<128x128xbf16>, vector<288x128xf32> -> vector<288x128xf32>
    %10 = arith.addf %4, %9 : vector<288x128xf32>
    %c0_11 = arith.constant 0 : index
    %c2 = arith.constant 2 : index
    %c0_12 = arith.constant 0 : index
    %11 = vector.load %arg3[%c0_11, %c2, %c0_12] : memref<1x326x128xbf16, #tpu.memory_space<vmem>>, vector<1x288x128xbf16>
    %12 = vector.shape_cast %11 : vector<1x288x128xbf16> to vector<288x128xbf16>
    %c2_13 = arith.constant 2 : index
    %c0_14 = arith.constant 0 : index
    %c0_15 = arith.constant 0 : index
    %13 = vector.load %arg4[%c2_13, %c0_14, %c0_15] : memref<9x128x128xbf16, #tpu.memory_space<vmem>>, vector<1x128x128xbf16>
    %14 = vector.shape_cast %13 : vector<1x128x128xbf16> to vector<128x128xbf16>
    %cst_16 = arith.constant dense<0.000000e+00> : vector<288x128xf32>
    %15 = tpu.matmul %12, %14, %cst_16 {dimension_numbers = #tpu.dot_dimension_numbers<[1], [0], [0], [1], [0, 0, 1, 1], [], []>} : vector<288x128xbf16>, vector<128x128xbf16>, vector<288x128xf32> -> vector<288x128xf32>
    %16 = arith.addf %10, %15 : vector<288x128xf32>
    %c0_17 = arith.constant 0 : index
    %c18 = arith.constant 18 : index
    %c0_18 = arith.constant 0 : index
    %17 = vector.load %arg3[%c0_17, %c18, %c0_18] : memref<1x326x128xbf16, #tpu.memory_space<vmem>>, vector<1x288x128xbf16>
    %18 = vector.shape_cast %17 : vector<1x288x128xbf16> to vector<288x128xbf16>
    %c3 = arith.constant 3 : index
    %c0_19 = arith.constant 0 : index
    %c0_20 = arith.constant 0 : index
    %19 = vector.load %arg4[%c3, %c0_19, %c0_20] : memref<9x128x128xbf16, #tpu.memory_space<vmem>>, vector<1x128x128xbf16>
    %20 = vector.shape_cast %19 : vector<1x128x128xbf16> to vector<128x128xbf16>
    %cst_21 = arith.constant dense<0.000000e+00> : vector<288x128xf32>
    %21 = tpu.matmul %18, %20, %cst_21 {dimension_numbers = #tpu.dot_dimension_numbers<[1], [0], [0], [1], [0, 0, 1, 1], [], []>} : vector<288x128xbf16>, vector<128x128xbf16>, vector<288x128xf32> -> vector<288x128xf32>
    %22 = arith.addf %16, %21 : vector<288x128xf32>
    %c0_22 = arith.constant 0 : index
    %c19 = arith.constant 19 : index
    %c0_23 = arith.constant 0 : index
    %23 = vector.load %arg3[%c0_22, %c19, %c0_23] : memref<1x326x128xbf16, #tpu.memory_space<vmem>>, vector<1x288x128xbf16>
    %24 = vector.shape_cast %23 : vector<1x288x128xbf16> to vector<288x128xbf16>
    %c4 = arith.constant 4 : index
    %c0_24 = arith.constant 0 : index
    %c0_25 = arith.constant 0 : index
    %25 = vector.load %arg4[%c4, %c0_24, %c0_25] : memref<9x128x128xbf16, #tpu.memory_space<vmem>>, vector<1x128x128xbf16>
    %26 = vector.shape_cast %25 : vector<1x128x128xbf16> to vector<128x128xbf16>
    %cst_26 = arith.constant dense<0.000000e+00> : vector<288x128xf32>
    %27 = tpu.matmul %24, %26, %cst_26 {dimension_numbers = #tpu.dot_dimension_numbers<[1], [0], [0], [1], [0, 0, 1, 1], [], []>} : vector<288x128xbf16>, vector<128x128xbf16>, vector<288x128xf32> -> vector<288x128xf32>
    %28 = arith.addf %22, %27 : vector<288x128xf32>
    %c0_27 = arith.constant 0 : index
    %c20 = arith.constant 20 : index
    %c0_28 = arith.constant 0 : index
    %29 = vector.load %arg3[%c0_27, %c20, %c0_28] : memref<1x326x128xbf16, #tpu.memory_space<vmem>>, vector<1x288x128xbf16>
    %30 = vector.shape_cast %29 : vector<1x288x128xbf16> to vector<288x128xbf16>
    %c5 = arith.constant 5 : index
    %c0_29 = arith.constant 0 : index
    %c0_30 = arith.constant 0 : index
    %31 = vector.load %arg4[%c5, %c0_29, %c0_30] : memref<9x128x128xbf16, #tpu.memory_space<vmem>>, vector<1x128x128xbf16>
    %32 = vector.shape_cast %31 : vector<1x128x128xbf16> to vector<128x128xbf16>
    %cst_31 = arith.constant dense<0.000000e+00> : vector<288x128xf32>
    %33 = tpu.matmul %30, %32, %cst_31 {dimension_numbers = #tpu.dot_dimension_numbers<[1], [0], [0], [1], [0, 0, 1, 1], [], []>} : vector<288x128xbf16>, vector<128x128xbf16>, vector<288x128xf32> -> vector<288x128xf32>
    %34 = arith.addf %28, %33 : vector<288x128xf32>
    %c0_32 = arith.constant 0 : index
    %c36 = arith.constant 36 : index
    %c0_33 = arith.constant 0 : index
    %35 = vector.load %arg3[%c0_32, %c36, %c0_33] : memref<1x326x128xbf16, #tpu.memory_space<vmem>>, vector<1x288x128xbf16>
    %36 = vector.shape_cast %35 : vector<1x288x128xbf16> to vector<288x128xbf16>
    %c6 = arith.constant 6 : index
    %c0_34 = arith.constant 0 : index
    %c0_35 = arith.constant 0 : index
    %37 = vector.load %arg4[%c6, %c0_34, %c0_35] : memref<9x128x128xbf16, #tpu.memory_space<vmem>>, vector<1x128x128xbf16>
    %38 = vector.shape_cast %37 : vector<1x128x128xbf16> to vector<128x128xbf16>
    %cst_36 = arith.constant dense<0.000000e+00> : vector<288x128xf32>
    %39 = tpu.matmul %36, %38, %cst_36 {dimension_numbers = #tpu.dot_dimension_numbers<[1], [0], [0], [1], [0, 0, 1, 1], [], []>} : vector<288x128xbf16>, vector<128x128xbf16>, vector<288x128xf32> -> vector<288x128xf32>
    %40 = arith.addf %34, %39 : vector<288x128xf32>
    %c0_37 = arith.constant 0 : index
    %c37 = arith.constant 37 : index
    %c0_38 = arith.constant 0 : index
    %41 = vector.load %arg3[%c0_37, %c37, %c0_38] : memref<1x326x128xbf16, #tpu.memory_space<vmem>>, vector<1x288x128xbf16>
    %42 = vector.shape_cast %41 : vector<1x288x128xbf16> to vector<288x128xbf16>
    %c7 = arith.constant 7 : index
    %c0_39 = arith.constant 0 : index
    %c0_40 = arith.constant 0 : index
    %43 = vector.load %arg4[%c7, %c0_39, %c0_40] : memref<9x128x128xbf16, #tpu.memory_space<vmem>>, vector<1x128x128xbf16>
    %44 = vector.shape_cast %43 : vector<1x128x128xbf16> to vector<128x128xbf16>
    %cst_41 = arith.constant dense<0.000000e+00> : vector<288x128xf32>
    %45 = tpu.matmul %42, %44, %cst_41 {dimension_numbers = #tpu.dot_dimension_numbers<[1], [0], [0], [1], [0, 0, 1, 1], [], []>} : vector<288x128xbf16>, vector<128x128xbf16>, vector<288x128xf32> -> vector<288x128xf32>
    %46 = arith.addf %40, %45 : vector<288x128xf32>
    %c0_42 = arith.constant 0 : index
    %c38 = arith.constant 38 : index
    %c0_43 = arith.constant 0 : index
    %47 = vector.load %arg3[%c0_42, %c38, %c0_43] : memref<1x326x128xbf16, #tpu.memory_space<vmem>>, vector<1x288x128xbf16>
    %48 = vector.shape_cast %47 : vector<1x288x128xbf16> to vector<288x128xbf16>
    %c8 = arith.constant 8 : index
    %c0_44 = arith.constant 0 : index
    %c0_45 = arith.constant 0 : index
    %49 = vector.load %arg4[%c8, %c0_44, %c0_45] : memref<9x128x128xbf16, #tpu.memory_space<vmem>>, vector<1x128x128xbf16>
    %50 = vector.shape_cast %49 : vector<1x128x128xbf16> to vector<128x128xbf16>
    %cst_46 = arith.constant dense<0.000000e+00> : vector<288x128xf32>
    %51 = tpu.matmul %48, %50, %cst_46 {dimension_numbers = #tpu.dot_dimension_numbers<[1], [0], [0], [1], [0, 0, 1, 1], [], []>} : vector<288x128xbf16>, vector<128x128xbf16>, vector<288x128xf32> -> vector<288x128xf32>
    %52 = arith.addf %46, %51 : vector<288x128xf32>
    %c0_47 = arith.constant 0 : index
    %c0_48 = arith.constant 0 : index
    %53 = vector.load %arg5[%c0_47, %c0_48] : memref<1x128xf32, #tpu.memory_space<vmem>>, vector<1x128xf32>
    %54 = vector.broadcast %53 : vector<1x128xf32> to vector<288x128xf32>
    %55 = arith.addf %52, %54 : vector<288x128xf32>
    %56 = arith.truncf %55 : vector<288x128xf32> to vector<288x128xbf16>
    %c0_49 = arith.constant 0 : index
    %c0_50 = arith.constant 0 : index
    %c0_51 = arith.constant 0 : index
    %57 = vector.load %arg6[%c0_49, %c0_50, %c0_51] : memref<1x288x128xbf16, #tpu.memory_space<vmem>>, vector<1x288x128xbf16>
    %58 = vector.shape_cast %57 : vector<1x288x128xbf16> to vector<288x128xbf16>
    %59 = vector.shape_cast %56 : vector<288x128xbf16> to vector<1x288x128xbf16>
    tpu.vector_store %arg6[%c0_49, %c0_50, %c0_51], %59 {strides = array<i32>} : memref<1x288x128xbf16, #tpu.memory_space<vmem>>, vector<1x288x128xbf16>,
    return
  }
  func.func @transform_0(%arg0: i32, %arg1: i32, %arg2: i32) -> (i32, i32, i32) {
    %c0_i32 = arith.constant 0 : i32
    %c0_i32_0 = arith.constant 0 : i32
    return %arg0, %c0_i32, %arg2 : i32, i32, i32
  }
  func.func @transform_1(%arg0: i32, %arg1: i32, %arg2: i32) -> (i32, i32, i32) {
    %c0_i32 = arith.constant 0 : i32
    %c0_i32_0 = arith.constant 0 : i32
    return %c0_i32, %arg2, %arg1 : i32, i32, i32
  }
  func.func @transform_2(%arg0: i32, %arg1: i32, %arg2: i32) -> (i32, i32) {
    %c0_i32 = arith.constant 0 : i32
    %c0_i32_0 = arith.constant 0 : i32
    return %c0_i32, %arg1 : i32, i32
  }
  func.func @transform_3(%arg0: i32, %arg1: i32, %arg2: i32) -> (i32, i32, i32) {
    %c0_i32 = arith.constant 0 : i32
    %c0_i32_0 = arith.constant 0 : i32
    return %arg0, %c0_i32, %arg1 : i32, i32, i32
  }
}

module attributes {stable_mosaic.version = 11 : i64} {
  func.func @_head_kernel(%arg0: i32, %arg1: i32, %arg2: memref<8x512xbf16, #tpu.memory_space<vmem>>, %arg3: memref<512x128xbf16, #tpu.memory_space<vmem>>, %arg4: memref<1x128xf32, #tpu.memory_space<vmem>>, %arg5: memref<128x128xbf16, #tpu.memory_space<vmem>>, %arg6: memref<1x128xf32, #tpu.memory_space<vmem>>, %arg7: memref<8x128xf32, #tpu.memory_space<vmem>>, %arg8: memref<8x128xf32, #tpu.memory_space<vmem>>) attributes {dimension_semantics = [#tpu.dimension_semantics<parallel>, #tpu.dimension_semantics<arbitrary>], iteration_bounds = array<i64: 1, 4>, scalar_prefetch = 0 : i64, scratch_operands = 1 : i64, tpu.core_type = #tpu.core_type<tc>, window_params = [{transform_indices = @transform_0, window_bounds = array<i64: 8, 512>}, {transform_indices = @transform_1, window_bounds = array<i64: 512, 128>}, {pipeline_mode = #tpu.pipeline_mode<synchronous>, transform_indices = @transform_2, window_bounds = array<i64: 1, 128>}, {pipeline_mode = #tpu.pipeline_mode<synchronous>, transform_indices = @transform_3, window_bounds = array<i64: 128, 128>}, {pipeline_mode = #tpu.pipeline_mode<synchronous>, transform_indices = @transform_4, window_bounds = array<i64: 1, 128>}, {transform_indices = @transform_5, window_bounds = array<i64: 8, 128>}]} {
    %c0 = arith.constant 0 : index
    %c0_0 = arith.constant 0 : index
    %0 = vector.load %arg2[%c0, %c0_0] : memref<8x512xbf16, #tpu.memory_space<vmem>>, vector<8x512xbf16>
    %c0_1 = arith.constant 0 : index
    %c0_2 = arith.constant 0 : index
    %1 = vector.load %arg3[%c0_1, %c0_2] : memref<512x128xbf16, #tpu.memory_space<vmem>>, vector<512x128xbf16>
    %cst = arith.constant dense<0.000000e+00> : vector<8x128xf32>
    %2 = tpu.matmul %0, %1, %cst {dimension_numbers = #tpu.dot_dimension_numbers<[1], [0], [0], [1], [0, 0, 1, 1], [], []>} : vector<8x512xbf16>, vector<512x128xbf16>, vector<8x128xf32> -> vector<8x128xf32>
    %c0_i32 = arith.constant 0 : i32
    %3 = arith.cmpi eq, %arg1, %c0_i32 : i32
    %4 = arith.extui %3 : i1 to i32
    %c0_i32_3 = arith.constant 0 : i32
    %5 = arith.cmpi ne, %4, %c0_i32_3 : i32
    scf.if %5 {
      %c0_7 = arith.constant 0 : index
      %c0_8 = arith.constant 0 : index
      %12 = vector.load %arg8[%c0_7, %c0_8] : memref<8x128xf32, #tpu.memory_space<vmem>>, vector<8x128xf32>
      tpu.vector_store %arg8[%c0_7, %c0_8], %2 {strides = array<i32>} : memref<8x128xf32, #tpu.memory_space<vmem>>, vector<8x128xf32>,
    } else {
    }
    %c0_i32_4 = arith.constant 0 : i32
    %6 = arith.cmpi sgt, %arg1, %c0_i32_4 : i32
    %7 = arith.extui %6 : i1 to i32
    %c0_i32_5 = arith.constant 0 : i32
    %8 = arith.cmpi ne, %7, %c0_i32_5 : i32
    scf.if %8 {
      %c0_7 = arith.constant 0 : index
      %c0_8 = arith.constant 0 : index
      %12 = vector.load %arg8[%c0_7, %c0_8] : memref<8x128xf32, #tpu.memory_space<vmem>>, vector<8x128xf32>
      %13 = arith.addf %12, %2 : vector<8x128xf32>
      %c0_9 = arith.constant 0 : index
      %c0_10 = arith.constant 0 : index
      %14 = vector.load %arg8[%c0_9, %c0_10] : memref<8x128xf32, #tpu.memory_space<vmem>>, vector<8x128xf32>
      tpu.vector_store %arg8[%c0_9, %c0_10], %13 {strides = array<i32>} : memref<8x128xf32, #tpu.memory_space<vmem>>, vector<8x128xf32>,
    } else {
    }
    %c3_i32 = arith.constant 3 : i32
    %9 = arith.cmpi eq, %arg1, %c3_i32 : i32
    %10 = arith.extui %9 : i1 to i32
    %c0_i32_6 = arith.constant 0 : i32
    %11 = arith.cmpi ne, %10, %c0_i32_6 : i32
    scf.if %11 {
      %c0_7 = arith.constant 0 : index
      %c0_8 = arith.constant 0 : index
      %12 = vector.load %arg8[%c0_7, %c0_8] : memref<8x128xf32, #tpu.memory_space<vmem>>, vector<8x128xf32>
      %c0_9 = arith.constant 0 : index
      %c0_10 = arith.constant 0 : index
      %13 = vector.load %arg4[%c0_9, %c0_10] : memref<1x128xf32, #tpu.memory_space<vmem>>, vector<1x128xf32>
      %14 = vector.broadcast %13 : vector<1x128xf32> to vector<8x128xf32>
      %15 = arith.addf %12, %14 : vector<8x128xf32>
      %16 = arith.truncf %15 : vector<8x128xf32> to vector<8x128xbf16>
      %c0_11 = arith.constant 0 : index
      %c0_12 = arith.constant 0 : index
      %17 = vector.load %arg5[%c0_11, %c0_12] : memref<128x128xbf16, #tpu.memory_space<vmem>>, vector<128x128xbf16>
      %cst_13 = arith.constant dense<0.000000e+00> : vector<8x128xf32>
      %18 = tpu.matmul %16, %17, %cst_13 {dimension_numbers = #tpu.dot_dimension_numbers<[1], [0], [0], [1], [0, 0, 1, 1], [], []>} : vector<8x128xbf16>, vector<128x128xbf16>, vector<8x128xf32> -> vector<8x128xf32>
      %c0_14 = arith.constant 0 : index
      %c0_15 = arith.constant 0 : index
      %19 = vector.load %arg6[%c0_14, %c0_15] : memref<1x128xf32, #tpu.memory_space<vmem>>, vector<1x128xf32>
      %20 = vector.broadcast %19 : vector<1x128xf32> to vector<8x128xf32>
      %21 = arith.addf %18, %20 : vector<8x128xf32>
      %c0_16 = arith.constant 0 : index
      %c0_17 = arith.constant 0 : index
      %22 = vector.load %arg7[%c0_16, %c0_17] : memref<8x128xf32, #tpu.memory_space<vmem>>, vector<8x128xf32>
      tpu.vector_store %arg7[%c0_16, %c0_17], %21 {strides = array<i32>} : memref<8x128xf32, #tpu.memory_space<vmem>>, vector<8x128xf32>,
    } else {
    }
    return
  }
  func.func @transform_0(%arg0: i32, %arg1: i32) -> (i32, i32) {
    %c0_i32 = arith.constant 0 : i32
    return %arg0, %arg1 : i32, i32
  }
  func.func @transform_1(%arg0: i32, %arg1: i32) -> (i32, i32) {
    %c0_i32 = arith.constant 0 : i32
    %c0_i32_0 = arith.constant 0 : i32
    return %arg1, %c0_i32 : i32, i32
  }
  func.func @transform_2(%arg0: i32, %arg1: i32) -> (i32, i32) {
    %c0_i32 = arith.constant 0 : i32
    %c0_i32_0 = arith.constant 0 : i32
    %c0_i32_1 = arith.constant 0 : i32
    return %c0_i32, %c0_i32_0 : i32, i32
  }
  func.func @transform_3(%arg0: i32, %arg1: i32) -> (i32, i32) {
    %c0_i32 = arith.constant 0 : i32
    %c0_i32_0 = arith.constant 0 : i32
    %c0_i32_1 = arith.constant 0 : i32
    return %c0_i32, %c0_i32_0 : i32, i32
  }
  func.func @transform_4(%arg0: i32, %arg1: i32) -> (i32, i32) {
    %c0_i32 = arith.constant 0 : i32
    %c0_i32_0 = arith.constant 0 : i32
    %c0_i32_1 = arith.constant 0 : i32
    return %c0_i32, %c0_i32_0 : i32, i32
  }
  func.func @transform_5(%arg0: i32, %arg1: i32) -> (i32, i32) {
    %c0_i32 = arith.constant 0 : i32
    %c0_i32_0 = arith.constant 0 : i32
    return %arg0, %c0_i32 : i32, i32
  }
}

</mosaic_0001>

<llo_original>
// kernel: clip_with_lora_forward.7
$region0: #{clip_with_lora_forward.7}
  #allocation0 [shape = 'u32[]', space=smem, size = 0x4, offset = 0x4, fixed_abs, tag = 'smem constant byte address 0x4 - core index']
  #allocation1 [shape = 'u32[144,128]{1,0:T(1,128)}', space=vmem, size = 0x12000, scoped, tag = 'internal scratch']
  %s0 = inlined_call_operand.vmem [shape: bf16[1,128,128], index: 0, kind: input, shape index: {}]
  %s1 = inlined_call_operand.vmem [shape: f32[1,128,8], index: 1, kind: input, shape index: {}]
  %s2 = inlined_call_operand.vmem [shape: f32[8,128], index: 2, kind: input, shape index: {}]
  %s3 = inlined_call_operand.vmem [shape: bf16[1,128,128], index: 3, kind: output, shape index: {}]
  %s4 = sld [smem:[#allocation0]]
  $region22: #{clip_with_lora_forward.7} parent=0
    _
  %s6 = ssub.s32 1, %s4
  %s7 = scalar_select 0, %s6, %s4
  // Predicated region
  $region2: #{clip_with_lora_forward.7} parent=0 // pred_check
    _
  $region3: #{clip_with_lora_forward.7} parent=0 // pred_check_branch
    %9 = sbr.rel (0) target = $region5
  $region4: #{clip_with_lora_forward.7} parent=0 // pred_region
    _
  $region5: #{clip_with_lora_forward.7} parent=0 // pred_fallthru
    _
  // Predicated region
  $region6: #{clip_with_lora_forward.7} parent=0 // pred_check
    _
  $region7: #{clip_with_lora_forward.7} parent=0 // pred_check_branch
    %11 = sbr.rel (0) target = $region9
  $region8: #{clip_with_lora_forward.7} parent=0 // pred_region
    _
  $region9: #{clip_with_lora_forward.7} parent=0 // pred_fallthru
    _
  // Predicated region
  $region10: #{clip_with_lora_forward.7} parent=0 // pred_check
    _
  $region11: #{clip_with_lora_forward.7} parent=0 // pred_check_branch
    %13 = sbr.rel (0) target = $region13
  $region12: #{clip_with_lora_forward.7} parent=0 // pred_region
    _
  $region13: #{clip_with_lora_forward.7} parent=0 // pred_fallthru
    _
  %v14 = vld [vmem:[%s1] sm:$0xff]
  %v15 = vld [vmem:[%s1 + $0x8] sm:$0xff]
  %v16 = vld [vmem:[%s1 + $0x10] sm:$0xff]
  %v17 = vld [vmem:[%s1 + $0x18] sm:$0xff]
  %v18 = vld [vmem:[%s1 + $0x20] sm:$0xff]
  %v19 = vld [vmem:[%s1 + $0x28] sm:$0xff]
  %v20 = vld [vmem:[%s1 + $0x30] sm:$0xff]
  %v21 = vld [vmem:[%s1 + $0x38] sm:$0xff]
  %v22 = vld [vmem:[%s1 + $0x40] sm:$0xff]
  %v23 = vld [vmem:[%s1 + $0x48] sm:$0xff]
  %v24 = vld [vmem:[%s1 + $0x50] sm:$0xff]
  %v25 = vld [vmem:[%s1 + $0x58] sm:$0xff]
  %v26 = vld [vmem:[%s1 + $0x60] sm:$0xff]
  %v27 = vld [vmem:[%s1 + $0x68] sm:$0xff]
  %v28 = vld [vmem:[%s1 + $0x70] sm:$0xff]
  %v29 = vld [vmem:[%s1 + $0x78] sm:$0xff]
  %v30 = vld [vmem:[%s2] sm:$0xff]
  %vm31 = vcmask 64512
  %v33 = vsel %vm31, %v14, 0
  %v36 = vsel %vm31, %v15, 0
  %v39 = vsel %vm31, %v16, 0
  %v42 = vsel %vm31, %v17, 0
  %v45 = vsel %vm31, %v18, 0
  %v48 = vsel %vm31, %v19, 0
  %v51 = vsel %vm31, %v20, 0
  %v54 = vsel %vm31, %v21, 0
  %v57 = vsel %vm31, %v22, 0
  %v60 = vsel %vm31, %v23, 0
  %v63 = vsel %vm31, %v24, 0
  %v66 = vsel %vm31, %v25, 0
  %v69 = vsel %vm31, %v26, 0
  %v72 = vsel %vm31, %v27, 0
  %v75 = vsel %vm31, %v28, 0
  %v78 = vsel %vm31, %v29, 0
  %80 = vmatprep.subr.mxu0 0.0
  %81 = vmatpush1.msra.mxu0 %v30
  %82 = vmatprep.subr.mxu0 0.0
  %83 = vmatpush1.msra.mxu0 0.0
  %84 = vmatprep.subr.mxu0 0.0
  %85 = vmatpush1.msra.mxu0 0.0
  %86 = vmatprep.subr.mxu0 0.0
  %87 = vmatpush1.msra.mxu0 0.0
  %88 = vmatprep.subr.mxu0 0.0
  %89 = vmatpush1.msra.mxu0 0.0
  %90 = vmatprep.subr.mxu0 0.0
  %91 = vmatpush1.msra.mxu0 0.0
  %92 = vmatprep.subr.mxu0 0.0
  %93 = vmatpush1.msra.mxu0 0.0
  %94 = vmatprep.subr.mxu0 0.0
  %95 = vmatpush1.msra.mxu0 0.0
  %96 = vmatprep.subr.mxu0 0.0
  %97 = vmatpush1.msra.mxu0 0.0
  %98 = vmatprep.subr.mxu0 0.0
  %99 = vmatpush1.msra.mxu0 0.0
  %100 = vmatprep.subr.mxu0 0.0
  %101 = vmatpush1.msra.mxu0 0.0
  %102 = vmatprep.subr.mxu0 0.0
  %103 = vmatpush1.msra.mxu0 0.0
  %104 = vmatprep.subr.mxu0 0.0
  %105 = vmatpush1.msra.mxu0 0.0
  %106 = vmatprep.subr.mxu0 0.0
  %107 = vmatpush1.msra.mxu0 0.0
  %108 = vmatprep.subr.mxu0 0.0
  %109 = vmatpush1.msra.mxu0 0.0
  %110 = vmatprep.subr.mxu0 0.0
  %111 = vmatpush1.msra.mxu0 0.0
  %112 = vmatprep.subr.mxu0 0.0
  %113 = vmatpush1.msra.mxu0 0.0
  %114 = vmatprep.subr.mxu0 0.0
  %115 = vmatpush1.msra.mxu0 0.0
  %116 = vmatprep.subr.mxu0 0.0
  %117 = vmatpush1.msra.mxu0 0.0
  %118 = vmatprep.subr.mxu0 0.0
  %119 = vmatpush1.msra.mxu0 0.0
  %120 = vmatprep.subr.mxu0 0.0
  %121 = vmatpush1.msra.mxu0 0.0
  %122 = vmatprep.subr.mxu0 0.0
  %123 = vmatpush1.msra.mxu0 0.0
  %124 = vmatprep.subr.mxu0 0.0
  %125 = vmatpush1.msra.mxu0 0.0
  %126 = vmatprep.subr.mxu0 0.0
  %127 = vmatpush1.msra.mxu0 0.0
  %128 = vmatprep.subr.mxu0 0.0
  %129 = vmatpush1.msra.mxu0 0.0
  %130 = vmatprep.subr.mxu0 0.0
  %131 = vmatpush1.msra.mxu0 0.0
  %132 = vmatprep.subr.mxu0 0.0
  %133 = vmatpush1.msra.mxu0 0.0
  %134 = vmatprep.subr.mxu0 0.0
  %135 = vmatpush1.msra.mxu0 0.0
  %136 = vmatprep.subr.mxu0 0.0
  %137 = vmatpush1.msra.mxu0 0.0
  %138 = vmatprep.subr.mxu0 0.0
  %139 = vmatpush1.msra.mxu0 0.0
  %140 = vmatprep.subr.mxu0 0.0
  %141 = vmatpush1.msra.mxu0 0.0
  %142 = vmatprep.subr.mxu0 0.0
  %143 = vmatpush1.msra.mxu0 0.0
  %144 = vmatprep.mubr.f32.mxu0 0.0
  %145 = vmatmul.mubr.f32.gmra.mrb[0].mxu0 %v33
  %v146 = vpop.f32.mrb[0].mxu0
  %v147 = vadd.f32 0.0, %v146
  %v148 = vpop.f32.mrb[0].mxu0
  %149 = vmatprep.mubr.f32.mxu0 0.0
  %150 = vmatmul.mubr.f32.gmra.mrb[0].mxu0 %v36
  %v151 = vpop.f32.mrb[0].mxu0
  %v152 = vadd.f32 0.0, %v151
  %v153 = vpop.f32.mrb[0].mxu0
  %154 = vmatprep.mubr.f32.mxu0 0.0
  %155 = vmatmul.mubr.f32.gmra.mrb[0].mxu0 %v39
  %v156 = vpop.f32.mrb[0].mxu0
  %v157 = vadd.f32 0.0, %v156
  %v158 = vpop.f32.mrb[0].mxu0
  %159 = vmatprep.mubr.f32.mxu0 0.0
  %160 = vmatmul.mubr.f32.gmra.mrb[0].mxu0 %v42
  %v161 = vpop.f32.mrb[0].mxu0
  %v162 = vadd.f32 0.0, %v161
  %v163 = vpop.f32.mrb[0].mxu0
  %164 = vmatprep.mubr.f32.mxu0 0.0
  %165 = vmatmul.mubr.f32.gmra.mrb[0].mxu0 %v45
  %v166 = vpop.f32.mrb[0].mxu0
  %v167 = vadd.f32 0.0, %v166
  %v168 = vpop.f32.mrb[0].mxu0
  %169 = vmatprep.mubr.f32.mxu0 0.0
  %170 = vmatmul.mubr.f32.gmra.mrb[0].mxu0 %v48
  %v171 = vpop.f32.mrb[0].mxu0
  %v172 = vadd.f32 0.0, %v171
  %v173 = vpop.f32.mrb[0].mxu0
  %174 = vmatprep.mubr.f32.mxu0 0.0
  %175 = vmatmul.mubr.f32.gmra.mrb[0].mxu0 %v51
  %v176 = vpop.f32.mrb[0].mxu0
  %v177 = vadd.f32 0.0, %v176
  %v178 = vpop.f32.mrb[0].mxu0
  %179 = vmatprep.mubr.f32.mxu0 0.0
  %180 = vmatmul.mubr.f32.gmra.mrb[0].mxu0 %v54
  %v181 = vpop.f32.mrb[0].mxu0
  %v182 = vadd.f32 0.0, %v181
  %v183 = vpop.f32.mrb[0].mxu0
  %184 = vmatprep.mubr.f32.mxu0 0.0
  %185 = vmatmul.mubr.f32.gmra.mrb[0].mxu0 %v57
  %v186 = vpop.f32.mrb[0].mxu0
  %v187 = vadd.f32 0.0, %v186
  %v188 = vpop.f32.mrb[0].mxu0
  %189 = vmatprep.mubr.f32.mxu0 0.0
  %190 = vmatmul.mubr.f32.gmra.mrb[0].mxu0 %v60
  %v191 = vpop.f32.mrb[0].mxu0
  %v192 = vadd.f32 0.0, %v191
  %v193 = vpop.f32.mrb[0].mxu0
  %194 = vmatprep.mubr.f32.mxu0 0.0
  %195 = vmatmul.mubr.f32.gmra.mrb[0].mxu0 %v63
  %v196 = vpop.f32.mrb[0].mxu0
  %v197 = vadd.f32 0.0, %v196
  %v198 = vpop.f32.mrb[0].mxu0
  %199 = vmatprep.mubr.f32.mxu0 0.0
  %200 = vmatmul.mubr.f32.gmra.mrb[0].mxu0 %v66
  %v201 = vpop.f32.mrb[0].mxu0
  %v202 = vadd.f32 0.0, %v201
  %v203 = vpop.f32.mrb[0].mxu0
  %204 = vmatprep.mubr.f32.mxu0 0.0
  %205 = vmatmul.mubr.f32.gmra.mrb[0].mxu0 %v69
  %v206 = vpop.f32.mrb[0].mxu0
  %v207 = vadd.f32 0.0, %v206
  %v208 = vpop.f32.mrb[0].mxu0
  %209 = vmatprep.mubr.f32.mxu0 0.0
  %210 = vmatmul.mubr.f32.gmra.mrb[0].mxu0 %v72
  %v211 = vpop.f32.mrb[0].mxu0
  %v212 = vadd.f32 0.0, %v211
  %v213 = vpop.f32.mrb[0].mxu0
  %214 = vmatprep.mubr.f32.mxu0 0.0
  %215 = vmatmul.mubr.f32.gmra.mrb[0].mxu0 %v75
  %v216 = vpop.f32.mrb[0].mxu0
  %v217 = vadd.f32 0.0, %v216
  %v218 = vpop.f32.mrb[0].mxu0
  %219 = vmatprep.mubr.f32.mxu0 0.0
  %220 = vmatmul.mubr.f32.gmra.mrb[0].mxu0 %v78
  %v221 = vpop.f32.mrb[0].mxu0
  %v222 = vadd.f32 0.0, %v221
  %v223 = vpop.f32.mrb[0].mxu0
  %224 = vdwg.mxu0
  %v225 = vld [vmem:[%s0] sm:$0xf]
  %v226 = vld [vmem:[%s0 + $0x4] sm:$0xf]
  %v227 = vld [vmem:[%s0 + $0x8] sm:$0xf]
  %v228 = vld [vmem:[%s0 + $0xc] sm:$0xf]
  %v229 = vld [vmem:[%s0 + $0x10] sm:$0xf]
  %v230 = vld [vmem:[%s0 + $0x14] sm:$0xf]
  %v231 = vld [vmem:[%s0 + $0x18] sm:$0xf]
  %v232 = vld [vmem:[%s0 + $0x1c] sm:$0xf]
  %v233 = vld [vmem:[%s0 + $0x20] sm:$0xf]
  %v234 = vld [vmem:[%s0 + $0x24] sm:$0xf]
  %v235 = vld [vmem:[%s0 + $0x28] sm:$0xf]
  %v236 = vld [vmem:[%s0 + $0x2c] sm:$0xf]
  %v237 = vld [vmem:[%s0 + $0x30] sm:$0xf]
  %v238 = vld [vmem:[%s0 + $0x34] sm:$0xf]
  %v239 = vld [vmem:[%s0 + $0x38] sm:$0xf]
  %v240 = vld [vmem:[%s0 + $0x3c] sm:$0xf]
  %v241 = vunpack.c.l.bf16 %v225
  %v242 = vunpack.c.l.bf16 %v226
  %v243 = vunpack.c.l.bf16 %v227
  %v244 = vunpack.c.l.bf16 %v228
  %v245 = vunpack.c.l.bf16 %v229
  %v246 = vunpack.c.l.bf16 %v230
  %v247 = vunpack.c.l.bf16 %v231
  %v248 = vunpack.c.l.bf16 %v232
  %v249 = vunpack.c.l.bf16 %v233
  %v250 = vunpack.c.l.bf16 %v234
  %v251 = vunpack.c.l.bf16 %v235
  %v252 = vunpack.c.l.bf16 %v236
  %v253 = vunpack.c.l.bf16 %v237
  %v254 = vunpack.c.l.bf16 %v238
  %v255 = vunpack.c.l.bf16 %v239
  %v256 = vunpack.c.l.bf16 %v240
  %v257 = vadd.f32 %v241, %v147
  %v258 = vadd.f32 %v242, %v152
  %v259 = vadd.f32 %v243, %v157
  %v260 = vadd.f32 %v244, %v162
  %v261 = vadd.f32 %v245, %v167
  %v262 = vadd.f32 %v246, %v172
  %v263 = vadd.f32 %v247, %v177
  %v264 = vadd.f32 %v248, %v182
  %v265 = vadd.f32 %v249, %v187
  %v266 = vadd.f32 %v250, %v192
  %v267 = vadd.f32 %v251, %v197
  %v268 = vadd.f32 %v252, %v202
  %v269 = vadd.f32 %v253, %v207
  %v270 = vadd.f32 %v254, %v212
  %v271 = vadd.f32 %v255, %v217
  %v272 = vadd.f32 %v256, %v222
  %v273 = vpack.c.bf16 %v258, %v257
  %v274 = vpack.c.bf16 %v260, %v259
  %v275 = vpack.c.bf16 %v262, %v261
  %v276 = vpack.c.bf16 %v264, %v263
  %v277 = vpack.c.bf16 %v266, %v265
  %v278 = vpack.c.bf16 %v268, %v267
  %v279 = vpack.c.bf16 %v270, %v269
  %v280 = vpack.c.bf16 %v272, %v271
  %v289 = vunpack.c.l.b16 %v273
  %v290 = vunpack.c.h.b16 %v273
  %v291 = vunpack.c.l.b16 %v274
  %v292 = vunpack.c.h.b16 %v274
  %v293 = vunpack.c.l.b16 %v275
  %v294 = vunpack.c.h.b16 %v275
  %v295 = vunpack.c.l.b16 %v276
  %v296 = vunpack.c.h.b16 %v276
  %v297 = vunpack.c.l.b16 %v277
  %v298 = vunpack.c.h.b16 %v277
  %v299 = vunpack.c.l.b16 %v278
  %v300 = vunpack.c.h.b16 %v278
  %v301 = vunpack.c.l.b16 %v279
  %v302 = vunpack.c.h.b16 %v279
  %v303 = vunpack.c.l.b16 %v280
  %v304 = vunpack.c.h.b16 %v280
  %v305 = vpack.c.b16 %v289, %v289
  %v306 = vpack.c.b16 %v290, %v290
  %v307 = vpack.c.b16 %v291, %v291
  %v308 = vpack.c.b16 %v292, %v292
  %v309 = vpack.c.b16 %v293, %v293
  %v310 = vpack.c.b16 %v294, %v294
  %v311 = vpack.c.b16 %v295, %v295
  %v312 = vpack.c.b16 %v296, %v296
  %v313 = vpack.c.b16 %v297, %v297
  %v314 = vpack.c.b16 %v298, %v298
  %v315 = vpack.c.b16 %v299, %v299
  %v316 = vpack.c.b16 %v300, %v300
  %v317 = vpack.c.b16 %v301, %v301
  %v318 = vpack.c.b16 %v302, %v302
  %v319 = vpack.c.b16 %v303, %v303
  %v320 = vpack.c.b16 %v304, %v304
  %337 = vst [vmem:[%s3] sm:$0xf] %v305
  %338 = vst [vmem:[%s3 + $0x4] sm:$0xf] %v306
  %339 = vst [vmem:[%s3 + $0x8] sm:$0xf] %v307
  %340 = vst [vmem:[%s3 + $0xc] sm:$0xf] %v308
  %341 = vst [vmem:[%s3 + $0x10] sm:$0xf] %v309
  %342 = vst [vmem:[%s3 + $0x14] sm:$0xf] %v310
  %343 = vst [vmem:[%s3 + $0x18] sm:$0xf] %v311
  %344 = vst [vmem:[%s3 + $0x1c] sm:$0xf] %v312
  %345 = vst [vmem:[%s3 + $0x20] sm:$0xf] %v313
  %346 = vst [vmem:[%s3 + $0x24] sm:$0xf] %v314
  %347 = vst [vmem:[%s3 + $0x28] sm:$0xf] %v315
  %348 = vst [vmem:[%s3 + $0x2c] sm:$0xf] %v316
  %349 = vst [vmem:[%s3 + $0x30] sm:$0xf] %v317
  %350 = vst [vmem:[%s3 + $0x34] sm:$0xf] %v318
  %351 = vst [vmem:[%s3 + $0x38] sm:$0xf] %v319
  %352 = vst [vmem:[%s3 + $0x3c] sm:$0xf] %v320
  // Predicated region
  $region14: #{clip_with_lora_forward.7} parent=0 // pred_check
    _
  $region15: #{clip_with_lora_forward.7} parent=0 // pred_check_branch
    %354 = sbr.rel (0) target = $region17
  $region16: #{clip_with_lora_forward.7} parent=0 // pred_region
    _
  $region17: #{clip_with_lora_forward.7} parent=0 // pred_fallthru
    _
  // Predicated region
  $region18: #{clip_with_lora_forward.7} parent=0 // pred_check
    _
  $region19: #{clip_with_lora_forward.7} parent=0 // pred_check_branch
    %356 = sbr.rel (0) target = $region21
  $region20: #{clip_with_lora_forward.7} parent=0 // pred_region
    _
  $region21: #{clip_with_lora_forward.7} parent=0 // pred_fallthru
    _

// kernel: clip_with_lora_forward.8
$region0: #{clip_with_lora_forward.8}
  #allocation0 [shape = 'u32[]', space=smem, size = 0x4, offset = 0x4, fixed_abs, tag = 'smem constant byte address 0x4 - core index']
  #allocation1 [shape = 'u32[144,128]{1,0:T(1,128)}', space=vmem, size = 0x12000, scoped, tag = 'internal scratch']
  %s0 = inlined_call_operand.vmem [shape: bf16[2,256,128], index: 0, kind: input, shape index: {}]
  %s1 = inlined_call_operand.vmem [shape: bf16[1,128,128], index: 1, kind: input, shape index: {}]
  %s2 = inlined_call_operand.vmem [shape: f32[1,128], index: 2, kind: input, shape index: {}]
  %s3 = inlined_call_operand.vmem [shape: bf16[2,256,128], index: 3, kind: output, shape index: {}]
  %s4 = sld [smem:[#allocation0]]
  $region45: #{clip_with_lora_forward.8} parent=0
    _
  %s6 = ssub.s32 1, %s4
  %s7 = scalar_select 0, %s6, %s4
  loop: start=0, step=1, limit=4
  $region2: #{clip_with_lora_forward.8} parent=0 // loop_pre_header
    _
  $region3: #{clip_with_lora_forward.8} parent=0 // loop_header
    %s9 = sphi 0, %s13
    %p10 = scmp.ge.s32.totalorder %s9, 4
    %s16 = sphi 0, %s35
    %s17 = sphi 0, %s31
    %s18 = sphi 0, %s27
    %s19 = sphi 0, %s16
    %s20 = sphi 0, %s17
    %s21 = sphi 0, %s18
    %s22 = sphi 0, %s19
    %s23 = sphi 0, %s20
    %s24 = sphi 0, %s21
    %s40 = sphi 0, %s42
    %s43 = sphi 0, %s40
    %s44 = sphi 0, %s43
    %s60 = sphi 0, %s44
    %s68 = sphi 0, %s70
    %s71 = sphi 0, %s68
    %s72 = sphi 0, %s71
    %s88 = sphi 0, %s72
    %s94 = sphi 0, %s96
    %s97 = sphi 0, %s94
    %s98 = sphi 0, %s97
    %s114 = sphi 0, %s98
    %s122 = sphi 0, %s124
    %s125 = sphi 0, %s122
    %s126 = sphi 0, %s125
    %s142 = sphi 0, %s126
  $region4: #{clip_with_lora_forward.8} parent=0 // loop_header_branch
    %12 = sbr.rel (%p10) target = $region8
  $region5: #{clip_with_lora_forward.8} parent=0 // loop_body
    %s14 = ssub.s32 %s9, 1
    %s15 = ssub.s32 %s9, 2
    %s25 = sadd.s32 1, %s18
    %p26 = scmp.ge.s32.totalorder %s25, 1
    %s27 = scalar_select %p26, 0, %s25
    %s28 = sadd.s32 1, %s17
    %s29 = scalar_select %p26, %s28, %s17
    %p30 = scmp.ge.s32.totalorder %s29, 1
    %s31 = scalar_select %p30, 0, %s29
    %s32 = sadd.s32 1, %s16
    %s33 = scalar_select %p30, %s32, %s16
    %p34 = scmp.ge.s32.totalorder %s33, 2
    %s35 = scalar_select %p34, 0, %s33
    %s36 = ssub.s32 %s16, %s35
    %s37 = ssub.s32 %s18, %s27
    %s38 = sor.u32 %s36, %s37
    %p39 = scmp.eq.s32.totalorder %s38, 0
    %s41 = sadd.s32 %s40, 1
    %s42 = scalar_select %p39, %s40, %s41
    %p45 = pneg %p39
    %p46 = scmp.eq.s32.totalorder %s9, 1
    %p47 = por %p45, %p46
    %p48 = scmp.ne.s32.totalorder %s40, %s43
    %p49 = scmp.eq.s32.totalorder %s9, 0
    %p50 = por %p48, %p49
    %p51 = scmp.ne.s32.totalorder %s40, %s43
    %p52 = scmp.eq.s32.totalorder %s14, 1
    %p53 = por %p51, %p52
    %p54 = scmp.ne.s32.totalorder %s43, %s44
    %p55 = scmp.eq.s32.totalorder %s14, 0
    %p56 = por %p54, %p55
    %p57 = scmp.ne.s32.totalorder %s43, %s44
    %p58 = scmp.eq.s32.totalorder %s15, 1
    %p59 = por %p57, %p58
    %p61 = scmp.ne.s32.totalorder %s44, %s60
    %p62 = scmp.eq.s32.totalorder %s15, 0
    %p63 = por %p61, %p62
    %s64 = ssub.s32 %s18, %s27
    %s65 = ssub.s32 %s17, %s31
    %s66 = sor.u32 %s64, %s65
    %p67 = scmp.eq.s32.totalorder %s66, 0
    %s69 = sadd.s32 %s68, 1
    %s70 = scalar_select %p67, %s68, %s69
    %p73 = pneg %p67
    %p74 = scmp.eq.s32.totalorder %s9, 1
    %p75 = por %p73, %p74
    %p76 = scmp.ne.s32.totalorder %s68, %s71
    %p77 = scmp.eq.s32.totalorder %s9, 0
    %p78 = por %p76, %p77
    %p79 = scmp.ne.s32.totalorder %s68, %s71
    %p80 = scmp.eq.s32.totalorder %s14, 1
    %p81 = por %p79, %p80
    %p82 = scmp.ne.s32.totalorder %s71, %s72
    %p83 = scmp.eq.s32.totalorder %s14, 0
    %p84 = por %p82, %p83
    %p85 = scmp.ne.s32.totalorder %s71, %s72
    %p86 = scmp.eq.s32.totalorder %s15, 1
    %p87 = por %p85, %p86
    %p89 = scmp.ne.s32.totalorder %s72, %s88
    %p90 = scmp.eq.s32.totalorder %s15, 0
    %p91 = por %p89, %p90
    %s92 = ssub.s32 %s17, %s31
    %p93 = scmp.eq.s32.totalorder %s92, 0
    %s95 = sadd.s32 %s94, 1
    %s96 = scalar_select %p93, %s94, %s95
    %p99 = pneg %p93
    %p100 = scmp.eq.s32.totalorder %s9, 1
    %p101 = por %p99, %p100
    %p102 = scmp.ne.s32.totalorder %s94, %s97
    %p103 = scmp.eq.s32.totalorder %s9, 0
    %p104 = por %p102, %p103
    %p105 = scmp.ne.s32.totalorder %s94, %s97
    %p106 = scmp.eq.s32.totalorder %s14, 1
    %p107 = por %p105, %p106
    %p108 = scmp.ne.s32.totalorder %s97, %s98
    %p109 = scmp.eq.s32.totalorder %s14, 0
    %p110 = por %p108, %p109
    %p111 = scmp.ne.s32.totalorder %s97, %s98
    %p112 = scmp.eq.s32.totalorder %s15, 1
    %p113 = por %p111, %p112
    %p115 = scmp.ne.s32.totalorder %s98, %s114
    %p116 = scmp.eq.s32.totalorder %s15, 0
    %p117 = por %p115, %p116
    %s118 = ssub.s32 %s16, %s35
    %s119 = ssub.s32 %s17, %s31
    %s120 = sor.u32 %s118, %s119
    %p121 = scmp.eq.s32.totalorder %s120, 0
    %s123 = sadd.s32 %s122, 1
    %s124 = scalar_select %p121, %s122, %s123
    %p127 = pneg %p121
    %p128 = scmp.eq.s32.totalorder %s9, 1
    %p129 = por %p127, %p128
    %p130 = scmp.ne.s32.totalorder %s122, %s125
    %p131 = scmp.eq.s32.totalorder %s9, 0
    %p132 = por %p130, %p131
    %p133 = scmp.ne.s32.totalorder %s122, %s125
    %p134 = scmp.eq.s32.totalorder %s14, 1
    %p135 = por %p133, %p134
    %p136 = scmp.ne.s32.totalorder %s125, %s126
    %p137 = scmp.eq.s32.totalorder %s14, 0
    %p138 = por %p136, %p137
    %p139 = scmp.ne.s32.totalorder %s125, %s126
    %p140 = scmp.eq.s32.totalorder %s15, 1
    %p141 = por %p139, %p140
    %p143 = scmp.ne.s32.totalorder %s126, %s142
    %p144 = scmp.eq.s32.totalorder %s15, 0
    %p145 = por %p143, %p144
    %p146 = scmp.le.s32.totalorder 1, %s9
    %p147 = scmp.lt.s32.totalorder %s9, 3
    %p148 = pnand %p146, %p147
    %p149 = pneg %p148
    // Predicated region
    $region9: #{clip_with_lora_forward.8} parent=5 // pred_check
      _
    $region10: #{clip_with_lora_forward.8} parent=5 // pred_check_branch
      %151 = sbr.rel (%p148) target = $region12
    $region11: #{clip_with_lora_forward.8} parent=5 // pred_region
      %s152 = ssub.s32 %s9, 1
      // Predicated region
      $region13: #{clip_with_lora_forward.8} parent=11 // pred_check
        %p153 = pneg %p84
      $region14: #{clip_with_lora_forward.8} parent=11 // pred_check_branch
        %155 = sbr.rel (%p153) target = $region16
      $region15: #{clip_with_lora_forward.8} parent=11 // pred_region
        %s156 = smul.u32 16, %s21
        %p157 = scmp.lt.s32.totalorder %s156, 15
        %s158 = scalar_select %p157, %s156, 15
        %p159 = scmp.lt.s32.totalorder %s20, 0
        %s160 = scalar_select %p159, %s20, 0
        %s161 = sadd.s32 %s160, %s158
        %s162 = smul.addr %s161, 4
        %s163 = scalar_lea.vmem %s1, %s162
        %s164 = smul.u32 16, %s21
      $region16: #{clip_with_lora_forward.8} parent=11 // pred_fallthru
        _
      // Predicated region
      $region17: #{clip_with_lora_forward.8} parent=11 // pred_check
        %p165 = pneg %p110
      $region18: #{clip_with_lora_forward.8} parent=11 // pred_check_branch
        %167 = sbr.rel (%p165) target = $region20
      $region19: #{clip_with_lora_forward.8} parent=11 // pred_region
        %p168 = scmp.lt.s32.totalorder %s20, 0
        %s169 = scalar_select %p168, %s20, 0
        %s170 = scalar_lea.vmem %s2, %s169
      $region20: #{clip_with_lora_forward.8} parent=11 // pred_fallthru
        _
    $region12: #{clip_with_lora_forward.8} parent=5 // pred_fallthru
      _
    %p171 = scmp.lt.s32.totalorder %s9, 2
    // Predicated region
    $region21: #{clip_with_lora_forward.8} parent=5 // pred_check
      %p172 = pneg %p171
    $region22: #{clip_with_lora_forward.8} parent=5 // pred_check_branch
      %174 = sbr.rel (%p172) target = $region24
    $region23: #{clip_with_lora_forward.8} parent=5 // pred_region
      // Predicated region
      $region25: #{clip_with_lora_forward.8} parent=23 // pred_check
        %p175 = pneg %p50
      $region26: #{clip_with_lora_forward.8} parent=23 // pred_check_branch
        %177 = sbr.rel (%p175) target = $region28
      $region27: #{clip_with_lora_forward.8} parent=23 // pred_region
        %p178 = scmp.lt.s32.totalorder %s16, 1
        %s179 = scalar_select %p178, %s16, 1
        %p180 = scmp.lt.s32.totalorder %s18, 0
        %s181 = scalar_select %p180, %s18, 0
        %s182 = smul.addr %s179, 32
        %s183 = sadd.s32 %s181, %s182
        %s184 = smul.addr %s183, 4
        %s185 = scalar_lea.vmem %s0, %s184
      $region28: #{clip_with_lora_forward.8} parent=23 // pred_fallthru
        _
    $region24: #{clip_with_lora_forward.8} parent=5 // pred_fallthru
      _
    %p186 = scmp.le.s32.totalorder 1, %s9
    %p187 = scmp.lt.s32.totalorder %s9, 3
    %p188 = pnand %p186, %p187
    %p189 = pneg %p188
    // Predicated region
    $region29: #{clip_with_lora_forward.8} parent=5 // pred_check
      _
    $region30: #{clip_with_lora_forward.8} parent=5 // pred_check_branch
      %191 = sbr.rel (%p188) target = $region32
    $region31: #{clip_with_lora_forward.8} parent=5 // pred_region
      %s192 = ssub.s32 %s9, 1
      %p193 = scmp.lt.s32.totalorder %s19, 1
      %s194 = scalar_select %p193, %s19, 1
      %p195 = scmp.lt.s32.totalorder %s21, 0
      %s196 = scalar_select %p195, %s21, 0
      %s197 = smul.addr %s194, 32
      %s198 = sadd.s32 %s196, %s197
      %s199 = smul.addr %s198, 4
      %s200 = scalar_lea.vmem %s0, %s199
      %p201 = pneg %p56
      %p202 = pneg %p53
      %s203 = smul.u32 16, %s21
      %p204 = scmp.lt.s32.totalorder %s203, 15
      %s205 = scalar_select %p204, %s203, 15
      %p206 = scmp.lt.s32.totalorder %s20, 0
      %s207 = scalar_select %p206, %s20, 0
      %s208 = sadd.s32 %s207, %s205
      %s209 = smul.addr %s208, 4
      %s210 = scalar_lea.vmem %s1, %s209
      %p211 = pneg %p84
      %p212 = pneg %p81
      %p213 = scmp.lt.s32.totalorder %s20, 0
      %s214 = scalar_select %p213, %s20, 0
      %s215 = scalar_lea.vmem %s2, %s214
      %p216 = pneg %p110
      %p217 = pneg %p107
      %p218 = pneg %p138
      %p219 = pneg %p135
      %p220 = scmp.lt.s32.totalorder %s19, 1
      %s221 = scalar_select %p220, %s19, 1
      %p222 = scmp.lt.s32.totalorder %s20, 0
      %s223 = scalar_select %p222, %s20, 0
      %s224 = smul.addr %s221, 32
      %s225 = sadd.s32 %s223, %s224
      %s226 = smul.addr %s225, 4
      %s227 = scalar_lea.vmem %s3, %s226
      %p228 = scmp.lt.s32.totalorder %s19, 1
      %s229 = scalar_select %p228, %s19, 1
      %p230 = scmp.lt.s32.totalorder %s21, 0
      %s231 = scalar_select %p230, %s21, 0
      %s232 = smul.addr %s229, 32
      %s233 = sadd.s32 %s231, %s232
      %s234 = smul.addr %s233, 4
      %s235 = scalar_lea.vmem %s0, %s234
      %s236 = smul.u32 16, %s21
      %p237 = scmp.lt.s32.totalorder %s236, 15
      %s238 = scalar_select %p237, %s236, 15
      %p239 = scmp.lt.s32.totalorder %s20, 0
      %s240 = scalar_select %p239, %s20, 0
      %s241 = sadd.s32 %s240, %s238
      %s242 = smul.addr %s241, 4
      %s243 = scalar_lea.vmem %s1, %s242
      %s244 = smul.u32 16, %s21
      %p245 = scmp.lt.s32.totalorder %s20, 0
      %s246 = scalar_select %p245, %s20, 0
      %s247 = scalar_lea.vmem %s2, %s246
      %p248 = scmp.lt.s32.totalorder %s19, 1
      %s249 = scalar_select %p248, %s19, 1
      %p250 = scmp.lt.s32.totalorder %s20, 0
      %s251 = scalar_select %p250, %s20, 0
      %s252 = smul.addr %s249, 32
      %s253 = sadd.s32 %s251, %s252
      %s254 = smul.addr %s253, 4
      %s255 = scalar_lea.vmem %s3, %s254
      %v257 = vld [vmem:[%s235] sm:$0xf]
      %v258 = vld [vmem:[%s235 + $0x4] sm:$0xf]
      %v259 = vld [vmem:[%s235 + $0x8] sm:$0xf]
      %v260 = vld [vmem:[%s235 + $0xc] sm:$0xf]
      %v261 = vld [vmem:[%s235 + $0x10] sm:$0xf]
      %v262 = vld [vmem:[%s235 + $0x14] sm:$0xf]
      %v263 = vld [vmem:[%s235 + $0x18] sm:$0xf]
      %v264 = vld [vmem:[%s235 + $0x1c] sm:$0xf]
      %v265 = vld [vmem:[%s235 + $0x20] sm:$0xf]
      %v266 = vld [vmem:[%s235 + $0x24] sm:$0xf]
      %v267 = vld [vmem:[%s235 + $0x28] sm:$0xf]
      %v268 = vld [vmem:[%s235 + $0x2c] sm:$0xf]
      %v269 = vld [vmem:[%s235 + $0x30] sm:$0xf]
      %v270 = vld [vmem:[%s235 + $0x34] sm:$0xf]
      %v271 = vld [vmem:[%s235 + $0x38] sm:$0xf]
      %v272 = vld [vmem:[%s235 + $0x3c] sm:$0xf]
      %v273 = vld [vmem:[%s235 + $0x40] sm:$0xf]
      %v274 = vld [vmem:[%s235 + $0x44] sm:$0xf]
      %v275 = vld [vmem:[%s235 + $0x48] sm:$0xf]
      %v276 = vld [vmem:[%s235 + $0x4c] sm:$0xf]
      %v277 = vld [vmem:[%s235 + $0x50] sm:$0xf]
      %v278 = vld [vmem:[%s235 + $0x54] sm:$0xf]
      %v279 = vld [vmem:[%s235 + $0x58] sm:$0xf]
      %v280 = vld [vmem:[%s235 + $0x5c] sm:$0xf]
      %v281 = vld [vmem:[%s235 + $0x60] sm:$0xf]
      %v282 = vld [vmem:[%s235 + $0x64] sm:$0xf]
      %v283 = vld [vmem:[%s235 + $0x68] sm:$0xf]
      %v284 = vld [vmem:[%s235 + $0x6c] sm:$0xf]
      %v285 = vld [vmem:[%s235 + $0x70] sm:$0xf]
      %v286 = vld [vmem:[%s235 + $0x74] sm:$0xf]
      %v287 = vld [vmem:[%s235 + $0x78] sm:$0xf]
      %v288 = vld [vmem:[%s235 + $0x7c] sm:$0xf]
      %v289 = vld [vmem:[%s243] sm:$0xf]
      %v290 = vld [vmem:[%s243 + $0x4] sm:$0xf]
      %v291 = vld [vmem:[%s243 + $0x8] sm:$0xf]
      %v292 = vld [vmem:[%s243 + $0xc] sm:$0xf]
      %v293 = vld [vmem:[%s243 + $0x10] sm:$0xf]
      %v294 = vld [vmem:[%s243 + $0x14] sm:$0xf]
      %v295 = vld [vmem:[%s243 + $0x18] sm:$0xf]
      %v296 = vld [vmem:[%s243 + $0x1c] sm:$0xf]
      %v297 = vld [vmem:[%s243 + $0x20] sm:$0xf]
      %v298 = vld [vmem:[%s243 + $0x24] sm:$0xf]
      %v299 = vld [vmem:[%s243 + $0x28] sm:$0xf]
      %v300 = vld [vmem:[%s243 + $0x2c] sm:$0xf]
      %v301 = vld [vmem:[%s243 + $0x30] sm:$0xf]
      %v302 = vld [vmem:[%s243 + $0x34] sm:$0xf]
      %v303 = vld [vmem:[%s243 + $0x38] sm:$0xf]
      %v304 = vld [vmem:[%s243 + $0x3c] sm:$0xf]
      %v305 = vld [vmem:[%s247] sm:$0x1]
      %v307 = vlaneseq
      %v308 = vshrl.u32 %v307, 7
      %v309 = vsub.s32 0, %v308
      %v310 = vrot.slane %v305, %v309
      %v344 = vunpack.c.l.b16 %v257
      %v345 = vunpack.c.l.b16 %v258
      %v346 = vunpack.c.l.b16 %v259
      %v347 = vunpack.c.l.b16 %v260
      %v348 = vunpack.c.l.b16 %v261
      %v349 = vunpack.c.l.b16 %v262
      %v350 = vunpack.c.l.b16 %v263
      %v351 = vunpack.c.l.b16 %v264
      %v352 = vunpack.c.l.b16 %v265
      %v353 = vunpack.c.l.b16 %v266
      %v354 = vunpack.c.l.b16 %v267
      %v355 = vunpack.c.l.b16 %v268
      %v356 = vunpack.c.l.b16 %v269
      %v357 = vunpack.c.l.b16 %v270
      %v358 = vunpack.c.l.b16 %v271
      %v359 = vunpack.c.l.b16 %v272
      %v360 = vunpack.c.l.b16 %v273
      %v361 = vunpack.c.l.b16 %v274
      %v362 = vunpack.c.l.b16 %v275
      %v363 = vunpack.c.l.b16 %v276
      %v364 = vunpack.c.l.b16 %v277
      %v365 = vunpack.c.l.b16 %v278
      %v366 = vunpack.c.l.b16 %v279
      %v367 = vunpack.c.l.b16 %v280
      %v368 = vunpack.c.l.b16 %v281
      %v369 = vunpack.c.l.b16 %v282
      %v370 = vunpack.c.l.b16 %v283
      %v371 = vunpack.c.l.b16 %v284
      %v372 = vunpack.c.l.b16 %v285
      %v373 = vunpack.c.l.b16 %v286
      %v374 = vunpack.c.l.b16 %v287
      %v375 = vunpack.c.l.b16 %v288
      %v376 = vpack.c.b16 %v345, %v344
      %v377 = vpack.c.b16 %v347, %v346
      %v378 = vpack.c.b16 %v349, %v348
      %v379 = vpack.c.b16 %v351, %v350
      %v380 = vpack.c.b16 %v353, %v352
      %v381 = vpack.c.b16 %v355, %v354
      %v382 = vpack.c.b16 %v357, %v356
      %v383 = vpack.c.b16 %v359, %v358
      %v384 = vpack.c.b16 %v361, %v360
      %v385 = vpack.c.b16 %v363, %v362
      %v386 = vpack.c.b16 %v365, %v364
      %v387 = vpack.c.b16 %v367, %v366
      %v388 = vpack.c.b16 %v369, %v368
      %v389 = vpack.c.b16 %v371, %v370
      %v390 = vpack.c.b16 %v373, %v372
      %v391 = vpack.c.b16 %v375, %v374
      %v424 = vunpack.c.l.b16 %v289
      %v425 = vunpack.c.l.b16 %v290
      %v426 = vunpack.c.l.b16 %v291
      %v427 = vunpack.c.l.b16 %v292
      %v428 = vunpack.c.l.b16 %v293
      %v429 = vunpack.c.l.b16 %v294
      %v430 = vunpack.c.l.b16 %v295
      %v431 = vunpack.c.l.b16 %v296
      %v432 = vunpack.c.l.b16 %v297
      %v433 = vunpack.c.l.b16 %v298
      %v434 = vunpack.c.l.b16 %v299
      %v435 = vunpack.c.l.b16 %v300
      %v436 = vunpack.c.l.b16 %v301
      %v437 = vunpack.c.l.b16 %v302
      %v438 = vunpack.c.l.b16 %v303
      %v439 = vunpack.c.l.b16 %v304
      %v440 = vpack.c.b16 %v425, %v424
      %v441 = vpack.c.b16 %v427, %v426
      %v442 = vpack.c.b16 %v429, %v428
      %v443 = vpack.c.b16 %v431, %v430
      %v444 = vpack.c.b16 %v433, %v432
      %v445 = vpack.c.b16 %v435, %v434
      %v446 = vpack.c.b16 %v437, %v436
      %v447 = vpack.c.b16 %v439, %v438
      %456 = vmatprep.subr.bf16.mxu0 0
      %457 = vmatpush1.bf16.msra.mxu0 %v440
      %458 = vmatprep.subr.bf16.mxu0 0
      %459 = vmatpush1.bf16.msra.mxu0 %v441
      %460 = vmatprep.subr.bf16.mxu0 0
      %461 = vmatpush1.bf16.msra.mxu0 %v442
      %462 = vmatprep.subr.bf16.mxu0 0
      %463 = vmatpush1.bf16.msra.mxu0 %v443
      %464 = vmatprep.subr.bf16.mxu0 0
      %465 = vmatpush1.bf16.msra.mxu0 %v444
      %466 = vmatprep.subr.bf16.mxu0 0
      %467 = vmatpush1.bf16.msra.mxu0 %v445
      %468 = vmatprep.subr.bf16.mxu0 0
      %469 = vmatpush1.bf16.msra.mxu0 %v446
      %470 = vmatprep.subr.bf16.mxu0 0
      %471 = vmatpush1.bf16.msra.mxu0 %v447
      %472 = vmatprep.subr.bf16.mxu0 0
      %473 = vmatpush1.bf16.msra.mxu0 0
      %474 = vmatprep.subr.bf16.mxu0 0
      %475 = vmatpush1.bf16.msra.mxu0 0
      %476 = vmatprep.subr.bf16.mxu0 0
      %477 = vmatpush1.bf16.msra.mxu0 0
      %478 = vmatprep.subr.bf16.mxu0 0
      %479 = vmatpush1.bf16.msra.mxu0 0
      %480 = vmatprep.subr.bf16.mxu0 0
      %481 = vmatpush1.bf16.msra.mxu0 0
      %482 = vmatprep.subr.bf16.mxu0 0
      %483 = vmatpush1.bf16.msra.mxu0 0
      %484 = vmatprep.subr.bf16.mxu0 0
      %485 = vmatpush1.bf16.msra.mxu0 0
      %486 = vmatprep.subr.bf16.mxu0 0
      %487 = vmatpush1.bf16.msra.mxu0 0
      %488 = vmatprep.mubr.bf16.mxu0 0
      %489 = vmatmul.mubr.bf16.gmra.mrb[0].mxu0 %v376
      %v490 = vpop.f32.mrb[0].mxu0
      %v491 = vadd.f32 %v310, %v490
      %v492 = vpop.f32.mrb[0].mxu0
      %v493 = vpop.f32.mrb[0].mxu0
      %v494 = vadd.f32 %v310, %v493
      %v495 = vpop.f32.mrb[0].mxu0
      %496 = vmatprep.mubr.bf16.mxu0 0
      %497 = vmatmul.mubr.bf16.gmra.mrb[0].mxu0 %v377
      %v498 = vpop.f32.mrb[0].mxu0
      %v499 = vadd.f32 %v310, %v498
      %v500 = vpop.f32.mrb[0].mxu0
      %v501 = vpop.f32.mrb[0].mxu0
      %v502 = vadd.f32 %v310, %v501
      %v503 = vpop.f32.mrb[0].mxu0
      %504 = vmatprep.mubr.bf16.mxu0 0
      %505 = vmatmul.mubr.bf16.gmra.mrb[0].mxu0 %v378
      %v506 = vpop.f32.mrb[0].mxu0
      %v507 = vadd.f32 %v310, %v506
      %v508 = vpop.f32.mrb[0].mxu0
      %v509 = vpop.f32.mrb[0].mxu0
      %v510 = vadd.f32 %v310, %v509
      %v511 = vpop.f32.mrb[0].mxu0
      %512 = vmatprep.mubr.bf16.mxu0 0
      %513 = vmatmul.mubr.bf16.gmra.mrb[0].mxu0 %v379
      %v514 = vpop.f32.mrb[0].mxu0
      %v515 = vadd.f32 %v310, %v514
      %v516 = vpop.f32.mrb[0].mxu0
      %v517 = vpop.f32.mrb[0].mxu0
      %v518 = vadd.f32 %v310, %v517
      %v519 = vpop.f32.mrb[0].mxu0
      %520 = vmatprep.mubr.bf16.mxu0 0
      %521 = vmatmul.mubr.bf16.gmra.mrb[0].mxu0 %v380
      %v522 = vpop.f32.mrb[0].mxu0
      %v523 = vadd.f32 %v310, %v522
      %v524 = vpop.f32.mrb[0].mxu0
      %v525 = vpop.f32.mrb[0].mxu0
      %v526 = vadd.f32 %v310, %v525
      %v527 = vpop.f32.mrb[0].mxu0
      %528 = vmatprep.mubr.bf16.mxu0 0
      %529 = vmatmul.mubr.bf16.gmra.mrb[0].mxu0 %v381
      %v530 = vpop.f32.mrb[0].mxu0
      %v531 = vadd.f32 %v310, %v530
      %v532 = vpop.f32.mrb[0].mxu0
      %v533 = vpop.f32.mrb[0].mxu0
      %v534 = vadd.f32 %v310, %v533
      %v535 = vpop.f32.mrb[0].mxu0
      %536 = vmatprep.mubr.bf16.mxu0 0
      %537 = vmatmul.mubr.bf16.gmra.mrb[0].mxu0 %v382
      %v538 = vpop.f32.mrb[0].mxu0
      %v539 = vadd.f32 %v310, %v538
      %v540 = vpop.f32.mrb[0].mxu0
      %v541 = vpop.f32.mrb[0].mxu0
      %v542 = vadd.f32 %v310, %v541
      %v543 = vpop.f32.mrb[0].mxu0
      %544 = vmatprep.mubr.bf16.mxu0 0
      %545 = vmatmul.mubr.bf16.gmra.mrb[0].mxu0 %v383
      %v546 = vpop.f32.mrb[0].mxu0
      %v547 = vadd.f32 %v310, %v546
      %v548 = vpop.f32.mrb[0].mxu0
      %v549 = vpop.f32.mrb[0].mxu0
      %v550 = vadd.f32 %v310, %v549
      %v551 = vpop.f32.mrb[0].mxu0
      %552 = vmatprep.mubr.bf16.mxu0 0
      %553 = vmatmul.mubr.bf16.gmra.mrb[0].mxu0 %v384
      %v554 = vpop.f32.mrb[0].mxu0
      %v555 = vadd.f32 %v310, %v554
      %v556 = vpop.f32.mrb[0].mxu0
      %v557 = vpop.f32.mrb[0].mxu0
      %v558 = vadd.f32 %v310, %v557
      %v559 = vpop.f32.mrb[0].mxu0
      %560 = vmatprep.mubr.bf16.mxu0 0
      %561 = vmatmul.mubr.bf16.gmra.mrb[0].mxu0 %v385
      %v562 = vpop.f32.mrb[0].mxu0
      %v563 = vadd.f32 %v310, %v562
      %v564 = vpop.f32.mrb[0].mxu0
      %v565 = vpop.f32.mrb[0].mxu0
      %v566 = vadd.f32 %v310, %v565
      %v567 = vpop.f32.mrb[0].mxu0
      %568 = vmatprep.mubr.bf16.mxu0 0
      %569 = vmatmul.mubr.bf16.gmra.mrb[0].mxu0 %v386
      %v570 = vpop.f32.mrb[0].mxu0
      %v571 = vadd.f32 %v310, %v570
      %v572 = vpop.f32.mrb[0].mxu0
      %v573 = vpop.f32.mrb[0].mxu0
      %v574 = vadd.f32 %v310, %v573
      %v575 = vpop.f32.mrb[0].mxu0
      %576 = vmatprep.mubr.bf16.mxu0 0
      %577 = vmatmul.mubr.bf16.gmra.mrb[0].mxu0 %v387
      %v578 = vpop.f32.mrb[0].mxu0
      %v579 = vadd.f32 %v310, %v578
      %v580 = vpop.f32.mrb[0].mxu0
      %v581 = vpop.f32.mrb[0].mxu0
      %v582 = vadd.f32 %v310, %v581
      %v583 = vpop.f32.mrb[0].mxu0
      %584 = vmatprep.mubr.bf16.mxu0 0
      %585 = vmatmul.mubr.bf16.gmra.mrb[0].mxu0 %v388
      %v586 = vpop.f32.mrb[0].mxu0
      %v587 = vadd.f32 %v310, %v586
      %v588 = vpop.f32.mrb[0].mxu0
      %v589 = vpop.f32.mrb[0].mxu0
      %v590 = vadd.f32 %v310, %v589
      %v591 = vpop.f32.mrb[0].mxu0
      %592 = vmatprep.mubr.bf16.mxu0 0
      %593 = vmatmul.mubr.bf16.gmra.mrb[0].mxu0 %v389
      %v594 = vpop.f32.mrb[0].mxu0
      %v595 = vadd.f32 %v310, %v594
      %v596 = vpop.f32.mrb[0].mxu0
      %v597 = vpop.f32.mrb[0].mxu0
      %v598 = vadd.f32 %v310, %v597
      %v599 = vpop.f32.mrb[0].mxu0
      %600 = vmatprep.mubr.bf16.mxu0 0
      %601 = vmatmul.mubr.bf16.gmra.mrb[0].mxu0 %v390
      %v602 = vpop.f32.mrb[0].mxu0
      %v603 = vadd.f32 %v310, %v602
      %v604 = vpop.f32.mrb[0].mxu0
      %v605 = vpop.f32.mrb[0].mxu0
      %v606 = vadd.f32 %v310, %v605
      %v607 = vpop.f32.mrb[0].mxu0
      %608 = vmatprep.mubr.bf16.mxu0 0
      %609 = vmatmul.mubr.bf16.gmra.mrb[0].mxu0 %v391
      %v610 = vpop.f32.mrb[0].mxu0
      %v611 = vadd.f32 %v310, %v610
      %v612 = vpop.f32.mrb[0].mxu0
      %v613 = vpop.f32.mrb[0].mxu0
      %v614 = vadd.f32 %v310, %v613
      %v615 = vpop.f32.mrb[0].mxu0
      %616 = vdwg.mxu0
      %v617 = vpack.c.bf16 %v494, %v491
      %v618 = vpack.c.bf16 %v502, %v499
      %v619 = vpack.c.bf16 %v510, %v507
      %v620 = vpack.c.bf16 %v518, %v515
      %v621 = vpack.c.bf16 %v526, %v523
      %v622 = vpack.c.bf16 %v534, %v531
      %v623 = vpack.c.bf16 %v542, %v539
      %v624 = vpack.c.bf16 %v550, %v547
      %v625 = vpack.c.bf16 %v558, %v555
      %v626 = vpack.c.bf16 %v566, %v563
      %v627 = vpack.c.bf16 %v574, %v571
      %v628 = vpack.c.bf16 %v582, %v579
      %v629 = vpack.c.bf16 %v590, %v587
      %v630 = vpack.c.bf16 %v598, %v595
      %v631 = vpack.c.bf16 %v606, %v603
      %v632 = vpack.c.bf16 %v614, %v611
      %v649 = vunpack.c.l.b16 %v617
      %v650 = vunpack.c.h.b16 %v617
      %v651 = vunpack.c.l.b16 %v618
      %v652 = vunpack.c.h.b16 %v618
      %v653 = vunpack.c.l.b16 %v619
      %v654 = vunpack.c.h.b16 %v619
      %v655 = vunpack.c.l.b16 %v620
      %v656 = vunpack.c.h.b16 %v620
      %v657 = vunpack.c.l.b16 %v621
      %v658 = vunpack.c.h.b16 %v621
      %v659 = vunpack.c.l.b16 %v622
      %v660 = vunpack.c.h.b16 %v622
      %v661 = vunpack.c.l.b16 %v623
      %v662 = vunpack.c.h.b16 %v623
      %v663 = vunpack.c.l.b16 %v624
      %v664 = vunpack.c.h.b16 %v624
      %v665 = vunpack.c.l.b16 %v625
      %v666 = vunpack.c.h.b16 %v625
      %v667 = vunpack.c.l.b16 %v626
      %v668 = vunpack.c.h.b16 %v626
      %v669 = vunpack.c.l.b16 %v627
      %v670 = vunpack.c.h.b16 %v627
      %v671 = vunpack.c.l.b16 %v628
      %v672 = vunpack.c.h.b16 %v628
      %v673 = vunpack.c.l.b16 %v629
      %v674 = vunpack.c.h.b16 %v629
      %v675 = vunpack.c.l.b16 %v630
      %v676 = vunpack.c.h.b16 %v630
      %v677 = vunpack.c.l.b16 %v631
      %v678 = vunpack.c.h.b16 %v631
      %v679 = vunpack.c.l.b16 %v632
      %v680 = vunpack.c.h.b16 %v632
      %v681 = vpack.c.b16 %v649, %v649
      %v682 = vpack.c.b16 %v650, %v650
      %v683 = vpack.c.b16 %v651, %v651
      %v684 = vpack.c.b16 %v652, %v652
      %v685 = vpack.c.b16 %v653, %v653
      %v686 = vpack.c.b16 %v654, %v654
      %v687 = vpack.c.b16 %v655, %v655
      %v688 = vpack.c.b16 %v656, %v656
      %v689 = vpack.c.b16 %v657, %v657
      %v690 = vpack.c.b16 %v658, %v658
      %v691 = vpack.c.b16 %v659, %v659
      %v692 = vpack.c.b16 %v660, %v660
      %v693 = vpack.c.b16 %v661, %v661
      %v694 = vpack.c.b16 %v662, %v662
      %v695 = vpack.c.b16 %v663, %v663
      %v696 = vpack.c.b16 %v664, %v664
      %v697 = vpack.c.b16 %v665, %v665
      %v698 = vpack.c.b16 %v666, %v666
      %v699 = vpack.c.b16 %v667, %v667
      %v700 = vpack.c.b16 %v668, %v668
      %v701 = vpack.c.b16 %v669, %v669
      %v702 = vpack.c.b16 %v670, %v670
      %v703 = vpack.c.b16 %v671, %v671
      %v704 = vpack.c.b16 %v672, %v672
      %v705 = vpack.c.b16 %v673, %v673
      %v706 = vpack.c.b16 %v674, %v674
      %v707 = vpack.c.b16 %v675, %v675
      %v708 = vpack.c.b16 %v676, %v676
      %v709 = vpack.c.b16 %v677, %v677
      %v710 = vpack.c.b16 %v678, %v678
      %v711 = vpack.c.b16 %v679, %v679
      %v712 = vpack.c.b16 %v680, %v680
      %745 = vst [vmem:[%s255] sm:$0xf] %v681
      %746 = vst [vmem:[%s255 + $0x4] sm:$0xf] %v682
      %747 = vst [vmem:[%s255 + $0x8] sm:$0xf] %v683
      %748 = vst [vmem:[%s255 + $0xc] sm:$0xf] %v684
      %749 = vst [vmem:[%s255 + $0x10] sm:$0xf] %v685
      %750 = vst [vmem:[%s255 + $0x14] sm:$0xf] %v686
      %751 = vst [vmem:[%s255 + $0x18] sm:$0xf] %v687
      %752 = vst [vmem:[%s255 + $0x1c] sm:$0xf] %v688
      %753 = vst [vmem:[%s255 + $0x20] sm:$0xf] %v689
      %754 = vst [vmem:[%s255 + $0x24] sm:$0xf] %v690
      %755 = vst [vmem:[%s255 + $0x28] sm:$0xf] %v691
      %756 = vst [vmem:[%s255 + $0x2c] sm:$0xf] %v692
      %757 = vst [vmem:[%s255 + $0x30] sm:$0xf] %v693
      %758 = vst [vmem:[%s255 + $0x34] sm:$0xf] %v694
      %759 = vst [vmem:[%s255 + $0x38] sm:$0xf] %v695
      %760 = vst [vmem:[%s255 + $0x3c] sm:$0xf] %v696
      %761 = vst [vmem:[%s255 + $0x40] sm:$0xf] %v697
      %762 = vst [vmem:[%s255 + $0x44] sm:$0xf] %v698
      %763 = vst [vmem:[%s255 + $0x48] sm:$0xf] %v699
      %764 = vst [vmem:[%s255 + $0x4c] sm:$0xf] %v700
      %765 = vst [vmem:[%s255 + $0x50] sm:$0xf] %v701
      %766 = vst [vmem:[%s255 + $0x54] sm:$0xf] %v702
      %767 = vst [vmem:[%s255 + $0x58] sm:$0xf] %v703
      %768 = vst [vmem:[%s255 + $0x5c] sm:$0xf] %v704
      %769 = vst [vmem:[%s255 + $0x60] sm:$0xf] %v705
      %770 = vst [vmem:[%s255 + $0x64] sm:$0xf] %v706
      %771 = vst [vmem:[%s255 + $0x68] sm:$0xf] %v707
      %772 = vst [vmem:[%s255 + $0x6c] sm:$0xf] %v708
      %773 = vst [vmem:[%s255 + $0x70] sm:$0xf] %v709
      %774 = vst [vmem:[%s255 + $0x74] sm:$0xf] %v710
      %775 = vst [vmem:[%s255 + $0x78] sm:$0xf] %v711
      %776 = vst [vmem:[%s255 + $0x7c] sm:$0xf] %v712
      %p777 = scmp.lt.s32.totalorder %s19, 1
      %s778 = scalar_select %p777, %s19, 1
      %p779 = scmp.lt.s32.totalorder %s20, 0
      %s780 = scalar_select %p779, %s20, 0
      %s781 = smul.addr %s778, 32
      %s782 = sadd.s32 %s780, %s781
      %s783 = smul.addr %s782, 4
      %s784 = scalar_lea.vmem %s3, %s783
      // Predicated region
      $region33: #{clip_with_lora_forward.8} parent=31 // pred_check
        %p785 = pneg %p135
      $region34: #{clip_with_lora_forward.8} parent=31 // pred_check_branch
        %787 = sbr.rel (%p785) target = $region36
      $region35: #{clip_with_lora_forward.8} parent=31 // pred_region
        _
      $region36: #{clip_with_lora_forward.8} parent=31 // pred_fallthru
        _
    $region32: #{clip_with_lora_forward.8} parent=5 // pred_fallthru
      _
    %p788 = scmp.le.s32.totalorder 2, %s9
    // Predicated region
    $region37: #{clip_with_lora_forward.8} parent=5 // pred_check
      %p789 = pneg %p788
    $region38: #{clip_with_lora_forward.8} parent=5 // pred_check_branch
      %791 = sbr.rel (%p789) target = $region40
    $region39: #{clip_with_lora_forward.8} parent=5 // pred_region
      %s792 = ssub.s32 %s9, 2
      // Predicated region
      $region41: #{clip_with_lora_forward.8} parent=39 // pred_check
        %p793 = pneg %p141
      $region42: #{clip_with_lora_forward.8} parent=39 // pred_check_branch
        %795 = sbr.rel (%p793) target = $region44
      $region43: #{clip_with_lora_forward.8} parent=39 // pred_region
        %p796 = scmp.lt.s32.totalorder %s22, 1
        %s797 = scalar_select %p796, %s22, 1
        %p798 = scmp.lt.s32.totalorder %s23, 0
        %s799 = scalar_select %p798, %s23, 0
        %s800 = smul.addr %s797, 32
        %s801 = sadd.s32 %s799, %s800
        %s802 = smul.addr %s801, 4
        %s803 = scalar_lea.vmem %s3, %s802
      $region44: #{clip_with_lora_forward.8} parent=39 // pred_fallthru
        _
    $region40: #{clip_with_lora_forward.8} parent=5 // pred_fallthru
      _
  $region6: #{clip_with_lora_forward.8} parent=0 // loop_footer
    %s13 = sadd.s32 1, %s9
  $region7: #{clip_with_lora_forward.8} parent=0 // loop_footer_branch
    %8 = sbr.rel target = $region3
  $region8: #{clip_with_lora_forward.8} parent=0 // loop_exit
    _

// kernel: clip_with_lora_forward.9
$region0: #{clip_with_lora_forward.9}
  #allocation0 [shape = 'u32[]', space=smem, size = 0x4, offset = 0x4, fixed_abs, tag = 'smem constant byte address 0x4 - core index']
  #allocation1 [shape = 'u32[144,128]{1,0:T(1,128)}', space=vmem, size = 0x12000, scoped, tag = 'internal scratch']
  %s0 = inlined_call_operand.vmem [shape: bf16[9,128,128], index: 0, kind: input, shape index: {}]
  %s1 = inlined_call_operand.vmem [shape: f32[9,128,8], index: 1, kind: input, shape index: {}]
  %s2 = inlined_call_operand.vmem [shape: f32[8,128], index: 2, kind: input, shape index: {}]
  %s3 = inlined_call_operand.vmem [shape: bf16[9,128,128], index: 3, kind: output, shape index: {}]
  %s4 = sld [smem:[#allocation0]]
  $region45: #{clip_with_lora_forward.9} parent=0
    _
  %s6 = ssub.s32 1, %s4
  %s7 = scalar_select 0, %s6, %s4
  loop: start=0, step=1, limit=11
  $region2: #{clip_with_lora_forward.9} parent=0 // loop_pre_header
    _
  $region3: #{clip_with_lora_forward.9} parent=0 // loop_header
    %s9 = sphi 0, %s13
    %p10 = scmp.ge.s32.totalorder %s9, 11
    %s16 = sphi 0, %s35
    %s17 = sphi 0, %s31
    %s18 = sphi 0, %s27
    %s19 = sphi 0, %s16
    %s20 = sphi 0, %s17
    %s21 = sphi 0, %s18
    %s22 = sphi 0, %s19
    %s23 = sphi 0, %s20
    %s24 = sphi 0, %s21
    %s42 = sphi 0, %s44
    %s45 = sphi 0, %s42
    %s46 = sphi 0, %s45
    %s62 = sphi 0, %s46
    %s70 = sphi 0, %s72
    %s73 = sphi 0, %s70
    %s74 = sphi 0, %s73
    %s90 = sphi 0, %s74
    %s96 = sphi 0, %s98
    %s99 = sphi 0, %s96
    %s100 = sphi 0, %s99
    %s116 = sphi 0, %s100
    %s126 = sphi 0, %s128
    %s129 = sphi 0, %s126
    %s130 = sphi 0, %s129
    %s146 = sphi 0, %s130
  $region4: #{clip_with_lora_forward.9} parent=0 // loop_header_branch
    %12 = sbr.rel (%p10) target = $region8
  $region5: #{clip_with_lora_forward.9} parent=0 // loop_body
    %s14 = ssub.s32 %s9, 1
    %s15 = ssub.s32 %s9, 2
    %s25 = sadd.s32 1, %s18
    %p26 = scmp.ge.s32.totalorder %s25, 1
    %s27 = scalar_select %p26, 0, %s25
    %s28 = sadd.s32 1, %s17
    %s29 = scalar_select %p26, %s28, %s17
    %p30 = scmp.ge.s32.totalorder %s29, 1
    %s31 = scalar_select %p30, 0, %s29
    %s32 = sadd.s32 1, %s16
    %s33 = scalar_select %p30, %s32, %s16
    %p34 = scmp.ge.s32.totalorder %s33, 9
    %s35 = scalar_select %p34, 0, %s33
    %s36 = ssub.s32 %s16, %s35
    %s37 = ssub.s32 %s17, %s31
    %s38 = sor.u32 %s36, %s37
    %s39 = ssub.s32 %s18, %s27
    %s40 = sor.u32 %s38, %s39
    %p41 = scmp.eq.s32.totalorder %s40, 0
    %s43 = sadd.s32 %s42, 1
    %s44 = scalar_select %p41, %s42, %s43
    %p47 = pneg %p41
    %p48 = scmp.eq.s32.totalorder %s9, 8
    %p49 = por %p47, %p48
    %p50 = scmp.ne.s32.totalorder %s42, %s45
    %p51 = scmp.eq.s32.totalorder %s9, 0
    %p52 = por %p50, %p51
    %p53 = scmp.ne.s32.totalorder %s42, %s45
    %p54 = scmp.eq.s32.totalorder %s14, 8
    %p55 = por %p53, %p54
    %p56 = scmp.ne.s32.totalorder %s45, %s46
    %p57 = scmp.eq.s32.totalorder %s14, 0
    %p58 = por %p56, %p57
    %p59 = scmp.ne.s32.totalorder %s45, %s46
    %p60 = scmp.eq.s32.totalorder %s15, 8
    %p61 = por %p59, %p60
    %p63 = scmp.ne.s32.totalorder %s46, %s62
    %p64 = scmp.eq.s32.totalorder %s15, 0
    %p65 = por %p63, %p64
    %s66 = ssub.s32 %s16, %s35
    %s67 = ssub.s32 %s17, %s31
    %s68 = sor.u32 %s66, %s67
    %p69 = scmp.eq.s32.totalorder %s68, 0
    %s71 = sadd.s32 %s70, 1
    %s72 = scalar_select %p69, %s70, %s71
    %p75 = pneg %p69
    %p76 = scmp.eq.s32.totalorder %s9, 8
    %p77 = por %p75, %p76
    %p78 = scmp.ne.s32.totalorder %s70, %s73
    %p79 = scmp.eq.s32.totalorder %s9, 0
    %p80 = por %p78, %p79
    %p81 = scmp.ne.s32.totalorder %s70, %s73
    %p82 = scmp.eq.s32.totalorder %s14, 8
    %p83 = por %p81, %p82
    %p84 = scmp.ne.s32.totalorder %s73, %s74
    %p85 = scmp.eq.s32.totalorder %s14, 0
    %p86 = por %p84, %p85
    %p87 = scmp.ne.s32.totalorder %s73, %s74
    %p88 = scmp.eq.s32.totalorder %s15, 8
    %p89 = por %p87, %p88
    %p91 = scmp.ne.s32.totalorder %s74, %s90
    %p92 = scmp.eq.s32.totalorder %s15, 0
    %p93 = por %p91, %p92
    %s94 = ssub.s32 %s18, %s27
    %p95 = scmp.eq.s32.totalorder %s94, 0
    %s97 = sadd.s32 %s96, 1
    %s98 = scalar_select %p95, %s96, %s97
    %p101 = pneg %p95
    %p102 = scmp.eq.s32.totalorder %s9, 8
    %p103 = por %p101, %p102
    %p104 = scmp.ne.s32.totalorder %s96, %s99
    %p105 = scmp.eq.s32.totalorder %s9, 0
    %p106 = por %p104, %p105
    %p107 = scmp.ne.s32.totalorder %s96, %s99
    %p108 = scmp.eq.s32.totalorder %s14, 8
    %p109 = por %p107, %p108
    %p110 = scmp.ne.s32.totalorder %s99, %s100
    %p111 = scmp.eq.s32.totalorder %s14, 0
    %p112 = por %p110, %p111
    %p113 = scmp.ne.s32.totalorder %s99, %s100
    %p114 = scmp.eq.s32.totalorder %s15, 8
    %p115 = por %p113, %p114
    %p117 = scmp.ne.s32.totalorder %s100, %s116
    %p118 = scmp.eq.s32.totalorder %s15, 0
    %p119 = por %p117, %p118
    %s120 = ssub.s32 %s16, %s35
    %s121 = ssub.s32 %s17, %s31
    %s122 = sor.u32 %s120, %s121
    %s123 = ssub.s32 %s18, %s27
    %s124 = sor.u32 %s122, %s123
    %p125 = scmp.eq.s32.totalorder %s124, 0
    %s127 = sadd.s32 %s126, 1
    %s128 = scalar_select %p125, %s126, %s127
    %p131 = pneg %p125
    %p132 = scmp.eq.s32.totalorder %s9, 8
    %p133 = por %p131, %p132
    %p134 = scmp.ne.s32.totalorder %s126, %s129
    %p135 = scmp.eq.s32.totalorder %s9, 0
    %p136 = por %p134, %p135
    %p137 = scmp.ne.s32.totalorder %s126, %s129
    %p138 = scmp.eq.s32.totalorder %s14, 8
    %p139 = por %p137, %p138
    %p140 = scmp.ne.s32.totalorder %s129, %s130
    %p141 = scmp.eq.s32.totalorder %s14, 0
    %p142 = por %p140, %p141
    %p143 = scmp.ne.s32.totalorder %s129, %s130
    %p144 = scmp.eq.s32.totalorder %s15, 8
    %p145 = por %p143, %p144
    %p147 = scmp.ne.s32.totalorder %s130, %s146
    %p148 = scmp.eq.s32.totalorder %s15, 0
    %p149 = por %p147, %p148
    %p150 = scmp.le.s32.totalorder 1, %s9
    %p151 = scmp.lt.s32.totalorder %s9, 10
    %p152 = pnand %p150, %p151
    %p153 = pneg %p152
    // Predicated region
    $region9: #{clip_with_lora_forward.9} parent=5 // pred_check
      _
    $region10: #{clip_with_lora_forward.9} parent=5 // pred_check_branch
      %155 = sbr.rel (%p152) target = $region12
    $region11: #{clip_with_lora_forward.9} parent=5 // pred_region
      %s156 = ssub.s32 %s9, 1
      // Predicated region
      $region13: #{clip_with_lora_forward.9} parent=11 // pred_check
        %p157 = pneg %p112
      $region14: #{clip_with_lora_forward.9} parent=11 // pred_check_branch
        %159 = sbr.rel (%p157) target = $region16
      $region15: #{clip_with_lora_forward.9} parent=11 // pred_region
        %p160 = scmp.lt.s32.totalorder %s21, 0
        %s161 = scalar_select %p160, %s21, 0
        %s162 = smul.addr %s161, 8
        %s163 = scalar_lea.vmem %s2, %s162
      $region16: #{clip_with_lora_forward.9} parent=11 // pred_fallthru
        _
    $region12: #{clip_with_lora_forward.9} parent=5 // pred_fallthru
      _
    %p164 = scmp.lt.s32.totalorder %s9, 9
    // Predicated region
    $region17: #{clip_with_lora_forward.9} parent=5 // pred_check
      %p165 = pneg %p164
    $region18: #{clip_with_lora_forward.9} parent=5 // pred_check_branch
      %167 = sbr.rel (%p165) target = $region20
    $region19: #{clip_with_lora_forward.9} parent=5 // pred_region
      // Predicated region
      $region21: #{clip_with_lora_forward.9} parent=19 // pred_check
        %p168 = pneg %p52
      $region22: #{clip_with_lora_forward.9} parent=19 // pred_check_branch
        %170 = sbr.rel (%p168) target = $region24
      $region23: #{clip_with_lora_forward.9} parent=19 // pred_region
        %s171 = smul.u32 16, %s17
        %p172 = scmp.lt.s32.totalorder %s16, 8
        %s173 = scalar_select %p172, %s16, 8
        %p174 = scmp.lt.s32.totalorder %s171, 15
        %s175 = scalar_select %p174, %s171, 15
        %p176 = scmp.lt.s32.totalorder %s18, 0
        %s177 = scalar_select %p176, %s18, 0
        %s178 = sadd.s32 %s177, %s175
        %s179 = smul.addr %s173, 16
        %s180 = sadd.s32 %s178, %s179
        %s181 = smul.addr %s180, 4
        %s182 = scalar_lea.vmem %s0, %s181
        %s183 = smul.u32 16, %s17
      $region24: #{clip_with_lora_forward.9} parent=19 // pred_fallthru
        _
      // Predicated region
      $region25: #{clip_with_lora_forward.9} parent=19 // pred_check
        %p184 = pneg %p80
      $region26: #{clip_with_lora_forward.9} parent=19 // pred_check_branch
        %186 = sbr.rel (%p184) target = $region28
      $region27: #{clip_with_lora_forward.9} parent=19 // pred_region
        %s187 = smul.u32 16, %s17
        %p188 = scmp.lt.s32.totalorder %s16, 8
        %s189 = scalar_select %p188, %s16, 8
        %p190 = scmp.lt.s32.totalorder %s187, 15
        %s191 = scalar_select %p190, %s187, 15
        %s192 = smul.addr %s189, 16
        %s193 = sadd.s32 %s191, %s192
        %s194 = smul.addr %s193, 8
        %s195 = scalar_lea.vmem %s1, %s194
        %s196 = smul.u32 16, %s17
      $region28: #{clip_with_lora_forward.9} parent=19 // pred_fallthru
        _
    $region20: #{clip_with_lora_forward.9} parent=5 // pred_fallthru
      _
    %p197 = scmp.le.s32.totalorder 1, %s9
    %p198 = scmp.lt.s32.totalorder %s9, 10
    %p199 = pnand %p197, %p198
    %p200 = pneg %p199
    // Predicated region
    $region29: #{clip_with_lora_forward.9} parent=5 // pred_check
      _
    $region30: #{clip_with_lora_forward.9} parent=5 // pred_check_branch
      %202 = sbr.rel (%p199) target = $region32
    $region31: #{clip_with_lora_forward.9} parent=5 // pred_region
      %s203 = ssub.s32 %s9, 1
      %s204 = smul.u32 16, %s20
      %p205 = scmp.lt.s32.totalorder %s19, 8
      %s206 = scalar_select %p205, %s19, 8
      %p207 = scmp.lt.s32.totalorder %s204, 15
      %s208 = scalar_select %p207, %s204, 15
      %p209 = scmp.lt.s32.totalorder %s21, 0
      %s210 = scalar_select %p209, %s21, 0
      %s211 = sadd.s32 %s210, %s208
      %s212 = smul.addr %s206, 16
      %s213 = sadd.s32 %s211, %s212
      %s214 = smul.addr %s213, 4
      %s215 = scalar_lea.vmem %s0, %s214
      %p216 = pneg %p58
      %p217 = pneg %p55
      %s218 = smul.u32 16, %s20
      %p219 = scmp.lt.s32.totalorder %s19, 8
      %s220 = scalar_select %p219, %s19, 8
      %p221 = scmp.lt.s32.totalorder %s218, 15
      %s222 = scalar_select %p221, %s218, 15
      %s223 = smul.addr %s220, 16
      %s224 = sadd.s32 %s222, %s223
      %s225 = smul.addr %s224, 8
      %s226 = scalar_lea.vmem %s1, %s225
      %p227 = pneg %p86
      %p228 = pneg %p83
      %p229 = scmp.lt.s32.totalorder %s21, 0
      %s230 = scalar_select %p229, %s21, 0
      %s231 = smul.addr %s230, 8
      %s232 = scalar_lea.vmem %s2, %s231
      %p233 = pneg %p112
      %p234 = pneg %p109
      %p235 = pneg %p142
      %p236 = pneg %p139
      %s237 = smul.u32 16, %s20
      %p238 = scmp.lt.s32.totalorder %s19, 8
      %s239 = scalar_select %p238, %s19, 8
      %p240 = scmp.lt.s32.totalorder %s237, 15
      %s241 = scalar_select %p240, %s237, 15
      %p242 = scmp.lt.s32.totalorder %s21, 0
      %s243 = scalar_select %p242, %s21, 0
      %s244 = sadd.s32 %s243, %s241
      %s245 = smul.addr %s239, 16
      %s246 = sadd.s32 %s244, %s245
      %s247 = smul.addr %s246, 4
      %s248 = scalar_lea.vmem %s3, %s247
      %s249 = smul.u32 16, %s20
      %p250 = scmp.lt.s32.totalorder %s19, 8
      %s251 = scalar_select %p250, %s19, 8
      %p252 = scmp.lt.s32.totalorder %s249, 15
      %s253 = scalar_select %p252, %s249, 15
      %p254 = scmp.lt.s32.totalorder %s21, 0
      %s255 = scalar_select %p254, %s21, 0
      %s256 = sadd.s32 %s255, %s253
      %s257 = smul.addr %s251, 16
      %s258 = sadd.s32 %s256, %s257
      %s259 = smul.addr %s258, 4
      %s260 = scalar_lea.vmem %s0, %s259
      %s261 = smul.u32 16, %s20
      %s262 = smul.u32 16, %s20
      %p263 = scmp.lt.s32.totalorder %s19, 8
      %s264 = scalar_select %p263, %s19, 8
      %p265 = scmp.lt.s32.totalorder %s262, 15
      %s266 = scalar_select %p265, %s262, 15
      %s267 = smul.addr %s264, 16
      %s268 = sadd.s32 %s266, %s267
      %s269 = smul.addr %s268, 8
      %s270 = scalar_lea.vmem %s1, %s269
      %s271 = smul.u32 16, %s20
      %p272 = scmp.lt.s32.totalorder %s21, 0
      %s273 = scalar_select %p272, %s21, 0
      %s274 = smul.addr %s273, 8
      %s275 = scalar_lea.vmem %s2, %s274
      %s276 = smul.u32 16, %s20
      %p277 = scmp.lt.s32.totalorder %s19, 8
      %s278 = scalar_select %p277, %s19, 8
      %p279 = scmp.lt.s32.totalorder %s276, 15
      %s280 = scalar_select %p279, %s276, 15
      %p281 = scmp.lt.s32.totalorder %s21, 0
      %s282 = scalar_select %p281, %s21, 0
      %s283 = sadd.s32 %s282, %s280
      %s284 = smul.addr %s278, 16
      %s285 = sadd.s32 %s283, %s284
      %s286 = smul.addr %s285, 4
      %s287 = scalar_lea.vmem %s3, %s286
      %s288 = smul.u32 16, %s20
      %v289 = vld [vmem:[%s270] sm:$0xff]
      %v290 = vld [vmem:[%s270 + $0x8] sm:$0xff]
      %v291 = vld [vmem:[%s270 + $0x10] sm:$0xff]
      %v292 = vld [vmem:[%s270 + $0x18] sm:$0xff]
      %v293 = vld [vmem:[%s270 + $0x20] sm:$0xff]
      %v294 = vld [vmem:[%s270 + $0x28] sm:$0xff]
      %v295 = vld [vmem:[%s270 + $0x30] sm:$0xff]
      %v296 = vld [vmem:[%s270 + $0x38] sm:$0xff]
      %v297 = vld [vmem:[%s270 + $0x40] sm:$0xff]
      %v298 = vld [vmem:[%s270 + $0x48] sm:$0xff]
      %v299 = vld [vmem:[%s270 + $0x50] sm:$0xff]
      %v300 = vld [vmem:[%s270 + $0x58] sm:$0xff]
      %v301 = vld [vmem:[%s270 + $0x60] sm:$0xff]
      %v302 = vld [vmem:[%s270 + $0x68] sm:$0xff]
      %v303 = vld [vmem:[%s270 + $0x70] sm:$0xff]
      %v304 = vld [vmem:[%s270 + $0x78] sm:$0xff]
      %v305 = vld [vmem:[%s275] sm:$0xff]
      %vm306 = vcmask 64512
      %v308 = vsel %vm306, %v289, 0
      %v311 = vsel %vm306, %v290, 0
      %v314 = vsel %vm306, %v291, 0
      %v317 = vsel %vm306, %v292, 0
      %v320 = vsel %vm306, %v293, 0
      %v323 = vsel %vm306, %v294, 0
      %v326 = vsel %vm306, %v295, 0
      %v329 = vsel %vm306, %v296, 0
      %v332 = vsel %vm306, %v297, 0
      %v335 = vsel %vm306, %v298, 0
      %v338 = vsel %vm306, %v299, 0
      %v341 = vsel %vm306, %v300, 0
      %v344 = vsel %vm306, %v301, 0
      %v347 = vsel %vm306, %v302, 0
      %v350 = vsel %vm306, %v303, 0
      %v353 = vsel %vm306, %v304, 0
      %355 = vmatprep.subr.mxu0 0.0
      %356 = vmatpush1.msra.mxu0 %v305
      %357 = vmatprep.subr.mxu0 0.0
      %358 = vmatpush1.msra.mxu0 0.0
      %359 = vmatprep.subr.mxu0 0.0
      %360 = vmatpush1.msra.mxu0 0.0
      %361 = vmatprep.subr.mxu0 0.0
      %362 = vmatpush1.msra.mxu0 0.0
      %363 = vmatprep.subr.mxu0 0.0
      %364 = vmatpush1.msra.mxu0 0.0
      %365 = vmatprep.subr.mxu0 0.0
      %366 = vmatpush1.msra.mxu0 0.0
      %367 = vmatprep.subr.mxu0 0.0
      %368 = vmatpush1.msra.mxu0 0.0
      %369 = vmatprep.subr.mxu0 0.0
      %370 = vmatpush1.msra.mxu0 0.0
      %371 = vmatprep.subr.mxu0 0.0
      %372 = vmatpush1.msra.mxu0 0.0
      %373 = vmatprep.subr.mxu0 0.0
      %374 = vmatpush1.msra.mxu0 0.0
      %375 = vmatprep.subr.mxu0 0.0
      %376 = vmatpush1.msra.mxu0 0.0
      %377 = vmatprep.subr.mxu0 0.0
      %378 = vmatpush1.msra.mxu0 0.0
      %379 = vmatprep.subr.mxu0 0.0
      %380 = vmatpush1.msra.mxu0 0.0
      %381 = vmatprep.subr.mxu0 0.0
      %382 = vmatpush1.msra.mxu0 0.0
      %383 = vmatprep.subr.mxu0 0.0
      %384 = vmatpush1.msra.mxu0 0.0
      %385 = vmatprep.subr.mxu0 0.0
      %386 = vmatpush1.msra.mxu0 0.0
      %387 = vmatprep.subr.mxu0 0.0
      %388 = vmatpush1.msra.mxu0 0.0
      %389 = vmatprep.subr.mxu0 0.0
      %390 = vmatpush1.msra.mxu0 0.0
      %391 = vmatprep.subr.mxu0 0.0
      %392 = vmatpush1.msra.mxu0 0.0
      %393 = vmatprep.subr.mxu0 0.0
      %394 = vmatpush1.msra.mxu0 0.0
      %395 = vmatprep.subr.mxu0 0.0
      %396 = vmatpush1.msra.mxu0 0.0
      %397 = vmatprep.subr.mxu0 0.0
      %398 = vmatpush1.msra.mxu0 0.0
      %399 = vmatprep.subr.mxu0 0.0
      %400 = vmatpush1.msra.mxu0 0.0
      %401 = vmatprep.subr.mxu0 0.0
      %402 = vmatpush1.msra.mxu0 0.0
      %403 = vmatprep.subr.mxu0 0.0
      %404 = vmatpush1.msra.mxu0 0.0
      %405 = vmatprep.subr.mxu0 0.0
      %406 = vmatpush1.msra.mxu0 0.0
      %407 = vmatprep.subr.mxu0 0.0
      %408 = vmatpush1.msra.mxu0 0.0
      %409 = vmatprep.subr.mxu0 0.0
      %410 = vmatpush1.msra.mxu0 0.0
      %411 = vmatprep.subr.mxu0 0.0
      %412 = vmatpush1.msra.mxu0 0.0
      %413 = vmatprep.subr.mxu0 0.0
      %414 = vmatpush1.msra.mxu0 0.0
      %415 = vmatprep.subr.mxu0 0.0
      %416 = vmatpush1.msra.mxu0 0.0
      %417 = vmatprep.subr.mxu0 0.0
      %418 = vmatpush1.msra.mxu0 0.0
      %419 = vmatprep.mubr.f32.mxu0 0.0
      %420 = vmatmul.mubr.f32.gmra.mrb[0].mxu0 %v308
      %v421 = vpop.f32.mrb[0].mxu0
      %v422 = vadd.f32 0.0, %v421
      %v423 = vpop.f32.mrb[0].mxu0
      %424 = vmatprep.mubr.f32.mxu0 0.0
      %425 = vmatmul.mubr.f32.gmra.mrb[0].mxu0 %v311
      %v426 = vpop.f32.mrb[0].mxu0
      %v427 = vadd.f32 0.0, %v426
      %v428 = vpop.f32.mrb[0].mxu0
      %429 = vmatprep.mubr.f32.mxu0 0.0
      %430 = vmatmul.mubr.f32.gmra.mrb[0].mxu0 %v314
      %v431 = vpop.f32.mrb[0].mxu0
      %v432 = vadd.f32 0.0, %v431
      %v433 = vpop.f32.mrb[0].mxu0
      %434 = vmatprep.mubr.f32.mxu0 0.0
      %435 = vmatmul.mubr.f32.gmra.mrb[0].mxu0 %v317
      %v436 = vpop.f32.mrb[0].mxu0
      %v437 = vadd.f32 0.0, %v436
      %v438 = vpop.f32.mrb[0].mxu0
      %439 = vmatprep.mubr.f32.mxu0 0.0
      %440 = vmatmul.mubr.f32.gmra.mrb[0].mxu0 %v320
      %v441 = vpop.f32.mrb[0].mxu0
      %v442 = vadd.f32 0.0, %v441
      %v443 = vpop.f32.mrb[0].mxu0
      %444 = vmatprep.mubr.f32.mxu0 0.0
      %445 = vmatmul.mubr.f32.gmra.mrb[0].mxu0 %v323
      %v446 = vpop.f32.mrb[0].mxu0
      %v447 = vadd.f32 0.0, %v446
      %v448 = vpop.f32.mrb[0].mxu0
      %449 = vmatprep.mubr.f32.mxu0 0.0
      %450 = vmatmul.mubr.f32.gmra.mrb[0].mxu0 %v326
      %v451 = vpop.f32.mrb[0].mxu0
      %v452 = vadd.f32 0.0, %v451
      %v453 = vpop.f32.mrb[0].mxu0
      %454 = vmatprep.mubr.f32.mxu0 0.0
      %455 = vmatmul.mubr.f32.gmra.mrb[0].mxu0 %v329
      %v456 = vpop.f32.mrb[0].mxu0
      %v457 = vadd.f32 0.0, %v456
      %v458 = vpop.f32.mrb[0].mxu0
      %459 = vmatprep.mubr.f32.mxu0 0.0
      %460 = vmatmul.mubr.f32.gmra.mrb[0].mxu0 %v332
      %v461 = vpop.f32.mrb[0].mxu0
      %v462 = vadd.f32 0.0, %v461
      %v463 = vpop.f32.mrb[0].mxu0
      %464 = vmatprep.mubr.f32.mxu0 0.0
      %465 = vmatmul.mubr.f32.gmra.mrb[0].mxu0 %v335
      %v466 = vpop.f32.mrb[0].mxu0
      %v467 = vadd.f32 0.0, %v466
      %v468 = vpop.f32.mrb[0].mxu0
      %469 = vmatprep.mubr.f32.mxu0 0.0
      %470 = vmatmul.mubr.f32.gmra.mrb[0].mxu0 %v338
      %v471 = vpop.f32.mrb[0].mxu0
      %v472 = vadd.f32 0.0, %v471
      %v473 = vpop.f32.mrb[0].mxu0
      %474 = vmatprep.mubr.f32.mxu0 0.0
      %475 = vmatmul.mubr.f32.gmra.mrb[0].mxu0 %v341
      %v476 = vpop.f32.mrb[0].mxu0
      %v477 = vadd.f32 0.0, %v476
      %v478 = vpop.f32.mrb[0].mxu0
      %479 = vmatprep.mubr.f32.mxu0 0.0
      %480 = vmatmul.mubr.f32.gmra.mrb[0].mxu0 %v344
      %v481 = vpop.f32.mrb[0].mxu0
      %v482 = vadd.f32 0.0, %v481
      %v483 = vpop.f32.mrb[0].mxu0
      %484 = vmatprep.mubr.f32.mxu0 0.0
      %485 = vmatmul.mubr.f32.gmra.mrb[0].mxu0 %v347
      %v486 = vpop.f32.mrb[0].mxu0
      %v487 = vadd.f32 0.0, %v486
      %v488 = vpop.f32.mrb[0].mxu0
      %489 = vmatprep.mubr.f32.mxu0 0.0
      %490 = vmatmul.mubr.f32.gmra.mrb[0].mxu0 %v350
      %v491 = vpop.f32.mrb[0].mxu0
      %v492 = vadd.f32 0.0, %v491
      %v493 = vpop.f32.mrb[0].mxu0
      %494 = vmatprep.mubr.f32.mxu0 0.0
      %495 = vmatmul.mubr.f32.gmra.mrb[0].mxu0 %v353
      %v496 = vpop.f32.mrb[0].mxu0
      %v497 = vadd.f32 0.0, %v496
      %v498 = vpop.f32.mrb[0].mxu0
      %499 = vdwg.mxu0
      %v500 = vld [vmem:[%s260] sm:$0xf]
      %v501 = vld [vmem:[%s260 + $0x4] sm:$0xf]
      %v502 = vld [vmem:[%s260 + $0x8] sm:$0xf]
      %v503 = vld [vmem:[%s260 + $0xc] sm:$0xf]
      %v504 = vld [vmem:[%s260 + $0x10] sm:$0xf]
      %v505 = vld [vmem:[%s260 + $0x14] sm:$0xf]
      %v506 = vld [vmem:[%s260 + $0x18] sm:$0xf]
      %v507 = vld [vmem:[%s260 + $0x1c] sm:$0xf]
      %v508 = vld [vmem:[%s260 + $0x20] sm:$0xf]
      %v509 = vld [vmem:[%s260 + $0x24] sm:$0xf]
      %v510 = vld [vmem:[%s260 + $0x28] sm:$0xf]
      %v511 = vld [vmem:[%s260 + $0x2c] sm:$0xf]
      %v512 = vld [vmem:[%s260 + $0x30] sm:$0xf]
      %v513 = vld [vmem:[%s260 + $0x34] sm:$0xf]
      %v514 = vld [vmem:[%s260 + $0x38] sm:$0xf]
      %v515 = vld [vmem:[%s260 + $0x3c] sm:$0xf]
      %v516 = vunpack.c.l.bf16 %v500
      %v517 = vunpack.c.l.bf16 %v501
      %v518 = vunpack.c.l.bf16 %v502
      %v519 = vunpack.c.l.bf16 %v503
      %v520 = vunpack.c.l.bf16 %v504
      %v521 = vunpack.c.l.bf16 %v505
      %v522 = vunpack.c.l.bf16 %v506
      %v523 = vunpack.c.l.bf16 %v507
      %v524 = vunpack.c.l.bf16 %v508
      %v525 = vunpack.c.l.bf16 %v509
      %v526 = vunpack.c.l.bf16 %v510
      %v527 = vunpack.c.l.bf16 %v511
      %v528 = vunpack.c.l.bf16 %v512
      %v529 = vunpack.c.l.bf16 %v513
      %v530 = vunpack.c.l.bf16 %v514
      %v531 = vunpack.c.l.bf16 %v515
      %v532 = vadd.f32 %v516, %v422
      %v533 = vadd.f32 %v517, %v427
      %v534 = vadd.f32 %v518, %v432
      %v535 = vadd.f32 %v519, %v437
      %v536 = vadd.f32 %v520, %v442
      %v537 = vadd.f32 %v521, %v447
      %v538 = vadd.f32 %v522, %v452
      %v539 = vadd.f32 %v523, %v457
      %v540 = vadd.f32 %v524, %v462
      %v541 = vadd.f32 %v525, %v467
      %v542 = vadd.f32 %v526, %v472
      %v543 = vadd.f32 %v527, %v477
      %v544 = vadd.f32 %v528, %v482
      %v545 = vadd.f32 %v529, %v487
      %v546 = vadd.f32 %v530, %v492
      %v547 = vadd.f32 %v531, %v497
      %v548 = vpack.c.bf16 %v533, %v532
      %v549 = vpack.c.bf16 %v535, %v534
      %v550 = vpack.c.bf16 %v537, %v536
      %v551 = vpack.c.bf16 %v539, %v538
      %v552 = vpack.c.bf16 %v541, %v540
      %v553 = vpack.c.bf16 %v543, %v542
      %v554 = vpack.c.bf16 %v545, %v544
      %v555 = vpack.c.bf16 %v547, %v546
      %v564 = vunpack.c.l.b16 %v548
      %v565 = vunpack.c.h.b16 %v548
      %v566 = vunpack.c.l.b16 %v549
      %v567 = vunpack.c.h.b16 %v549
      %v568 = vunpack.c.l.b16 %v550
      %v569 = vunpack.c.h.b16 %v550
      %v570 = vunpack.c.l.b16 %v551
      %v571 = vunpack.c.h.b16 %v551
      %v572 = vunpack.c.l.b16 %v552
      %v573 = vunpack.c.h.b16 %v552
      %v574 = vunpack.c.l.b16 %v553
      %v575 = vunpack.c.h.b16 %v553
      %v576 = vunpack.c.l.b16 %v554
      %v577 = vunpack.c.h.b16 %v554
      %v578 = vunpack.c.l.b16 %v555
      %v579 = vunpack.c.h.b16 %v555
      %v580 = vpack.c.b16 %v564, %v564
      %v581 = vpack.c.b16 %v565, %v565
      %v582 = vpack.c.b16 %v566, %v566
      %v583 = vpack.c.b16 %v567, %v567
      %v584 = vpack.c.b16 %v568, %v568
      %v585 = vpack.c.b16 %v569, %v569
      %v586 = vpack.c.b16 %v570, %v570
      %v587 = vpack.c.b16 %v571, %v571
      %v588 = vpack.c.b16 %v572, %v572
      %v589 = vpack.c.b16 %v573, %v573
      %v590 = vpack.c.b16 %v574, %v574
      %v591 = vpack.c.b16 %v575, %v575
      %v592 = vpack.c.b16 %v576, %v576
      %v593 = vpack.c.b16 %v577, %v577
      %v594 = vpack.c.b16 %v578, %v578
      %v595 = vpack.c.b16 %v579, %v579
      %612 = vst [vmem:[%s287] sm:$0xf] %v580
      %613 = vst [vmem:[%s287 + $0x4] sm:$0xf] %v581
      %614 = vst [vmem:[%s287 + $0x8] sm:$0xf] %v582
      %615 = vst [vmem:[%s287 + $0xc] sm:$0xf] %v583
      %616 = vst [vmem:[%s287 + $0x10] sm:$0xf] %v584
      %617 = vst [vmem:[%s287 + $0x14] sm:$0xf] %v585
      %618 = vst [vmem:[%s287 + $0x18] sm:$0xf] %v586
      %619 = vst [vmem:[%s287 + $0x1c] sm:$0xf] %v587
      %620 = vst [vmem:[%s287 + $0x20] sm:$0xf] %v588
      %621 = vst [vmem:[%s287 + $0x24] sm:$0xf] %v589
      %622 = vst [vmem:[%s287 + $0x28] sm:$0xf] %v590
      %623 = vst [vmem:[%s287 + $0x2c] sm:$0xf] %v591
      %624 = vst [vmem:[%s287 + $0x30] sm:$0xf] %v592
      %625 = vst [vmem:[%s287 + $0x34] sm:$0xf] %v593
      %626 = vst [vmem:[%s287 + $0x38] sm:$0xf] %v594
      %627 = vst [vmem:[%s287 + $0x3c] sm:$0xf] %v595
      %s628 = smul.u32 16, %s20
      %p629 = scmp.lt.s32.totalorder %s19, 8
      %s630 = scalar_select %p629, %s19, 8
      %p631 = scmp.lt.s32.totalorder %s628, 15
      %s632 = scalar_select %p631, %s628, 15
      %p633 = scmp.lt.s32.totalorder %s21, 0
      %s634 = scalar_select %p633, %s21, 0
      %s635 = sadd.s32 %s634, %s632
      %s636 = smul.addr %s630, 16
      %s637 = sadd.s32 %s635, %s636
      %s638 = smul.addr %s637, 4
      %s639 = scalar_lea.vmem %s3, %s638
      // Predicated region
      $region33: #{clip_with_lora_forward.9} parent=31 // pred_check
        %p640 = pneg %p139
      $region34: #{clip_with_lora_forward.9} parent=31 // pred_check_branch
        %642 = sbr.rel (%p640) target = $region36
      $region35: #{clip_with_lora_forward.9} parent=31 // pred_region
        %s643 = smul.u32 16, %s20
      $region36: #{clip_with_lora_forward.9} parent=31 // pred_fallthru
        _
    $region32: #{clip_with_lora_forward.9} parent=5 // pred_fallthru
      _
    %p644 = scmp.le.s32.totalorder 2, %s9
    // Predicated region
    $region37: #{clip_with_lora_forward.9} parent=5 // pred_check
      %p645 = pneg %p644
    $region38: #{clip_with_lora_forward.9} parent=5 // pred_check_branch
      %647 = sbr.rel (%p645) target = $region40
    $region39: #{clip_with_lora_forward.9} parent=5 // pred_region
      %s648 = ssub.s32 %s9, 2
      // Predicated region
      $region41: #{clip_with_lora_forward.9} parent=39 // pred_check
        %p649 = pneg %p145
      $region42: #{clip_with_lora_forward.9} parent=39 // pred_check_branch
        %651 = sbr.rel (%p649) target = $region44
      $region43: #{clip_with_lora_forward.9} parent=39 // pred_region
        %s652 = smul.u32 16, %s23
        %p653 = scmp.lt.s32.totalorder %s22, 8
        %s654 = scalar_select %p653, %s22, 8
        %p655 = scmp.lt.s32.totalorder %s652, 15
        %s656 = scalar_select %p655, %s652, 15
        %p657 = scmp.lt.s32.totalorder %s24, 0
        %s658 = scalar_select %p657, %s24, 0
        %s659 = sadd.s32 %s658, %s656
        %s660 = smul.addr %s654, 16
        %s661 = sadd.s32 %s659, %s660
        %s662 = smul.addr %s661, 4
        %s663 = scalar_lea.vmem %s3, %s662
      $region44: #{clip_with_lora_forward.9} parent=39 // pred_fallthru
        _
    $region40: #{clip_with_lora_forward.9} parent=5 // pred_fallthru
      _
  $region6: #{clip_with_lora_forward.9} parent=0 // loop_footer
    %s13 = sadd.s32 1, %s9
  $region7: #{clip_with_lora_forward.9} parent=0 // loop_footer_branch
    %8 = sbr.rel target = $region3
  $region8: #{clip_with_lora_forward.9} parent=0 // loop_exit
    _

// kernel: clip_with_lora_forward.13
$region0: #{clip_with_lora_forward.13}
  #allocation0 [shape = 'u32[]', space=smem, size = 0x4, offset = 0x4, fixed_abs, tag = 'smem constant byte address 0x4 - core index']
  #allocation1 [shape = 'u32[144,128]{1,0:T(1,128)}', space=vmem, size = 0x12000, scoped, tag = 'internal scratch']
  #allocation2 [shape = 'f32[8,128]{1,0:T(8,128)}', space=vmem, size = 0x1000, scoped, tag = 'scratch operand']
  %s0 = inlined_call_operand.vmem [shape: bf16[8,2048], index: 0, kind: input, shape index: {}]
  %s1 = inlined_call_operand.vmem [shape: bf16[2048,128], index: 1, kind: input, shape index: {}]
  %s2 = inlined_call_operand.vmem [shape: f32[1,128], index: 2, kind: input, shape index: {}]
  %s3 = inlined_call_operand.vmem [shape: bf16[128,128], index: 3, kind: input, shape index: {}]
  %s4 = inlined_call_operand.vmem [shape: f32[1,128], index: 4, kind: input, shape index: {}]
  %s5 = inlined_call_operand.vmem [shape: f32[8,128], index: 5, kind: output, shape index: {}]
  %s6 = sld [smem:[#allocation0]]
  $region65: #{clip_with_lora_forward.13} parent=0
    _
  %s8 = ssub.s32 1, %s6
  %s9 = scalar_select 0, %s8, %s6
  loop: start=0, step=1, limit=6
  $region2: #{clip_with_lora_forward.13} parent=0 // loop_pre_header
    _
  $region3: #{clip_with_lora_forward.13} parent=0 // loop_header
    %s11 = sphi 0, %s15
    %p12 = scmp.ge.s32.totalorder %s11, 6
    %s18 = sphi 0, %s30
    %s19 = sphi 0, %s26
    %s20 = sphi 0, %s18
    %s21 = sphi 0, %s19
    %s22 = sphi 0, %s20
    %s23 = sphi 0, %s21
    %s35 = sphi 0, %s37
    %s38 = sphi 0, %s35
    %s39 = sphi 0, %s38
    %s55 = sphi 0, %s39
    %s61 = sphi 0, %s63
    %s64 = sphi 0, %s61
    %s65 = sphi 0, %s64
    %s81 = sphi 0, %s65
    %s85 = sphi 0, %s85
    %s87 = sphi 0, %s85
    %s88 = sphi 0, %s87
    %s102 = sphi 0, %s88
    %s106 = sphi 0, %s106
    %s108 = sphi 0, %s106
    %s109 = sphi 0, %s108
    %s123 = sphi 0, %s109
    %s127 = sphi 0, %s127
    %s129 = sphi 0, %s127
    %s130 = sphi 0, %s129
    %s144 = sphi 0, %s130
    %s150 = sphi 0, %s152
    %s153 = sphi 0, %s150
    %s154 = sphi 0, %s153
    %s170 = sphi 0, %s154
  $region4: #{clip_with_lora_forward.13} parent=0 // loop_header_branch
    %14 = sbr.rel (%p12) target = $region8
  $region5: #{clip_with_lora_forward.13} parent=0 // loop_body
    %s16 = ssub.s32 %s11, 1
    %s17 = ssub.s32 %s11, 2
    %s24 = sadd.s32 1, %s19
    %p25 = scmp.ge.s32.totalorder %s24, 4
    %s26 = scalar_select %p25, 0, %s24
    %s27 = sadd.s32 1, %s18
    %s28 = scalar_select %p25, %s27, %s18
    %p29 = scmp.ge.s32.totalorder %s28, 1
    %s30 = scalar_select %p29, 0, %s28
    %s31 = ssub.s32 %s18, %s30
    %s32 = ssub.s32 %s19, %s26
    %s33 = sor.u32 %s31, %s32
    %p34 = scmp.eq.s32.totalorder %s33, 0
    %s36 = sadd.s32 %s35, 1
    %s37 = scalar_select %p34, %s35, %s36
    %p40 = pneg %p34
    %p41 = scmp.eq.s32.totalorder %s11, 3
    %p42 = por %p40, %p41
    %p43 = scmp.ne.s32.totalorder %s35, %s38
    %p44 = scmp.eq.s32.totalorder %s11, 0
    %p45 = por %p43, %p44
    %p46 = scmp.ne.s32.totalorder %s35, %s38
    %p47 = scmp.eq.s32.totalorder %s16, 3
    %p48 = por %p46, %p47
    %p49 = scmp.ne.s32.totalorder %s38, %s39
    %p50 = scmp.eq.s32.totalorder %s16, 0
    %p51 = por %p49, %p50
    %p52 = scmp.ne.s32.totalorder %s38, %s39
    %p53 = scmp.eq.s32.totalorder %s17, 3
    %p54 = por %p52, %p53
    %p56 = scmp.ne.s32.totalorder %s39, %s55
    %p57 = scmp.eq.s32.totalorder %s17, 0
    %p58 = por %p56, %p57
    %s59 = ssub.s32 %s19, %s26
    %p60 = scmp.eq.s32.totalorder %s59, 0
    %s62 = sadd.s32 %s61, 1
    %s63 = scalar_select %p60, %s61, %s62
    %p66 = pneg %p60
    %p67 = scmp.eq.s32.totalorder %s11, 3
    %p68 = por %p66, %p67
    %p69 = scmp.ne.s32.totalorder %s61, %s64
    %p70 = scmp.eq.s32.totalorder %s11, 0
    %p71 = por %p69, %p70
    %p72 = scmp.ne.s32.totalorder %s61, %s64
    %p73 = scmp.eq.s32.totalorder %s16, 3
    %p74 = por %p72, %p73
    %p75 = scmp.ne.s32.totalorder %s64, %s65
    %p76 = scmp.eq.s32.totalorder %s16, 0
    %p77 = por %p75, %p76
    %p78 = scmp.ne.s32.totalorder %s64, %s65
    %p79 = scmp.eq.s32.totalorder %s17, 3
    %p80 = por %p78, %p79
    %p82 = scmp.ne.s32.totalorder %s65, %s81
    %p83 = scmp.eq.s32.totalorder %s17, 0
    %p84 = por %p82, %p83
    %s86 = sadd.s32 %s85, 1
    %p89 = scmp.eq.s32.totalorder %s11, 3
    %p90 = scmp.ne.s32.totalorder %s85, %s87
    %p91 = scmp.eq.s32.totalorder %s11, 0
    %p92 = por %p90, %p91
    %p93 = scmp.ne.s32.totalorder %s85, %s87
    %p94 = scmp.eq.s32.totalorder %s16, 3
    %p95 = por %p93, %p94
    %p96 = scmp.ne.s32.totalorder %s87, %s88
    %p97 = scmp.eq.s32.totalorder %s16, 0
    %p98 = por %p96, %p97
    %p99 = scmp.ne.s32.totalorder %s87, %s88
    %p100 = scmp.eq.s32.totalorder %s17, 3
    %p101 = por %p99, %p100
    %p103 = scmp.ne.s32.totalorder %s88, %s102
    %p104 = scmp.eq.s32.totalorder %s17, 0
    %p105 = por %p103, %p104
    %s107 = sadd.s32 %s106, 1
    %p110 = scmp.eq.s32.totalorder %s11, 3
    %p111 = scmp.ne.s32.totalorder %s106, %s108
    %p112 = scmp.eq.s32.totalorder %s11, 0
    %p113 = por %p111, %p112
    %p114 = scmp.ne.s32.totalorder %s106, %s108
    %p115 = scmp.eq.s32.totalorder %s16, 3
    %p116 = por %p114, %p115
    %p117 = scmp.ne.s32.totalorder %s108, %s109
    %p118 = scmp.eq.s32.totalorder %s16, 0
    %p119 = por %p117, %p118
    %p120 = scmp.ne.s32.totalorder %s108, %s109
    %p121 = scmp.eq.s32.totalorder %s17, 3
    %p122 = por %p120, %p121
    %p124 = scmp.ne.s32.totalorder %s109, %s123
    %p125 = scmp.eq.s32.totalorder %s17, 0
    %p126 = por %p124, %p125
    %s128 = sadd.s32 %s127, 1
    %p131 = scmp.eq.s32.totalorder %s11, 3
    %p132 = scmp.ne.s32.totalorder %s127, %s129
    %p133 = scmp.eq.s32.totalorder %s11, 0
    %p134 = por %p132, %p133
    %p135 = scmp.ne.s32.totalorder %s127, %s129
    %p136 = scmp.eq.s32.totalorder %s16, 3
    %p137 = por %p135, %p136
    %p138 = scmp.ne.s32.totalorder %s129, %s130
    %p139 = scmp.eq.s32.totalorder %s16, 0
    %p140 = por %p138, %p139
    %p141 = scmp.ne.s32.totalorder %s129, %s130
    %p142 = scmp.eq.s32.totalorder %s17, 3
    %p143 = por %p141, %p142
    %p145 = scmp.ne.s32.totalorder %s130, %s144
    %p146 = scmp.eq.s32.totalorder %s17, 0
    %p147 = por %p145, %p146
    %s148 = ssub.s32 %s18, %s30
    %p149 = scmp.eq.s32.totalorder %s148, 0
    %s151 = sadd.s32 %s150, 1
    %s152 = scalar_select %p149, %s150, %s151
    %p155 = pneg %p149
    %p156 = scmp.eq.s32.totalorder %s11, 3
    %p157 = por %p155, %p156
    %p158 = scmp.ne.s32.totalorder %s150, %s153
    %p159 = scmp.eq.s32.totalorder %s11, 0
    %p160 = por %p158, %p159
    %p161 = scmp.ne.s32.totalorder %s150, %s153
    %p162 = scmp.eq.s32.totalorder %s16, 3
    %p163 = por %p161, %p162
    %p164 = scmp.ne.s32.totalorder %s153, %s154
    %p165 = scmp.eq.s32.totalorder %s16, 0
    %p166 = por %p164, %p165
    %p167 = scmp.ne.s32.totalorder %s153, %s154
    %p168 = scmp.eq.s32.totalorder %s17, 3
    %p169 = por %p167, %p168
    %p171 = scmp.ne.s32.totalorder %s154, %s170
    %p172 = scmp.eq.s32.totalorder %s17, 0
    %p173 = por %p171, %p172
    %p174 = scmp.le.s32.totalorder 1, %s11
    %p175 = scmp.lt.s32.totalorder %s11, 5
    %p176 = pnand %p174, %p175
    %p177 = pneg %p176
    // Predicated region
    $region9: #{clip_with_lora_forward.13} parent=5 // pred_check
      _
    $region10: #{clip_with_lora_forward.13} parent=5 // pred_check_branch
      %179 = sbr.rel (%p176) target = $region12
    $region11: #{clip_with_lora_forward.13} parent=5 // pred_region
      %s180 = ssub.s32 %s11, 1
      // Predicated region
      $region13: #{clip_with_lora_forward.13} parent=11 // pred_check
        %p181 = pneg %p98
      $region14: #{clip_with_lora_forward.13} parent=11 // pred_check_branch
        %183 = sbr.rel (%p181) target = $region16
      $region15: #{clip_with_lora_forward.13} parent=11 // pred_region
        _
      $region16: #{clip_with_lora_forward.13} parent=11 // pred_fallthru
        _
      // Predicated region
      $region17: #{clip_with_lora_forward.13} parent=11 // pred_check
        %p184 = pneg %p119
      $region18: #{clip_with_lora_forward.13} parent=11 // pred_check_branch
        %186 = sbr.rel (%p184) target = $region20
      $region19: #{clip_with_lora_forward.13} parent=11 // pred_region
        _
      $region20: #{clip_with_lora_forward.13} parent=11 // pred_fallthru
        _
      // Predicated region
      $region21: #{clip_with_lora_forward.13} parent=11 // pred_check
        %p187 = pneg %p140
      $region22: #{clip_with_lora_forward.13} parent=11 // pred_check_branch
        %189 = sbr.rel (%p187) target = $region24
      $region23: #{clip_with_lora_forward.13} parent=11 // pred_region
        _
      $region24: #{clip_with_lora_forward.13} parent=11 // pred_fallthru
        _
    $region12: #{clip_with_lora_forward.13} parent=5 // pred_fallthru
      _
    %p190 = scmp.lt.s32.totalorder %s11, 4
    // Predicated region
    $region25: #{clip_with_lora_forward.13} parent=5 // pred_check
      %p191 = pneg %p190
    $region26: #{clip_with_lora_forward.13} parent=5 // pred_check_branch
      %193 = sbr.rel (%p191) target = $region28
    $region27: #{clip_with_lora_forward.13} parent=5 // pred_region
      // Predicated region
      $region29: #{clip_with_lora_forward.13} parent=27 // pred_check
        %p194 = pneg %p45
      $region30: #{clip_with_lora_forward.13} parent=27 // pred_check_branch
        %196 = sbr.rel (%p194) target = $region32
      $region31: #{clip_with_lora_forward.13} parent=27 // pred_region
        %s197 = smul.u32 4, %s19
        %p198 = scmp.lt.s32.totalorder %s18, 0
        %s199 = scalar_select %p198, %s18, 0
        %p200 = scmp.lt.s32.totalorder %s197, 15
        %s201 = scalar_select %p200, %s197, 15
        %s202 = smul.addr %s199, 16
        %s203 = sadd.s32 %s201, %s202
        %s204 = smul.addr %s203, 4
        %s205 = scalar_lea.vmem %s0, %s204
        %s206 = smul.u32 4, %s19
      $region32: #{clip_with_lora_forward.13} parent=27 // pred_fallthru
        _
      // Predicated region
      $region33: #{clip_with_lora_forward.13} parent=27 // pred_check
        %p207 = pneg %p71
      $region34: #{clip_with_lora_forward.13} parent=27 // pred_check_branch
        %209 = sbr.rel (%p207) target = $region36
      $region35: #{clip_with_lora_forward.13} parent=27 // pred_region
        %s210 = smul.u32 64, %s19
        %p211 = scmp.lt.s32.totalorder %s210, 255
        %s212 = scalar_select %p211, %s210, 255
        %s213 = smul.addr %s212, 4
        %s214 = scalar_lea.vmem %s1, %s213
        %s215 = smul.u32 64, %s19
      $region36: #{clip_with_lora_forward.13} parent=27 // pred_fallthru
        _
    $region28: #{clip_with_lora_forward.13} parent=5 // pred_fallthru
      _
    %p216 = scmp.le.s32.totalorder 1, %s11
    %p217 = scmp.lt.s32.totalorder %s11, 5
    %p218 = pnand %p216, %p217
    %p219 = pneg %p218
    // Predicated region
    $region37: #{clip_with_lora_forward.13} parent=5 // pred_check
      _
    $region38: #{clip_with_lora_forward.13} parent=5 // pred_check_branch
      %221 = sbr.rel (%p218) target = $region40
    $region39: #{clip_with_lora_forward.13} parent=5 // pred_region
      %s222 = ssub.s32 %s11, 1
      %s223 = smul.u32 4, %s21
      %p224 = scmp.lt.s32.totalorder %s20, 0
      %s225 = scalar_select %p224, %s20, 0
      %p226 = scmp.lt.s32.totalorder %s223, 15
      %s227 = scalar_select %p226, %s223, 15
      %s228 = smul.addr %s225, 16
      %s229 = sadd.s32 %s227, %s228
      %s230 = smul.addr %s229, 4
      %s231 = scalar_lea.vmem %s0, %s230
      %p232 = pneg %p51
      %p233 = pneg %p48
      %s234 = smul.u32 64, %s21
      %p235 = scmp.lt.s32.totalorder %s234, 255
      %s236 = scalar_select %p235, %s234, 255
      %s237 = smul.addr %s236, 4
      %s238 = scalar_lea.vmem %s1, %s237
      %p239 = pneg %p77
      %p240 = pneg %p74
      %p241 = pneg %p98
      %p242 = pneg %p95
      %p243 = pneg %p119
      %p244 = pneg %p116
      %p245 = pneg %p140
      %p246 = pneg %p137
      %p247 = pneg %p166
      %p248 = pneg %p163
      %p249 = scmp.lt.s32.totalorder %s20, 0
      %s250 = scalar_select %p249, %s20, 0
      %s251 = smul.addr %s250, 8
      %s252 = scalar_lea.vmem %s5, %s251
      %s253 = smul.u32 4, %s21
      %p254 = scmp.lt.s32.totalorder %s20, 0
      %s255 = scalar_select %p254, %s20, 0
      %p256 = scmp.lt.s32.totalorder %s253, 15
      %s257 = scalar_select %p256, %s253, 15
      %s258 = smul.addr %s255, 16
      %s259 = sadd.s32 %s257, %s258
      %s260 = smul.addr %s259, 4
      %s261 = scalar_lea.vmem %s0, %s260
      %s262 = smul.u32 4, %s21
      %s263 = smul.u32 64, %s21
      %p264 = scmp.lt.s32.totalorder %s263, 255
      %s265 = scalar_select %p264, %s263, 255
      %s266 = smul.addr %s265, 4
      %s267 = scalar_lea.vmem %s1, %s266
      %s268 = smul.u32 64, %s21
      %p269 = scmp.lt.s32.totalorder %s20, 0
      %s270 = scalar_select %p269, %s20, 0
      %s271 = smul.addr %s270, 8
      %s272 = scalar_lea.vmem %s5, %s271
      %v274 = vld [vmem:[%s261] sm:$0xff]
      %v275 = vld [vmem:[%s261 + $0x8] sm:$0xff]
      %v276 = vld [vmem:[%s267] sm:$0xf]
      %v277 = vld [vmem:[%s267 + $0x4] sm:$0xf]
      %v278 = vld [vmem:[%s267 + $0x8] sm:$0xf]
      %v279 = vld [vmem:[%s267 + $0xc] sm:$0xf]
      %v280 = vld [vmem:[%s267 + $0x10] sm:$0xf]
      %v281 = vld [vmem:[%s267 + $0x14] sm:$0xf]
      %v282 = vld [vmem:[%s267 + $0x18] sm:$0xf]
      %v283 = vld [vmem:[%s267 + $0x1c] sm:$0xf]
      %v284 = vld [vmem:[%s267 + $0x20] sm:$0xf]
      %v285 = vld [vmem:[%s267 + $0x24] sm:$0xf]
      %v286 = vld [vmem:[%s267 + $0x28] sm:$0xf]
      %v287 = vld [vmem:[%s267 + $0x2c] sm:$0xf]
      %v288 = vld [vmem:[%s267 + $0x30] sm:$0xf]
      %v289 = vld [vmem:[%s267 + $0x34] sm:$0xf]
      %v290 = vld [vmem:[%s267 + $0x38] sm:$0xf]
      %v291 = vld [vmem:[%s267 + $0x3c] sm:$0xf]
      %v292 = vld [vmem:[%s267 + $0x40] sm:$0xf]
      %v293 = vld [vmem:[%s267 + $0x44] sm:$0xf]
      %v294 = vld [vmem:[%s267 + $0x48] sm:$0xf]
      %v295 = vld [vmem:[%s267 + $0x4c] sm:$0xf]
      %v296 = vld [vmem:[%s267 + $0x50] sm:$0xf]
      %v297 = vld [vmem:[%s267 + $0x54] sm:$0xf]
      %v298 = vld [vmem:[%s267 + $0x58] sm:$0xf]
      %v299 = vld [vmem:[%s267 + $0x5c] sm:$0xf]
      %v300 = vld [vmem:[%s267 + $0x60] sm:$0xf]
      %v301 = vld [vmem:[%s267 + $0x64] sm:$0xf]
      %v302 = vld [vmem:[%s267 + $0x68] sm:$0xf]
      %v303 = vld [vmem:[%s267 + $0x6c] sm:$0xf]
      %v304 = vld [vmem:[%s267 + $0x70] sm:$0xf]
      %v305 = vld [vmem:[%s267 + $0x74] sm:$0xf]
      %v306 = vld [vmem:[%s267 + $0x78] sm:$0xf]
      %v307 = vld [vmem:[%s267 + $0x7c] sm:$0xf]
      %v308 = vld [vmem:[%s267 + $0x80] sm:$0xf]
      %v309 = vld [vmem:[%s267 + $0x84] sm:$0xf]
      %v310 = vld [vmem:[%s267 + $0x88] sm:$0xf]
      %v311 = vld [vmem:[%s267 + $0x8c] sm:$0xf]
      %v312 = vld [vmem:[%s267 + $0x90] sm:$0xf]
      %v313 = vld [vmem:[%s267 + $0x94] sm:$0xf]
      %v314 = vld [vmem:[%s267 + $0x98] sm:$0xf]
      %v315 = vld [vmem:[%s267 + $0x9c] sm:$0xf]
      %v316 = vld [vmem:[%s267 + $0xa0] sm:$0xf]
      %v317 = vld [vmem:[%s267 + $0xa4] sm:$0xf]
      %v318 = vld [vmem:[%s267 + $0xa8] sm:$0xf]
      %v319 = vld [vmem:[%s267 + $0xac] sm:$0xf]
      %v320 = vld [vmem:[%s267 + $0xb0] sm:$0xf]
      %v321 = vld [vmem:[%s267 + $0xb4] sm:$0xf]
      %v322 = vld [vmem:[%s267 + $0xb8] sm:$0xf]
      %v323 = vld [vmem:[%s267 + $0xbc] sm:$0xf]
      %v324 = vld [vmem:[%s267 + $0xc0] sm:$0xf]
      %v325 = vld [vmem:[%s267 + $0xc4] sm:$0xf]
      %v326 = vld [vmem:[%s267 + $0xc8] sm:$0xf]
      %v327 = vld [vmem:[%s267 + $0xcc] sm:$0xf]
      %v328 = vld [vmem:[%s267 + $0xd0] sm:$0xf]
      %v329 = vld [vmem:[%s267 + $0xd4] sm:$0xf]
      %v330 = vld [vmem:[%s267 + $0xd8] sm:$0xf]
      %v331 = vld [vmem:[%s267 + $0xdc] sm:$0xf]
      %v332 = vld [vmem:[%s267 + $0xe0] sm:$0xf]
      %v333 = vld [vmem:[%s267 + $0xe4] sm:$0xf]
      %v334 = vld [vmem:[%s267 + $0xe8] sm:$0xf]
      %v335 = vld [vmem:[%s267 + $0xec] sm:$0xf]
      %v336 = vld [vmem:[%s267 + $0xf0] sm:$0xf]
      %v337 = vld [vmem:[%s267 + $0xf4] sm:$0xf]
      %v338 = vld [vmem:[%s267 + $0xf8] sm:$0xf]
      %v339 = vld [vmem:[%s267 + $0xfc] sm:$0xf]
      %v342 = vunpack.c.l.b16 %v274
      %v343 = vunpack.c.h.b16 %v274
      %v344 = vunpack.c.l.b16 %v275
      %v345 = vunpack.c.h.b16 %v275
      %v346 = vpack.c.b16 %v342, %v342
      %v347 = vpack.c.b16 %v343, %v343
      %v348 = vpack.c.b16 %v344, %v344
      %v349 = vpack.c.b16 %v345, %v345
      %v418 = vunpack.c.l.b16 %v276
      %v419 = vunpack.c.l.b16 %v277
      %v420 = vunpack.c.l.b16 %v278
      %v421 = vunpack.c.l.b16 %v279
      %v422 = vunpack.c.l.b16 %v280
      %v423 = vunpack.c.l.b16 %v281
      %v424 = vunpack.c.l.b16 %v282
      %v425 = vunpack.c.l.b16 %v283
      %v426 = vunpack.c.l.b16 %v284
      %v427 = vunpack.c.l.b16 %v285
      %v428 = vunpack.c.l.b16 %v286
      %v429 = vunpack.c.l.b16 %v287
      %v430 = vunpack.c.l.b16 %v288
      %v431 = vunpack.c.l.b16 %v289
      %v432 = vunpack.c.l.b16 %v290
      %v433 = vunpack.c.l.b16 %v291
      %v434 = vunpack.c.l.b16 %v292
      %v435 = vunpack.c.l.b16 %v293
      %v436 = vunpack.c.l.b16 %v294
      %v437 = vunpack.c.l.b16 %v295
      %v438 = vunpack.c.l.b16 %v296
      %v439 = vunpack.c.l.b16 %v297
      %v440 = vunpack.c.l.b16 %v298
      %v441 = vunpack.c.l.b16 %v299
      %v442 = vunpack.c.l.b16 %v300
      %v443 = vunpack.c.l.b16 %v301
      %v444 = vunpack.c.l.b16 %v302
      %v445 = vunpack.c.l.b16 %v303
      %v446 = vunpack.c.l.b16 %v304
      %v447 = vunpack.c.l.b16 %v305
      %v448 = vunpack.c.l.b16 %v306
      %v449 = vunpack.c.l.b16 %v307
      %v450 = vunpack.c.l.b16 %v308
      %v451 = vunpack.c.l.b16 %v309
      %v452 = vunpack.c.l.b16 %v310
      %v453 = vunpack.c.l.b16 %v311
      %v454 = vunpack.c.l.b16 %v312
      %v455 = vunpack.c.l.b16 %v313
      %v456 = vunpack.c.l.b16 %v314
      %v457 = vunpack.c.l.b16 %v315
      %v458 = vunpack.c.l.b16 %v316
      %v459 = vunpack.c.l.b16 %v317
      %v460 = vunpack.c.l.b16 %v318
      %v461 = vunpack.c.l.b16 %v319
      %v462 = vunpack.c.l.b16 %v320
      %v463 = vunpack.c.l.b16 %v321
      %v464 = vunpack.c.l.b16 %v322
      %v465 = vunpack.c.l.b16 %v323
      %v466 = vunpack.c.l.b16 %v324
      %v467 = vunpack.c.l.b16 %v325
      %v468 = vunpack.c.l.b16 %v326
      %v469 = vunpack.c.l.b16 %v327
      %v470 = vunpack.c.l.b16 %v328
      %v471 = vunpack.c.l.b16 %v329
      %v472 = vunpack.c.l.b16 %v330
      %v473 = vunpack.c.l.b16 %v331
      %v474 = vunpack.c.l.b16 %v332
      %v475 = vunpack.c.l.b16 %v333
      %v476 = vunpack.c.l.b16 %v334
      %v477 = vunpack.c.l.b16 %v335
      %v478 = vunpack.c.l.b16 %v336
      %v479 = vunpack.c.l.b16 %v337
      %v480 = vunpack.c.l.b16 %v338
      %v481 = vunpack.c.l.b16 %v339
      %v482 = vpack.c.b16 %v419, %v418
      %v483 = vpack.c.b16 %v421, %v420
      %v484 = vpack.c.b16 %v423, %v422
      %v485 = vpack.c.b16 %v425, %v424
      %v486 = vpack.c.b16 %v427, %v426
      %v487 = vpack.c.b16 %v429, %v428
      %v488 = vpack.c.b16 %v431, %v430
      %v489 = vpack.c.b16 %v433, %v432
      %v490 = vpack.c.b16 %v435, %v434
      %v491 = vpack.c.b16 %v437, %v436
      %v492 = vpack.c.b16 %v439, %v438
      %v493 = vpack.c.b16 %v441, %v440
      %v494 = vpack.c.b16 %v443, %v442
      %v495 = vpack.c.b16 %v445, %v444
      %v496 = vpack.c.b16 %v447, %v446
      %v497 = vpack.c.b16 %v449, %v448
      %v498 = vpack.c.b16 %v451, %v450
      %v499 = vpack.c.b16 %v453, %v452
      %v500 = vpack.c.b16 %v455, %v454
      %v501 = vpack.c.b16 %v457, %v456
      %v502 = vpack.c.b16 %v459, %v458
      %v503 = vpack.c.b16 %v461, %v460
      %v504 = vpack.c.b16 %v463, %v462
      %v505 = vpack.c.b16 %v465, %v464
      %v506 = vpack.c.b16 %v467, %v466
      %v507 = vpack.c.b16 %v469, %v468
      %v508 = vpack.c.b16 %v471, %v470
      %v509 = vpack.c.b16 %v473, %v472
      %v510 = vpack.c.b16 %v475, %v474
      %v511 = vpack.c.b16 %v477, %v476
      %v512 = vpack.c.b16 %v479, %v478
      %v513 = vpack.c.b16 %v481, %v480
      %546 = vmatprep.subr.bf16.mxu0 0
      %547 = vmatpush1.bf16.msra.mxu0 %v482
      %548 = vmatprep.subr.bf16.mxu0 0
      %549 = vmatpush1.bf16.msra.mxu0 %v483
      %550 = vmatprep.subr.bf16.mxu0 0
      %551 = vmatpush1.bf16.msra.mxu0 %v484
      %552 = vmatprep.subr.bf16.mxu0 0
      %553 = vmatpush1.bf16.msra.mxu0 %v485
      %554 = vmatprep.subr.bf16.mxu0 0
      %555 = vmatpush1.bf16.msra.mxu0 %v486
      %556 = vmatprep.subr.bf16.mxu0 0
      %557 = vmatpush1.bf16.msra.mxu0 %v487
      %558 = vmatprep.subr.bf16.mxu0 0
      %559 = vmatpush1.bf16.msra.mxu0 %v488
      %560 = vmatprep.subr.bf16.mxu0 0
      %561 = vmatpush1.bf16.msra.mxu0 %v489
      %562 = vmatprep.subr.bf16.mxu0 0
      %563 = vmatpush1.bf16.msra.mxu0 %v490
      %564 = vmatprep.subr.bf16.mxu0 0
      %565 = vmatpush1.bf16.msra.mxu0 %v491
      %566 = vmatprep.subr.bf16.mxu0 0
      %567 = vmatpush1.bf16.msra.mxu0 %v492
      %568 = vmatprep.subr.bf16.mxu0 0
      %569 = vmatpush1.bf16.msra.mxu0 %v493
      %570 = vmatprep.subr.bf16.mxu0 0
      %571 = vmatpush1.bf16.msra.mxu0 %v494
      %572 = vmatprep.subr.bf16.mxu0 0
      %573 = vmatpush1.bf16.msra.mxu0 %v495
      %574 = vmatprep.subr.bf16.mxu0 0
      %575 = vmatpush1.bf16.msra.mxu0 %v496
      %576 = vmatprep.subr.bf16.mxu0 0
      %577 = vmatpush1.bf16.msra.mxu0 %v497
      %578 = vmatprep.mubr.bf16.mxu0 %v347
      %579 = vmatmul.mubr.bf16.gmra.mrb[0].mxu0 %v346
      %v580 = vpop.f32.mrb[0].mxu0
      %v581 = vadd.f32 0.0, %v580
      %v582 = vpop.f32.mrb[0].mxu0
      %v583 = vpop.f32.mrb[0].mxu0
      %v584 = vpop.f32.mrb[0].mxu0
      %585 = vdwg.mxu0
      %586 = vmatprep.subr.bf16.mxu0 0
      %587 = vmatpush1.bf16.msra.mxu0 %v498
      %588 = vmatprep.subr.bf16.mxu0 0
      %589 = vmatpush1.bf16.msra.mxu0 %v499
      %590 = vmatprep.subr.bf16.mxu0 0
      %591 = vmatpush1.bf16.msra.mxu0 %v500
      %592 = vmatprep.subr.bf16.mxu0 0
      %593 = vmatpush1.bf16.msra.mxu0 %v501
      %594 = vmatprep.subr.bf16.mxu0 0
      %595 = vmatpush1.bf16.msra.mxu0 %v502
      %596 = vmatprep.subr.bf16.mxu0 0
      %597 = vmatpush1.bf16.msra.mxu0 %v503
      %598 = vmatprep.subr.bf16.mxu0 0
      %599 = vmatpush1.bf16.msra.mxu0 %v504
      %600 = vmatprep.subr.bf16.mxu0 0
      %601 = vmatpush1.bf16.msra.mxu0 %v505
      %602 = vmatprep.subr.bf16.mxu0 0
      %603 = vmatpush1.bf16.msra.mxu0 %v506
      %604 = vmatprep.subr.bf16.mxu0 0
      %605 = vmatpush1.bf16.msra.mxu0 %v507
      %606 = vmatprep.subr.bf16.mxu0 0
      %607 = vmatpush1.bf16.msra.mxu0 %v508
      %608 = vmatprep.subr.bf16.mxu0 0
      %609 = vmatpush1.bf16.msra.mxu0 %v509
      %610 = vmatprep.subr.bf16.mxu0 0
      %611 = vmatpush1.bf16.msra.mxu0 %v510
      %612 = vmatprep.subr.bf16.mxu0 0
      %613 = vmatpush1.bf16.msra.mxu0 %v511
      %614 = vmatprep.subr.bf16.mxu0 0
      %615 = vmatpush1.bf16.msra.mxu0 %v512
      %616 = vmatprep.subr.bf16.mxu0 0
      %617 = vmatpush1.bf16.msra.mxu0 %v513
      %618 = vmatprep.mubr.bf16.mxu0 %v349
      %619 = vmatmul.mubr.bf16.gmra.mrb[0].mxu0 %v348
      %v620 = vpop.f32.mrb[0].mxu0
      %v621 = vadd.f32 %v581, %v620
      %v622 = vpop.f32.mrb[0].mxu0
      %v623 = vpop.f32.mrb[0].mxu0
      %v624 = vpop.f32.mrb[0].mxu0
      %625 = vdwg.mxu0
      %p626 = scmp.eq.s32.totalorder %s21, 0
      // Predicated region
      $region41: #{clip_with_lora_forward.13} parent=39 // pred_check
        %p627 = pneg %p626
      $region42: #{clip_with_lora_forward.13} parent=39 // pred_check_branch
        %629 = sbr.rel (%p627) target = $region44
      $region43: #{clip_with_lora_forward.13} parent=39 // pred_region
        %630 = vst [vmem:[#allocation2] sm:$0xff] %v621
      $region44: #{clip_with_lora_forward.13} parent=39 // pred_fallthru
        _
      %p631 = scmp.gt.s32.totalorder %s21, 0
      // Predicated region
      $region45: #{clip_with_lora_forward.13} parent=39 // pred_check
        %p632 = pneg %p631
      $region46: #{clip_with_lora_forward.13} parent=39 // pred_check_branch
        %634 = sbr.rel (%p632) target = $region48
      $region47: #{clip_with_lora_forward.13} parent=39 // pred_region
        %v635 = vld [vmem:[#allocation2] sm:$0xff]
        %v636 = vadd.f32 %v635, %v621
        %637 = vst [vmem:[#allocation2] sm:$0xff] %v636
      $region48: #{clip_with_lora_forward.13} parent=39 // pred_fallthru
        _
      %p638 = scmp.eq.s32.totalorder %s21, 3
      // Predicated region
      $region49: #{clip_with_lora_forward.13} parent=39 // pred_check
        %p639 = pneg %p638
      $region50: #{clip_with_lora_forward.13} parent=39 // pred_check_branch
        %641 = sbr.rel (%p639) target = $region52
      $region51: #{clip_with_lora_forward.13} parent=39 // pred_region
        %v642 = vld [vmem:[#allocation2] sm:$0xff]
        %v643 = vld [vmem:[%s2] sm:$0x1]
        %v645 = vlaneseq
        %v646 = vshrl.u32 %v645, 7
        %v647 = vsub.s32 0, %v646
        %v648 = vrot.slane %v643, %v647
        %v650 = vadd.f32 %v642, %v648
        %v651 = vpack.c.bf16 %v650, %v650
        %v652 = vld [vmem:[%s3] sm:$0xf]
        %v653 = vld [vmem:[%s3 + $0x4] sm:$0xf]
        %v654 = vld [vmem:[%s3 + $0x8] sm:$0xf]
        %v655 = vld [vmem:[%s3 + $0xc] sm:$0xf]
        %v656 = vld [vmem:[%s3 + $0x10] sm:$0xf]
        %v657 = vld [vmem:[%s3 + $0x14] sm:$0xf]
        %v658 = vld [vmem:[%s3 + $0x18] sm:$0xf]
        %v659 = vld [vmem:[%s3 + $0x1c] sm:$0xf]
        %v660 = vld [vmem:[%s3 + $0x20] sm:$0xf]
        %v661 = vld [vmem:[%s3 + $0x24] sm:$0xf]
        %v662 = vld [vmem:[%s3 + $0x28] sm:$0xf]
        %v663 = vld [vmem:[%s3 + $0x2c] sm:$0xf]
        %v664 = vld [vmem:[%s3 + $0x30] sm:$0xf]
        %v665 = vld [vmem:[%s3 + $0x34] sm:$0xf]
        %v666 = vld [vmem:[%s3 + $0x38] sm:$0xf]
        %v667 = vld [vmem:[%s3 + $0x3c] sm:$0xf]
        %v668 = vld [vmem:[%s4] sm:$0x1]
        %v670 = vlaneseq
        %v671 = vshrl.u32 %v670, 7
        %v672 = vsub.s32 0, %v671
        %v673 = vrot.slane %v668, %v672
        %v691 = vunpack.c.l.b16 %v652
        %v692 = vunpack.c.l.b16 %v653
        %v693 = vunpack.c.l.b16 %v654
        %v694 = vunpack.c.l.b16 %v655
        %v695 = vunpack.c.l.b16 %v656
        %v696 = vunpack.c.l.b16 %v657
        %v697 = vunpack.c.l.b16 %v658
        %v698 = vunpack.c.l.b16 %v659
        %v699 = vunpack.c.l.b16 %v660
        %v700 = vunpack.c.l.b16 %v661
        %v701 = vunpack.c.l.b16 %v662
        %v702 = vunpack.c.l.b16 %v663
        %v703 = vunpack.c.l.b16 %v664
        %v704 = vunpack.c.l.b16 %v665
        %v705 = vunpack.c.l.b16 %v666
        %v706 = vunpack.c.l.b16 %v667
        %v707 = vpack.c.b16 %v692, %v691
        %v708 = vpack.c.b16 %v694, %v693
        %v709 = vpack.c.b16 %v696, %v695
        %v710 = vpack.c.b16 %v698, %v697
        %v711 = vpack.c.b16 %v700, %v699
        %v712 = vpack.c.b16 %v702, %v701
        %v713 = vpack.c.b16 %v704, %v703
        %v714 = vpack.c.b16 %v706, %v705
        %723 = vmatprep.subr.bf16.mxu0 0
        %724 = vmatpush1.bf16.msra.mxu0 %v707
        %725 = vmatprep.subr.bf16.mxu0 0
        %726 = vmatpush1.bf16.msra.mxu0 %v708
        %727 = vmatprep.subr.bf16.mxu0 0
        %728 = vmatpush1.bf16.msra.mxu0 %v709
        %729 = vmatprep.subr.bf16.mxu0 0
        %730 = vmatpush1.bf16.msra.mxu0 %v710
        %731 = vmatprep.subr.bf16.mxu0 0
        %732 = vmatpush1.bf16.msra.mxu0 %v711
        %733 = vmatprep.subr.bf16.mxu0 0
        %734 = vmatpush1.bf16.msra.mxu0 %v712
        %735 = vmatprep.subr.bf16.mxu0 0
        %736 = vmatpush1.bf16.msra.mxu0 %v713
        %737 = vmatprep.subr.bf16.mxu0 0
        %738 = vmatpush1.bf16.msra.mxu0 %v714
        %739 = vmatprep.subr.bf16.mxu0 0
        %740 = vmatpush1.bf16.msra.mxu0 0
        %741 = vmatprep.subr.bf16.mxu0 0
        %742 = vmatpush1.bf16.msra.mxu0 0
        %743 = vmatprep.subr.bf16.mxu0 0
        %744 = vmatpush1.bf16.msra.mxu0 0
        %745 = vmatprep.subr.bf16.mxu0 0
        %746 = vmatpush1.bf16.msra.mxu0 0
        %747 = vmatprep.subr.bf16.mxu0 0
        %748 = vmatpush1.bf16.msra.mxu0 0
        %749 = vmatprep.subr.bf16.mxu0 0
        %750 = vmatpush1.bf16.msra.mxu0 0
        %751 = vmatprep.subr.bf16.mxu0 0
        %752 = vmatpush1.bf16.msra.mxu0 0
        %753 = vmatprep.subr.bf16.mxu0 0
        %754 = vmatpush1.bf16.msra.mxu0 0
        %755 = vmatprep.mubr.bf16.mxu0 0
        %756 = vmatmul.mubr.bf16.gmra.mrb[0].mxu0 %v651
        %v757 = vpop.f32.mrb[0].mxu0
        %v758 = vadd.f32 %v673, %v757
        %v759 = vpop.f32.mrb[0].mxu0
        %v760 = vpop.f32.mrb[0].mxu0
        %v761 = vpop.f32.mrb[0].mxu0
        %762 = vdwg.mxu0
        %763 = vst [vmem:[%s272] sm:$0xff] %v758
      $region52: #{clip_with_lora_forward.13} parent=39 // pred_fallthru
        _
      %p764 = scmp.lt.s32.totalorder %s20, 0
      %s765 = scalar_select %p764, %s20, 0
      %s766 = smul.addr %s765, 8
      %s767 = scalar_lea.vmem %s5, %s766
      // Predicated region
      $region53: #{clip_with_lora_forward.13} parent=39 // pred_check
        %p768 = pneg %p163
      $region54: #{clip_with_lora_forward.13} parent=39 // pred_check_branch
        %770 = sbr.rel (%p768) target = $region56
      $region55: #{clip_with_lora_forward.13} parent=39 // pred_region
        _
      $region56: #{clip_with_lora_forward.13} parent=39 // pred_fallthru
        _
      // Predicated region
      $region57: #{clip_with_lora_forward.13} parent=39 // pred_check
        %p771 = pneg %p163
      $region58: #{clip_with_lora_forward.13} parent=39 // pred_check_branch
        %773 = sbr.rel (%p771) target = $region60
      $region59: #{clip_with_lora_forward.13} parent=39 // pred_region
        %p774 = scmp.lt.s32.totalorder %s20, 0
        %s775 = scalar_select %p774, %s20, 0
        %s776 = smul.addr %s775, 8
        %s777 = scalar_lea.vmem %s5, %s776
      $region60: #{clip_with_lora_forward.13} parent=39 // pred_fallthru
        _
    $region40: #{clip_with_lora_forward.13} parent=5 // pred_fallthru
      _
    %p778 = scmp.le.s32.totalorder 2, %s11
    // Predicated region
    $region61: #{clip_with_lora_forward.13} parent=5 // pred_check
      %p779 = pneg %p778
    $region62: #{clip_with_lora_forward.13} parent=5 // pred_check_branch
      %781 = sbr.rel (%p779) target = $region64
    $region63: #{clip_with_lora_forward.13} parent=5 // pred_region
      %s782 = ssub.s32 %s11, 2
    $region64: #{clip_with_lora_forward.13} parent=5 // pred_fallthru
      _
  $region6: #{clip_with_lora_forward.13} parent=0 // loop_footer
    %s15 = sadd.s32 1, %s11
  $region7: #{clip_with_lora_forward.13} parent=0 // loop_footer_branch
    %10 = sbr.rel target = $region3
  $region8: #{clip_with_lora_forward.13} parent=0 // loop_exit
    _

// kernel: clip_with_lora_forward.10
$region0: #{clip_with_lora_forward.10}
  #allocation0 [shape = 'u32[]', space=smem, size = 0x4, offset = 0x4, fixed_abs, tag = 'smem constant byte address 0x4 - core index']
  #allocation1 [shape = 'u32[144,128]{1,0:T(1,128)}', space=vmem, size = 0x12000, scoped, tag = 'internal scratch']
  %s0 = inlined_call_operand.vmem [shape: bf16[2,326,128], index: 0, kind: input, shape index: {}]
  %s1 = inlined_call_operand.vmem [shape: bf16[9,128,128], index: 1, kind: input, shape index: {}]
  %s2 = inlined_call_operand.vmem [shape: f32[1,128], index: 2, kind: input, shape index: {}]
  %s3 = inlined_call_operand.vmem [shape: bf16[2,288,128], index: 3, kind: output, shape index: {}]
  %s4 = sld [smem:[#allocation0]]
  $region45: #{clip_with_lora_forward.10} parent=0
    _
  %s6 = ssub.s32 1, %s4
  %s7 = scalar_select 0, %s6, %s4
  loop: start=0, step=1, limit=4
  $region2: #{clip_with_lora_forward.10} parent=0 // loop_pre_header
    _
  $region3: #{clip_with_lora_forward.10} parent=0 // loop_header
    %s9 = sphi 0, %s13
    %p10 = scmp.ge.s32.totalorder %s9, 4
    %s16 = sphi 0, %s35
    %s17 = sphi 0, %s31
    %s18 = sphi 0, %s27
    %s19 = sphi 0, %s16
    %s20 = sphi 0, %s17
    %s21 = sphi 0, %s18
    %s22 = sphi 0, %s19
    %s23 = sphi 0, %s20
    %s24 = sphi 0, %s21
    %s40 = sphi 0, %s42
    %s43 = sphi 0, %s40
    %s44 = sphi 0, %s43
    %s60 = sphi 0, %s44
    %s68 = sphi 0, %s70
    %s71 = sphi 0, %s68
    %s72 = sphi 0, %s71
    %s88 = sphi 0, %s72
    %s94 = sphi 0, %s96
    %s97 = sphi 0, %s94
    %s98 = sphi 0, %s97
    %s114 = sphi 0, %s98
    %s122 = sphi 0, %s124
    %s125 = sphi 0, %s122
    %s126 = sphi 0, %s125
    %s142 = sphi 0, %s126
  $region4: #{clip_with_lora_forward.10} parent=0 // loop_header_branch
    %12 = sbr.rel (%p10) target = $region8
  $region5: #{clip_with_lora_forward.10} parent=0 // loop_body
    %s14 = ssub.s32 %s9, 1
    %s15 = ssub.s32 %s9, 2
    %s25 = sadd.s32 1, %s18
    %p26 = scmp.ge.s32.totalorder %s25, 1
    %s27 = scalar_select %p26, 0, %s25
    %s28 = sadd.s32 1, %s17
    %s29 = scalar_select %p26, %s28, %s17
    %p30 = scmp.ge.s32.totalorder %s29, 1
    %s31 = scalar_select %p30, 0, %s29
    %s32 = sadd.s32 1, %s16
    %s33 = scalar_select %p30, %s32, %s16
    %p34 = scmp.ge.s32.totalorder %s33, 2
    %s35 = scalar_select %p34, 0, %s33
    %s36 = ssub.s32 %s16, %s35
    %s37 = ssub.s32 %s18, %s27
    %s38 = sor.u32 %s36, %s37
    %p39 = scmp.eq.s32.totalorder %s38, 0
    %s41 = sadd.s32 %s40, 1
    %s42 = scalar_select %p39, %s40, %s41
    %p45 = pneg %p39
    %p46 = scmp.eq.s32.totalorder %s9, 1
    %p47 = por %p45, %p46
    %p48 = scmp.ne.s32.totalorder %s40, %s43
    %p49 = scmp.eq.s32.totalorder %s9, 0
    %p50 = por %p48, %p49
    %p51 = scmp.ne.s32.totalorder %s40, %s43
    %p52 = scmp.eq.s32.totalorder %s14, 1
    %p53 = por %p51, %p52
    %p54 = scmp.ne.s32.totalorder %s43, %s44
    %p55 = scmp.eq.s32.totalorder %s14, 0
    %p56 = por %p54, %p55
    %p57 = scmp.ne.s32.totalorder %s43, %s44
    %p58 = scmp.eq.s32.totalorder %s15, 1
    %p59 = por %p57, %p58
    %p61 = scmp.ne.s32.totalorder %s44, %s60
    %p62 = scmp.eq.s32.totalorder %s15, 0
    %p63 = por %p61, %p62
    %s64 = ssub.s32 %s18, %s27
    %s65 = ssub.s32 %s17, %s31
    %s66 = sor.u32 %s64, %s65
    %p67 = scmp.eq.s32.totalorder %s66, 0
    %s69 = sadd.s32 %s68, 1
    %s70 = scalar_select %p67, %s68, %s69
    %p73 = pneg %p67
    %p74 = scmp.eq.s32.totalorder %s9, 1
    %p75 = por %p73, %p74
    %p76 = scmp.ne.s32.totalorder %s68, %s71
    %p77 = scmp.eq.s32.totalorder %s9, 0
    %p78 = por %p76, %p77
    %p79 = scmp.ne.s32.totalorder %s68, %s71
    %p80 = scmp.eq.s32.totalorder %s14, 1
    %p81 = por %p79, %p80
    %p82 = scmp.ne.s32.totalorder %s71, %s72
    %p83 = scmp.eq.s32.totalorder %s14, 0
    %p84 = por %p82, %p83
    %p85 = scmp.ne.s32.totalorder %s71, %s72
    %p86 = scmp.eq.s32.totalorder %s15, 1
    %p87 = por %p85, %p86
    %p89 = scmp.ne.s32.totalorder %s72, %s88
    %p90 = scmp.eq.s32.totalorder %s15, 0
    %p91 = por %p89, %p90
    %s92 = ssub.s32 %s17, %s31
    %p93 = scmp.eq.s32.totalorder %s92, 0
    %s95 = sadd.s32 %s94, 1
    %s96 = scalar_select %p93, %s94, %s95
    %p99 = pneg %p93
    %p100 = scmp.eq.s32.totalorder %s9, 1
    %p101 = por %p99, %p100
    %p102 = scmp.ne.s32.totalorder %s94, %s97
    %p103 = scmp.eq.s32.totalorder %s9, 0
    %p104 = por %p102, %p103
    %p105 = scmp.ne.s32.totalorder %s94, %s97
    %p106 = scmp.eq.s32.totalorder %s14, 1
    %p107 = por %p105, %p106
    %p108 = scmp.ne.s32.totalorder %s97, %s98
    %p109 = scmp.eq.s32.totalorder %s14, 0
    %p110 = por %p108, %p109
    %p111 = scmp.ne.s32.totalorder %s97, %s98
    %p112 = scmp.eq.s32.totalorder %s15, 1
    %p113 = por %p111, %p112
    %p115 = scmp.ne.s32.totalorder %s98, %s114
    %p116 = scmp.eq.s32.totalorder %s15, 0
    %p117 = por %p115, %p116
    %s118 = ssub.s32 %s16, %s35
    %s119 = ssub.s32 %s17, %s31
    %s120 = sor.u32 %s118, %s119
    %p121 = scmp.eq.s32.totalorder %s120, 0
    %s123 = sadd.s32 %s122, 1
    %s124 = scalar_select %p121, %s122, %s123
    %p127 = pneg %p121
    %p128 = scmp.eq.s32.totalorder %s9, 1
    %p129 = por %p127, %p128
    %p130 = scmp.ne.s32.totalorder %s122, %s125
    %p131 = scmp.eq.s32.totalorder %s9, 0
    %p132 = por %p130, %p131
    %p133 = scmp.ne.s32.totalorder %s122, %s125
    %p134 = scmp.eq.s32.totalorder %s14, 1
    %p135 = por %p133, %p134
    %p136 = scmp.ne.s32.totalorder %s125, %s126
    %p137 = scmp.eq.s32.totalorder %s14, 0
    %p138 = por %p136, %p137
    %p139 = scmp.ne.s32.totalorder %s125, %s126
    %p140 = scmp.eq.s32.totalorder %s15, 1
    %p141 = por %p139, %p140
    %p143 = scmp.ne.s32.totalorder %s126, %s142
    %p144 = scmp.eq.s32.totalorder %s15, 0
    %p145 = por %p143, %p144
    %p146 = scmp.le.s32.totalorder 1, %s9
    %p147 = scmp.lt.s32.totalorder %s9, 3
    %p148 = pnand %p146, %p147
    %p149 = pneg %p148
    // Predicated region
    $region9: #{clip_with_lora_forward.10} parent=5 // pred_check
      _
    $region10: #{clip_with_lora_forward.10} parent=5 // pred_check_branch
      %151 = sbr.rel (%p148) target = $region12
    $region11: #{clip_with_lora_forward.10} parent=5 // pred_region
      %s152 = ssub.s32 %s9, 1
      // Predicated region
      $region13: #{clip_with_lora_forward.10} parent=11 // pred_check
        %p153 = pneg %p84
      $region14: #{clip_with_lora_forward.10} parent=11 // pred_check_branch
        %155 = sbr.rel (%p153) target = $region16
      $region15: #{clip_with_lora_forward.10} parent=11 // pred_region
        %s156 = smul.u32 16, %s21
        %p157 = scmp.lt.s32.totalorder %s156, 15
        %s158 = scalar_select %p157, %s156, 15
        %p159 = scmp.lt.s32.totalorder %s20, 0
        %s160 = scalar_select %p159, %s20, 0
        %s161 = sadd.s32 %s160, %s158
        %s162 = smul.addr %s161, 4
        %s163 = scalar_lea.vmem %s1, %s162
        %s164 = smul.u32 16, %s21
      $region16: #{clip_with_lora_forward.10} parent=11 // pred_fallthru
        _
      // Predicated region
      $region17: #{clip_with_lora_forward.10} parent=11 // pred_check
        %p165 = pneg %p110
      $region18: #{clip_with_lora_forward.10} parent=11 // pred_check_branch
        %167 = sbr.rel (%p165) target = $region20
      $region19: #{clip_with_lora_forward.10} parent=11 // pred_region
        %p168 = scmp.lt.s32.totalorder %s20, 0
        %s169 = scalar_select %p168, %s20, 0
        %s170 = scalar_lea.vmem %s2, %s169
      $region20: #{clip_with_lora_forward.10} parent=11 // pred_fallthru
        _
    $region12: #{clip_with_lora_forward.10} parent=5 // pred_fallthru
      _
    %p171 = scmp.lt.s32.totalorder %s9, 2
    // Predicated region
    $region21: #{clip_with_lora_forward.10} parent=5 // pred_check
      %p172 = pneg %p171
    $region22: #{clip_with_lora_forward.10} parent=5 // pred_check_branch
      %174 = sbr.rel (%p172) target = $region24
    $region23: #{clip_with_lora_forward.10} parent=5 // pred_region
      // Predicated region
      $region25: #{clip_with_lora_forward.10} parent=23 // pred_check
        %p175 = pneg %p50
      $region26: #{clip_with_lora_forward.10} parent=23 // pred_check_branch
        %177 = sbr.rel (%p175) target = $region28
      $region27: #{clip_with_lora_forward.10} parent=23 // pred_region
        %p178 = scmp.lt.s32.totalorder %s16, 1
        %s179 = scalar_select %p178, %s16, 1
        %p180 = scmp.lt.s32.totalorder %s18, 0
        %s181 = scalar_select %p180, %s18, 0
        %s182 = smul.addr %s179, 41
        %s183 = sadd.s32 %s181, %s182
        %s184 = smul.addr %s183, 4
        %s185 = scalar_lea.vmem %s0, %s184
      $region28: #{clip_with_lora_forward.10} parent=23 // pred_fallthru
        _
    $region24: #{clip_with_lora_forward.10} parent=5 // pred_fallthru
      _
    %p186 = scmp.le.s32.totalorder 1, %s9
    %p187 = scmp.lt.s32.totalorder %s9, 3
    %p188 = pnand %p186, %p187
    %p189 = pneg %p188
    // Predicated region
    $region29: #{clip_with_lora_forward.10} parent=5 // pred_check
      _
    $region30: #{clip_with_lora_forward.10} parent=5 // pred_check_branch
      %191 = sbr.rel (%p188) target = $region32
    $region31: #{clip_with_lora_forward.10} parent=5 // pred_region
      %s192 = ssub.s32 %s9, 1
      %p193 = scmp.lt.s32.totalorder %s19, 1
      %s194 = scalar_select %p193, %s19, 1
      %p195 = scmp.lt.s32.totalorder %s21, 0
      %s196 = scalar_select %p195, %s21, 0
      %s197 = smul.addr %s194, 41
      %s198 = sadd.s32 %s196, %s197
      %s199 = smul.addr %s198, 4
      %s200 = scalar_lea.vmem %s0, %s199
      %p201 = pneg %p56
      %p202 = pneg %p53
      %s203 = smul.u32 16, %s21
      %p204 = scmp.lt.s32.totalorder %s203, 15
      %s205 = scalar_select %p204, %s203, 15
      %p206 = scmp.lt.s32.totalorder %s20, 0
      %s207 = scalar_select %p206, %s20, 0
      %s208 = sadd.s32 %s207, %s205
      %s209 = smul.addr %s208, 4
      %s210 = scalar_lea.vmem %s1, %s209
      %p211 = pneg %p84
      %p212 = pneg %p81
      %p213 = scmp.lt.s32.totalorder %s20, 0
      %s214 = scalar_select %p213, %s20, 0
      %s215 = scalar_lea.vmem %s2, %s214
      %p216 = pneg %p110
      %p217 = pneg %p107
      %p218 = pneg %p138
      %p219 = pneg %p135
      %p220 = scmp.lt.s32.totalorder %s19, 1
      %s221 = scalar_select %p220, %s19, 1
      %p222 = scmp.lt.s32.totalorder %s20, 0
      %s223 = scalar_select %p222, %s20, 0
      %s224 = smul.addr %s221, 36
      %s225 = sadd.s32 %s223, %s224
      %s226 = smul.addr %s225, 4
      %s227 = scalar_lea.vmem %s3, %s226
      %p228 = scmp.lt.s32.totalorder %s19, 1
      %s229 = scalar_select %p228, %s19, 1
      %p230 = scmp.lt.s32.totalorder %s21, 0
      %s231 = scalar_select %p230, %s21, 0
      %s232 = smul.addr %s229, 41
      %s233 = sadd.s32 %s231, %s232
      %s234 = smul.addr %s233, 4
      %s235 = scalar_lea.vmem %s0, %s234
      %s236 = smul.u32 16, %s21
      %p237 = scmp.lt.s32.totalorder %s236, 15
      %s238 = scalar_select %p237, %s236, 15
      %p239 = scmp.lt.s32.totalorder %s20, 0
      %s240 = scalar_select %p239, %s20, 0
      %s241 = sadd.s32 %s240, %s238
      %s242 = smul.addr %s241, 4
      %s243 = scalar_lea.vmem %s1, %s242
      %s244 = smul.u32 16, %s21
      %p245 = scmp.lt.s32.totalorder %s20, 0
      %s246 = scalar_select %p245, %s20, 0
      %s247 = scalar_lea.vmem %s2, %s246
      %p248 = scmp.lt.s32.totalorder %s19, 1
      %s249 = scalar_select %p248, %s19, 1
      %p250 = scmp.lt.s32.totalorder %s20, 0
      %s251 = scalar_select %p250, %s20, 0
      %s252 = smul.addr %s249, 36
      %s253 = sadd.s32 %s251, %s252
      %s254 = smul.addr %s253, 4
      %s255 = scalar_lea.vmem %s3, %s254
      %v257 = vld [vmem:[%s235] sm:$0xf]
      %v258 = vld [vmem:[%s235 + $0x4] sm:$0xf]
      %v259 = vld [vmem:[%s235 + $0x8] sm:$0xf]
      %v260 = vld [vmem:[%s235 + $0xc] sm:$0xf]
      %v261 = vld [vmem:[%s235 + $0x10] sm:$0xf]
      %v262 = vld [vmem:[%s235 + $0x14] sm:$0xf]
      %v263 = vld [vmem:[%s235 + $0x18] sm:$0xf]
      %v264 = vld [vmem:[%s235 + $0x1c] sm:$0xf]
      %v265 = vld [vmem:[%s235 + $0x20] sm:$0xf]
      %v266 = vld [vmem:[%s235 + $0x24] sm:$0xf]
      %v267 = vld [vmem:[%s235 + $0x28] sm:$0xf]
      %v268 = vld [vmem:[%s235 + $0x2c] sm:$0xf]
      %v269 = vld [vmem:[%s235 + $0x30] sm:$0xf]
      %v270 = vld [vmem:[%s235 + $0x34] sm:$0xf]
      %v271 = vld [vmem:[%s235 + $0x38] sm:$0xf]
      %v272 = vld [vmem:[%s235 + $0x3c] sm:$0xf]
      %v273 = vld [vmem:[%s235 + $0x40] sm:$0xf]
      %v274 = vld [vmem:[%s235 + $0x44] sm:$0xf]
      %v275 = vld [vmem:[%s235 + $0x48] sm:$0xf]
      %v276 = vld [vmem:[%s235 + $0x4c] sm:$0xf]
      %v277 = vld [vmem:[%s235 + $0x50] sm:$0xf]
      %v278 = vld [vmem:[%s235 + $0x54] sm:$0xf]
      %v279 = vld [vmem:[%s235 + $0x58] sm:$0xf]
      %v280 = vld [vmem:[%s235 + $0x5c] sm:$0xf]
      %v281 = vld [vmem:[%s235 + $0x60] sm:$0xf]
      %v282 = vld [vmem:[%s235 + $0x64] sm:$0xf]
      %v283 = vld [vmem:[%s235 + $0x68] sm:$0xf]
      %v284 = vld [vmem:[%s235 + $0x6c] sm:$0xf]
      %v285 = vld [vmem:[%s235 + $0x70] sm:$0xf]
      %v286 = vld [vmem:[%s235 + $0x74] sm:$0xf]
      %v287 = vld [vmem:[%s235 + $0x78] sm:$0xf]
      %v288 = vld [vmem:[%s235 + $0x7c] sm:$0xf]
      %v289 = vld [vmem:[%s235 + $0x80] sm:$0xf]
      %v290 = vld [vmem:[%s235 + $0x84] sm:$0xf]
      %v291 = vld [vmem:[%s235 + $0x88] sm:$0xf]
      %v292 = vld [vmem:[%s235 + $0x8c] sm:$0xf]
      %v293 = vld [vmem:[%s243] sm:$0xf]
      %v294 = vld [vmem:[%s243 + $0x4] sm:$0xf]
      %v295 = vld [vmem:[%s243 + $0x8] sm:$0xf]
      %v296 = vld [vmem:[%s243 + $0xc] sm:$0xf]
      %v297 = vld [vmem:[%s243 + $0x10] sm:$0xf]
      %v298 = vld [vmem:[%s243 + $0x14] sm:$0xf]
      %v299 = vld [vmem:[%s243 + $0x18] sm:$0xf]
      %v300 = vld [vmem:[%s243 + $0x1c] sm:$0xf]
      %v301 = vld [vmem:[%s243 + $0x20] sm:$0xf]
      %v302 = vld [vmem:[%s243 + $0x24] sm:$0xf]
      %v303 = vld [vmem:[%s243 + $0x28] sm:$0xf]
      %v304 = vld [vmem:[%s243 + $0x2c] sm:$0xf]
      %v305 = vld [vmem:[%s243 + $0x30] sm:$0xf]
      %v306 = vld [vmem:[%s243 + $0x34] sm:$0xf]
      %v307 = vld [vmem:[%s243 + $0x38] sm:$0xf]
      %v308 = vld [vmem:[%s243 + $0x3c] sm:$0xf]
      %v309 = vld [vmem:[%s235 + $0x90] sm:$0x1]
      %s310 = scalar_lea.vmem %s243, 64
      %v311 = vld [vmem:[%s310] sm:$0xf]
      %v312 = vld [vmem:[%s310 + $0x4] sm:$0xf]
      %v313 = vld [vmem:[%s310 + $0x8] sm:$0xf]
      %v314 = vld [vmem:[%s310 + $0xc] sm:$0xf]
      %v315 = vld [vmem:[%s310 + $0x10] sm:$0xf]
      %v316 = vld [vmem:[%s310 + $0x14] sm:$0xf]
      %v317 = vld [vmem:[%s310 + $0x18] sm:$0xf]
      %v318 = vld [vmem:[%s310 + $0x1c] sm:$0xf]
      %v319 = vld [vmem:[%s310 + $0x20] sm:$0xf]
      %v320 = vld [vmem:[%s310 + $0x24] sm:$0xf]
      %v321 = vld [vmem:[%s310 + $0x28] sm:$0xf]
      %v322 = vld [vmem:[%s310 + $0x2c] sm:$0xf]
      %v323 = vld [vmem:[%s310 + $0x30] sm:$0xf]
      %v324 = vld [vmem:[%s310 + $0x34] sm:$0xf]
      %v325 = vld [vmem:[%s310 + $0x38] sm:$0xf]
      %v326 = vld [vmem:[%s310 + $0x3c] sm:$0xf]
      %v364 = vunpack.c.l.b16 %v257
      %v365 = vunpack.c.l.b16 %v258
      %v366 = vunpack.c.l.b16 %v259
      %v367 = vunpack.c.l.b16 %v260
      %v368 = vunpack.c.l.b16 %v261
      %v369 = vunpack.c.l.b16 %v262
      %v370 = vunpack.c.l.b16 %v263
      %v371 = vunpack.c.l.b16 %v264
      %v372 = vunpack.c.l.b16 %v265
      %v373 = vunpack.c.l.b16 %v266
      %v374 = vunpack.c.l.b16 %v267
      %v375 = vunpack.c.l.b16 %v268
      %v376 = vunpack.c.l.b16 %v269
      %v377 = vunpack.c.l.b16 %v270
      %v378 = vunpack.c.l.b16 %v271
      %v379 = vunpack.c.l.b16 %v272
      %v380 = vunpack.c.l.b16 %v273
      %v381 = vunpack.c.l.b16 %v274
      %v382 = vunpack.c.l.b16 %v275
      %v383 = vunpack.c.l.b16 %v276
      %v384 = vunpack.c.l.b16 %v277
      %v385 = vunpack.c.l.b16 %v278
      %v386 = vunpack.c.l.b16 %v279
      %v387 = vunpack.c.l.b16 %v280
      %v388 = vunpack.c.l.b16 %v281
      %v389 = vunpack.c.l.b16 %v282
      %v390 = vunpack.c.l.b16 %v283
      %v391 = vunpack.c.l.b16 %v284
      %v392 = vunpack.c.l.b16 %v285
      %v393 = vunpack.c.l.b16 %v286
      %v394 = vunpack.c.l.b16 %v287
      %v395 = vunpack.c.l.b16 %v288
      %v396 = vunpack.c.l.b16 %v289
      %v397 = vunpack.c.l.b16 %v290
      %v398 = vunpack.c.l.b16 %v291
      %v399 = vunpack.c.l.b16 %v292
      %v400 = vunpack.c.l.b16 %v309
      %v401 = vpack.c.b16 %v365, %v364
      %v402 = vpack.c.b16 %v367, %v366
      %v403 = vpack.c.b16 %v369, %v368
      %v404 = vpack.c.b16 %v371, %v370
      %v405 = vpack.c.b16 %v373, %v372
      %v406 = vpack.c.b16 %v375, %v374
      %v407 = vpack.c.b16 %v377, %v376
      %v408 = vpack.c.b16 %v379, %v378
      %v409 = vpack.c.b16 %v381, %v380
      %v410 = vpack.c.b16 %v383, %v382
      %v411 = vpack.c.b16 %v385, %v384
      %v412 = vpack.c.b16 %v387, %v386
      %v413 = vpack.c.b16 %v389, %v388
      %v414 = vpack.c.b16 %v391, %v390
      %v415 = vpack.c.b16 %v393, %v392
      %v416 = vpack.c.b16 %v395, %v394
      %v417 = vpack.c.b16 %v397, %v396
      %v418 = vpack.c.b16 %v399, %v398
      %v419 = vpack.c.b16 %v400, %v400
      %vm420 = vsmask.f32 7424
      %v422 = vshrl.u32 %v401, 16
      %v424 = vshll.u32 %v401, 16
      %v426 = vrot.slane %v424, 1
      %v427 = vor.u32 %v422, %v426
      %v429 = vshll.u32 %v402, 16
      %v431 = vrot.slane %v429, 1
      %v432 = vsel %vm420, %v427, %v431
      %v433 = vshrl.u32 %v402, 16
      %v435 = vor.u32 %v433, %v431
      %v437 = vshll.u32 %v403, 16
      %v439 = vrot.slane %v437, 1
      %v440 = vsel %vm420, %v435, %v439
      %v441 = vshrl.u32 %v403, 16
      %v443 = vor.u32 %v441, %v439
      %v445 = vshll.u32 %v404, 16
      %v447 = vrot.slane %v445, 1
      %v448 = vsel %vm420, %v443, %v447
      %v449 = vshrl.u32 %v404, 16
      %v451 = vor.u32 %v449, %v447
      %v453 = vshll.u32 %v405, 16
      %v455 = vrot.slane %v453, 1
      %v456 = vsel %vm420, %v451, %v455
      %v457 = vshrl.u32 %v405, 16
      %v459 = vor.u32 %v457, %v455
      %v461 = vshll.u32 %v406, 16
      %v463 = vrot.slane %v461, 1
      %v464 = vsel %vm420, %v459, %v463
      %v465 = vshrl.u32 %v406, 16
      %v467 = vor.u32 %v465, %v463
      %v469 = vshll.u32 %v407, 16
      %v471 = vrot.slane %v469, 1
      %v472 = vsel %vm420, %v467, %v471
      %v473 = vshrl.u32 %v407, 16
      %v475 = vor.u32 %v473, %v471
      %v477 = vshll.u32 %v408, 16
      %v479 = vrot.slane %v477, 1
      %v480 = vsel %vm420, %v475, %v479
      %v481 = vshrl.u32 %v408, 16
      %v483 = vor.u32 %v481, %v479
      %v485 = vshll.u32 %v409, 16
      %v487 = vrot.slane %v485, 1
      %v488 = vsel %vm420, %v483, %v487
      %v489 = vshrl.u32 %v409, 16
      %v491 = vor.u32 %v489, %v487
      %v493 = vshll.u32 %v410, 16
      %v495 = vrot.slane %v493, 1
      %v496 = vsel %vm420, %v491, %v495
      %v497 = vshrl.u32 %v410, 16
      %v499 = vor.u32 %v497, %v495
      %v501 = vshll.u32 %v411, 16
      %v503 = vrot.slane %v501, 1
      %v504 = vsel %vm420, %v499, %v503
      %v505 = vshrl.u32 %v411, 16
      %v507 = vor.u32 %v505, %v503
      %v509 = vshll.u32 %v412, 16
      %v511 = vrot.slane %v509, 1
      %v512 = vsel %vm420, %v507, %v511
      %v513 = vshrl.u32 %v412, 16
      %v515 = vor.u32 %v513, %v511
      %v517 = vshll.u32 %v413, 16
      %v519 = vrot.slane %v517, 1
      %v520 = vsel %vm420, %v515, %v519
      %v521 = vshrl.u32 %v413, 16
      %v523 = vor.u32 %v521, %v519
      %v525 = vshll.u32 %v414, 16
      %v527 = vrot.slane %v525, 1
      %v528 = vsel %vm420, %v523, %v527
      %v529 = vshrl.u32 %v414, 16
      %v531 = vor.u32 %v529, %v527
      %v533 = vshll.u32 %v415, 16
      %v535 = vrot.slane %v533, 1
      %v536 = vsel %vm420, %v531, %v535
      %v537 = vshrl.u32 %v415, 16
      %v539 = vor.u32 %v537, %v535
      %v541 = vshll.u32 %v416, 16
      %v543 = vrot.slane %v541, 1
      %v544 = vsel %vm420, %v539, %v543
      %v545 = vshrl.u32 %v416, 16
      %v547 = vor.u32 %v545, %v543
      %v549 = vshll.u32 %v417, 16
      %v551 = vrot.slane %v549, 1
      %v552 = vsel %vm420, %v547, %v551
      %v553 = vshrl.u32 %v417, 16
      %v555 = vor.u32 %v553, %v551
      %v557 = vshll.u32 %v418, 16
      %v559 = vrot.slane %v557, 1
      %v560 = vsel %vm420, %v555, %v559
      %v561 = vshrl.u32 %v418, 16
      %v563 = vor.u32 %v561, %v559
      %v565 = vshll.u32 %v419, 16
      %v567 = vrot.slane %v565, 1
      %v568 = vsel %vm420, %v563, %v567
      %v603 = vunpack.c.l.b16 %v311
      %v604 = vunpack.c.l.b16 %v312
      %v605 = vunpack.c.l.b16 %v313
      %v606 = vunpack.c.l.b16 %v314
      %v607 = vunpack.c.l.b16 %v315
      %v608 = vunpack.c.l.b16 %v316
      %v609 = vunpack.c.l.b16 %v317
      %v610 = vunpack.c.l.b16 %v318
      %v611 = vunpack.c.l.b16 %v319
      %v612 = vunpack.c.l.b16 %v320
      %v613 = vunpack.c.l.b16 %v321
      %v614 = vunpack.c.l.b16 %v322
      %v615 = vunpack.c.l.b16 %v323
      %v616 = vunpack.c.l.b16 %v324
      %v617 = vunpack.c.l.b16 %v325
      %v618 = vunpack.c.l.b16 %v326
      %v619 = vpack.c.b16 %v604, %v603
      %v620 = vpack.c.b16 %v606, %v605
      %v621 = vpack.c.b16 %v608, %v607
      %v622 = vpack.c.b16 %v610, %v609
      %v623 = vpack.c.b16 %v612, %v611
      %v624 = vpack.c.b16 %v614, %v613
      %v625 = vpack.c.b16 %v616, %v615
      %v626 = vpack.c.b16 %v618, %v617
      %635 = vmatprep.subr.bf16.mxu0 0
      %636 = vmatpush1.bf16.msra.mxu0 %v619
      %637 = vmatprep.subr.bf16.mxu0 0
      %638 = vmatpush1.bf16.msra.mxu0 %v620
      %639 = vmatprep.subr.bf16.mxu0 0
      %640 = vmatpush1.bf16.msra.mxu0 %v621
      %641 = vmatprep.subr.bf16.mxu0 0
      %642 = vmatpush1.bf16.msra.mxu0 %v622
      %643 = vmatprep.subr.bf16.mxu0 0
      %644 = vmatpush1.bf16.msra.mxu0 %v623
      %645 = vmatprep.subr.bf16.mxu0 0
      %646 = vmatpush1.bf16.msra.mxu0 %v624
      %647 = vmatprep.subr.bf16.mxu0 0
      %648 = vmatpush1.bf16.msra.mxu0 %v625
      %649 = vmatprep.subr.bf16.mxu0 0
      %650 = vmatpush1.bf16.msra.mxu0 %v626
      %651 = vmatprep.subr.bf16.mxu0 0
      %652 = vmatpush1.bf16.msra.mxu0 0
      %653 = vmatprep.subr.bf16.mxu0 0
      %654 = vmatpush1.bf16.msra.mxu0 0
      %655 = vmatprep.subr.bf16.mxu0 0
      %656 = vmatpush1.bf16.msra.mxu0 0
      %657 = vmatprep.subr.bf16.mxu0 0
      %658 = vmatpush1.bf16.msra.mxu0 0
      %659 = vmatprep.subr.bf16.mxu0 0
      %660 = vmatpush1.bf16.msra.mxu0 0
      %661 = vmatprep.subr.bf16.mxu0 0
      %662 = vmatpush1.bf16.msra.mxu0 0
      %663 = vmatprep.subr.bf16.mxu0 0
      %664 = vmatpush1.bf16.msra.mxu0 0
      %665 = vmatprep.subr.bf16.mxu0 0
      %666 = vmatpush1.bf16.msra.mxu0 0
      %667 = vmatprep.mubr.bf16.mxu0 0
      %668 = vmatmul.mubr.bf16.gmra.mrb[0].mxu0 %v432
      %v669 = vpop.f32.mrb[0].mxu0
      %v670 = vadd.f32 0.0, %v669
      %v671 = vpop.f32.mrb[0].mxu0
      %v672 = vpop.f32.mrb[0].mxu0
      %v673 = vadd.f32 0.0, %v672
      %v674 = vpop.f32.mrb[0].mxu0
      %675 = vmatprep.mubr.bf16.mxu0 0
      %676 = vmatmul.mubr.bf16.gmra.mrb[0].mxu0 %v440
      %v677 = vpop.f32.mrb[0].mxu0
      %v678 = vadd.f32 0.0, %v677
      %v679 = vpop.f32.mrb[0].mxu0
      %v680 = vpop.f32.mrb[0].mxu0
      %v681 = vadd.f32 0.0, %v680
      %v682 = vpop.f32.mrb[0].mxu0
      %683 = vmatprep.mubr.bf16.mxu0 0
      %684 = vmatmul.mubr.bf16.gmra.mrb[0].mxu0 %v448
      %v685 = vpop.f32.mrb[0].mxu0
      %v686 = vadd.f32 0.0, %v685
      %v687 = vpop.f32.mrb[0].mxu0
      %v688 = vpop.f32.mrb[0].mxu0
      %v689 = vadd.f32 0.0, %v688
      %v690 = vpop.f32.mrb[0].mxu0
      %691 = vmatprep.mubr.bf16.mxu0 0
      %692 = vmatmul.mubr.bf16.gmra.mrb[0].mxu0 %v456
      %v693 = vpop.f32.mrb[0].mxu0
      %v694 = vadd.f32 0.0, %v693
      %v695 = vpop.f32.mrb[0].mxu0
      %v696 = vpop.f32.mrb[0].mxu0
      %v697 = vadd.f32 0.0, %v696
      %v698 = vpop.f32.mrb[0].mxu0
      %699 = vmatprep.mubr.bf16.mxu0 0
      %700 = vmatmul.mubr.bf16.gmra.mrb[0].mxu0 %v464
      %v701 = vpop.f32.mrb[0].mxu0
      %v702 = vadd.f32 0.0, %v701
      %v703 = vpop.f32.mrb[0].mxu0
      %v704 = vpop.f32.mrb[0].mxu0
      %v705 = vadd.f32 0.0, %v704
      %v706 = vpop.f32.mrb[0].mxu0
      %707 = vmatprep.mubr.bf16.mxu0 0
      %708 = vmatmul.mubr.bf16.gmra.mrb[0].mxu0 %v472
      %v709 = vpop.f32.mrb[0].mxu0
      %v710 = vadd.f32 0.0, %v709
      %v711 = vpop.f32.mrb[0].mxu0
      %v712 = vpop.f32.mrb[0].mxu0
      %v713 = vadd.f32 0.0, %v712
      %v714 = vpop.f32.mrb[0].mxu0
      %715 = vmatprep.mubr.bf16.mxu0 0
      %716 = vmatmul.mubr.bf16.gmra.mrb[0].mxu0 %v480
      %v717 = vpop.f32.mrb[0].mxu0
      %v718 = vadd.f32 0.0, %v717
      %v719 = vpop.f32.mrb[0].mxu0
      %v720 = vpop.f32.mrb[0].mxu0
      %v721 = vadd.f32 0.0, %v720
      %v722 = vpop.f32.mrb[0].mxu0
      %723 = vmatprep.mubr.bf16.mxu0 0
      %724 = vmatmul.mubr.bf16.gmra.mrb[0].mxu0 %v488
      %v725 = vpop.f32.mrb[0].mxu0
      %v726 = vadd.f32 0.0, %v725
      %v727 = vpop.f32.mrb[0].mxu0
      %v728 = vpop.f32.mrb[0].mxu0
      %v729 = vadd.f32 0.0, %v728
      %v730 = vpop.f32.mrb[0].mxu0
      %731 = vmatprep.mubr.bf16.mxu0 0
      %732 = vmatmul.mubr.bf16.gmra.mrb[0].mxu0 %v496
      %v733 = vpop.f32.mrb[0].mxu0
      %v734 = vadd.f32 0.0, %v733
      %v735 = vpop.f32.mrb[0].mxu0
      %v736 = vpop.f32.mrb[0].mxu0
      %v737 = vadd.f32 0.0, %v736
      %v738 = vpop.f32.mrb[0].mxu0
      %739 = vmatprep.mubr.bf16.mxu0 0
      %740 = vmatmul.mubr.bf16.gmra.mrb[0].mxu0 %v504
      %v741 = vpop.f32.mrb[0].mxu0
      %v742 = vadd.f32 0.0, %v741
      %v743 = vpop.f32.mrb[0].mxu0
      %v744 = vpop.f32.mrb[0].mxu0
      %v745 = vadd.f32 0.0, %v744
      %v746 = vpop.f32.mrb[0].mxu0
      %747 = vmatprep.mubr.bf16.mxu0 0
      %748 = vmatmul.mubr.bf16.gmra.mrb[0].mxu0 %v512
      %v749 = vpop.f32.mrb[0].mxu0
      %v750 = vadd.f32 0.0, %v749
      %v751 = vpop.f32.mrb[0].mxu0
      %v752 = vpop.f32.mrb[0].mxu0
      %v753 = vadd.f32 0.0, %v752
      %v754 = vpop.f32.mrb[0].mxu0
      %755 = vmatprep.mubr.bf16.mxu0 0
      %756 = vmatmul.mubr.bf16.gmra.mrb[0].mxu0 %v520
      %v757 = vpop.f32.mrb[0].mxu0
      %v758 = vadd.f32 0.0, %v757
      %v759 = vpop.f32.mrb[0].mxu0
      %v760 = vpop.f32.mrb[0].mxu0
      %v761 = vadd.f32 0.0, %v760
      %v762 = vpop.f32.mrb[0].mxu0
      %763 = vmatprep.mubr.bf16.mxu0 0
      %764 = vmatmul.mubr.bf16.gmra.mrb[0].mxu0 %v528
      %v765 = vpop.f32.mrb[0].mxu0
      %v766 = vadd.f32 0.0, %v765
      %v767 = vpop.f32.mrb[0].mxu0
      %v768 = vpop.f32.mrb[0].mxu0
      %v769 = vadd.f32 0.0, %v768
      %v770 = vpop.f32.mrb[0].mxu0
      %771 = vmatprep.mubr.bf16.mxu0 0
      %772 = vmatmul.mubr.bf16.gmra.mrb[0].mxu0 %v536
      %v773 = vpop.f32.mrb[0].mxu0
      %v774 = vadd.f32 0.0, %v773
      %v775 = vpop.f32.mrb[0].mxu0
      %v776 = vpop.f32.mrb[0].mxu0
      %v777 = vadd.f32 0.0, %v776
      %v778 = vpop.f32.mrb[0].mxu0
      %779 = vmatprep.mubr.bf16.mxu0 0
      %780 = vmatmul.mubr.bf16.gmra.mrb[0].mxu0 %v544
      %v781 = vpop.f32.mrb[0].mxu0
      %v782 = vadd.f32 0.0, %v781
      %v783 = vpop.f32.mrb[0].mxu0
      %v784 = vpop.f32.mrb[0].mxu0
      %v785 = vadd.f32 0.0, %v784
      %v786 = vpop.f32.mrb[0].mxu0
      %787 = vmatprep.mubr.bf16.mxu0 0
      %788 = vmatmul.mubr.bf16.gmra.mrb[0].mxu0 %v552
      %v789 = vpop.f32.mrb[0].mxu0
      %v790 = vadd.f32 0.0, %v789
      %v791 = vpop.f32.mrb[0].mxu0
      %v792 = vpop.f32.mrb[0].mxu0
      %v793 = vadd.f32 0.0, %v792
      %v794 = vpop.f32.mrb[0].mxu0
      %795 = vmatprep.mubr.bf16.mxu0 0
      %796 = vmatmul.mubr.bf16.gmra.mrb[0].mxu0 %v560
      %v797 = vpop.f32.mrb[0].mxu0
      %v798 = vadd.f32 0.0, %v797
      %v799 = vpop.f32.mrb[0].mxu0
      %v800 = vpop.f32.mrb[0].mxu0
      %v801 = vadd.f32 0.0, %v800
      %v802 = vpop.f32.mrb[0].mxu0
      %803 = vmatprep.mubr.bf16.mxu0 0
      %804 = vmatmul.mubr.bf16.gmra.mrb[0].mxu0 %v568
      %v805 = vpop.f32.mrb[0].mxu0
      %v806 = vadd.f32 0.0, %v805
      %v807 = vpop.f32.mrb[0].mxu0
      %v808 = vpop.f32.mrb[0].mxu0
      %v809 = vadd.f32 0.0, %v808
      %v810 = vpop.f32.mrb[0].mxu0
      %811 = vdwg.mxu0
      %v846 = vunpack.c.l.b16 %v293
      %v847 = vunpack.c.l.b16 %v294
      %v848 = vunpack.c.l.b16 %v295
      %v849 = vunpack.c.l.b16 %v296
      %v850 = vunpack.c.l.b16 %v297
      %v851 = vunpack.c.l.b16 %v298
      %v852 = vunpack.c.l.b16 %v299
      %v853 = vunpack.c.l.b16 %v300
      %v854 = vunpack.c.l.b16 %v301
      %v855 = vunpack.c.l.b16 %v302
      %v856 = vunpack.c.l.b16 %v303
      %v857 = vunpack.c.l.b16 %v304
      %v858 = vunpack.c.l.b16 %v305
      %v859 = vunpack.c.l.b16 %v306
      %v860 = vunpack.c.l.b16 %v307
      %v861 = vunpack.c.l.b16 %v308
      %v862 = vpack.c.b16 %v847, %v846
      %v863 = vpack.c.b16 %v849, %v848
      %v864 = vpack.c.b16 %v851, %v850
      %v865 = vpack.c.b16 %v853, %v852
      %v866 = vpack.c.b16 %v855, %v854
      %v867 = vpack.c.b16 %v857, %v856
      %v868 = vpack.c.b16 %v859, %v858
      %v869 = vpack.c.b16 %v861, %v860
      %878 = vmatprep.subr.bf16.mxu0 0
      %879 = vmatpush1.bf16.msra.mxu0 %v862
      %880 = vmatprep.subr.bf16.mxu0 0
      %881 = vmatpush1.bf16.msra.mxu0 %v863
      %882 = vmatprep.subr.bf16.mxu0 0
      %883 = vmatpush1.bf16.msra.mxu0 %v864
      %884 = vmatprep.subr.bf16.mxu0 0
      %885 = vmatpush1.bf16.msra.mxu0 %v865
      %886 = vmatprep.subr.bf16.mxu0 0
      %887 = vmatpush1.bf16.msra.mxu0 %v866
      %888 = vmatprep.subr.bf16.mxu0 0
      %889 = vmatpush1.bf16.msra.mxu0 %v867
      %890 = vmatprep.subr.bf16.mxu0 0
      %891 = vmatpush1.bf16.msra.mxu0 %v868
      %892 = vmatprep.subr.bf16.mxu0 0
      %893 = vmatpush1.bf16.msra.mxu0 %v869
      %894 = vmatprep.subr.bf16.mxu0 0
      %895 = vmatpush1.bf16.msra.mxu0 0
      %896 = vmatprep.subr.bf16.mxu0 0
      %897 = vmatpush1.bf16.msra.mxu0 0
      %898 = vmatprep.subr.bf16.mxu0 0
      %899 = vmatpush1.bf16.msra.mxu0 0
      %900 = vmatprep.subr.bf16.mxu0 0
      %901 = vmatpush1.bf16.msra.mxu0 0
      %902 = vmatprep.subr.bf16.mxu0 0
      %903 = vmatpush1.bf16.msra.mxu0 0
      %904 = vmatprep.subr.bf16.mxu0 0
      %905 = vmatpush1.bf16.msra.mxu0 0
      %906 = vmatprep.subr.bf16.mxu0 0
      %907 = vmatpush1.bf16.msra.mxu0 0
      %908 = vmatprep.subr.bf16.mxu0 0
      %909 = vmatpush1.bf16.msra.mxu0 0
      %910 = vmatprep.mubr.bf16.mxu0 0
      %911 = vmatmul.mubr.bf16.gmra.mrb[0].mxu0 %v401
      %v912 = vpop.f32.mrb[0].mxu0
      %v913 = vadd.f32 %v670, %v912
      %v914 = vpop.f32.mrb[0].mxu0
      %v915 = vpop.f32.mrb[0].mxu0
      %v916 = vadd.f32 %v673, %v915
      %v917 = vpop.f32.mrb[0].mxu0
      %918 = vmatprep.mubr.bf16.mxu0 0
      %919 = vmatmul.mubr.bf16.gmra.mrb[0].mxu0 %v402
      %v920 = vpop.f32.mrb[0].mxu0
      %v921 = vadd.f32 %v678, %v920
      %v922 = vpop.f32.mrb[0].mxu0
      %v923 = vpop.f32.mrb[0].mxu0
      %v924 = vadd.f32 %v681, %v923
      %v925 = vpop.f32.mrb[0].mxu0
      %926 = vmatprep.mubr.bf16.mxu0 0
      %927 = vmatmul.mubr.bf16.gmra.mrb[0].mxu0 %v403
      %v928 = vpop.f32.mrb[0].mxu0
      %v929 = vadd.f32 %v686, %v928
      %v930 = vpop.f32.mrb[0].mxu0
      %v931 = vpop.f32.mrb[0].mxu0
      %v932 = vadd.f32 %v689, %v931
      %v933 = vpop.f32.mrb[0].mxu0
      %934 = vmatprep.mubr.bf16.mxu0 0
      %935 = vmatmul.mubr.bf16.gmra.mrb[0].mxu0 %v404
      %v936 = vpop.f32.mrb[0].mxu0
      %v937 = vadd.f32 %v694, %v936
      %v938 = vpop.f32.mrb[0].mxu0
      %v939 = vpop.f32.mrb[0].mxu0
      %v940 = vadd.f32 %v697, %v939
      %v941 = vpop.f32.mrb[0].mxu0
      %942 = vmatprep.mubr.bf16.mxu0 0
      %943 = vmatmul.mubr.bf16.gmra.mrb[0].mxu0 %v405
      %v944 = vpop.f32.mrb[0].mxu0
      %v945 = vadd.f32 %v702, %v944
      %v946 = vpop.f32.mrb[0].mxu0
      %v947 = vpop.f32.mrb[0].mxu0
      %v948 = vadd.f32 %v705, %v947
      %v949 = vpop.f32.mrb[0].mxu0
      %950 = vmatprep.mubr.bf16.mxu0 0
      %951 = vmatmul.mubr.bf16.gmra.mrb[0].mxu0 %v406
      %v952 = vpop.f32.mrb[0].mxu0
      %v953 = vadd.f32 %v710, %v952
      %v954 = vpop.f32.mrb[0].mxu0
      %v955 = vpop.f32.mrb[0].mxu0
      %v956 = vadd.f32 %v713, %v955
      %v957 = vpop.f32.mrb[0].mxu0
      %958 = vmatprep.mubr.bf16.mxu0 0
      %959 = vmatmul.mubr.bf16.gmra.mrb[0].mxu0 %v407
      %v960 = vpop.f32.mrb[0].mxu0
      %v961 = vadd.f32 %v718, %v960
      %v962 = vpop.f32.mrb[0].mxu0
      %v963 = vpop.f32.mrb[0].mxu0
      %v964 = vadd.f32 %v721, %v963
      %v965 = vpop.f32.mrb[0].mxu0
      %966 = vmatprep.mubr.bf16.mxu0 0
      %967 = vmatmul.mubr.bf16.gmra.mrb[0].mxu0 %v408
      %v968 = vpop.f32.mrb[0].mxu0
      %v969 = vadd.f32 %v726, %v968
      %v970 = vpop.f32.mrb[0].mxu0
      %v971 = vpop.f32.mrb[0].mxu0
      %v972 = vadd.f32 %v729, %v971
      %v973 = vpop.f32.mrb[0].mxu0
      %974 = vmatprep.mubr.bf16.mxu0 0
      %975 = vmatmul.mubr.bf16.gmra.mrb[0].mxu0 %v409
      %v976 = vpop.f32.mrb[0].mxu0
      %v977 = vadd.f32 %v734, %v976
      %v978 = vpop.f32.mrb[0].mxu0
      %v979 = vpop.f32.mrb[0].mxu0
      %v980 = vadd.f32 %v737, %v979
      %v981 = vpop.f32.mrb[0].mxu0
      %982 = vmatprep.mubr.bf16.mxu0 0
      %983 = vmatmul.mubr.bf16.gmra.mrb[0].mxu0 %v410
      %v984 = vpop.f32.mrb[0].mxu0
      %v985 = vadd.f32 %v742, %v984
      %v986 = vpop.f32.mrb[0].mxu0
      %v987 = vpop.f32.mrb[0].mxu0
      %v988 = vadd.f32 %v745, %v987
      %v989 = vpop.f32.mrb[0].mxu0
      %990 = vmatprep.mubr.bf16.mxu0 0
      %991 = vmatmul.mubr.bf16.gmra.mrb[0].mxu0 %v411
      %v992 = vpop.f32.mrb[0].mxu0
      %v993 = vadd.f32 %v750, %v992
      %v994 = vpop.f32.mrb[0].mxu0
      %v995 = vpop.f32.mrb[0].mxu0
      %v996 = vadd.f32 %v753, %v995
      %v997 = vpop.f32.mrb[0].mxu0
      %998 = vmatprep.mubr.bf16.mxu0 0
      %999 = vmatmul.mubr.bf16.gmra.mrb[0].mxu0 %v412
      %v1000 = vpop.f32.mrb[0].mxu0
      %v1001 = vadd.f32 %v758, %v1000
      %v1002 = vpop.f32.mrb[0].mxu0
      %v1003 = vpop.f32.mrb[0].mxu0
      %v1004 = vadd.f32 %v761, %v1003
      %v1005 = vpop.f32.mrb[0].mxu0
      %1006 = vmatprep.mubr.bf16.mxu0 0
      %1007 = vmatmul.mubr.bf16.gmra.mrb[0].mxu0 %v413
      %v1008 = vpop.f32.mrb[0].mxu0
      %v1009 = vadd.f32 %v766, %v1008
      %v1010 = vpop.f32.mrb[0].mxu0
      %v1011 = vpop.f32.mrb[0].mxu0
      %v1012 = vadd.f32 %v769, %v1011
      %v1013 = vpop.f32.mrb[0].mxu0
      %1014 = vmatprep.mubr.bf16.mxu0 0
      %1015 = vmatmul.mubr.bf16.gmra.mrb[0].mxu0 %v414
      %v1016 = vpop.f32.mrb[0].mxu0
      %v1017 = vadd.f32 %v774, %v1016
      %v1018 = vpop.f32.mrb[0].mxu0
      %v1019 = vpop.f32.mrb[0].mxu0
      %v1020 = vadd.f32 %v777, %v1019
      %v1021 = vpop.f32.mrb[0].mxu0
      %1022 = vmatprep.mubr.bf16.mxu0 0
      %1023 = vmatmul.mubr.bf16.gmra.mrb[0].mxu0 %v415
      %v1024 = vpop.f32.mrb[0].mxu0
      %v1025 = vadd.f32 %v782, %v1024
      %v1026 = vpop.f32.mrb[0].mxu0
      %v1027 = vpop.f32.mrb[0].mxu0
      %v1028 = vadd.f32 %v785, %v1027
      %v1029 = vpop.f32.mrb[0].mxu0
      %1030 = vmatprep.mubr.bf16.mxu0 0
      %1031 = vmatmul.mubr.bf16.gmra.mrb[0].mxu0 %v416
      %v1032 = vpop.f32.mrb[0].mxu0
      %v1033 = vadd.f32 %v790, %v1032
      %v1034 = vpop.f32.mrb[0].mxu0
      %v1035 = vpop.f32.mrb[0].mxu0
      %v1036 = vadd.f32 %v793, %v1035
      %v1037 = vpop.f32.mrb[0].mxu0
      %1038 = vmatprep.mubr.bf16.mxu0 0
      %1039 = vmatmul.mubr.bf16.gmra.mrb[0].mxu0 %v417
      %v1040 = vpop.f32.mrb[0].mxu0
      %v1041 = vadd.f32 %v798, %v1040
      %v1042 = vpop.f32.mrb[0].mxu0
      %v1043 = vpop.f32.mrb[0].mxu0
      %v1044 = vadd.f32 %v801, %v1043
      %v1045 = vpop.f32.mrb[0].mxu0
      %1046 = vmatprep.mubr.bf16.mxu0 0
      %1047 = vmatmul.mubr.bf16.gmra.mrb[0].mxu0 %v418
      %v1048 = vpop.f32.mrb[0].mxu0
      %v1049 = vadd.f32 %v806, %v1048
      %v1050 = vpop.f32.mrb[0].mxu0
      %v1051 = vpop.f32.mrb[0].mxu0
      %v1052 = vadd.f32 %v809, %v1051
      %v1053 = vpop.f32.mrb[0].mxu0
      %1054 = vdwg.mxu0
      %v1055 = vld [vmem:[%s235] sm:$0xe]
      %s1056 = scalar_lea.vmem %s243, 128
      %v1057 = vld [vmem:[%s1056] sm:$0xf]
      %v1058 = vld [vmem:[%s1056 + $0x4] sm:$0xf]
      %v1059 = vld [vmem:[%s1056 + $0x8] sm:$0xf]
      %v1060 = vld [vmem:[%s1056 + $0xc] sm:$0xf]
      %v1061 = vld [vmem:[%s1056 + $0x10] sm:$0xf]
      %v1062 = vld [vmem:[%s1056 + $0x14] sm:$0xf]
      %v1063 = vld [vmem:[%s1056 + $0x18] sm:$0xf]
      %v1064 = vld [vmem:[%s1056 + $0x1c] sm:$0xf]
      %v1065 = vld [vmem:[%s1056 + $0x20] sm:$0xf]
      %v1066 = vld [vmem:[%s1056 + $0x24] sm:$0xf]
      %v1067 = vld [vmem:[%s1056 + $0x28] sm:$0xf]
      %v1068 = vld [vmem:[%s1056 + $0x2c] sm:$0xf]
      %v1069 = vld [vmem:[%s1056 + $0x30] sm:$0xf]
      %v1070 = vld [vmem:[%s1056 + $0x34] sm:$0xf]
      %v1071 = vld [vmem:[%s1056 + $0x38] sm:$0xf]
      %v1072 = vld [vmem:[%s1056 + $0x3c] sm:$0xf]
      %v1074 = vunpack.c.l.b16 %v1055
      %v1075 = vpack.c.b16 %v365, %v1074
      %vm1076 = vcmask 1046528
      %v1077 = vrot.slane %v1075, 1
      %v1078 = vrot.slane %v402, 1
      %v1079 = vsel %vm1076, %v1077, %v1078
      %v1080 = vrot.slane %v403, 1
      %v1081 = vsel %vm1076, %v1078, %v1080
      %v1082 = vrot.slane %v404, 1
      %v1083 = vsel %vm1076, %v1080, %v1082
      %v1084 = vrot.slane %v405, 1
      %v1085 = vsel %vm1076, %v1082, %v1084
      %v1086 = vrot.slane %v406, 1
      %v1087 = vsel %vm1076, %v1084, %v1086
      %v1088 = vrot.slane %v407, 1
      %v1089 = vsel %vm1076, %v1086, %v1088
      %v1090 = vrot.slane %v408, 1
      %v1091 = vsel %vm1076, %v1088, %v1090
      %v1092 = vrot.slane %v409, 1
      %v1093 = vsel %vm1076, %v1090, %v1092
      %v1094 = vrot.slane %v410, 1
      %v1095 = vsel %vm1076, %v1092, %v1094
      %v1096 = vrot.slane %v411, 1
      %v1097 = vsel %vm1076, %v1094, %v1096
      %v1098 = vrot.slane %v412, 1
      %v1099 = vsel %vm1076, %v1096, %v1098
      %v1100 = vrot.slane %v413, 1
      %v1101 = vsel %vm1076, %v1098, %v1100
      %v1102 = vrot.slane %v414, 1
      %v1103 = vsel %vm1076, %v1100, %v1102
      %v1104 = vrot.slane %v415, 1
      %v1105 = vsel %vm1076, %v1102, %v1104
      %v1106 = vrot.slane %v416, 1
      %v1107 = vsel %vm1076, %v1104, %v1106
      %v1108 = vrot.slane %v417, 1
      %v1109 = vsel %vm1076, %v1106, %v1108
      %v1110 = vrot.slane %v418, 1
      %v1111 = vsel %vm1076, %v1108, %v1110
      %v1112 = vrot.slane %v419, 1
      %v1113 = vsel %vm1076, %v1110, %v1112
      %v1148 = vunpack.c.l.b16 %v1057
      %v1149 = vunpack.c.l.b16 %v1058
      %v1150 = vunpack.c.l.b16 %v1059
      %v1151 = vunpack.c.l.b16 %v1060
      %v1152 = vunpack.c.l.b16 %v1061
      %v1153 = vunpack.c.l.b16 %v1062
      %v1154 = vunpack.c.l.b16 %v1063
      %v1155 = vunpack.c.l.b16 %v1064
      %v1156 = vunpack.c.l.b16 %v1065
      %v1157 = vunpack.c.l.b16 %v1066
      %v1158 = vunpack.c.l.b16 %v1067
      %v1159 = vunpack.c.l.b16 %v1068
      %v1160 = vunpack.c.l.b16 %v1069
      %v1161 = vunpack.c.l.b16 %v1070
      %v1162 = vunpack.c.l.b16 %v1071
      %v1163 = vunpack.c.l.b16 %v1072
      %v1164 = vpack.c.b16 %v1149, %v1148
      %v1165 = vpack.c.b16 %v1151, %v1150
      %v1166 = vpack.c.b16 %v1153, %v1152
      %v1167 = vpack.c.b16 %v1155, %v1154
      %v1168 = vpack.c.b16 %v1157, %v1156
      %v1169 = vpack.c.b16 %v1159, %v1158
      %v1170 = vpack.c.b16 %v1161, %v1160
      %v1171 = vpack.c.b16 %v1163, %v1162
      %1180 = vmatprep.subr.bf16.mxu0 0
      %1181 = vmatpush1.bf16.msra.mxu0 %v1164
      %1182 = vmatprep.subr.bf16.mxu0 0
      %1183 = vmatpush1.bf16.msra.mxu0 %v1165
      %1184 = vmatprep.subr.bf16.mxu0 0
      %1185 = vmatpush1.bf16.msra.mxu0 %v1166
      %1186 = vmatprep.subr.bf16.mxu0 0
      %1187 = vmatpush1.bf16.msra.mxu0 %v1167
      %1188 = vmatprep.subr.bf16.mxu0 0
      %1189 = vmatpush1.bf16.msra.mxu0 %v1168
      %1190 = vmatprep.subr.bf16.mxu0 0
      %1191 = vmatpush1.bf16.msra.mxu0 %v1169
      %1192 = vmatprep.subr.bf16.mxu0 0
      %1193 = vmatpush1.bf16.msra.mxu0 %v1170
      %1194 = vmatprep.subr.bf16.mxu0 0
      %1195 = vmatpush1.bf16.msra.mxu0 %v1171
      %1196 = vmatprep.subr.bf16.mxu0 0
      %1197 = vmatpush1.bf16.msra.mxu0 0
      %1198 = vmatprep.subr.bf16.mxu0 0
      %1199 = vmatpush1.bf16.msra.mxu0 0
      %1200 = vmatprep.subr.bf16.mxu0 0
      %1201 = vmatpush1.bf16.msra.mxu0 0
      %1202 = vmatprep.subr.bf16.mxu0 0
      %1203 = vmatpush1.bf16.msra.mxu0 0
      %1204 = vmatprep.subr.bf16.mxu0 0
      %1205 = vmatpush1.bf16.msra.mxu0 0
      %1206 = vmatprep.subr.bf16.mxu0 0
      %1207 = vmatpush1.bf16.msra.mxu0 0
      %1208 = vmatprep.subr.bf16.mxu0 0
      %1209 = vmatpush1.bf16.msra.mxu0 0
      %1210 = vmatprep.subr.bf16.mxu0 0
      %1211 = vmatpush1.bf16.msra.mxu0 0
      %1212 = vmatprep.mubr.bf16.mxu0 0
      %1213 = vmatmul.mubr.bf16.gmra.mrb[0].mxu0 %v1079
      %v1214 = vpop.f32.mrb[0].mxu0
      %v1215 = vadd.f32 0.0, %v1214
      %v1216 = vpop.f32.mrb[0].mxu0
      %v1217 = vpop.f32.mrb[0].mxu0
      %v1218 = vadd.f32 0.0, %v1217
      %v1219 = vpop.f32.mrb[0].mxu0
      %1220 = vmatprep.mubr.bf16.mxu0 0
      %1221 = vmatmul.mubr.bf16.gmra.mrb[0].mxu0 %v1081
      %v1222 = vpop.f32.mrb[0].mxu0
      %v1223 = vadd.f32 0.0, %v1222
      %v1224 = vpop.f32.mrb[0].mxu0
      %v1225 = vpop.f32.mrb[0].mxu0
      %v1226 = vadd.f32 0.0, %v1225
      %v1227 = vpop.f32.mrb[0].mxu0
      %1228 = vmatprep.mubr.bf16.mxu0 0
      %1229 = vmatmul.mubr.bf16.gmra.mrb[0].mxu0 %v1083
      %v1230 = vpop.f32.mrb[0].mxu0
      %v1231 = vadd.f32 0.0, %v1230
      %v1232 = vpop.f32.mrb[0].mxu0
      %v1233 = vpop.f32.mrb[0].mxu0
      %v1234 = vadd.f32 0.0, %v1233
      %v1235 = vpop.f32.mrb[0].mxu0
      %1236 = vmatprep.mubr.bf16.mxu0 0
      %1237 = vmatmul.mubr.bf16.gmra.mrb[0].mxu0 %v1085
      %v1238 = vpop.f32.mrb[0].mxu0
      %v1239 = vadd.f32 0.0, %v1238
      %v1240 = vpop.f32.mrb[0].mxu0
      %v1241 = vpop.f32.mrb[0].mxu0
      %v1242 = vadd.f32 0.0, %v1241
      %v1243 = vpop.f32.mrb[0].mxu0
      %1244 = vmatprep.mubr.bf16.mxu0 0
      %1245 = vmatmul.mubr.bf16.gmra.mrb[0].mxu0 %v1087
      %v1246 = vpop.f32.mrb[0].mxu0
      %v1247 = vadd.f32 0.0, %v1246
      %v1248 = vpop.f32.mrb[0].mxu0
      %v1249 = vpop.f32.mrb[0].mxu0
      %v1250 = vadd.f32 0.0, %v1249
      %v1251 = vpop.f32.mrb[0].mxu0
      %1252 = vmatprep.mubr.bf16.mxu0 0
      %1253 = vmatmul.mubr.bf16.gmra.mrb[0].mxu0 %v1089
      %v1254 = vpop.f32.mrb[0].mxu0
      %v1255 = vadd.f32 0.0, %v1254
      %v1256 = vpop.f32.mrb[0].mxu0
      %v1257 = vpop.f32.mrb[0].mxu0
      %v1258 = vadd.f32 0.0, %v1257
      %v1259 = vpop.f32.mrb[0].mxu0
      %1260 = vmatprep.mubr.bf16.mxu0 0
      %1261 = vmatmul.mubr.bf16.gmra.mrb[0].mxu0 %v1091
      %v1262 = vpop.f32.mrb[0].mxu0
      %v1263 = vadd.f32 0.0, %v1262
      %v1264 = vpop.f32.mrb[0].mxu0
      %v1265 = vpop.f32.mrb[0].mxu0
      %v1266 = vadd.f32 0.0, %v1265
      %v1267 = vpop.f32.mrb[0].mxu0
      %1268 = vmatprep.mubr.bf16.mxu0 0
      %1269 = vmatmul.mubr.bf16.gmra.mrb[0].mxu0 %v1093
      %v1270 = vpop.f32.mrb[0].mxu0
      %v1271 = vadd.f32 0.0, %v1270
      %v1272 = vpop.f32.mrb[0].mxu0
      %v1273 = vpop.f32.mrb[0].mxu0
      %v1274 = vadd.f32 0.0, %v1273
      %v1275 = vpop.f32.mrb[0].mxu0
      %1276 = vmatprep.mubr.bf16.mxu0 0
      %1277 = vmatmul.mubr.bf16.gmra.mrb[0].mxu0 %v1095
      %v1278 = vpop.f32.mrb[0].mxu0
      %v1279 = vadd.f32 0.0, %v1278
      %v1280 = vpop.f32.mrb[0].mxu0
      %v1281 = vpop.f32.mrb[0].mxu0
      %v1282 = vadd.f32 0.0, %v1281
      %v1283 = vpop.f32.mrb[0].mxu0
      %1284 = vmatprep.mubr.bf16.mxu0 0
      %1285 = vmatmul.mubr.bf16.gmra.mrb[0].mxu0 %v1097
      %v1286 = vpop.f32.mrb[0].mxu0
      %v1287 = vadd.f32 0.0, %v1286
      %v1288 = vpop.f32.mrb[0].mxu0
      %v1289 = vpop.f32.mrb[0].mxu0
      %v1290 = vadd.f32 0.0, %v1289
      %v1291 = vpop.f32.mrb[0].mxu0
      %1292 = vmatprep.mubr.bf16.mxu0 0
      %1293 = vmatmul.mubr.bf16.gmra.mrb[0].mxu0 %v1099
      %v1294 = vpop.f32.mrb[0].mxu0
      %v1295 = vadd.f32 0.0, %v1294
      %v1296 = vpop.f32.mrb[0].mxu0
      %v1297 = vpop.f32.mrb[0].mxu0
      %v1298 = vadd.f32 0.0, %v1297
      %v1299 = vpop.f32.mrb[0].mxu0
      %1300 = vmatprep.mubr.bf16.mxu0 0
      %1301 = vmatmul.mubr.bf16.gmra.mrb[0].mxu0 %v1101
      %v1302 = vpop.f32.mrb[0].mxu0
      %v1303 = vadd.f32 0.0, %v1302
      %v1304 = vpop.f32.mrb[0].mxu0
      %v1305 = vpop.f32.mrb[0].mxu0
      %v1306 = vadd.f32 0.0, %v1305
      %v1307 = vpop.f32.mrb[0].mxu0
      %1308 = vmatprep.mubr.bf16.mxu0 0
      %1309 = vmatmul.mubr.bf16.gmra.mrb[0].mxu0 %v1103
      %v1310 = vpop.f32.mrb[0].mxu0
      %v1311 = vadd.f32 0.0, %v1310
      %v1312 = vpop.f32.mrb[0].mxu0
      %v1313 = vpop.f32.mrb[0].mxu0
      %v1314 = vadd.f32 0.0, %v1313
      %v1315 = vpop.f32.mrb[0].mxu0
      %1316 = vmatprep.mubr.bf16.mxu0 0
      %1317 = vmatmul.mubr.bf16.gmra.mrb[0].mxu0 %v1105
      %v1318 = vpop.f32.mrb[0].mxu0
      %v1319 = vadd.f32 0.0, %v1318
      %v1320 = vpop.f32.mrb[0].mxu0
      %v1321 = vpop.f32.mrb[0].mxu0
      %v1322 = vadd.f32 0.0, %v1321
      %v1323 = vpop.f32.mrb[0].mxu0
      %1324 = vmatprep.mubr.bf16.mxu0 0
      %1325 = vmatmul.mubr.bf16.gmra.mrb[0].mxu0 %v1107
      %v1326 = vpop.f32.mrb[0].mxu0
      %v1327 = vadd.f32 0.0, %v1326
      %v1328 = vpop.f32.mrb[0].mxu0
      %v1329 = vpop.f32.mrb[0].mxu0
      %v1330 = vadd.f32 0.0, %v1329
      %v1331 = vpop.f32.mrb[0].mxu0
      %1332 = vmatprep.mubr.bf16.mxu0 0
      %1333 = vmatmul.mubr.bf16.gmra.mrb[0].mxu0 %v1109
      %v1334 = vpop.f32.mrb[0].mxu0
      %v1335 = vadd.f32 0.0, %v1334
      %v1336 = vpop.f32.mrb[0].mxu0
      %v1337 = vpop.f32.mrb[0].mxu0
      %v1338 = vadd.f32 0.0, %v1337
      %v1339 = vpop.f32.mrb[0].mxu0
      %1340 = vmatprep.mubr.bf16.mxu0 0
      %1341 = vmatmul.mubr.bf16.gmra.mrb[0].mxu0 %v1111
      %v1342 = vpop.f32.mrb[0].mxu0
      %v1343 = vadd.f32 0.0, %v1342
      %v1344 = vpop.f32.mrb[0].mxu0
      %v1345 = vpop.f32.mrb[0].mxu0
      %v1346 = vadd.f32 0.0, %v1345
      %v1347 = vpop.f32.mrb[0].mxu0
      %1348 = vmatprep.mubr.bf16.mxu0 0
      %1349 = vmatmul.mubr.bf16.gmra.mrb[0].mxu0 %v1113
      %v1350 = vpop.f32.mrb[0].mxu0
      %v1351 = vadd.f32 0.0, %v1350
      %v1352 = vpop.f32.mrb[0].mxu0
      %v1353 = vpop.f32.mrb[0].mxu0
      %v1354 = vadd.f32 0.0, %v1353
      %v1355 = vpop.f32.mrb[0].mxu0
      %1356 = vdwg.mxu0
      %v1357 = vadd.f32 %v913, %v1215
      %v1358 = vadd.f32 %v916, %v1218
      %v1359 = vadd.f32 %v921, %v1223
      %v1360 = vadd.f32 %v924, %v1226
      %v1361 = vadd.f32 %v929, %v1231
      %v1362 = vadd.f32 %v932, %v1234
      %v1363 = vadd.f32 %v937, %v1239
      %v1364 = vadd.f32 %v940, %v1242
      %v1365 = vadd.f32 %v945, %v1247
      %v1366 = vadd.f32 %v948, %v1250
      %v1367 = vadd.f32 %v953, %v1255
      %v1368 = vadd.f32 %v956, %v1258
      %v1369 = vadd.f32 %v961, %v1263
      %v1370 = vadd.f32 %v964, %v1266
      %v1371 = vadd.f32 %v969, %v1271
      %v1372 = vadd.f32 %v972, %v1274
      %v1373 = vadd.f32 %v977, %v1279
      %v1374 = vadd.f32 %v980, %v1282
      %v1375 = vadd.f32 %v985, %v1287
      %v1376 = vadd.f32 %v988, %v1290
      %v1377 = vadd.f32 %v993, %v1295
      %v1378 = vadd.f32 %v996, %v1298
      %v1379 = vadd.f32 %v1001, %v1303
      %v1380 = vadd.f32 %v1004, %v1306
      %v1381 = vadd.f32 %v1009, %v1311
      %v1382 = vadd.f32 %v1012, %v1314
      %v1383 = vadd.f32 %v1017, %v1319
      %v1384 = vadd.f32 %v1020, %v1322
      %v1385 = vadd.f32 %v1025, %v1327
      %v1386 = vadd.f32 %v1028, %v1330
      %v1387 = vadd.f32 %v1033, %v1335
      %v1388 = vadd.f32 %v1036, %v1338
      %v1389 = vadd.f32 %v1041, %v1343
      %v1390 = vadd.f32 %v1044, %v1346
      %v1391 = vadd.f32 %v1049, %v1351
      %v1392 = vadd.f32 %v1052, %v1354
      %v1393 = vld [vmem:[%s235 + $0x8] sm:$0xe]
      %v1394 = vld [vmem:[%s235 + $0xc] sm:$0xf]
      %v1395 = vld [vmem:[%s235 + $0x10] sm:$0xf]
      %v1396 = vld [vmem:[%s235 + $0x14] sm:$0xf]
      %v1397 = vld [vmem:[%s235 + $0x18] sm:$0xf]
      %v1398 = vld [vmem:[%s235 + $0x1c] sm:$0xf]
      %v1399 = vld [vmem:[%s235 + $0x20] sm:$0xf]
      %v1400 = vld [vmem:[%s235 + $0x24] sm:$0xf]
      %v1401 = vld [vmem:[%s235 + $0x28] sm:$0xf]
      %v1402 = vld [vmem:[%s235 + $0x2c] sm:$0xf]
      %v1403 = vld [vmem:[%s235 + $0x30] sm:$0xf]
      %v1404 = vld [vmem:[%s235 + $0x34] sm:$0xf]
      %v1405 = vld [vmem:[%s235 + $0x38] sm:$0xf]
      %v1406 = vld [vmem:[%s235 + $0x3c] sm:$0xf]
      %v1407 = vld [vmem:[%s235 + $0x40] sm:$0xf]
      %v1408 = vld [vmem:[%s235 + $0x44] sm:$0xf]
      %v1409 = vld [vmem:[%s235 + $0x48] sm:$0xf]
      %v1410 = vld [vmem:[%s235 + $0x4c] sm:$0xf]
      %v1411 = vld [vmem:[%s235 + $0x50] sm:$0xf]
      %v1412 = vld [vmem:[%s235 + $0x54] sm:$0xf]
      %v1413 = vld [vmem:[%s235 + $0x58] sm:$0xf]
      %v1414 = vld [vmem:[%s235 + $0x5c] sm:$0xf]
      %v1415 = vld [vmem:[%s235 + $0x60] sm:$0xf]
      %v1416 = vld [vmem:[%s235 + $0x64] sm:$0xf]
      %v1417 = vld [vmem:[%s235 + $0x68] sm:$0xf]
      %v1418 = vld [vmem:[%s235 + $0x6c] sm:$0xf]
      %v1419 = vld [vmem:[%s235 + $0x70] sm:$0xf]
      %v1420 = vld [vmem:[%s235 + $0x74] sm:$0xf]
      %v1421 = vld [vmem:[%s235 + $0x78] sm:$0xf]
      %v1422 = vld [vmem:[%s235 + $0x7c] sm:$0xf]
      %v1423 = vld [vmem:[%s235 + $0x80] sm:$0xf]
      %v1424 = vld [vmem:[%s235 + $0x84] sm:$0xf]
      %v1425 = vld [vmem:[%s235 + $0x88] sm:$0xf]
      %v1426 = vld [vmem:[%s235 + $0x8c] sm:$0xf]
      %v1427 = vld [vmem:[%s235 + $0x90] sm:$0xf]
      %v1428 = vld [vmem:[%s235 + $0x94] sm:$0xf]
      %v1429 = vld [vmem:[%s235 + $0x98] sm:$0x1]
      %s1430 = scalar_lea.vmem %s243, 192
      %v1431 = vld [vmem:[%s1430] sm:$0xf]
      %v1432 = vld [vmem:[%s1430 + $0x4] sm:$0xf]
      %v1433 = vld [vmem:[%s1430 + $0x8] sm:$0xf]
      %v1434 = vld [vmem:[%s1430 + $0xc] sm:$0xf]
      %v1435 = vld [vmem:[%s1430 + $0x10] sm:$0xf]
      %v1436 = vld [vmem:[%s1430 + $0x14] sm:$0xf]
      %v1437 = vld [vmem:[%s1430 + $0x18] sm:$0xf]
      %v1438 = vld [vmem:[%s1430 + $0x1c] sm:$0xf]
      %v1439 = vld [vmem:[%s1430 + $0x20] sm:$0xf]
      %v1440 = vld [vmem:[%s1430 + $0x24] sm:$0xf]
      %v1441 = vld [vmem:[%s1430 + $0x28] sm:$0xf]
      %v1442 = vld [vmem:[%s1430 + $0x2c] sm:$0xf]
      %v1443 = vld [vmem:[%s1430 + $0x30] sm:$0xf]
      %v1444 = vld [vmem:[%s1430 + $0x34] sm:$0xf]
      %v1445 = vld [vmem:[%s1430 + $0x38] sm:$0xf]
      %v1446 = vld [vmem:[%s1430 + $0x3c] sm:$0xf]
      %v1484 = vunpack.c.l.b16 %v1393
      %v1485 = vunpack.c.l.b16 %v1394
      %v1486 = vunpack.c.l.b16 %v1395
      %v1487 = vunpack.c.l.b16 %v1396
      %v1488 = vunpack.c.l.b16 %v1397
      %v1489 = vunpack.c.l.b16 %v1398
      %v1490 = vunpack.c.l.b16 %v1399
      %v1491 = vunpack.c.l.b16 %v1400
      %v1492 = vunpack.c.l.b16 %v1401
      %v1493 = vunpack.c.l.b16 %v1402
      %v1494 = vunpack.c.l.b16 %v1403
      %v1495 = vunpack.c.l.b16 %v1404
      %v1496 = vunpack.c.l.b16 %v1405
      %v1497 = vunpack.c.l.b16 %v1406
      %v1498 = vunpack.c.l.b16 %v1407
      %v1499 = vunpack.c.l.b16 %v1408
      %v1500 = vunpack.c.l.b16 %v1409
      %v1501 = vunpack.c.l.b16 %v1410
      %v1502 = vunpack.c.l.b16 %v1411
      %v1503 = vunpack.c.l.b16 %v1412
      %v1504 = vunpack.c.l.b16 %v1413
      %v1505 = vunpack.c.l.b16 %v1414
      %v1506 = vunpack.c.l.b16 %v1415
      %v1507 = vunpack.c.l.b16 %v1416
      %v1508 = vunpack.c.l.b16 %v1417
      %v1509 = vunpack.c.l.b16 %v1418
      %v1510 = vunpack.c.l.b16 %v1419
      %v1511 = vunpack.c.l.b16 %v1420
      %v1512 = vunpack.c.l.b16 %v1421
      %v1513 = vunpack.c.l.b16 %v1422
      %v1514 = vunpack.c.l.b16 %v1423
      %v1515 = vunpack.c.l.b16 %v1424
      %v1516 = vunpack.c.l.b16 %v1425
      %v1517 = vunpack.c.l.b16 %v1426
      %v1518 = vunpack.c.l.b16 %v1427
      %v1519 = vunpack.c.l.b16 %v1428
      %v1520 = vunpack.c.l.b16 %v1429
      %v1521 = vpack.c.b16 %v1485, %v1484
      %v1522 = vpack.c.b16 %v1487, %v1486
      %v1523 = vpack.c.b16 %v1489, %v1488
      %v1524 = vpack.c.b16 %v1491, %v1490
      %v1525 = vpack.c.b16 %v1493, %v1492
      %v1526 = vpack.c.b16 %v1495, %v1494
      %v1527 = vpack.c.b16 %v1497, %v1496
      %v1528 = vpack.c.b16 %v1499, %v1498
      %v1529 = vpack.c.b16 %v1501, %v1500
      %v1530 = vpack.c.b16 %v1503, %v1502
      %v1531 = vpack.c.b16 %v1505, %v1504
      %v1532 = vpack.c.b16 %v1507, %v1506
      %v1533 = vpack.c.b16 %v1509, %v1508
      %v1534 = vpack.c.b16 %v1511, %v1510
      %v1535 = vpack.c.b16 %v1513, %v1512
      %v1536 = vpack.c.b16 %v1515, %v1514
      %v1537 = vpack.c.b16 %v1517, %v1516
      %v1538 = vpack.c.b16 %v1519, %v1518
      %v1539 = vpack.c.b16 %v1520, %v1520
      %v1540 = vrot.slane %v1521, 1
      %v1541 = vrot.slane %v1522, 1
      %v1542 = vsel %vm1076, %v1540, %v1541
      %v1543 = vrot.slane %v1523, 1
      %v1544 = vsel %vm1076, %v1541, %v1543
      %v1545 = vrot.slane %v1524, 1
      %v1546 = vsel %vm1076, %v1543, %v1545
      %v1547 = vrot.slane %v1525, 1
      %v1548 = vsel %vm1076, %v1545, %v1547
      %v1549 = vrot.slane %v1526, 1
      %v1550 = vsel %vm1076, %v1547, %v1549
      %v1551 = vrot.slane %v1527, 1
      %v1552 = vsel %vm1076, %v1549, %v1551
      %v1553 = vrot.slane %v1528, 1
      %v1554 = vsel %vm1076, %v1551, %v1553
      %v1555 = vrot.slane %v1529, 1
      %v1556 = vsel %vm1076, %v1553, %v1555
      %v1557 = vrot.slane %v1530, 1
      %v1558 = vsel %vm1076, %v1555, %v1557
      %v1559 = vrot.slane %v1531, 1
      %v1560 = vsel %vm1076, %v1557, %v1559
      %v1561 = vrot.slane %v1532, 1
      %v1562 = vsel %vm1076, %v1559, %v1561
      %v1563 = vrot.slane %v1533, 1
      %v1564 = vsel %vm1076, %v1561, %v1563
      %v1565 = vrot.slane %v1534, 1
      %v1566 = vsel %vm1076, %v1563, %v1565
      %v1567 = vrot.slane %v1535, 1
      %v1568 = vsel %vm1076, %v1565, %v1567
      %v1569 = vrot.slane %v1536, 1
      %v1570 = vsel %vm1076, %v1567, %v1569
      %v1571 = vrot.slane %v1537, 1
      %v1572 = vsel %vm1076, %v1569, %v1571
      %v1573 = vrot.slane %v1538, 1
      %v1574 = vsel %vm1076, %v1571, %v1573
      %v1575 = vrot.slane %v1539, 1
      %v1576 = vsel %vm1076, %v1573, %v1575
      %v1611 = vunpack.c.l.b16 %v1431
      %v1612 = vunpack.c.l.b16 %v1432
      %v1613 = vunpack.c.l.b16 %v1433
      %v1614 = vunpack.c.l.b16 %v1434
      %v1615 = vunpack.c.l.b16 %v1435
      %v1616 = vunpack.c.l.b16 %v1436
      %v1617 = vunpack.c.l.b16 %v1437
      %v1618 = vunpack.c.l.b16 %v1438
      %v1619 = vunpack.c.l.b16 %v1439
      %v1620 = vunpack.c.l.b16 %v1440
      %v1621 = vunpack.c.l.b16 %v1441
      %v1622 = vunpack.c.l.b16 %v1442
      %v1623 = vunpack.c.l.b16 %v1443
      %v1624 = vunpack.c.l.b16 %v1444
      %v1625 = vunpack.c.l.b16 %v1445
      %v1626 = vunpack.c.l.b16 %v1446
      %v1627 = vpack.c.b16 %v1612, %v1611
      %v1628 = vpack.c.b16 %v1614, %v1613
      %v1629 = vpack.c.b16 %v1616, %v1615
      %v1630 = vpack.c.b16 %v1618, %v1617
      %v1631 = vpack.c.b16 %v1620, %v1619
      %v1632 = vpack.c.b16 %v1622, %v1621
      %v1633 = vpack.c.b16 %v1624, %v1623
      %v1634 = vpack.c.b16 %v1626, %v1625
      %1643 = vmatprep.subr.bf16.mxu0 0
      %1644 = vmatpush1.bf16.msra.mxu0 %v1627
      %1645 = vmatprep.subr.bf16.mxu0 0
      %1646 = vmatpush1.bf16.msra.mxu0 %v1628
      %1647 = vmatprep.subr.bf16.mxu0 0
      %1648 = vmatpush1.bf16.msra.mxu0 %v1629
      %1649 = vmatprep.subr.bf16.mxu0 0
      %1650 = vmatpush1.bf16.msra.mxu0 %v1630
      %1651 = vmatprep.subr.bf16.mxu0 0
      %1652 = vmatpush1.bf16.msra.mxu0 %v1631
      %1653 = vmatprep.subr.bf16.mxu0 0
      %1654 = vmatpush1.bf16.msra.mxu0 %v1632
      %1655 = vmatprep.subr.bf16.mxu0 0
      %1656 = vmatpush1.bf16.msra.mxu0 %v1633
      %1657 = vmatprep.subr.bf16.mxu0 0
      %1658 = vmatpush1.bf16.msra.mxu0 %v1634
      %1659 = vmatprep.subr.bf16.mxu0 0
      %1660 = vmatpush1.bf16.msra.mxu0 0
      %1661 = vmatprep.subr.bf16.mxu0 0
      %1662 = vmatpush1.bf16.msra.mxu0 0
      %1663 = vmatprep.subr.bf16.mxu0 0
      %1664 = vmatpush1.bf16.msra.mxu0 0
      %1665 = vmatprep.subr.bf16.mxu0 0
      %1666 = vmatpush1.bf16.msra.mxu0 0
      %1667 = vmatprep.subr.bf16.mxu0 0
      %1668 = vmatpush1.bf16.msra.mxu0 0
      %1669 = vmatprep.subr.bf16.mxu0 0
      %1670 = vmatpush1.bf16.msra.mxu0 0
      %1671 = vmatprep.subr.bf16.mxu0 0
      %1672 = vmatpush1.bf16.msra.mxu0 0
      %1673 = vmatprep.subr.bf16.mxu0 0
      %1674 = vmatpush1.bf16.msra.mxu0 0
      %1675 = vmatprep.mubr.bf16.mxu0 0
      %1676 = vmatmul.mubr.bf16.gmra.mrb[0].mxu0 %v1542
      %v1677 = vpop.f32.mrb[0].mxu0
      %v1678 = vadd.f32 0.0, %v1677
      %v1679 = vpop.f32.mrb[0].mxu0
      %v1680 = vpop.f32.mrb[0].mxu0
      %v1681 = vadd.f32 0.0, %v1680
      %v1682 = vpop.f32.mrb[0].mxu0
      %1683 = vmatprep.mubr.bf16.mxu0 0
      %1684 = vmatmul.mubr.bf16.gmra.mrb[0].mxu0 %v1544
      %v1685 = vpop.f32.mrb[0].mxu0
      %v1686 = vadd.f32 0.0, %v1685
      %v1687 = vpop.f32.mrb[0].mxu0
      %v1688 = vpop.f32.mrb[0].mxu0
      %v1689 = vadd.f32 0.0, %v1688
      %v1690 = vpop.f32.mrb[0].mxu0
      %1691 = vmatprep.mubr.bf16.mxu0 0
      %1692 = vmatmul.mubr.bf16.gmra.mrb[0].mxu0 %v1546
      %v1693 = vpop.f32.mrb[0].mxu0
      %v1694 = vadd.f32 0.0, %v1693
      %v1695 = vpop.f32.mrb[0].mxu0
      %v1696 = vpop.f32.mrb[0].mxu0
      %v1697 = vadd.f32 0.0, %v1696
      %v1698 = vpop.f32.mrb[0].mxu0
      %1699 = vmatprep.mubr.bf16.mxu0 0
      %1700 = vmatmul.mubr.bf16.gmra.mrb[0].mxu0 %v1548
      %v1701 = vpop.f32.mrb[0].mxu0
      %v1702 = vadd.f32 0.0, %v1701
      %v1703 = vpop.f32.mrb[0].mxu0
      %v1704 = vpop.f32.mrb[0].mxu0
      %v1705 = vadd.f32 0.0, %v1704
      %v1706 = vpop.f32.mrb[0].mxu0
      %1707 = vmatprep.mubr.bf16.mxu0 0
      %1708 = vmatmul.mubr.bf16.gmra.mrb[0].mxu0 %v1550
      %v1709 = vpop.f32.mrb[0].mxu0
      %v1710 = vadd.f32 0.0, %v1709
      %v1711 = vpop.f32.mrb[0].mxu0
      %v1712 = vpop.f32.mrb[0].mxu0
      %v1713 = vadd.f32 0.0, %v1712
      %v1714 = vpop.f32.mrb[0].mxu0
      %1715 = vmatprep.mubr.bf16.mxu0 0
      %1716 = vmatmul.mubr.bf16.gmra.mrb[0].mxu0 %v1552
      %v1717 = vpop.f32.mrb[0].mxu0
      %v1718 = vadd.f32 0.0, %v1717
      %v1719 = vpop.f32.mrb[0].mxu0
      %v1720 = vpop.f32.mrb[0].mxu0
      %v1721 = vadd.f32 0.0, %v1720
      %v1722 = vpop.f32.mrb[0].mxu0
      %1723 = vmatprep.mubr.bf16.mxu0 0
      %1724 = vmatmul.mubr.bf16.gmra.mrb[0].mxu0 %v1554
      %v1725 = vpop.f32.mrb[0].mxu0
      %v1726 = vadd.f32 0.0, %v1725
      %v1727 = vpop.f32.mrb[0].mxu0
      %v1728 = vpop.f32.mrb[0].mxu0
      %v1729 = vadd.f32 0.0, %v1728
      %v1730 = vpop.f32.mrb[0].mxu0
      %1731 = vmatprep.mubr.bf16.mxu0 0
      %1732 = vmatmul.mubr.bf16.gmra.mrb[0].mxu0 %v1556
      %v1733 = vpop.f32.mrb[0].mxu0
      %v1734 = vadd.f32 0.0, %v1733
      %v1735 = vpop.f32.mrb[0].mxu0
      %v1736 = vpop.f32.mrb[0].mxu0
      %v1737 = vadd.f32 0.0, %v1736
      %v1738 = vpop.f32.mrb[0].mxu0
      %1739 = vmatprep.mubr.bf16.mxu0 0
      %1740 = vmatmul.mubr.bf16.gmra.mrb[0].mxu0 %v1558
      %v1741 = vpop.f32.mrb[0].mxu0
      %v1742 = vadd.f32 0.0, %v1741
      %v1743 = vpop.f32.mrb[0].mxu0
      %v1744 = vpop.f32.mrb[0].mxu0
      %v1745 = vadd.f32 0.0, %v1744
      %v1746 = vpop.f32.mrb[0].mxu0
      %1747 = vmatprep.mubr.bf16.mxu0 0
      %1748 = vmatmul.mubr.bf16.gmra.mrb[0].mxu0 %v1560
      %v1749 = vpop.f32.mrb[0].mxu0
      %v1750 = vadd.f32 0.0, %v1749
      %v1751 = vpop.f32.mrb[0].mxu0
      %v1752 = vpop.f32.mrb[0].mxu0
      %v1753 = vadd.f32 0.0, %v1752
      %v1754 = vpop.f32.mrb[0].mxu0
      %1755 = vmatprep.mubr.bf16.mxu0 0
      %1756 = vmatmul.mubr.bf16.gmra.mrb[0].mxu0 %v1562
      %v1757 = vpop.f32.mrb[0].mxu0
      %v1758 = vadd.f32 0.0, %v1757
      %v1759 = vpop.f32.mrb[0].mxu0
      %v1760 = vpop.f32.mrb[0].mxu0
      %v1761 = vadd.f32 0.0, %v1760
      %v1762 = vpop.f32.mrb[0].mxu0
      %1763 = vmatprep.mubr.bf16.mxu0 0
      %1764 = vmatmul.mubr.bf16.gmra.mrb[0].mxu0 %v1564
      %v1765 = vpop.f32.mrb[0].mxu0
      %v1766 = vadd.f32 0.0, %v1765
      %v1767 = vpop.f32.mrb[0].mxu0
      %v1768 = vpop.f32.mrb[0].mxu0
      %v1769 = vadd.f32 0.0, %v1768
      %v1770 = vpop.f32.mrb[0].mxu0
      %1771 = vmatprep.mubr.bf16.mxu0 0
      %1772 = vmatmul.mubr.bf16.gmra.mrb[0].mxu0 %v1566
      %v1773 = vpop.f32.mrb[0].mxu0
      %v1774 = vadd.f32 0.0, %v1773
      %v1775 = vpop.f32.mrb[0].mxu0
      %v1776 = vpop.f32.mrb[0].mxu0
      %v1777 = vadd.f32 0.0, %v1776
      %v1778 = vpop.f32.mrb[0].mxu0
      %1779 = vmatprep.mubr.bf16.mxu0 0
      %1780 = vmatmul.mubr.bf16.gmra.mrb[0].mxu0 %v1568
      %v1781 = vpop.f32.mrb[0].mxu0
      %v1782 = vadd.f32 0.0, %v1781
      %v1783 = vpop.f32.mrb[0].mxu0
      %v1784 = vpop.f32.mrb[0].mxu0
      %v1785 = vadd.f32 0.0, %v1784
      %v1786 = vpop.f32.mrb[0].mxu0
      %1787 = vmatprep.mubr.bf16.mxu0 0
      %1788 = vmatmul.mubr.bf16.gmra.mrb[0].mxu0 %v1570
      %v1789 = vpop.f32.mrb[0].mxu0
      %v1790 = vadd.f32 0.0, %v1789
      %v1791 = vpop.f32.mrb[0].mxu0
      %v1792 = vpop.f32.mrb[0].mxu0
      %v1793 = vadd.f32 0.0, %v1792
      %v1794 = vpop.f32.mrb[0].mxu0
      %1795 = vmatprep.mubr.bf16.mxu0 0
      %1796 = vmatmul.mubr.bf16.gmra.mrb[0].mxu0 %v1572
      %v1797 = vpop.f32.mrb[0].mxu0
      %v1798 = vadd.f32 0.0, %v1797
      %v1799 = vpop.f32.mrb[0].mxu0
      %v1800 = vpop.f32.mrb[0].mxu0
      %v1801 = vadd.f32 0.0, %v1800
      %v1802 = vpop.f32.mrb[0].mxu0
      %1803 = vmatprep.mubr.bf16.mxu0 0
      %1804 = vmatmul.mubr.bf16.gmra.mrb[0].mxu0 %v1574
      %v1805 = vpop.f32.mrb[0].mxu0
      %v1806 = vadd.f32 0.0, %v1805
      %v1807 = vpop.f32.mrb[0].mxu0
      %v1808 = vpop.f32.mrb[0].mxu0
      %v1809 = vadd.f32 0.0, %v1808
      %v1810 = vpop.f32.mrb[0].mxu0
      %1811 = vmatprep.mubr.bf16.mxu0 0
      %1812 = vmatmul.mubr.bf16.gmra.mrb[0].mxu0 %v1576
      %v1813 = vpop.f32.mrb[0].mxu0
      %v1814 = vadd.f32 0.0, %v1813
      %v1815 = vpop.f32.mrb[0].mxu0
      %v1816 = vpop.f32.mrb[0].mxu0
      %v1817 = vadd.f32 0.0, %v1816
      %v1818 = vpop.f32.mrb[0].mxu0
      %1819 = vdwg.mxu0
      %v1820 = vadd.f32 %v1357, %v1678
      %v1821 = vadd.f32 %v1358, %v1681
      %v1822 = vadd.f32 %v1359, %v1686
      %v1823 = vadd.f32 %v1360, %v1689
      %v1824 = vadd.f32 %v1361, %v1694
      %v1825 = vadd.f32 %v1362, %v1697
      %v1826 = vadd.f32 %v1363, %v1702
      %v1827 = vadd.f32 %v1364, %v1705
      %v1828 = vadd.f32 %v1365, %v1710
      %v1829 = vadd.f32 %v1366, %v1713
      %v1830 = vadd.f32 %v1367, %v1718
      %v1831 = vadd.f32 %v1368, %v1721
      %v1832 = vadd.f32 %v1369, %v1726
      %v1833 = vadd.f32 %v1370, %v1729
      %v1834 = vadd.f32 %v1371, %v1734
      %v1835 = vadd.f32 %v1372, %v1737
      %v1836 = vadd.f32 %v1373, %v1742
      %v1837 = vadd.f32 %v1374, %v1745
      %v1838 = vadd.f32 %v1375, %v1750
      %v1839 = vadd.f32 %v1376, %v1753
      %v1840 = vadd.f32 %v1377, %v1758
      %v1841 = vadd.f32 %v1378, %v1761
      %v1842 = vadd.f32 %v1379, %v1766
      %v1843 = vadd.f32 %v1380, %v1769
      %v1844 = vadd.f32 %v1381, %v1774
      %v1845 = vadd.f32 %v1382, %v1777
      %v1846 = vadd.f32 %v1383, %v1782
      %v1847 = vadd.f32 %v1384, %v1785
      %v1848 = vadd.f32 %v1385, %v1790
      %v1849 = vadd.f32 %v1386, %v1793
      %v1850 = vadd.f32 %v1387, %v1798
      %v1851 = vadd.f32 %v1388, %v1801
      %v1852 = vadd.f32 %v1389, %v1806
      %v1853 = vadd.f32 %v1390, %v1809
      %v1854 = vadd.f32 %v1391, %v1814
      %v1855 = vadd.f32 %v1392, %v1817
      %v1856 = vld [vmem:[%s235 + $0x98] sm:$0x3]
      %s1857 = scalar_lea.vmem %s243, 256
      %v1858 = vld [vmem:[%s1857] sm:$0xf]
      %v1859 = vld [vmem:[%s1857 + $0x4] sm:$0xf]
      %v1860 = vld [vmem:[%s1857 + $0x8] sm:$0xf]
      %v1861 = vld [vmem:[%s1857 + $0xc] sm:$0xf]
      %v1862 = vld [vmem:[%s1857 + $0x10] sm:$0xf]
      %v1863 = vld [vmem:[%s1857 + $0x14] sm:$0xf]
      %v1864 = vld [vmem:[%s1857 + $0x18] sm:$0xf]
      %v1865 = vld [vmem:[%s1857 + $0x1c] sm:$0xf]
      %v1866 = vld [vmem:[%s1857 + $0x20] sm:$0xf]
      %v1867 = vld [vmem:[%s1857 + $0x24] sm:$0xf]
      %v1868 = vld [vmem:[%s1857 + $0x28] sm:$0xf]
      %v1869 = vld [vmem:[%s1857 + $0x2c] sm:$0xf]
      %v1870 = vld [vmem:[%s1857 + $0x30] sm:$0xf]
      %v1871 = vld [vmem:[%s1857 + $0x34] sm:$0xf]
      %v1872 = vld [vmem:[%s1857 + $0x38] sm:$0xf]
      %v1873 = vld [vmem:[%s1857 + $0x3c] sm:$0xf]
      %v1875 = vunpack.c.l.b16 %v1856
      %v1876 = vpack.c.b16 %v1875, %v1875
      %vm1877 = vsmask.f32 6400
      %v1879 = vshrl.u32 %v1521, 16
      %v1881 = vrot.slane %v1879, 1
      %v1882 = vshll.u32 %v1521, 16
      %v1884 = vrot.slane %v1882, 2
      %v1885 = vor.u32 %v1881, %v1884
      %v1887 = vshrl.u32 %v1522, 16
      %v1889 = vrot.slane %v1887, 1
      %v1890 = vshll.u32 %v1522, 16
      %v1892 = vrot.slane %v1890, 2
      %v1893 = vor.u32 %v1889, %v1892
      %v1894 = vsel %vm1877, %v1885, %v1893
      %v1896 = vshrl.u32 %v1523, 16
      %v1898 = vrot.slane %v1896, 1
      %v1899 = vshll.u32 %v1523, 16
      %v1901 = vrot.slane %v1899, 2
      %v1902 = vor.u32 %v1898, %v1901
      %v1903 = vsel %vm1877, %v1893, %v1902
      %v1905 = vshrl.u32 %v1524, 16
      %v1907 = vrot.slane %v1905, 1
      %v1908 = vshll.u32 %v1524, 16
      %v1910 = vrot.slane %v1908, 2
      %v1911 = vor.u32 %v1907, %v1910
      %v1912 = vsel %vm1877, %v1902, %v1911
      %v1914 = vshrl.u32 %v1525, 16
      %v1916 = vrot.slane %v1914, 1
      %v1917 = vshll.u32 %v1525, 16
      %v1919 = vrot.slane %v1917, 2
      %v1920 = vor.u32 %v1916, %v1919
      %v1921 = vsel %vm1877, %v1911, %v1920
      %v1923 = vshrl.u32 %v1526, 16
      %v1925 = vrot.slane %v1923, 1
      %v1926 = vshll.u32 %v1526, 16
      %v1928 = vrot.slane %v1926, 2
      %v1929 = vor.u32 %v1925, %v1928
      %v1930 = vsel %vm1877, %v1920, %v1929
      %v1932 = vshrl.u32 %v1527, 16
      %v1934 = vrot.slane %v1932, 1
      %v1935 = vshll.u32 %v1527, 16
      %v1937 = vrot.slane %v1935, 2
      %v1938 = vor.u32 %v1934, %v1937
      %v1939 = vsel %vm1877, %v1929, %v1938
      %v1941 = vshrl.u32 %v1528, 16
      %v1943 = vrot.slane %v1941, 1
      %v1944 = vshll.u32 %v1528, 16
      %v1946 = vrot.slane %v1944, 2
      %v1947 = vor.u32 %v1943, %v1946
      %v1948 = vsel %vm1877, %v1938, %v1947
      %v1950 = vshrl.u32 %v1529, 16
      %v1952 = vrot.slane %v1950, 1
      %v1953 = vshll.u32 %v1529, 16
      %v1955 = vrot.slane %v1953, 2
      %v1956 = vor.u32 %v1952, %v1955
      %v1957 = vsel %vm1877, %v1947, %v1956
      %v1959 = vshrl.u32 %v1530, 16
      %v1961 = vrot.slane %v1959, 1
      %v1962 = vshll.u32 %v1530, 16
      %v1964 = vrot.slane %v1962, 2
      %v1965 = vor.u32 %v1961, %v1964
      %v1966 = vsel %vm1877, %v1956, %v1965
      %v1968 = vshrl.u32 %v1531, 16
      %v1970 = vrot.slane %v1968, 1
      %v1971 = vshll.u32 %v1531, 16
      %v1973 = vrot.slane %v1971, 2
      %v1974 = vor.u32 %v1970, %v1973
      %v1975 = vsel %vm1877, %v1965, %v1974
      %v1977 = vshrl.u32 %v1532, 16
      %v1979 = vrot.slane %v1977, 1
      %v1980 = vshll.u32 %v1532, 16
      %v1982 = vrot.slane %v1980, 2
      %v1983 = vor.u32 %v1979, %v1982
      %v1984 = vsel %vm1877, %v1974, %v1983
      %v1986 = vshrl.u32 %v1533, 16
      %v1988 = vrot.slane %v1986, 1
      %v1989 = vshll.u32 %v1533, 16
      %v1991 = vrot.slane %v1989, 2
      %v1992 = vor.u32 %v1988, %v1991
      %v1993 = vsel %vm1877, %v1983, %v1992
      %v1995 = vshrl.u32 %v1534, 16
      %v1997 = vrot.slane %v1995, 1
      %v1998 = vshll.u32 %v1534, 16
      %v2000 = vrot.slane %v1998, 2
      %v2001 = vor.u32 %v1997, %v2000
      %v2002 = vsel %vm1877, %v1992, %v2001
      %v2004 = vshrl.u32 %v1535, 16
      %v2006 = vrot.slane %v2004, 1
      %v2007 = vshll.u32 %v1535, 16
      %v2009 = vrot.slane %v2007, 2
      %v2010 = vor.u32 %v2006, %v2009
      %v2011 = vsel %vm1877, %v2001, %v2010
      %v2013 = vshrl.u32 %v1536, 16
      %v2015 = vrot.slane %v2013, 1
      %v2016 = vshll.u32 %v1536, 16
      %v2018 = vrot.slane %v2016, 2
      %v2019 = vor.u32 %v2015, %v2018
      %v2020 = vsel %vm1877, %v2010, %v2019
      %v2022 = vshrl.u32 %v1537, 16
      %v2024 = vrot.slane %v2022, 1
      %v2025 = vshll.u32 %v1537, 16
      %v2027 = vrot.slane %v2025, 2
      %v2028 = vor.u32 %v2024, %v2027
      %v2029 = vsel %vm1877, %v2019, %v2028
      %v2031 = vshrl.u32 %v1538, 16
      %v2033 = vrot.slane %v2031, 1
      %v2034 = vshll.u32 %v1538, 16
      %v2036 = vrot.slane %v2034, 2
      %v2037 = vor.u32 %v2033, %v2036
      %v2038 = vsel %vm1877, %v2028, %v2037
      %v2040 = vshrl.u32 %v1876, 16
      %v2042 = vrot.slane %v2040, 1
      %v2043 = vshll.u32 %v1876, 16
      %v2045 = vrot.slane %v2043, 2
      %v2046 = vor.u32 %v2042, %v2045
      %v2047 = vsel %vm1877, %v2037, %v2046
      %v2082 = vunpack.c.l.b16 %v1858
      %v2083 = vunpack.c.l.b16 %v1859
      %v2084 = vunpack.c.l.b16 %v1860
      %v2085 = vunpack.c.l.b16 %v1861
      %v2086 = vunpack.c.l.b16 %v1862
      %v2087 = vunpack.c.l.b16 %v1863
      %v2088 = vunpack.c.l.b16 %v1864
      %v2089 = vunpack.c.l.b16 %v1865
      %v2090 = vunpack.c.l.b16 %v1866
      %v2091 = vunpack.c.l.b16 %v1867
      %v2092 = vunpack.c.l.b16 %v1868
      %v2093 = vunpack.c.l.b16 %v1869
      %v2094 = vunpack.c.l.b16 %v1870
      %v2095 = vunpack.c.l.b16 %v1871
      %v2096 = vunpack.c.l.b16 %v1872
      %v2097 = vunpack.c.l.b16 %v1873
      %v2098 = vpack.c.b16 %v2083, %v2082
      %v2099 = vpack.c.b16 %v2085, %v2084
      %v2100 = vpack.c.b16 %v2087, %v2086
      %v2101 = vpack.c.b16 %v2089, %v2088
      %v2102 = vpack.c.b16 %v2091, %v2090
      %v2103 = vpack.c.b16 %v2093, %v2092
      %v2104 = vpack.c.b16 %v2095, %v2094
      %v2105 = vpack.c.b16 %v2097, %v2096
      %2114 = vmatprep.subr.bf16.mxu0 0
      %2115 = vmatpush1.bf16.msra.mxu0 %v2098
      %2116 = vmatprep.subr.bf16.mxu0 0
      %2117 = vmatpush1.bf16.msra.mxu0 %v2099
      %2118 = vmatprep.subr.bf16.mxu0 0
      %2119 = vmatpush1.bf16.msra.mxu0 %v2100
      %2120 = vmatprep.subr.bf16.mxu0 0
      %2121 = vmatpush1.bf16.msra.mxu0 %v2101
      %2122 = vmatprep.subr.bf16.mxu0 0
      %2123 = vmatpush1.bf16.msra.mxu0 %v2102
      %2124 = vmatprep.subr.bf16.mxu0 0
      %2125 = vmatpush1.bf16.msra.mxu0 %v2103
      %2126 = vmatprep.subr.bf16.mxu0 0
      %2127 = vmatpush1.bf16.msra.mxu0 %v2104
      %2128 = vmatprep.subr.bf16.mxu0 0
      %2129 = vmatpush1.bf16.msra.mxu0 %v2105
      %2130 = vmatprep.subr.bf16.mxu0 0
      %2131 = vmatpush1.bf16.msra.mxu0 0
      %2132 = vmatprep.subr.bf16.mxu0 0
      %2133 = vmatpush1.bf16.msra.mxu0 0
      %2134 = vmatprep.subr.bf16.mxu0 0
      %2135 = vmatpush1.bf16.msra.mxu0 0
      %2136 = vmatprep.subr.bf16.mxu0 0
      %2137 = vmatpush1.bf16.msra.mxu0 0
      %2138 = vmatprep.subr.bf16.mxu0 0
      %2139 = vmatpush1.bf16.msra.mxu0 0
      %2140 = vmatprep.subr.bf16.mxu0 0
      %2141 = vmatpush1.bf16.msra.mxu0 0
      %2142 = vmatprep.subr.bf16.mxu0 0
      %2143 = vmatpush1.bf16.msra.mxu0 0
      %2144 = vmatprep.subr.bf16.mxu0 0
      %2145 = vmatpush1.bf16.msra.mxu0 0
      %2146 = vmatprep.mubr.bf16.mxu0 0
      %2147 = vmatmul.mubr.bf16.gmra.mrb[0].mxu0 %v1894
      %v2148 = vpop.f32.mrb[0].mxu0
      %v2149 = vadd.f32 0.0, %v2148
      %v2150 = vpop.f32.mrb[0].mxu0
      %v2151 = vpop.f32.mrb[0].mxu0
      %v2152 = vadd.f32 0.0, %v2151
      %v2153 = vpop.f32.mrb[0].mxu0
      %2154 = vmatprep.mubr.bf16.mxu0 0
      %2155 = vmatmul.mubr.bf16.gmra.mrb[0].mxu0 %v1903
      %v2156 = vpop.f32.mrb[0].mxu0
      %v2157 = vadd.f32 0.0, %v2156
      %v2158 = vpop.f32.mrb[0].mxu0
      %v2159 = vpop.f32.mrb[0].mxu0
      %v2160 = vadd.f32 0.0, %v2159
      %v2161 = vpop.f32.mrb[0].mxu0
      %2162 = vmatprep.mubr.bf16.mxu0 0
      %2163 = vmatmul.mubr.bf16.gmra.mrb[0].mxu0 %v1912
      %v2164 = vpop.f32.mrb[0].mxu0
      %v2165 = vadd.f32 0.0, %v2164
      %v2166 = vpop.f32.mrb[0].mxu0
      %v2167 = vpop.f32.mrb[0].mxu0
      %v2168 = vadd.f32 0.0, %v2167
      %v2169 = vpop.f32.mrb[0].mxu0
      %2170 = vmatprep.mubr.bf16.mxu0 0
      %2171 = vmatmul.mubr.bf16.gmra.mrb[0].mxu0 %v1921
      %v2172 = vpop.f32.mrb[0].mxu0
      %v2173 = vadd.f32 0.0, %v2172
      %v2174 = vpop.f32.mrb[0].mxu0
      %v2175 = vpop.f32.mrb[0].mxu0
      %v2176 = vadd.f32 0.0, %v2175
      %v2177 = vpop.f32.mrb[0].mxu0
      %2178 = vmatprep.mubr.bf16.mxu0 0
      %2179 = vmatmul.mubr.bf16.gmra.mrb[0].mxu0 %v1930
      %v2180 = vpop.f32.mrb[0].mxu0
      %v2181 = vadd.f32 0.0, %v2180
      %v2182 = vpop.f32.mrb[0].mxu0
      %v2183 = vpop.f32.mrb[0].mxu0
      %v2184 = vadd.f32 0.0, %v2183
      %v2185 = vpop.f32.mrb[0].mxu0
      %2186 = vmatprep.mubr.bf16.mxu0 0
      %2187 = vmatmul.mubr.bf16.gmra.mrb[0].mxu0 %v1939
      %v2188 = vpop.f32.mrb[0].mxu0
      %v2189 = vadd.f32 0.0, %v2188
      %v2190 = vpop.f32.mrb[0].mxu0
      %v2191 = vpop.f32.mrb[0].mxu0
      %v2192 = vadd.f32 0.0, %v2191
      %v2193 = vpop.f32.mrb[0].mxu0
      %2194 = vmatprep.mubr.bf16.mxu0 0
      %2195 = vmatmul.mubr.bf16.gmra.mrb[0].mxu0 %v1948
      %v2196 = vpop.f32.mrb[0].mxu0
      %v2197 = vadd.f32 0.0, %v2196
      %v2198 = vpop.f32.mrb[0].mxu0
      %v2199 = vpop.f32.mrb[0].mxu0
      %v2200 = vadd.f32 0.0, %v2199
      %v2201 = vpop.f32.mrb[0].mxu0
      %2202 = vmatprep.mubr.bf16.mxu0 0
      %2203 = vmatmul.mubr.bf16.gmra.mrb[0].mxu0 %v1957
      %v2204 = vpop.f32.mrb[0].mxu0
      %v2205 = vadd.f32 0.0, %v2204
      %v2206 = vpop.f32.mrb[0].mxu0
      %v2207 = vpop.f32.mrb[0].mxu0
      %v2208 = vadd.f32 0.0, %v2207
      %v2209 = vpop.f32.mrb[0].mxu0
      %2210 = vmatprep.mubr.bf16.mxu0 0
      %2211 = vmatmul.mubr.bf16.gmra.mrb[0].mxu0 %v1966
      %v2212 = vpop.f32.mrb[0].mxu0
      %v2213 = vadd.f32 0.0, %v2212
      %v2214 = vpop.f32.mrb[0].mxu0
      %v2215 = vpop.f32.mrb[0].mxu0
      %v2216 = vadd.f32 0.0, %v2215
      %v2217 = vpop.f32.mrb[0].mxu0
      %2218 = vmatprep.mubr.bf16.mxu0 0
      %2219 = vmatmul.mubr.bf16.gmra.mrb[0].mxu0 %v1975
      %v2220 = vpop.f32.mrb[0].mxu0
      %v2221 = vadd.f32 0.0, %v2220
      %v2222 = vpop.f32.mrb[0].mxu0
      %v2223 = vpop.f32.mrb[0].mxu0
      %v2224 = vadd.f32 0.0, %v2223
      %v2225 = vpop.f32.mrb[0].mxu0
      %2226 = vmatprep.mubr.bf16.mxu0 0
      %2227 = vmatmul.mubr.bf16.gmra.mrb[0].mxu0 %v1984
      %v2228 = vpop.f32.mrb[0].mxu0
      %v2229 = vadd.f32 0.0, %v2228
      %v2230 = vpop.f32.mrb[0].mxu0
      %v2231 = vpop.f32.mrb[0].mxu0
      %v2232 = vadd.f32 0.0, %v2231
      %v2233 = vpop.f32.mrb[0].mxu0
      %2234 = vmatprep.mubr.bf16.mxu0 0
      %2235 = vmatmul.mubr.bf16.gmra.mrb[0].mxu0 %v1993
      %v2236 = vpop.f32.mrb[0].mxu0
      %v2237 = vadd.f32 0.0, %v2236
      %v2238 = vpop.f32.mrb[0].mxu0
      %v2239 = vpop.f32.mrb[0].mxu0
      %v2240 = vadd.f32 0.0, %v2239
      %v2241 = vpop.f32.mrb[0].mxu0
      %2242 = vmatprep.mubr.bf16.mxu0 0
      %2243 = vmatmul.mubr.bf16.gmra.mrb[0].mxu0 %v2002
      %v2244 = vpop.f32.mrb[0].mxu0
      %v2245 = vadd.f32 0.0, %v2244
      %v2246 = vpop.f32.mrb[0].mxu0
      %v2247 = vpop.f32.mrb[0].mxu0
      %v2248 = vadd.f32 0.0, %v2247
      %v2249 = vpop.f32.mrb[0].mxu0
      %2250 = vmatprep.mubr.bf16.mxu0 0
      %2251 = vmatmul.mubr.bf16.gmra.mrb[0].mxu0 %v2011
      %v2252 = vpop.f32.mrb[0].mxu0
      %v2253 = vadd.f32 0.0, %v2252
      %v2254 = vpop.f32.mrb[0].mxu0
      %v2255 = vpop.f32.mrb[0].mxu0
      %v2256 = vadd.f32 0.0, %v2255
      %v2257 = vpop.f32.mrb[0].mxu0
      %2258 = vmatprep.mubr.bf16.mxu0 0
      %2259 = vmatmul.mubr.bf16.gmra.mrb[0].mxu0 %v2020
      %v2260 = vpop.f32.mrb[0].mxu0
      %v2261 = vadd.f32 0.0, %v2260
      %v2262 = vpop.f32.mrb[0].mxu0
      %v2263 = vpop.f32.mrb[0].mxu0
      %v2264 = vadd.f32 0.0, %v2263
      %v2265 = vpop.f32.mrb[0].mxu0
      %2266 = vmatprep.mubr.bf16.mxu0 0
      %2267 = vmatmul.mubr.bf16.gmra.mrb[0].mxu0 %v2029
      %v2268 = vpop.f32.mrb[0].mxu0
      %v2269 = vadd.f32 0.0, %v2268
      %v2270 = vpop.f32.mrb[0].mxu0
      %v2271 = vpop.f32.mrb[0].mxu0
      %v2272 = vadd.f32 0.0, %v2271
      %v2273 = vpop.f32.mrb[0].mxu0
      %2274 = vmatprep.mubr.bf16.mxu0 0
      %2275 = vmatmul.mubr.bf16.gmra.mrb[0].mxu0 %v2038
      %v2276 = vpop.f32.mrb[0].mxu0
      %v2277 = vadd.f32 0.0, %v2276
      %v2278 = vpop.f32.mrb[0].mxu0
      %v2279 = vpop.f32.mrb[0].mxu0
      %v2280 = vadd.f32 0.0, %v2279
      %v2281 = vpop.f32.mrb[0].mxu0
      %2282 = vmatprep.mubr.bf16.mxu0 0
      %2283 = vmatmul.mubr.bf16.gmra.mrb[0].mxu0 %v2047
      %v2284 = vpop.f32.mrb[0].mxu0
      %v2285 = vadd.f32 0.0, %v2284
      %v2286 = vpop.f32.mrb[0].mxu0
      %v2287 = vpop.f32.mrb[0].mxu0
      %v2288 = vadd.f32 0.0, %v2287
      %v2289 = vpop.f32.mrb[0].mxu0
      %2290 = vdwg.mxu0
      %v2291 = vadd.f32 %v1820, %v2149
      %v2292 = vadd.f32 %v1821, %v2152
      %v2293 = vadd.f32 %v1822, %v2157
      %v2294 = vadd.f32 %v1823, %v2160
      %v2295 = vadd.f32 %v1824, %v2165
      %v2296 = vadd.f32 %v1825, %v2168
      %v2297 = vadd.f32 %v1826, %v2173
      %v2298 = vadd.f32 %v1827, %v2176
      %v2299 = vadd.f32 %v1828, %v2181
      %v2300 = vadd.f32 %v1829, %v2184
      %v2301 = vadd.f32 %v1830, %v2189
      %v2302 = vadd.f32 %v1831, %v2192
      %v2303 = vadd.f32 %v1832, %v2197
      %v2304 = vadd.f32 %v1833, %v2200
      %v2305 = vadd.f32 %v1834, %v2205
      %v2306 = vadd.f32 %v1835, %v2208
      %v2307 = vadd.f32 %v1836, %v2213
      %v2308 = vadd.f32 %v1837, %v2216
      %v2309 = vadd.f32 %v1838, %v2221
      %v2310 = vadd.f32 %v1839, %v2224
      %v2311 = vadd.f32 %v1840, %v2229
      %v2312 = vadd.f32 %v1841, %v2232
      %v2313 = vadd.f32 %v1842, %v2237
      %v2314 = vadd.f32 %v1843, %v2240
      %v2315 = vadd.f32 %v1844, %v2245
      %v2316 = vadd.f32 %v1845, %v2248
      %v2317 = vadd.f32 %v1846, %v2253
      %v2318 = vadd.f32 %v1847, %v2256
      %v2319 = vadd.f32 %v1848, %v2261
      %v2320 = vadd.f32 %v1849, %v2264
      %v2321 = vadd.f32 %v1850, %v2269
      %v2322 = vadd.f32 %v1851, %v2272
      %v2323 = vadd.f32 %v1852, %v2277
      %v2324 = vadd.f32 %v1853, %v2280
      %v2325 = vadd.f32 %v1854, %v2285
      %v2326 = vadd.f32 %v1855, %v2288
      %v2327 = vld [vmem:[%s235 + $0x8] sm:$0xc]
      %s2328 = scalar_lea.vmem %s243, 320
      %v2329 = vld [vmem:[%s2328] sm:$0xf]
      %v2330 = vld [vmem:[%s2328 + $0x4] sm:$0xf]
      %v2331 = vld [vmem:[%s2328 + $0x8] sm:$0xf]
      %v2332 = vld [vmem:[%s2328 + $0xc] sm:$0xf]
      %v2333 = vld [vmem:[%s2328 + $0x10] sm:$0xf]
      %v2334 = vld [vmem:[%s2328 + $0x14] sm:$0xf]
      %v2335 = vld [vmem:[%s2328 + $0x18] sm:$0xf]
      %v2336 = vld [vmem:[%s2328 + $0x1c] sm:$0xf]
      %v2337 = vld [vmem:[%s2328 + $0x20] sm:$0xf]
      %v2338 = vld [vmem:[%s2328 + $0x24] sm:$0xf]
      %v2339 = vld [vmem:[%s2328 + $0x28] sm:$0xf]
      %v2340 = vld [vmem:[%s2328 + $0x2c] sm:$0xf]
      %v2341 = vld [vmem:[%s2328 + $0x30] sm:$0xf]
      %v2342 = vld [vmem:[%s2328 + $0x34] sm:$0xf]
      %v2343 = vld [vmem:[%s2328 + $0x38] sm:$0xf]
      %v2344 = vld [vmem:[%s2328 + $0x3c] sm:$0xf]
      %v2346 = vunpack.c.l.b16 %v2327
      %v2347 = vpack.c.b16 %v1485, %v2346
      %vm2348 = vcmask 1045504
      %v2349 = vrot.slane %v2347, 2
      %v2350 = vrot.slane %v1522, 2
      %v2351 = vsel %vm2348, %v2349, %v2350
      %v2352 = vrot.slane %v1523, 2
      %v2353 = vsel %vm2348, %v2350, %v2352
      %v2354 = vrot.slane %v1524, 2
      %v2355 = vsel %vm2348, %v2352, %v2354
      %v2356 = vrot.slane %v1525, 2
      %v2357 = vsel %vm2348, %v2354, %v2356
      %v2358 = vrot.slane %v1526, 2
      %v2359 = vsel %vm2348, %v2356, %v2358
      %v2360 = vrot.slane %v1527, 2
      %v2361 = vsel %vm2348, %v2358, %v2360
      %v2362 = vrot.slane %v1528, 2
      %v2363 = vsel %vm2348, %v2360, %v2362
      %v2364 = vrot.slane %v1529, 2
      %v2365 = vsel %vm2348, %v2362, %v2364
      %v2366 = vrot.slane %v1530, 2
      %v2367 = vsel %vm2348, %v2364, %v2366
      %v2368 = vrot.slane %v1531, 2
      %v2369 = vsel %vm2348, %v2366, %v2368
      %v2370 = vrot.slane %v1532, 2
      %v2371 = vsel %vm2348, %v2368, %v2370
      %v2372 = vrot.slane %v1533, 2
      %v2373 = vsel %vm2348, %v2370, %v2372
      %v2374 = vrot.slane %v1534, 2
      %v2375 = vsel %vm2348, %v2372, %v2374
      %v2376 = vrot.slane %v1535, 2
      %v2377 = vsel %vm2348, %v2374, %v2376
      %v2378 = vrot.slane %v1536, 2
      %v2379 = vsel %vm2348, %v2376, %v2378
      %v2380 = vrot.slane %v1537, 2
      %v2381 = vsel %vm2348, %v2378, %v2380
      %v2382 = vrot.slane %v1538, 2
      %v2383 = vsel %vm2348, %v2380, %v2382
      %v2384 = vrot.slane %v1876, 2
      %v2385 = vsel %vm2348, %v2382, %v2384
      %v2420 = vunpack.c.l.b16 %v2329
      %v2421 = vunpack.c.l.b16 %v2330
      %v2422 = vunpack.c.l.b16 %v2331
      %v2423 = vunpack.c.l.b16 %v2332
      %v2424 = vunpack.c.l.b16 %v2333
      %v2425 = vunpack.c.l.b16 %v2334
      %v2426 = vunpack.c.l.b16 %v2335
      %v2427 = vunpack.c.l.b16 %v2336
      %v2428 = vunpack.c.l.b16 %v2337
      %v2429 = vunpack.c.l.b16 %v2338
      %v2430 = vunpack.c.l.b16 %v2339
      %v2431 = vunpack.c.l.b16 %v2340
      %v2432 = vunpack.c.l.b16 %v2341
      %v2433 = vunpack.c.l.b16 %v2342
      %v2434 = vunpack.c.l.b16 %v2343
      %v2435 = vunpack.c.l.b16 %v2344
      %v2436 = vpack.c.b16 %v2421, %v2420
      %v2437 = vpack.c.b16 %v2423, %v2422
      %v2438 = vpack.c.b16 %v2425, %v2424
      %v2439 = vpack.c.b16 %v2427, %v2426
      %v2440 = vpack.c.b16 %v2429, %v2428
      %v2441 = vpack.c.b16 %v2431, %v2430
      %v2442 = vpack.c.b16 %v2433, %v2432
      %v2443 = vpack.c.b16 %v2435, %v2434
      %2452 = vmatprep.subr.bf16.mxu0 0
      %2453 = vmatpush1.bf16.msra.mxu0 %v2436
      %2454 = vmatprep.subr.bf16.mxu0 0
      %2455 = vmatpush1.bf16.msra.mxu0 %v2437
      %2456 = vmatprep.subr.bf16.mxu0 0
      %2457 = vmatpush1.bf16.msra.mxu0 %v2438
      %2458 = vmatprep.subr.bf16.mxu0 0
      %2459 = vmatpush1.bf16.msra.mxu0 %v2439
      %2460 = vmatprep.subr.bf16.mxu0 0
      %2461 = vmatpush1.bf16.msra.mxu0 %v2440
      %2462 = vmatprep.subr.bf16.mxu0 0
      %2463 = vmatpush1.bf16.msra.mxu0 %v2441
      %2464 = vmatprep.subr.bf16.mxu0 0
      %2465 = vmatpush1.bf16.msra.mxu0 %v2442
      %2466 = vmatprep.subr.bf16.mxu0 0
      %2467 = vmatpush1.bf16.msra.mxu0 %v2443
      %2468 = vmatprep.subr.bf16.mxu0 0
      %2469 = vmatpush1.bf16.msra.mxu0 0
      %2470 = vmatprep.subr.bf16.mxu0 0
      %2471 = vmatpush1.bf16.msra.mxu0 0
      %2472 = vmatprep.subr.bf16.mxu0 0
      %2473 = vmatpush1.bf16.msra.mxu0 0
      %2474 = vmatprep.subr.bf16.mxu0 0
      %2475 = vmatpush1.bf16.msra.mxu0 0
      %2476 = vmatprep.subr.bf16.mxu0 0
      %2477 = vmatpush1.bf16.msra.mxu0 0
      %2478 = vmatprep.subr.bf16.mxu0 0
      %2479 = vmatpush1.bf16.msra.mxu0 0
      %2480 = vmatprep.subr.bf16.mxu0 0
      %2481 = vmatpush1.bf16.msra.mxu0 0
      %2482 = vmatprep.subr.bf16.mxu0 0
      %2483 = vmatpush1.bf16.msra.mxu0 0
      %2484 = vmatprep.mubr.bf16.mxu0 0
      %2485 = vmatmul.mubr.bf16.gmra.mrb[0].mxu0 %v2351
      %v2486 = vpop.f32.mrb[0].mxu0
      %v2487 = vadd.f32 0.0, %v2486
      %v2488 = vpop.f32.mrb[0].mxu0
      %v2489 = vpop.f32.mrb[0].mxu0
      %v2490 = vadd.f32 0.0, %v2489
      %v2491 = vpop.f32.mrb[0].mxu0
      %2492 = vmatprep.mubr.bf16.mxu0 0
      %2493 = vmatmul.mubr.bf16.gmra.mrb[0].mxu0 %v2353
      %v2494 = vpop.f32.mrb[0].mxu0
      %v2495 = vadd.f32 0.0, %v2494
      %v2496 = vpop.f32.mrb[0].mxu0
      %v2497 = vpop.f32.mrb[0].mxu0
      %v2498 = vadd.f32 0.0, %v2497
      %v2499 = vpop.f32.mrb[0].mxu0
      %2500 = vmatprep.mubr.bf16.mxu0 0
      %2501 = vmatmul.mubr.bf16.gmra.mrb[0].mxu0 %v2355
      %v2502 = vpop.f32.mrb[0].mxu0
      %v2503 = vadd.f32 0.0, %v2502
      %v2504 = vpop.f32.mrb[0].mxu0
      %v2505 = vpop.f32.mrb[0].mxu0
      %v2506 = vadd.f32 0.0, %v2505
      %v2507 = vpop.f32.mrb[0].mxu0
      %2508 = vmatprep.mubr.bf16.mxu0 0
      %2509 = vmatmul.mubr.bf16.gmra.mrb[0].mxu0 %v2357
      %v2510 = vpop.f32.mrb[0].mxu0
      %v2511 = vadd.f32 0.0, %v2510
      %v2512 = vpop.f32.mrb[0].mxu0
      %v2513 = vpop.f32.mrb[0].mxu0
      %v2514 = vadd.f32 0.0, %v2513
      %v2515 = vpop.f32.mrb[0].mxu0
      %2516 = vmatprep.mubr.bf16.mxu0 0
      %2517 = vmatmul.mubr.bf16.gmra.mrb[0].mxu0 %v2359
      %v2518 = vpop.f32.mrb[0].mxu0
      %v2519 = vadd.f32 0.0, %v2518
      %v2520 = vpop.f32.mrb[0].mxu0
      %v2521 = vpop.f32.mrb[0].mxu0
      %v2522 = vadd.f32 0.0, %v2521
      %v2523 = vpop.f32.mrb[0].mxu0
      %2524 = vmatprep.mubr.bf16.mxu0 0
      %2525 = vmatmul.mubr.bf16.gmra.mrb[0].mxu0 %v2361
      %v2526 = vpop.f32.mrb[0].mxu0
      %v2527 = vadd.f32 0.0, %v2526
      %v2528 = vpop.f32.mrb[0].mxu0
      %v2529 = vpop.f32.mrb[0].mxu0
      %v2530 = vadd.f32 0.0, %v2529
      %v2531 = vpop.f32.mrb[0].mxu0
      %2532 = vmatprep.mubr.bf16.mxu0 0
      %2533 = vmatmul.mubr.bf16.gmra.mrb[0].mxu0 %v2363
      %v2534 = vpop.f32.mrb[0].mxu0
      %v2535 = vadd.f32 0.0, %v2534
      %v2536 = vpop.f32.mrb[0].mxu0
      %v2537 = vpop.f32.mrb[0].mxu0
      %v2538 = vadd.f32 0.0, %v2537
      %v2539 = vpop.f32.mrb[0].mxu0
      %2540 = vmatprep.mubr.bf16.mxu0 0
      %2541 = vmatmul.mubr.bf16.gmra.mrb[0].mxu0 %v2365
      %v2542 = vpop.f32.mrb[0].mxu0
      %v2543 = vadd.f32 0.0, %v2542
      %v2544 = vpop.f32.mrb[0].mxu0
      %v2545 = vpop.f32.mrb[0].mxu0
      %v2546 = vadd.f32 0.0, %v2545
      %v2547 = vpop.f32.mrb[0].mxu0
      %2548 = vmatprep.mubr.bf16.mxu0 0
      %2549 = vmatmul.mubr.bf16.gmra.mrb[0].mxu0 %v2367
      %v2550 = vpop.f32.mrb[0].mxu0
      %v2551 = vadd.f32 0.0, %v2550
      %v2552 = vpop.f32.mrb[0].mxu0
      %v2553 = vpop.f32.mrb[0].mxu0
      %v2554 = vadd.f32 0.0, %v2553
      %v2555 = vpop.f32.mrb[0].mxu0
      %2556 = vmatprep.mubr.bf16.mxu0 0
      %2557 = vmatmul.mubr.bf16.gmra.mrb[0].mxu0 %v2369
      %v2558 = vpop.f32.mrb[0].mxu0
      %v2559 = vadd.f32 0.0, %v2558
      %v2560 = vpop.f32.mrb[0].mxu0
      %v2561 = vpop.f32.mrb[0].mxu0
      %v2562 = vadd.f32 0.0, %v2561
      %v2563 = vpop.f32.mrb[0].mxu0
      %2564 = vmatprep.mubr.bf16.mxu0 0
      %2565 = vmatmul.mubr.bf16.gmra.mrb[0].mxu0 %v2371
      %v2566 = vpop.f32.mrb[0].mxu0
      %v2567 = vadd.f32 0.0, %v2566
      %v2568 = vpop.f32.mrb[0].mxu0
      %v2569 = vpop.f32.mrb[0].mxu0
      %v2570 = vadd.f32 0.0, %v2569
      %v2571 = vpop.f32.mrb[0].mxu0
      %2572 = vmatprep.mubr.bf16.mxu0 0
      %2573 = vmatmul.mubr.bf16.gmra.mrb[0].mxu0 %v2373
      %v2574 = vpop.f32.mrb[0].mxu0
      %v2575 = vadd.f32 0.0, %v2574
      %v2576 = vpop.f32.mrb[0].mxu0
      %v2577 = vpop.f32.mrb[0].mxu0
      %v2578 = vadd.f32 0.0, %v2577
      %v2579 = vpop.f32.mrb[0].mxu0
      %2580 = vmatprep.mubr.bf16.mxu0 0
      %2581 = vmatmul.mubr.bf16.gmra.mrb[0].mxu0 %v2375
      %v2582 = vpop.f32.mrb[0].mxu0
      %v2583 = vadd.f32 0.0, %v2582
      %v2584 = vpop.f32.mrb[0].mxu0
      %v2585 = vpop.f32.mrb[0].mxu0
      %v2586 = vadd.f32 0.0, %v2585
      %v2587 = vpop.f32.mrb[0].mxu0
      %2588 = vmatprep.mubr.bf16.mxu0 0
      %2589 = vmatmul.mubr.bf16.gmra.mrb[0].mxu0 %v2377
      %v2590 = vpop.f32.mrb[0].mxu0
      %v2591 = vadd.f32 0.0, %v2590
      %v2592 = vpop.f32.mrb[0].mxu0
      %v2593 = vpop.f32.mrb[0].mxu0
      %v2594 = vadd.f32 0.0, %v2593
      %v2595 = vpop.f32.mrb[0].mxu0
      %2596 = vmatprep.mubr.bf16.mxu0 0
      %2597 = vmatmul.mubr.bf16.gmra.mrb[0].mxu0 %v2379
      %v2598 = vpop.f32.mrb[0].mxu0
      %v2599 = vadd.f32 0.0, %v2598
      %v2600 = vpop.f32.mrb[0].mxu0
      %v2601 = vpop.f32.mrb[0].mxu0
      %v2602 = vadd.f32 0.0, %v2601
      %v2603 = vpop.f32.mrb[0].mxu0
      %2604 = vmatprep.mubr.bf16.mxu0 0
      %2605 = vmatmul.mubr.bf16.gmra.mrb[0].mxu0 %v2381
      %v2606 = vpop.f32.mrb[0].mxu0
      %v2607 = vadd.f32 0.0, %v2606
      %v2608 = vpop.f32.mrb[0].mxu0
      %v2609 = vpop.f32.mrb[0].mxu0
      %v2610 = vadd.f32 0.0, %v2609
      %v2611 = vpop.f32.mrb[0].mxu0
      %2612 = vmatprep.mubr.bf16.mxu0 0
      %2613 = vmatmul.mubr.bf16.gmra.mrb[0].mxu0 %v2383
      %v2614 = vpop.f32.mrb[0].mxu0
      %v2615 = vadd.f32 0.0, %v2614
      %v2616 = vpop.f32.mrb[0].mxu0
      %v2617 = vpop.f32.mrb[0].mxu0
      %v2618 = vadd.f32 0.0, %v2617
      %v2619 = vpop.f32.mrb[0].mxu0
      %2620 = vmatprep.mubr.bf16.mxu0 0
      %2621 = vmatmul.mubr.bf16.gmra.mrb[0].mxu0 %v2385
      %v2622 = vpop.f32.mrb[0].mxu0
      %v2623 = vadd.f32 0.0, %v2622
      %v2624 = vpop.f32.mrb[0].mxu0
      %v2625 = vpop.f32.mrb[0].mxu0
      %v2626 = vadd.f32 0.0, %v2625
      %v2627 = vpop.f32.mrb[0].mxu0
      %2628 = vdwg.mxu0
      %v2629 = vadd.f32 %v2291, %v2487
      %v2630 = vadd.f32 %v2292, %v2490
      %v2631 = vadd.f32 %v2293, %v2495
      %v2632 = vadd.f32 %v2294, %v2498
      %v2633 = vadd.f32 %v2295, %v2503
      %v2634 = vadd.f32 %v2296, %v2506
      %v2635 = vadd.f32 %v2297, %v2511
      %v2636 = vadd.f32 %v2298, %v2514
      %v2637 = vadd.f32 %v2299, %v2519
      %v2638 = vadd.f32 %v2300, %v2522
      %v2639 = vadd.f32 %v2301, %v2527
      %v2640 = vadd.f32 %v2302, %v2530
      %v2641 = vadd.f32 %v2303, %v2535
      %v2642 = vadd.f32 %v2304, %v2538
      %v2643 = vadd.f32 %v2305, %v2543
      %v2644 = vadd.f32 %v2306, %v2546
      %v2645 = vadd.f32 %v2307, %v2551
      %v2646 = vadd.f32 %v2308, %v2554
      %v2647 = vadd.f32 %v2309, %v2559
      %v2648 = vadd.f32 %v2310, %v2562
      %v2649 = vadd.f32 %v2311, %v2567
      %v2650 = vadd.f32 %v2312, %v2570
      %v2651 = vadd.f32 %v2313, %v2575
      %v2652 = vadd.f32 %v2314, %v2578
      %v2653 = vadd.f32 %v2315, %v2583
      %v2654 = vadd.f32 %v2316, %v2586
      %v2655 = vadd.f32 %v2317, %v2591
      %v2656 = vadd.f32 %v2318, %v2594
      %v2657 = vadd.f32 %v2319, %v2599
      %v2658 = vadd.f32 %v2320, %v2602
      %v2659 = vadd.f32 %v2321, %v2607
      %v2660 = vadd.f32 %v2322, %v2610
      %v2661 = vadd.f32 %v2323, %v2615
      %v2662 = vadd.f32 %v2324, %v2618
      %v2663 = vadd.f32 %v2325, %v2623
      %v2664 = vadd.f32 %v2326, %v2626
      %v2665 = vld [vmem:[%s235 + $0x10] sm:$0xc]
      %v2666 = vld [vmem:[%s235 + $0x14] sm:$0xf]
      %v2667 = vld [vmem:[%s235 + $0x18] sm:$0xf]
      %v2668 = vld [vmem:[%s235 + $0x1c] sm:$0xf]
      %v2669 = vld [vmem:[%s235 + $0x20] sm:$0xf]
      %v2670 = vld [vmem:[%s235 + $0x24] sm:$0xf]
      %v2671 = vld [vmem:[%s235 + $0x28] sm:$0xf]
      %v2672 = vld [vmem:[%s235 + $0x2c] sm:$0xf]
      %v2673 = vld [vmem:[%s235 + $0x30] sm:$0xf]
      %v2674 = vld [vmem:[%s235 + $0x34] sm:$0xf]
      %v2675 = vld [vmem:[%s235 + $0x38] sm:$0xf]
      %v2676 = vld [vmem:[%s235 + $0x3c] sm:$0xf]
      %v2677 = vld [vmem:[%s235 + $0x40] sm:$0xf]
      %v2678 = vld [vmem:[%s235 + $0x44] sm:$0xf]
      %v2679 = vld [vmem:[%s235 + $0x48] sm:$0xf]
      %v2680 = vld [vmem:[%s235 + $0x4c] sm:$0xf]
      %v2681 = vld [vmem:[%s235 + $0x50] sm:$0xf]
      %v2682 = vld [vmem:[%s235 + $0x54] sm:$0xf]
      %v2683 = vld [vmem:[%s235 + $0x58] sm:$0xf]
      %v2684 = vld [vmem:[%s235 + $0x5c] sm:$0xf]
      %v2685 = vld [vmem:[%s235 + $0x60] sm:$0xf]
      %v2686 = vld [vmem:[%s235 + $0x64] sm:$0xf]
      %v2687 = vld [vmem:[%s235 + $0x68] sm:$0xf]
      %v2688 = vld [vmem:[%s235 + $0x6c] sm:$0xf]
      %v2689 = vld [vmem:[%s235 + $0x70] sm:$0xf]
      %v2690 = vld [vmem:[%s235 + $0x74] sm:$0xf]
      %v2691 = vld [vmem:[%s235 + $0x78] sm:$0xf]
      %v2692 = vld [vmem:[%s235 + $0x7c] sm:$0xf]
      %v2693 = vld [vmem:[%s235 + $0x80] sm:$0xf]
      %v2694 = vld [vmem:[%s235 + $0x84] sm:$0xf]
      %v2695 = vld [vmem:[%s235 + $0x88] sm:$0xf]
      %v2696 = vld [vmem:[%s235 + $0x8c] sm:$0xf]
      %v2697 = vld [vmem:[%s235 + $0x90] sm:$0xf]
      %v2698 = vld [vmem:[%s235 + $0x94] sm:$0xf]
      %v2699 = vld [vmem:[%s235 + $0x98] sm:$0xf]
      %v2700 = vld [vmem:[%s235 + $0x9c] sm:$0xf]
      %v2701 = vld [vmem:[%s235 + $0xa0] sm:$0x3]
      %s2702 = scalar_lea.vmem %s243, 384
      %v2703 = vld [vmem:[%s2702] sm:$0xf]
      %v2704 = vld [vmem:[%s2702 + $0x4] sm:$0xf]
      %v2705 = vld [vmem:[%s2702 + $0x8] sm:$0xf]
      %v2706 = vld [vmem:[%s2702 + $0xc] sm:$0xf]
      %v2707 = vld [vmem:[%s2702 + $0x10] sm:$0xf]
      %v2708 = vld [vmem:[%s2702 + $0x14] sm:$0xf]
      %v2709 = vld [vmem:[%s2702 + $0x18] sm:$0xf]
      %v2710 = vld [vmem:[%s2702 + $0x1c] sm:$0xf]
      %v2711 = vld [vmem:[%s2702 + $0x20] sm:$0xf]
      %v2712 = vld [vmem:[%s2702 + $0x24] sm:$0xf]
      %v2713 = vld [vmem:[%s2702 + $0x28] sm:$0xf]
      %v2714 = vld [vmem:[%s2702 + $0x2c] sm:$0xf]
      %v2715 = vld [vmem:[%s2702 + $0x30] sm:$0xf]
      %v2716 = vld [vmem:[%s2702 + $0x34] sm:$0xf]
      %v2717 = vld [vmem:[%s2702 + $0x38] sm:$0xf]
      %v2718 = vld [vmem:[%s2702 + $0x3c] sm:$0xf]
      %v2756 = vunpack.c.l.b16 %v2665
      %v2757 = vunpack.c.l.b16 %v2666
      %v2758 = vunpack.c.l.b16 %v2667
      %v2759 = vunpack.c.l.b16 %v2668
      %v2760 = vunpack.c.l.b16 %v2669
      %v2761 = vunpack.c.l.b16 %v2670
      %v2762 = vunpack.c.l.b16 %v2671
      %v2763 = vunpack.c.l.b16 %v2672
      %v2764 = vunpack.c.l.b16 %v2673
      %v2765 = vunpack.c.l.b16 %v2674
      %v2766 = vunpack.c.l.b16 %v2675
      %v2767 = vunpack.c.l.b16 %v2676
      %v2768 = vunpack.c.l.b16 %v2677
      %v2769 = vunpack.c.l.b16 %v2678
      %v2770 = vunpack.c.l.b16 %v2679
      %v2771 = vunpack.c.l.b16 %v2680
      %v2772 = vunpack.c.l.b16 %v2681
      %v2773 = vunpack.c.l.b16 %v2682
      %v2774 = vunpack.c.l.b16 %v2683
      %v2775 = vunpack.c.l.b16 %v2684
      %v2776 = vunpack.c.l.b16 %v2685
      %v2777 = vunpack.c.l.b16 %v2686
      %v2778 = vunpack.c.l.b16 %v2687
      %v2779 = vunpack.c.l.b16 %v2688
      %v2780 = vunpack.c.l.b16 %v2689
      %v2781 = vunpack.c.l.b16 %v2690
      %v2782 = vunpack.c.l.b16 %v2691
      %v2783 = vunpack.c.l.b16 %v2692
      %v2784 = vunpack.c.l.b16 %v2693
      %v2785 = vunpack.c.l.b16 %v2694
      %v2786 = vunpack.c.l.b16 %v2695
      %v2787 = vunpack.c.l.b16 %v2696
      %v2788 = vunpack.c.l.b16 %v2697
      %v2789 = vunpack.c.l.b16 %v2698
      %v2790 = vunpack.c.l.b16 %v2699
      %v2791 = vunpack.c.l.b16 %v2700
      %v2792 = vunpack.c.l.b16 %v2701
      %v2793 = vpack.c.b16 %v2757, %v2756
      %v2794 = vpack.c.b16 %v2759, %v2758
      %v2795 = vpack.c.b16 %v2761, %v2760
      %v2796 = vpack.c.b16 %v2763, %v2762
      %v2797 = vpack.c.b16 %v2765, %v2764
      %v2798 = vpack.c.b16 %v2767, %v2766
      %v2799 = vpack.c.b16 %v2769, %v2768
      %v2800 = vpack.c.b16 %v2771, %v2770
      %v2801 = vpack.c.b16 %v2773, %v2772
      %v2802 = vpack.c.b16 %v2775, %v2774
      %v2803 = vpack.c.b16 %v2777, %v2776
      %v2804 = vpack.c.b16 %v2779, %v2778
      %v2805 = vpack.c.b16 %v2781, %v2780
      %v2806 = vpack.c.b16 %v2783, %v2782
      %v2807 = vpack.c.b16 %v2785, %v2784
      %v2808 = vpack.c.b16 %v2787, %v2786
      %v2809 = vpack.c.b16 %v2789, %v2788
      %v2810 = vpack.c.b16 %v2791, %v2790
      %v2811 = vpack.c.b16 %v2792, %v2792
      %v2812 = vrot.slane %v2793, 2
      %v2813 = vrot.slane %v2794, 2
      %v2814 = vsel %vm2348, %v2812, %v2813
      %v2815 = vrot.slane %v2795, 2
      %v2816 = vsel %vm2348, %v2813, %v2815
      %v2817 = vrot.slane %v2796, 2
      %v2818 = vsel %vm2348, %v2815, %v2817
      %v2819 = vrot.slane %v2797, 2
      %v2820 = vsel %vm2348, %v2817, %v2819
      %v2821 = vrot.slane %v2798, 2
      %v2822 = vsel %vm2348, %v2819, %v2821
      %v2823 = vrot.slane %v2799, 2
      %v2824 = vsel %vm2348, %v2821, %v2823
      %v2825 = vrot.slane %v2800, 2
      %v2826 = vsel %vm2348, %v2823, %v2825
      %v2827 = vrot.slane %v2801, 2
      %v2828 = vsel %vm2348, %v2825, %v2827
      %v2829 = vrot.slane %v2802, 2
      %v2830 = vsel %vm2348, %v2827, %v2829
      %v2831 = vrot.slane %v2803, 2
      %v2832 = vsel %vm2348, %v2829, %v2831
      %v2833 = vrot.slane %v2804, 2
      %v2834 = vsel %vm2348, %v2831, %v2833
      %v2835 = vrot.slane %v2805, 2
      %v2836 = vsel %vm2348, %v2833, %v2835
      %v2837 = vrot.slane %v2806, 2
      %v2838 = vsel %vm2348, %v2835, %v2837
      %v2839 = vrot.slane %v2807, 2
      %v2840 = vsel %vm2348, %v2837, %v2839
      %v2841 = vrot.slane %v2808, 2
      %v2842 = vsel %vm2348, %v2839, %v2841
      %v2843 = vrot.slane %v2809, 2
      %v2844 = vsel %vm2348, %v2841, %v2843
      %v2845 = vrot.slane %v2810, 2
      %v2846 = vsel %vm2348, %v2843, %v2845
      %v2847 = vrot.slane %v2811, 2
      %v2848 = vsel %vm2348, %v2845, %v2847
      %v2883 = vunpack.c.l.b16 %v2703
      %v2884 = vunpack.c.l.b16 %v2704
      %v2885 = vunpack.c.l.b16 %v2705
      %v2886 = vunpack.c.l.b16 %v2706
      %v2887 = vunpack.c.l.b16 %v2707
      %v2888 = vunpack.c.l.b16 %v2708
      %v2889 = vunpack.c.l.b16 %v2709
      %v2890 = vunpack.c.l.b16 %v2710
      %v2891 = vunpack.c.l.b16 %v2711
      %v2892 = vunpack.c.l.b16 %v2712
      %v2893 = vunpack.c.l.b16 %v2713
      %v2894 = vunpack.c.l.b16 %v2714
      %v2895 = vunpack.c.l.b16 %v2715
      %v2896 = vunpack.c.l.b16 %v2716
      %v2897 = vunpack.c.l.b16 %v2717
      %v2898 = vunpack.c.l.b16 %v2718
      %v2899 = vpack.c.b16 %v2884, %v2883
      %v2900 = vpack.c.b16 %v2886, %v2885
      %v2901 = vpack.c.b16 %v2888, %v2887
      %v2902 = vpack.c.b16 %v2890, %v2889
      %v2903 = vpack.c.b16 %v2892, %v2891
      %v2904 = vpack.c.b16 %v2894, %v2893
      %v2905 = vpack.c.b16 %v2896, %v2895
      %v2906 = vpack.c.b16 %v2898, %v2897
      %2915 = vmatprep.subr.bf16.mxu0 0
      %2916 = vmatpush1.bf16.msra.mxu0 %v2899
      %2917 = vmatprep.subr.bf16.mxu0 0
      %2918 = vmatpush1.bf16.msra.mxu0 %v2900
      %2919 = vmatprep.subr.bf16.mxu0 0
      %2920 = vmatpush1.bf16.msra.mxu0 %v2901
      %2921 = vmatprep.subr.bf16.mxu0 0
      %2922 = vmatpush1.bf16.msra.mxu0 %v2902
      %2923 = vmatprep.subr.bf16.mxu0 0
      %2924 = vmatpush1.bf16.msra.mxu0 %v2903
      %2925 = vmatprep.subr.bf16.mxu0 0
      %2926 = vmatpush1.bf16.msra.mxu0 %v2904
      %2927 = vmatprep.subr.bf16.mxu0 0
      %2928 = vmatpush1.bf16.msra.mxu0 %v2905
      %2929 = vmatprep.subr.bf16.mxu0 0
      %2930 = vmatpush1.bf16.msra.mxu0 %v2906
      %2931 = vmatprep.subr.bf16.mxu0 0
      %2932 = vmatpush1.bf16.msra.mxu0 0
      %2933 = vmatprep.subr.bf16.mxu0 0
      %2934 = vmatpush1.bf16.msra.mxu0 0
      %2935 = vmatprep.subr.bf16.mxu0 0
      %2936 = vmatpush1.bf16.msra.mxu0 0
      %2937 = vmatprep.subr.bf16.mxu0 0
      %2938 = vmatpush1.bf16.msra.mxu0 0
      %2939 = vmatprep.subr.bf16.mxu0 0
      %2940 = vmatpush1.bf16.msra.mxu0 0
      %2941 = vmatprep.subr.bf16.mxu0 0
      %2942 = vmatpush1.bf16.msra.mxu0 0
      %2943 = vmatprep.subr.bf16.mxu0 0
      %2944 = vmatpush1.bf16.msra.mxu0 0
      %2945 = vmatprep.subr.bf16.mxu0 0
      %2946 = vmatpush1.bf16.msra.mxu0 0
      %2947 = vmatprep.mubr.bf16.mxu0 0
      %2948 = vmatmul.mubr.bf16.gmra.mrb[0].mxu0 %v2814
      %v2949 = vpop.f32.mrb[0].mxu0
      %v2950 = vadd.f32 0.0, %v2949
      %v2951 = vpop.f32.mrb[0].mxu0
      %v2952 = vpop.f32.mrb[0].mxu0
      %v2953 = vadd.f32 0.0, %v2952
      %v2954 = vpop.f32.mrb[0].mxu0
      %2955 = vmatprep.mubr.bf16.mxu0 0
      %2956 = vmatmul.mubr.bf16.gmra.mrb[0].mxu0 %v2816
      %v2957 = vpop.f32.mrb[0].mxu0
      %v2958 = vadd.f32 0.0, %v2957
      %v2959 = vpop.f32.mrb[0].mxu0
      %v2960 = vpop.f32.mrb[0].mxu0
      %v2961 = vadd.f32 0.0, %v2960
      %v2962 = vpop.f32.mrb[0].mxu0
      %2963 = vmatprep.mubr.bf16.mxu0 0
      %2964 = vmatmul.mubr.bf16.gmra.mrb[0].mxu0 %v2818
      %v2965 = vpop.f32.mrb[0].mxu0
      %v2966 = vadd.f32 0.0, %v2965
      %v2967 = vpop.f32.mrb[0].mxu0
      %v2968 = vpop.f32.mrb[0].mxu0
      %v2969 = vadd.f32 0.0, %v2968
      %v2970 = vpop.f32.mrb[0].mxu0
      %2971 = vmatprep.mubr.bf16.mxu0 0
      %2972 = vmatmul.mubr.bf16.gmra.mrb[0].mxu0 %v2820
      %v2973 = vpop.f32.mrb[0].mxu0
      %v2974 = vadd.f32 0.0, %v2973
      %v2975 = vpop.f32.mrb[0].mxu0
      %v2976 = vpop.f32.mrb[0].mxu0
      %v2977 = vadd.f32 0.0, %v2976
      %v2978 = vpop.f32.mrb[0].mxu0
      %2979 = vmatprep.mubr.bf16.mxu0 0
      %2980 = vmatmul.mubr.bf16.gmra.mrb[0].mxu0 %v2822
      %v2981 = vpop.f32.mrb[0].mxu0
      %v2982 = vadd.f32 0.0, %v2981
      %v2983 = vpop.f32.mrb[0].mxu0
      %v2984 = vpop.f32.mrb[0].mxu0
      %v2985 = vadd.f32 0.0, %v2984
      %v2986 = vpop.f32.mrb[0].mxu0
      %2987 = vmatprep.mubr.bf16.mxu0 0
      %2988 = vmatmul.mubr.bf16.gmra.mrb[0].mxu0 %v2824
      %v2989 = vpop.f32.mrb[0].mxu0
      %v2990 = vadd.f32 0.0, %v2989
      %v2991 = vpop.f32.mrb[0].mxu0
      %v2992 = vpop.f32.mrb[0].mxu0
      %v2993 = vadd.f32 0.0, %v2992
      %v2994 = vpop.f32.mrb[0].mxu0
      %2995 = vmatprep.mubr.bf16.mxu0 0
      %2996 = vmatmul.mubr.bf16.gmra.mrb[0].mxu0 %v2826
      %v2997 = vpop.f32.mrb[0].mxu0
      %v2998 = vadd.f32 0.0, %v2997
      %v2999 = vpop.f32.mrb[0].mxu0
      %v3000 = vpop.f32.mrb[0].mxu0
      %v3001 = vadd.f32 0.0, %v3000
      %v3002 = vpop.f32.mrb[0].mxu0
      %3003 = vmatprep.mubr.bf16.mxu0 0
      %3004 = vmatmul.mubr.bf16.gmra.mrb[0].mxu0 %v2828
      %v3005 = vpop.f32.mrb[0].mxu0
      %v3006 = vadd.f32 0.0, %v3005
      %v3007 = vpop.f32.mrb[0].mxu0
      %v3008 = vpop.f32.mrb[0].mxu0
      %v3009 = vadd.f32 0.0, %v3008
      %v3010 = vpop.f32.mrb[0].mxu0
      %3011 = vmatprep.mubr.bf16.mxu0 0
      %3012 = vmatmul.mubr.bf16.gmra.mrb[0].mxu0 %v2830
      %v3013 = vpop.f32.mrb[0].mxu0
      %v3014 = vadd.f32 0.0, %v3013
      %v3015 = vpop.f32.mrb[0].mxu0
      %v3016 = vpop.f32.mrb[0].mxu0
      %v3017 = vadd.f32 0.0, %v3016
      %v3018 = vpop.f32.mrb[0].mxu0
      %3019 = vmatprep.mubr.bf16.mxu0 0
      %3020 = vmatmul.mubr.bf16.gmra.mrb[0].mxu0 %v2832
      %v3021 = vpop.f32.mrb[0].mxu0
      %v3022 = vadd.f32 0.0, %v3021
      %v3023 = vpop.f32.mrb[0].mxu0
      %v3024 = vpop.f32.mrb[0].mxu0
      %v3025 = vadd.f32 0.0, %v3024
      %v3026 = vpop.f32.mrb[0].mxu0
      %3027 = vmatprep.mubr.bf16.mxu0 0
      %3028 = vmatmul.mubr.bf16.gmra.mrb[0].mxu0 %v2834
      %v3029 = vpop.f32.mrb[0].mxu0
      %v3030 = vadd.f32 0.0, %v3029
      %v3031 = vpop.f32.mrb[0].mxu0
      %v3032 = vpop.f32.mrb[0].mxu0
      %v3033 = vadd.f32 0.0, %v3032
      %v3034 = vpop.f32.mrb[0].mxu0
      %3035 = vmatprep.mubr.bf16.mxu0 0
      %3036 = vmatmul.mubr.bf16.gmra.mrb[0].mxu0 %v2836
      %v3037 = vpop.f32.mrb[0].mxu0
      %v3038 = vadd.f32 0.0, %v3037
      %v3039 = vpop.f32.mrb[0].mxu0
      %v3040 = vpop.f32.mrb[0].mxu0
      %v3041 = vadd.f32 0.0, %v3040
      %v3042 = vpop.f32.mrb[0].mxu0
      %3043 = vmatprep.mubr.bf16.mxu0 0
      %3044 = vmatmul.mubr.bf16.gmra.mrb[0].mxu0 %v2838
      %v3045 = vpop.f32.mrb[0].mxu0
      %v3046 = vadd.f32 0.0, %v3045
      %v3047 = vpop.f32.mrb[0].mxu0
      %v3048 = vpop.f32.mrb[0].mxu0
      %v3049 = vadd.f32 0.0, %v3048
      %v3050 = vpop.f32.mrb[0].mxu0
      %3051 = vmatprep.mubr.bf16.mxu0 0
      %3052 = vmatmul.mubr.bf16.gmra.mrb[0].mxu0 %v2840
      %v3053 = vpop.f32.mrb[0].mxu0
      %v3054 = vadd.f32 0.0, %v3053
      %v3055 = vpop.f32.mrb[0].mxu0
      %v3056 = vpop.f32.mrb[0].mxu0
      %v3057 = vadd.f32 0.0, %v3056
      %v3058 = vpop.f32.mrb[0].mxu0
      %3059 = vmatprep.mubr.bf16.mxu0 0
      %3060 = vmatmul.mubr.bf16.gmra.mrb[0].mxu0 %v2842
      %v3061 = vpop.f32.mrb[0].mxu0
      %v3062 = vadd.f32 0.0, %v3061
      %v3063 = vpop.f32.mrb[0].mxu0
      %v3064 = vpop.f32.mrb[0].mxu0
      %v3065 = vadd.f32 0.0, %v3064
      %v3066 = vpop.f32.mrb[0].mxu0
      %3067 = vmatprep.mubr.bf16.mxu0 0
      %3068 = vmatmul.mubr.bf16.gmra.mrb[0].mxu0 %v2844
      %v3069 = vpop.f32.mrb[0].mxu0
      %v3070 = vadd.f32 0.0, %v3069
      %v3071 = vpop.f32.mrb[0].mxu0
      %v3072 = vpop.f32.mrb[0].mxu0
      %v3073 = vadd.f32 0.0, %v3072
      %v3074 = vpop.f32.mrb[0].mxu0
      %3075 = vmatprep.mubr.bf16.mxu0 0
      %3076 = vmatmul.mubr.bf16.gmra.mrb[0].mxu0 %v2846
      %v3077 = vpop.f32.mrb[0].mxu0
      %v3078 = vadd.f32 0.0, %v3077
      %v3079 = vpop.f32.mrb[0].mxu0
      %v3080 = vpop.f32.mrb[0].mxu0
      %v3081 = vadd.f32 0.0, %v3080
      %v3082 = vpop.f32.mrb[0].mxu0
      %3083 = vmatprep.mubr.bf16.mxu0 0
      %3084 = vmatmul.mubr.bf16.gmra.mrb[0].mxu0 %v2848
      %v3085 = vpop.f32.mrb[0].mxu0
      %v3086 = vadd.f32 0.0, %v3085
      %v3087 = vpop.f32.mrb[0].mxu0
      %v3088 = vpop.f32.mrb[0].mxu0
      %v3089 = vadd.f32 0.0, %v3088
      %v3090 = vpop.f32.mrb[0].mxu0
      %3091 = vdwg.mxu0
      %v3092 = vadd.f32 %v2629, %v2950
      %v3093 = vadd.f32 %v2630, %v2953
      %v3094 = vadd.f32 %v2631, %v2958
      %v3095 = vadd.f32 %v2632, %v2961
      %v3096 = vadd.f32 %v2633, %v2966
      %v3097 = vadd.f32 %v2634, %v2969
      %v3098 = vadd.f32 %v2635, %v2974
      %v3099 = vadd.f32 %v2636, %v2977
      %v3100 = vadd.f32 %v2637, %v2982
      %v3101 = vadd.f32 %v2638, %v2985
      %v3102 = vadd.f32 %v2639, %v2990
      %v3103 = vadd.f32 %v2640, %v2993
      %v3104 = vadd.f32 %v2641, %v2998
      %v3105 = vadd.f32 %v2642, %v3001
      %v3106 = vadd.f32 %v2643, %v3006
      %v3107 = vadd.f32 %v2644, %v3009
      %v3108 = vadd.f32 %v2645, %v3014
      %v3109 = vadd.f32 %v2646, %v3017
      %v3110 = vadd.f32 %v2647, %v3022
      %v3111 = vadd.f32 %v2648, %v3025
      %v3112 = vadd.f32 %v2649, %v3030
      %v3113 = vadd.f32 %v2650, %v3033
      %v3114 = vadd.f32 %v2651, %v3038
      %v3115 = vadd.f32 %v2652, %v3041
      %v3116 = vadd.f32 %v2653, %v3046
      %v3117 = vadd.f32 %v2654, %v3049
      %v3118 = vadd.f32 %v2655, %v3054
      %v3119 = vadd.f32 %v2656, %v3057
      %v3120 = vadd.f32 %v2657, %v3062
      %v3121 = vadd.f32 %v2658, %v3065
      %v3122 = vadd.f32 %v2659, %v3070
      %v3123 = vadd.f32 %v2660, %v3073
      %v3124 = vadd.f32 %v2661, %v3078
      %v3125 = vadd.f32 %v2662, %v3081
      %v3126 = vadd.f32 %v2663, %v3086
      %v3127 = vadd.f32 %v2664, %v3089
      %v3128 = vld [vmem:[%s235 + $0xa0] sm:$0x7]
      %s3129 = scalar_lea.vmem %s243, 448
      %v3130 = vld [vmem:[%s3129] sm:$0xf]
      %v3131 = vld [vmem:[%s3129 + $0x4] sm:$0xf]
      %v3132 = vld [vmem:[%s3129 + $0x8] sm:$0xf]
      %v3133 = vld [vmem:[%s3129 + $0xc] sm:$0xf]
      %v3134 = vld [vmem:[%s3129 + $0x10] sm:$0xf]
      %v3135 = vld [vmem:[%s3129 + $0x14] sm:$0xf]
      %v3136 = vld [vmem:[%s3129 + $0x18] sm:$0xf]
      %v3137 = vld [vmem:[%s3129 + $0x1c] sm:$0xf]
      %v3138 = vld [vmem:[%s3129 + $0x20] sm:$0xf]
      %v3139 = vld [vmem:[%s3129 + $0x24] sm:$0xf]
      %v3140 = vld [vmem:[%s3129 + $0x28] sm:$0xf]
      %v3141 = vld [vmem:[%s3129 + $0x2c] sm:$0xf]
      %v3142 = vld [vmem:[%s3129 + $0x30] sm:$0xf]
      %v3143 = vld [vmem:[%s3129 + $0x34] sm:$0xf]
      %v3144 = vld [vmem:[%s3129 + $0x38] sm:$0xf]
      %v3145 = vld [vmem:[%s3129 + $0x3c] sm:$0xf]
      %v3147 = vunpack.c.l.b16 %v3128
      %v3148 = vpack.c.b16 %v3147, %v3147
      %vm3149 = vsmask.f32 5376
      %v3151 = vshrl.u32 %v2793, 16
      %v3153 = vrot.slane %v3151, 2
      %v3154 = vshll.u32 %v2793, 16
      %v3156 = vrot.slane %v3154, 3
      %v3157 = vor.u32 %v3153, %v3156
      %v3159 = vshrl.u32 %v2794, 16
      %v3161 = vrot.slane %v3159, 2
      %v3162 = vshll.u32 %v2794, 16
      %v3164 = vrot.slane %v3162, 3
      %v3165 = vor.u32 %v3161, %v3164
      %v3166 = vsel %vm3149, %v3157, %v3165
      %v3168 = vshrl.u32 %v2795, 16
      %v3170 = vrot.slane %v3168, 2
      %v3171 = vshll.u32 %v2795, 16
      %v3173 = vrot.slane %v3171, 3
      %v3174 = vor.u32 %v3170, %v3173
      %v3175 = vsel %vm3149, %v3165, %v3174
      %v3177 = vshrl.u32 %v2796, 16
      %v3179 = vrot.slane %v3177, 2
      %v3180 = vshll.u32 %v2796, 16
      %v3182 = vrot.slane %v3180, 3
      %v3183 = vor.u32 %v3179, %v3182
      %v3184 = vsel %vm3149, %v3174, %v3183
      %v3186 = vshrl.u32 %v2797, 16
      %v3188 = vrot.slane %v3186, 2
      %v3189 = vshll.u32 %v2797, 16
      %v3191 = vrot.slane %v3189, 3
      %v3192 = vor.u32 %v3188, %v3191
      %v3193 = vsel %vm3149, %v3183, %v3192
      %v3195 = vshrl.u32 %v2798, 16
      %v3197 = vrot.slane %v3195, 2
      %v3198 = vshll.u32 %v2798, 16
      %v3200 = vrot.slane %v3198, 3
      %v3201 = vor.u32 %v3197, %v3200
      %v3202 = vsel %vm3149, %v3192, %v3201
      %v3204 = vshrl.u32 %v2799, 16
      %v3206 = vrot.slane %v3204, 2
      %v3207 = vshll.u32 %v2799, 16
      %v3209 = vrot.slane %v3207, 3
      %v3210 = vor.u32 %v3206, %v3209
      %v3211 = vsel %vm3149, %v3201, %v3210
      %v3213 = vshrl.u32 %v2800, 16
      %v3215 = vrot.slane %v3213, 2
      %v3216 = vshll.u32 %v2800, 16
      %v3218 = vrot.slane %v3216, 3
      %v3219 = vor.u32 %v3215, %v3218
      %v3220 = vsel %vm3149, %v3210, %v3219
      %v3222 = vshrl.u32 %v2801, 16
      %v3224 = vrot.slane %v3222, 2
      %v3225 = vshll.u32 %v2801, 16
      %v3227 = vrot.slane %v3225, 3
      %v3228 = vor.u32 %v3224, %v3227
      %v3229 = vsel %vm3149, %v3219, %v3228
      %v3231 = vshrl.u32 %v2802, 16
      %v3233 = vrot.slane %v3231, 2
      %v3234 = vshll.u32 %v2802, 16
      %v3236 = vrot.slane %v3234, 3
      %v3237 = vor.u32 %v3233, %v3236
      %v3238 = vsel %vm3149, %v3228, %v3237
      %v3240 = vshrl.u32 %v2803, 16
      %v3242 = vrot.slane %v3240, 2
      %v3243 = vshll.u32 %v2803, 16
      %v3245 = vrot.slane %v3243, 3
      %v3246 = vor.u32 %v3242, %v3245
      %v3247 = vsel %vm3149, %v3237, %v3246
      %v3249 = vshrl.u32 %v2804, 16
      %v3251 = vrot.slane %v3249, 2
      %v3252 = vshll.u32 %v2804, 16
      %v3254 = vrot.slane %v3252, 3
      %v3255 = vor.u32 %v3251, %v3254
      %v3256 = vsel %vm3149, %v3246, %v3255
      %v3258 = vshrl.u32 %v2805, 16
      %v3260 = vrot.slane %v3258, 2
      %v3261 = vshll.u32 %v2805, 16
      %v3263 = vrot.slane %v3261, 3
      %v3264 = vor.u32 %v3260, %v3263
      %v3265 = vsel %vm3149, %v3255, %v3264
      %v3267 = vshrl.u32 %v2806, 16
      %v3269 = vrot.slane %v3267, 2
      %v3270 = vshll.u32 %v2806, 16
      %v3272 = vrot.slane %v3270, 3
      %v3273 = vor.u32 %v3269, %v3272
      %v3274 = vsel %vm3149, %v3264, %v3273
      %v3276 = vshrl.u32 %v2807, 16
      %v3278 = vrot.slane %v3276, 2
      %v3279 = vshll.u32 %v2807, 16
      %v3281 = vrot.slane %v3279, 3
      %v3282 = vor.u32 %v3278, %v3281
      %v3283 = vsel %vm3149, %v3273, %v3282
      %v3285 = vshrl.u32 %v2808, 16
      %v3287 = vrot.slane %v3285, 2
      %v3288 = vshll.u32 %v2808, 16
      %v3290 = vrot.slane %v3288, 3
      %v3291 = vor.u32 %v3287, %v3290
      %v3292 = vsel %vm3149, %v3282, %v3291
      %v3294 = vshrl.u32 %v2809, 16
      %v3296 = vrot.slane %v3294, 2
      %v3297 = vshll.u32 %v2809, 16
      %v3299 = vrot.slane %v3297, 3
      %v3300 = vor.u32 %v3296, %v3299
      %v3301 = vsel %vm3149, %v3291, %v3300
      %v3303 = vshrl.u32 %v2810, 16
      %v3305 = vrot.slane %v3303, 2
      %v3306 = vshll.u32 %v2810, 16
      %v3308 = vrot.slane %v3306, 3
      %v3309 = vor.u32 %v3305, %v3308
      %v3310 = vsel %vm3149, %v3300, %v3309
      %v3312 = vshrl.u32 %v3148, 16
      %v3314 = vrot.slane %v3312, 2
      %v3315 = vshll.u32 %v3148, 16
      %v3317 = vrot.slane %v3315, 3
      %v3318 = vor.u32 %v3314, %v3317
      %v3319 = vsel %vm3149, %v3309, %v3318
      %v3354 = vunpack.c.l.b16 %v3130
      %v3355 = vunpack.c.l.b16 %v3131
      %v3356 = vunpack.c.l.b16 %v3132
      %v3357 = vunpack.c.l.b16 %v3133
      %v3358 = vunpack.c.l.b16 %v3134
      %v3359 = vunpack.c.l.b16 %v3135
      %v3360 = vunpack.c.l.b16 %v3136
      %v3361 = vunpack.c.l.b16 %v3137
      %v3362 = vunpack.c.l.b16 %v3138
      %v3363 = vunpack.c.l.b16 %v3139
      %v3364 = vunpack.c.l.b16 %v3140
      %v3365 = vunpack.c.l.b16 %v3141
      %v3366 = vunpack.c.l.b16 %v3142
      %v3367 = vunpack.c.l.b16 %v3143
      %v3368 = vunpack.c.l.b16 %v3144
      %v3369 = vunpack.c.l.b16 %v3145
      %v3370 = vpack.c.b16 %v3355, %v3354
      %v3371 = vpack.c.b16 %v3357, %v3356
      %v3372 = vpack.c.b16 %v3359, %v3358
      %v3373 = vpack.c.b16 %v3361, %v3360
      %v3374 = vpack.c.b16 %v3363, %v3362
      %v3375 = vpack.c.b16 %v3365, %v3364
      %v3376 = vpack.c.b16 %v3367, %v3366
      %v3377 = vpack.c.b16 %v3369, %v3368
      %3386 = vmatprep.subr.bf16.mxu0 0
      %3387 = vmatpush1.bf16.msra.mxu0 %v3370
      %3388 = vmatprep.subr.bf16.mxu0 0
      %3389 = vmatpush1.bf16.msra.mxu0 %v3371
      %3390 = vmatprep.subr.bf16.mxu0 0
      %3391 = vmatpush1.bf16.msra.mxu0 %v3372
      %3392 = vmatprep.subr.bf16.mxu0 0
      %3393 = vmatpush1.bf16.msra.mxu0 %v3373
      %3394 = vmatprep.subr.bf16.mxu0 0
      %3395 = vmatpush1.bf16.msra.mxu0 %v3374
      %3396 = vmatprep.subr.bf16.mxu0 0
      %3397 = vmatpush1.bf16.msra.mxu0 %v3375
      %3398 = vmatprep.subr.bf16.mxu0 0
      %3399 = vmatpush1.bf16.msra.mxu0 %v3376
      %3400 = vmatprep.subr.bf16.mxu0 0
      %3401 = vmatpush1.bf16.msra.mxu0 %v3377
      %3402 = vmatprep.subr.bf16.mxu0 0
      %3403 = vmatpush1.bf16.msra.mxu0 0
      %3404 = vmatprep.subr.bf16.mxu0 0
      %3405 = vmatpush1.bf16.msra.mxu0 0
      %3406 = vmatprep.subr.bf16.mxu0 0
      %3407 = vmatpush1.bf16.msra.mxu0 0
      %3408 = vmatprep.subr.bf16.mxu0 0
      %3409 = vmatpush1.bf16.msra.mxu0 0
      %3410 = vmatprep.subr.bf16.mxu0 0
      %3411 = vmatpush1.bf16.msra.mxu0 0
      %3412 = vmatprep.subr.bf16.mxu0 0
      %3413 = vmatpush1.bf16.msra.mxu0 0
      %3414 = vmatprep.subr.bf16.mxu0 0
      %3415 = vmatpush1.bf16.msra.mxu0 0
      %3416 = vmatprep.subr.bf16.mxu0 0
      %3417 = vmatpush1.bf16.msra.mxu0 0
      %3418 = vmatprep.mubr.bf16.mxu0 0
      %3419 = vmatmul.mubr.bf16.gmra.mrb[0].mxu0 %v3166
      %v3420 = vpop.f32.mrb[0].mxu0
      %v3421 = vadd.f32 0.0, %v3420
      %v3422 = vpop.f32.mrb[0].mxu0
      %v3423 = vpop.f32.mrb[0].mxu0
      %v3424 = vadd.f32 0.0, %v3423
      %v3425 = vpop.f32.mrb[0].mxu0
      %3426 = vmatprep.mubr.bf16.mxu0 0
      %3427 = vmatmul.mubr.bf16.gmra.mrb[0].mxu0 %v3175
      %v3428 = vpop.f32.mrb[0].mxu0
      %v3429 = vadd.f32 0.0, %v3428
      %v3430 = vpop.f32.mrb[0].mxu0
      %v3431 = vpop.f32.mrb[0].mxu0
      %v3432 = vadd.f32 0.0, %v3431
      %v3433 = vpop.f32.mrb[0].mxu0
      %3434 = vmatprep.mubr.bf16.mxu0 0
      %3435 = vmatmul.mubr.bf16.gmra.mrb[0].mxu0 %v3184
      %v3436 = vpop.f32.mrb[0].mxu0
      %v3437 = vadd.f32 0.0, %v3436
      %v3438 = vpop.f32.mrb[0].mxu0
      %v3439 = vpop.f32.mrb[0].mxu0
      %v3440 = vadd.f32 0.0, %v3439
      %v3441 = vpop.f32.mrb[0].mxu0
      %3442 = vmatprep.mubr.bf16.mxu0 0
      %3443 = vmatmul.mubr.bf16.gmra.mrb[0].mxu0 %v3193
      %v3444 = vpop.f32.mrb[0].mxu0
      %v3445 = vadd.f32 0.0, %v3444
      %v3446 = vpop.f32.mrb[0].mxu0
      %v3447 = vpop.f32.mrb[0].mxu0
      %v3448 = vadd.f32 0.0, %v3447
      %v3449 = vpop.f32.mrb[0].mxu0
      %3450 = vmatprep.mubr.bf16.mxu0 0
      %3451 = vmatmul.mubr.bf16.gmra.mrb[0].mxu0 %v3202
      %v3452 = vpop.f32.mrb[0].mxu0
      %v3453 = vadd.f32 0.0, %v3452
      %v3454 = vpop.f32.mrb[0].mxu0
      %v3455 = vpop.f32.mrb[0].mxu0
      %v3456 = vadd.f32 0.0, %v3455
      %v3457 = vpop.f32.mrb[0].mxu0
      %3458 = vmatprep.mubr.bf16.mxu0 0
      %3459 = vmatmul.mubr.bf16.gmra.mrb[0].mxu0 %v3211
      %v3460 = vpop.f32.mrb[0].mxu0
      %v3461 = vadd.f32 0.0, %v3460
      %v3462 = vpop.f32.mrb[0].mxu0
      %v3463 = vpop.f32.mrb[0].mxu0
      %v3464 = vadd.f32 0.0, %v3463
      %v3465 = vpop.f32.mrb[0].mxu0
      %3466 = vmatprep.mubr.bf16.mxu0 0
      %3467 = vmatmul.mubr.bf16.gmra.mrb[0].mxu0 %v3220
      %v3468 = vpop.f32.mrb[0].mxu0
      %v3469 = vadd.f32 0.0, %v3468
      %v3470 = vpop.f32.mrb[0].mxu0
      %v3471 = vpop.f32.mrb[0].mxu0
      %v3472 = vadd.f32 0.0, %v3471
      %v3473 = vpop.f32.mrb[0].mxu0
      %3474 = vmatprep.mubr.bf16.mxu0 0
      %3475 = vmatmul.mubr.bf16.gmra.mrb[0].mxu0 %v3229
      %v3476 = vpop.f32.mrb[0].mxu0
      %v3477 = vadd.f32 0.0, %v3476
      %v3478 = vpop.f32.mrb[0].mxu0
      %v3479 = vpop.f32.mrb[0].mxu0
      %v3480 = vadd.f32 0.0, %v3479
      %v3481 = vpop.f32.mrb[0].mxu0
      %3482 = vmatprep.mubr.bf16.mxu0 0
      %3483 = vmatmul.mubr.bf16.gmra.mrb[0].mxu0 %v3238
      %v3484 = vpop.f32.mrb[0].mxu0
      %v3485 = vadd.f32 0.0, %v3484
      %v3486 = vpop.f32.mrb[0].mxu0
      %v3487 = vpop.f32.mrb[0].mxu0
      %v3488 = vadd.f32 0.0, %v3487
      %v3489 = vpop.f32.mrb[0].mxu0
      %3490 = vmatprep.mubr.bf16.mxu0 0
      %3491 = vmatmul.mubr.bf16.gmra.mrb[0].mxu0 %v3247
      %v3492 = vpop.f32.mrb[0].mxu0
      %v3493 = vadd.f32 0.0, %v3492
      %v3494 = vpop.f32.mrb[0].mxu0
      %v3495 = vpop.f32.mrb[0].mxu0
      %v3496 = vadd.f32 0.0, %v3495
      %v3497 = vpop.f32.mrb[0].mxu0
      %3498 = vmatprep.mubr.bf16.mxu0 0
      %3499 = vmatmul.mubr.bf16.gmra.mrb[0].mxu0 %v3256
      %v3500 = vpop.f32.mrb[0].mxu0
      %v3501 = vadd.f32 0.0, %v3500
      %v3502 = vpop.f32.mrb[0].mxu0
      %v3503 = vpop.f32.mrb[0].mxu0
      %v3504 = vadd.f32 0.0, %v3503
      %v3505 = vpop.f32.mrb[0].mxu0
      %3506 = vmatprep.mubr.bf16.mxu0 0
      %3507 = vmatmul.mubr.bf16.gmra.mrb[0].mxu0 %v3265
      %v3508 = vpop.f32.mrb[0].mxu0
      %v3509 = vadd.f32 0.0, %v3508
      %v3510 = vpop.f32.mrb[0].mxu0
      %v3511 = vpop.f32.mrb[0].mxu0
      %v3512 = vadd.f32 0.0, %v3511
      %v3513 = vpop.f32.mrb[0].mxu0
      %3514 = vmatprep.mubr.bf16.mxu0 0
      %3515 = vmatmul.mubr.bf16.gmra.mrb[0].mxu0 %v3274
      %v3516 = vpop.f32.mrb[0].mxu0
      %v3517 = vadd.f32 0.0, %v3516
      %v3518 = vpop.f32.mrb[0].mxu0
      %v3519 = vpop.f32.mrb[0].mxu0
      %v3520 = vadd.f32 0.0, %v3519
      %v3521 = vpop.f32.mrb[0].mxu0
      %3522 = vmatprep.mubr.bf16.mxu0 0
      %3523 = vmatmul.mubr.bf16.gmra.mrb[0].mxu0 %v3283
      %v3524 = vpop.f32.mrb[0].mxu0
      %v3525 = vadd.f32 0.0, %v3524
      %v3526 = vpop.f32.mrb[0].mxu0
      %v3527 = vpop.f32.mrb[0].mxu0
      %v3528 = vadd.f32 0.0, %v3527
      %v3529 = vpop.f32.mrb[0].mxu0
      %3530 = vmatprep.mubr.bf16.mxu0 0
      %3531 = vmatmul.mubr.bf16.gmra.mrb[0].mxu0 %v3292
      %v3532 = vpop.f32.mrb[0].mxu0
      %v3533 = vadd.f32 0.0, %v3532
      %v3534 = vpop.f32.mrb[0].mxu0
      %v3535 = vpop.f32.mrb[0].mxu0
      %v3536 = vadd.f32 0.0, %v3535
      %v3537 = vpop.f32.mrb[0].mxu0
      %3538 = vmatprep.mubr.bf16.mxu0 0
      %3539 = vmatmul.mubr.bf16.gmra.mrb[0].mxu0 %v3301
      %v3540 = vpop.f32.mrb[0].mxu0
      %v3541 = vadd.f32 0.0, %v3540
      %v3542 = vpop.f32.mrb[0].mxu0
      %v3543 = vpop.f32.mrb[0].mxu0
      %v3544 = vadd.f32 0.0, %v3543
      %v3545 = vpop.f32.mrb[0].mxu0
      %3546 = vmatprep.mubr.bf16.mxu0 0
      %3547 = vmatmul.mubr.bf16.gmra.mrb[0].mxu0 %v3310
      %v3548 = vpop.f32.mrb[0].mxu0
      %v3549 = vadd.f32 0.0, %v3548
      %v3550 = vpop.f32.mrb[0].mxu0
      %v3551 = vpop.f32.mrb[0].mxu0
      %v3552 = vadd.f32 0.0, %v3551
      %v3553 = vpop.f32.mrb[0].mxu0
      %3554 = vmatprep.mubr.bf16.mxu0 0
      %3555 = vmatmul.mubr.bf16.gmra.mrb[0].mxu0 %v3319
      %v3556 = vpop.f32.mrb[0].mxu0
      %v3557 = vadd.f32 0.0, %v3556
      %v3558 = vpop.f32.mrb[0].mxu0
      %v3559 = vpop.f32.mrb[0].mxu0
      %v3560 = vadd.f32 0.0, %v3559
      %v3561 = vpop.f32.mrb[0].mxu0
      %3562 = vdwg.mxu0
      %v3563 = vadd.f32 %v3092, %v3421
      %v3564 = vadd.f32 %v3093, %v3424
      %v3565 = vadd.f32 %v3094, %v3429
      %v3566 = vadd.f32 %v3095, %v3432
      %v3567 = vadd.f32 %v3096, %v3437
      %v3568 = vadd.f32 %v3097, %v3440
      %v3569 = vadd.f32 %v3098, %v3445
      %v3570 = vadd.f32 %v3099, %v3448
      %v3571 = vadd.f32 %v3100, %v3453
      %v3572 = vadd.f32 %v3101, %v3456
      %v3573 = vadd.f32 %v3102, %v3461
      %v3574 = vadd.f32 %v3103, %v3464
      %v3575 = vadd.f32 %v3104, %v3469
      %v3576 = vadd.f32 %v3105, %v3472
      %v3577 = vadd.f32 %v3106, %v3477
      %v3578 = vadd.f32 %v3107, %v3480
      %v3579 = vadd.f32 %v3108, %v3485
      %v3580 = vadd.f32 %v3109, %v3488
      %v3581 = vadd.f32 %v3110, %v3493
      %v3582 = vadd.f32 %v3111, %v3496
      %v3583 = vadd.f32 %v3112, %v3501
      %v3584 = vadd.f32 %v3113, %v3504
      %v3585 = vadd.f32 %v3114, %v3509
      %v3586 = vadd.f32 %v3115, %v3512
      %v3587 = vadd.f32 %v3116, %v3517
      %v3588 = vadd.f32 %v3117, %v3520
      %v3589 = vadd.f32 %v3118, %v3525
      %v3590 = vadd.f32 %v3119, %v3528
      %v3591 = vadd.f32 %v3120, %v3533
      %v3592 = vadd.f32 %v3121, %v3536
      %v3593 = vadd.f32 %v3122, %v3541
      %v3594 = vadd.f32 %v3123, %v3544
      %v3595 = vadd.f32 %v3124, %v3549
      %v3596 = vadd.f32 %v3125, %v3552
      %v3597 = vadd.f32 %v3126, %v3557
      %v3598 = vadd.f32 %v3127, %v3560
      %v3599 = vld [vmem:[%s235 + $0x10] sm:$0x8]
      %s3600 = scalar_lea.vmem %s243, 512
      %v3601 = vld [vmem:[%s3600] sm:$0xf]
      %v3602 = vld [vmem:[%s3600 + $0x4] sm:$0xf]
      %v3603 = vld [vmem:[%s3600 + $0x8] sm:$0xf]
      %v3604 = vld [vmem:[%s3600 + $0xc] sm:$0xf]
      %v3605 = vld [vmem:[%s3600 + $0x10] sm:$0xf]
      %v3606 = vld [vmem:[%s3600 + $0x14] sm:$0xf]
      %v3607 = vld [vmem:[%s3600 + $0x18] sm:$0xf]
      %v3608 = vld [vmem:[%s3600 + $0x1c] sm:$0xf]
      %v3609 = vld [vmem:[%s3600 + $0x20] sm:$0xf]
      %v3610 = vld [vmem:[%s3600 + $0x24] sm:$0xf]
      %v3611 = vld [vmem:[%s3600 + $0x28] sm:$0xf]
      %v3612 = vld [vmem:[%s3600 + $0x2c] sm:$0xf]
      %v3613 = vld [vmem:[%s3600 + $0x30] sm:$0xf]
      %v3614 = vld [vmem:[%s3600 + $0x34] sm:$0xf]
      %v3615 = vld [vmem:[%s3600 + $0x38] sm:$0xf]
      %v3616 = vld [vmem:[%s3600 + $0x3c] sm:$0xf]
      %v3618 = vunpack.c.l.b16 %v3599
      %v3619 = vpack.c.b16 %v2757, %v3618
      %vm3620 = vcmask 1044480
      %v3621 = vrot.slane %v3619, 3
      %v3622 = vrot.slane %v2794, 3
      %v3623 = vsel %vm3620, %v3621, %v3622
      %v3624 = vrot.slane %v2795, 3
      %v3625 = vsel %vm3620, %v3622, %v3624
      %v3626 = vrot.slane %v2796, 3
      %v3627 = vsel %vm3620, %v3624, %v3626
      %v3628 = vrot.slane %v2797, 3
      %v3629 = vsel %vm3620, %v3626, %v3628
      %v3630 = vrot.slane %v2798, 3
      %v3631 = vsel %vm3620, %v3628, %v3630
      %v3632 = vrot.slane %v2799, 3
      %v3633 = vsel %vm3620, %v3630, %v3632
      %v3634 = vrot.slane %v2800, 3
      %v3635 = vsel %vm3620, %v3632, %v3634
      %v3636 = vrot.slane %v2801, 3
      %v3637 = vsel %vm3620, %v3634, %v3636
      %v3638 = vrot.slane %v2802, 3
      %v3639 = vsel %vm3620, %v3636, %v3638
      %v3640 = vrot.slane %v2803, 3
      %v3641 = vsel %vm3620, %v3638, %v3640
      %v3642 = vrot.slane %v2804, 3
      %v3643 = vsel %vm3620, %v3640, %v3642
      %v3644 = vrot.slane %v2805, 3
      %v3645 = vsel %vm3620, %v3642, %v3644
      %v3646 = vrot.slane %v2806, 3
      %v3647 = vsel %vm3620, %v3644, %v3646
      %v3648 = vrot.slane %v2807, 3
      %v3649 = vsel %vm3620, %v3646, %v3648
      %v3650 = vrot.slane %v2808, 3
      %v3651 = vsel %vm3620, %v3648, %v3650
      %v3652 = vrot.slane %v2809, 3
      %v3653 = vsel %vm3620, %v3650, %v3652
      %v3654 = vrot.slane %v2810, 3
      %v3655 = vsel %vm3620, %v3652, %v3654
      %v3656 = vrot.slane %v3148, 3
      %v3657 = vsel %vm3620, %v3654, %v3656
      %v3692 = vunpack.c.l.b16 %v3601
      %v3693 = vunpack.c.l.b16 %v3602
      %v3694 = vunpack.c.l.b16 %v3603
      %v3695 = vunpack.c.l.b16 %v3604
      %v3696 = vunpack.c.l.b16 %v3605
      %v3697 = vunpack.c.l.b16 %v3606
      %v3698 = vunpack.c.l.b16 %v3607
      %v3699 = vunpack.c.l.b16 %v3608
      %v3700 = vunpack.c.l.b16 %v3609
      %v3701 = vunpack.c.l.b16 %v3610
      %v3702 = vunpack.c.l.b16 %v3611
      %v3703 = vunpack.c.l.b16 %v3612
      %v3704 = vunpack.c.l.b16 %v3613
      %v3705 = vunpack.c.l.b16 %v3614
      %v3706 = vunpack.c.l.b16 %v3615
      %v3707 = vunpack.c.l.b16 %v3616
      %v3708 = vpack.c.b16 %v3693, %v3692
      %v3709 = vpack.c.b16 %v3695, %v3694
      %v3710 = vpack.c.b16 %v3697, %v3696
      %v3711 = vpack.c.b16 %v3699, %v3698
      %v3712 = vpack.c.b16 %v3701, %v3700
      %v3713 = vpack.c.b16 %v3703, %v3702
      %v3714 = vpack.c.b16 %v3705, %v3704
      %v3715 = vpack.c.b16 %v3707, %v3706
      %3724 = vmatprep.subr.bf16.mxu0 0
      %3725 = vmatpush1.bf16.msra.mxu0 %v3708
      %3726 = vmatprep.subr.bf16.mxu0 0
      %3727 = vmatpush1.bf16.msra.mxu0 %v3709
      %3728 = vmatprep.subr.bf16.mxu0 0
      %3729 = vmatpush1.bf16.msra.mxu0 %v3710
      %3730 = vmatprep.subr.bf16.mxu0 0
      %3731 = vmatpush1.bf16.msra.mxu0 %v3711
      %3732 = vmatprep.subr.bf16.mxu0 0
      %3733 = vmatpush1.bf16.msra.mxu0 %v3712
      %3734 = vmatprep.subr.bf16.mxu0 0
      %3735 = vmatpush1.bf16.msra.mxu0 %v3713
      %3736 = vmatprep.subr.bf16.mxu0 0
      %3737 = vmatpush1.bf16.msra.mxu0 %v3714
      %3738 = vmatprep.subr.bf16.mxu0 0
      %3739 = vmatpush1.bf16.msra.mxu0 %v3715
      %3740 = vmatprep.subr.bf16.mxu0 0
      %3741 = vmatpush1.bf16.msra.mxu0 0
      %3742 = vmatprep.subr.bf16.mxu0 0
      %3743 = vmatpush1.bf16.msra.mxu0 0
      %3744 = vmatprep.subr.bf16.mxu0 0
      %3745 = vmatpush1.bf16.msra.mxu0 0
      %3746 = vmatprep.subr.bf16.mxu0 0
      %3747 = vmatpush1.bf16.msra.mxu0 0
      %3748 = vmatprep.subr.bf16.mxu0 0
      %3749 = vmatpush1.bf16.msra.mxu0 0
      %3750 = vmatprep.subr.bf16.mxu0 0
      %3751 = vmatpush1.bf16.msra.mxu0 0
      %3752 = vmatprep.subr.bf16.mxu0 0
      %3753 = vmatpush1.bf16.msra.mxu0 0
      %3754 = vmatprep.subr.bf16.mxu0 0
      %3755 = vmatpush1.bf16.msra.mxu0 0
      %3756 = vmatprep.mubr.bf16.mxu0 0
      %3757 = vmatmul.mubr.bf16.gmra.mrb[0].mxu0 %v3623
      %v3758 = vpop.f32.mrb[0].mxu0
      %v3759 = vadd.f32 0.0, %v3758
      %v3760 = vpop.f32.mrb[0].mxu0
      %v3761 = vpop.f32.mrb[0].mxu0
      %v3762 = vadd.f32 0.0, %v3761
      %v3763 = vpop.f32.mrb[0].mxu0
      %3764 = vmatprep.mubr.bf16.mxu0 0
      %3765 = vmatmul.mubr.bf16.gmra.mrb[0].mxu0 %v3625
      %v3766 = vpop.f32.mrb[0].mxu0
      %v3767 = vadd.f32 0.0, %v3766
      %v3768 = vpop.f32.mrb[0].mxu0
      %v3769 = vpop.f32.mrb[0].mxu0
      %v3770 = vadd.f32 0.0, %v3769
      %v3771 = vpop.f32.mrb[0].mxu0
      %3772 = vmatprep.mubr.bf16.mxu0 0
      %3773 = vmatmul.mubr.bf16.gmra.mrb[0].mxu0 %v3627
      %v3774 = vpop.f32.mrb[0].mxu0
      %v3775 = vadd.f32 0.0, %v3774
      %v3776 = vpop.f32.mrb[0].mxu0
      %v3777 = vpop.f32.mrb[0].mxu0
      %v3778 = vadd.f32 0.0, %v3777
      %v3779 = vpop.f32.mrb[0].mxu0
      %3780 = vmatprep.mubr.bf16.mxu0 0
      %3781 = vmatmul.mubr.bf16.gmra.mrb[0].mxu0 %v3629
      %v3782 = vpop.f32.mrb[0].mxu0
      %v3783 = vadd.f32 0.0, %v3782
      %v3784 = vpop.f32.mrb[0].mxu0
      %v3785 = vpop.f32.mrb[0].mxu0
      %v3786 = vadd.f32 0.0, %v3785
      %v3787 = vpop.f32.mrb[0].mxu0
      %3788 = vmatprep.mubr.bf16.mxu0 0
      %3789 = vmatmul.mubr.bf16.gmra.mrb[0].mxu0 %v3631
      %v3790 = vpop.f32.mrb[0].mxu0
      %v3791 = vadd.f32 0.0, %v3790
      %v3792 = vpop.f32.mrb[0].mxu0
      %v3793 = vpop.f32.mrb[0].mxu0
      %v3794 = vadd.f32 0.0, %v3793
      %v3795 = vpop.f32.mrb[0].mxu0
      %3796 = vmatprep.mubr.bf16.mxu0 0
      %3797 = vmatmul.mubr.bf16.gmra.mrb[0].mxu0 %v3633
      %v3798 = vpop.f32.mrb[0].mxu0
      %v3799 = vadd.f32 0.0, %v3798
      %v3800 = vpop.f32.mrb[0].mxu0
      %v3801 = vpop.f32.mrb[0].mxu0
      %v3802 = vadd.f32 0.0, %v3801
      %v3803 = vpop.f32.mrb[0].mxu0
      %3804 = vmatprep.mubr.bf16.mxu0 0
      %3805 = vmatmul.mubr.bf16.gmra.mrb[0].mxu0 %v3635
      %v3806 = vpop.f32.mrb[0].mxu0
      %v3807 = vadd.f32 0.0, %v3806
      %v3808 = vpop.f32.mrb[0].mxu0
      %v3809 = vpop.f32.mrb[0].mxu0
      %v3810 = vadd.f32 0.0, %v3809
      %v3811 = vpop.f32.mrb[0].mxu0
      %3812 = vmatprep.mubr.bf16.mxu0 0
      %3813 = vmatmul.mubr.bf16.gmra.mrb[0].mxu0 %v3637
      %v3814 = vpop.f32.mrb[0].mxu0
      %v3815 = vadd.f32 0.0, %v3814
      %v3816 = vpop.f32.mrb[0].mxu0
      %v3817 = vpop.f32.mrb[0].mxu0
      %v3818 = vadd.f32 0.0, %v3817
      %v3819 = vpop.f32.mrb[0].mxu0
      %3820 = vmatprep.mubr.bf16.mxu0 0
      %3821 = vmatmul.mubr.bf16.gmra.mrb[0].mxu0 %v3639
      %v3822 = vpop.f32.mrb[0].mxu0
      %v3823 = vadd.f32 0.0, %v3822
      %v3824 = vpop.f32.mrb[0].mxu0
      %v3825 = vpop.f32.mrb[0].mxu0
      %v3826 = vadd.f32 0.0, %v3825
      %v3827 = vpop.f32.mrb[0].mxu0
      %3828 = vmatprep.mubr.bf16.mxu0 0
      %3829 = vmatmul.mubr.bf16.gmra.mrb[0].mxu0 %v3641
      %v3830 = vpop.f32.mrb[0].mxu0
      %v3831 = vadd.f32 0.0, %v3830
      %v3832 = vpop.f32.mrb[0].mxu0
      %v3833 = vpop.f32.mrb[0].mxu0
      %v3834 = vadd.f32 0.0, %v3833
      %v3835 = vpop.f32.mrb[0].mxu0
      %3836 = vmatprep.mubr.bf16.mxu0 0
      %3837 = vmatmul.mubr.bf16.gmra.mrb[0].mxu0 %v3643
      %v3838 = vpop.f32.mrb[0].mxu0
      %v3839 = vadd.f32 0.0, %v3838
      %v3840 = vpop.f32.mrb[0].mxu0
      %v3841 = vpop.f32.mrb[0].mxu0
      %v3842 = vadd.f32 0.0, %v3841
      %v3843 = vpop.f32.mrb[0].mxu0
      %3844 = vmatprep.mubr.bf16.mxu0 0
      %3845 = vmatmul.mubr.bf16.gmra.mrb[0].mxu0 %v3645
      %v3846 = vpop.f32.mrb[0].mxu0
      %v3847 = vadd.f32 0.0, %v3846
      %v3848 = vpop.f32.mrb[0].mxu0
      %v3849 = vpop.f32.mrb[0].mxu0
      %v3850 = vadd.f32 0.0, %v3849
      %v3851 = vpop.f32.mrb[0].mxu0
      %3852 = vmatprep.mubr.bf16.mxu0 0
      %3853 = vmatmul.mubr.bf16.gmra.mrb[0].mxu0 %v3647
      %v3854 = vpop.f32.mrb[0].mxu0
      %v3855 = vadd.f32 0.0, %v3854
      %v3856 = vpop.f32.mrb[0].mxu0
      %v3857 = vpop.f32.mrb[0].mxu0
      %v3858 = vadd.f32 0.0, %v3857
      %v3859 = vpop.f32.mrb[0].mxu0
      %3860 = vmatprep.mubr.bf16.mxu0 0
      %3861 = vmatmul.mubr.bf16.gmra.mrb[0].mxu0 %v3649
      %v3862 = vpop.f32.mrb[0].mxu0
      %v3863 = vadd.f32 0.0, %v3862
      %v3864 = vpop.f32.mrb[0].mxu0
      %v3865 = vpop.f32.mrb[0].mxu0
      %v3866 = vadd.f32 0.0, %v3865
      %v3867 = vpop.f32.mrb[0].mxu0
      %3868 = vmatprep.mubr.bf16.mxu0 0
      %3869 = vmatmul.mubr.bf16.gmra.mrb[0].mxu0 %v3651
      %v3870 = vpop.f32.mrb[0].mxu0
      %v3871 = vadd.f32 0.0, %v3870
      %v3872 = vpop.f32.mrb[0].mxu0
      %v3873 = vpop.f32.mrb[0].mxu0
      %v3874 = vadd.f32 0.0, %v3873
      %v3875 = vpop.f32.mrb[0].mxu0
      %3876 = vmatprep.mubr.bf16.mxu0 0
      %3877 = vmatmul.mubr.bf16.gmra.mrb[0].mxu0 %v3653
      %v3878 = vpop.f32.mrb[0].mxu0
      %v3879 = vadd.f32 0.0, %v3878
      %v3880 = vpop.f32.mrb[0].mxu0
      %v3881 = vpop.f32.mrb[0].mxu0
      %v3882 = vadd.f32 0.0, %v3881
      %v3883 = vpop.f32.mrb[0].mxu0
      %3884 = vmatprep.mubr.bf16.mxu0 0
      %3885 = vmatmul.mubr.bf16.gmra.mrb[0].mxu0 %v3655
      %v3886 = vpop.f32.mrb[0].mxu0
      %v3887 = vadd.f32 0.0, %v3886
      %v3888 = vpop.f32.mrb[0].mxu0
      %v3889 = vpop.f32.mrb[0].mxu0
      %v3890 = vadd.f32 0.0, %v3889
      %v3891 = vpop.f32.mrb[0].mxu0
      %3892 = vmatprep.mubr.bf16.mxu0 0
      %3893 = vmatmul.mubr.bf16.gmra.mrb[0].mxu0 %v3657
      %v3894 = vpop.f32.mrb[0].mxu0
      %v3895 = vadd.f32 0.0, %v3894
      %v3896 = vpop.f32.mrb[0].mxu0
      %v3897 = vpop.f32.mrb[0].mxu0
      %v3898 = vadd.f32 0.0, %v3897
      %v3899 = vpop.f32.mrb[0].mxu0
      %3900 = vdwg.mxu0
      %v3901 = vadd.f32 %v3563, %v3759
      %v3902 = vadd.f32 %v3564, %v3762
      %v3903 = vadd.f32 %v3565, %v3767
      %v3904 = vadd.f32 %v3566, %v3770
      %v3905 = vadd.f32 %v3567, %v3775
      %v3906 = vadd.f32 %v3568, %v3778
      %v3907 = vadd.f32 %v3569, %v3783
      %v3908 = vadd.f32 %v3570, %v3786
      %v3909 = vadd.f32 %v3571, %v3791
      %v3910 = vadd.f32 %v3572, %v3794
      %v3911 = vadd.f32 %v3573, %v3799
      %v3912 = vadd.f32 %v3574, %v3802
      %v3913 = vadd.f32 %v3575, %v3807
      %v3914 = vadd.f32 %v3576, %v3810
      %v3915 = vadd.f32 %v3577, %v3815
      %v3916 = vadd.f32 %v3578, %v3818
      %v3917 = vadd.f32 %v3579, %v3823
      %v3918 = vadd.f32 %v3580, %v3826
      %v3919 = vadd.f32 %v3581, %v3831
      %v3920 = vadd.f32 %v3582, %v3834
      %v3921 = vadd.f32 %v3583, %v3839
      %v3922 = vadd.f32 %v3584, %v3842
      %v3923 = vadd.f32 %v3585, %v3847
      %v3924 = vadd.f32 %v3586, %v3850
      %v3925 = vadd.f32 %v3587, %v3855
      %v3926 = vadd.f32 %v3588, %v3858
      %v3927 = vadd.f32 %v3589, %v3863
      %v3928 = vadd.f32 %v3590, %v3866
      %v3929 = vadd.f32 %v3591, %v3871
      %v3930 = vadd.f32 %v3592, %v3874
      %v3931 = vadd.f32 %v3593, %v3879
      %v3932 = vadd.f32 %v3594, %v3882
      %v3933 = vadd.f32 %v3595, %v3887
      %v3934 = vadd.f32 %v3596, %v3890
      %v3935 = vadd.f32 %v3597, %v3895
      %v3936 = vadd.f32 %v3598, %v3898
      %v3937 = vld [vmem:[%s247] sm:$0x1]
      %v3939 = vlaneseq
      %v3940 = vshrl.u32 %v3939, 7
      %v3941 = vsub.s32 0, %v3940
      %v3942 = vrot.slane %v3937, %v3941
      %v3944 = vadd.f32 %v3901, %v3942
      %v3945 = vadd.f32 %v3902, %v3942
      %v3946 = vadd.f32 %v3903, %v3942
      %v3947 = vadd.f32 %v3904, %v3942
      %v3948 = vadd.f32 %v3905, %v3942
      %v3949 = vadd.f32 %v3906, %v3942
      %v3950 = vadd.f32 %v3907, %v3942
      %v3951 = vadd.f32 %v3908, %v3942
      %v3952 = vadd.f32 %v3909, %v3942
      %v3953 = vadd.f32 %v3910, %v3942
      %v3954 = vadd.f32 %v3911, %v3942
      %v3955 = vadd.f32 %v3912, %v3942
      %v3956 = vadd.f32 %v3913, %v3942
      %v3957 = vadd.f32 %v3914, %v3942
      %v3958 = vadd.f32 %v3915, %v3942
      %v3959 = vadd.f32 %v3916, %v3942
      %v3960 = vadd.f32 %v3917, %v3942
      %v3961 = vadd.f32 %v3918, %v3942
      %v3962 = vadd.f32 %v3919, %v3942
      %v3963 = vadd.f32 %v3920, %v3942
      %v3964 = vadd.f32 %v3921, %v3942
      %v3965 = vadd.f32 %v3922, %v3942
      %v3966 = vadd.f32 %v3923, %v3942
      %v3967 = vadd.f32 %v3924, %v3942
      %v3968 = vadd.f32 %v3925, %v3942
      %v3969 = vadd.f32 %v3926, %v3942
      %v3970 = vadd.f32 %v3927, %v3942
      %v3971 = vadd.f32 %v3928, %v3942
      %v3972 = vadd.f32 %v3929, %v3942
      %v3973 = vadd.f32 %v3930, %v3942
      %v3974 = vadd.f32 %v3931, %v3942
      %v3975 = vadd.f32 %v3932, %v3942
      %v3976 = vadd.f32 %v3933, %v3942
      %v3977 = vadd.f32 %v3934, %v3942
      %v3978 = vadd.f32 %v3935, %v3942
      %v3979 = vadd.f32 %v3936, %v3942
      %v3980 = vpack.c.bf16 %v3945, %v3944
      %v3981 = vpack.c.bf16 %v3947, %v3946
      %v3982 = vpack.c.bf16 %v3949, %v3948
      %v3983 = vpack.c.bf16 %v3951, %v3950
      %v3984 = vpack.c.bf16 %v3953, %v3952
      %v3985 = vpack.c.bf16 %v3955, %v3954
      %v3986 = vpack.c.bf16 %v3957, %v3956
      %v3987 = vpack.c.bf16 %v3959, %v3958
      %v3988 = vpack.c.bf16 %v3961, %v3960
      %v3989 = vpack.c.bf16 %v3963, %v3962
      %v3990 = vpack.c.bf16 %v3965, %v3964
      %v3991 = vpack.c.bf16 %v3967, %v3966
      %v3992 = vpack.c.bf16 %v3969, %v3968
      %v3993 = vpack.c.bf16 %v3971, %v3970
      %v3994 = vpack.c.bf16 %v3973, %v3972
      %v3995 = vpack.c.bf16 %v3975, %v3974
      %v3996 = vpack.c.bf16 %v3977, %v3976
      %v3997 = vpack.c.bf16 %v3979, %v3978
      %v4016 = vunpack.c.l.b16 %v3980
      %v4017 = vunpack.c.h.b16 %v3980
      %v4018 = vunpack.c.l.b16 %v3981
      %v4019 = vunpack.c.h.b16 %v3981
      %v4020 = vunpack.c.l.b16 %v3982
      %v4021 = vunpack.c.h.b16 %v3982
      %v4022 = vunpack.c.l.b16 %v3983
      %v4023 = vunpack.c.h.b16 %v3983
      %v4024 = vunpack.c.l.b16 %v3984
      %v4025 = vunpack.c.h.b16 %v3984
      %v4026 = vunpack.c.l.b16 %v3985
      %v4027 = vunpack.c.h.b16 %v3985
      %v4028 = vunpack.c.l.b16 %v3986
      %v4029 = vunpack.c.h.b16 %v3986
      %v4030 = vunpack.c.l.b16 %v3987
      %v4031 = vunpack.c.h.b16 %v3987
      %v4032 = vunpack.c.l.b16 %v3988
      %v4033 = vunpack.c.h.b16 %v3988
      %v4034 = vunpack.c.l.b16 %v3989
      %v4035 = vunpack.c.h.b16 %v3989
      %v4036 = vunpack.c.l.b16 %v3990
      %v4037 = vunpack.c.h.b16 %v3990
      %v4038 = vunpack.c.l.b16 %v3991
      %v4039 = vunpack.c.h.b16 %v3991
      %v4040 = vunpack.c.l.b16 %v3992
      %v4041 = vunpack.c.h.b16 %v3992
      %v4042 = vunpack.c.l.b16 %v3993
      %v4043 = vunpack.c.h.b16 %v3993
      %v4044 = vunpack.c.l.b16 %v3994
      %v4045 = vunpack.c.h.b16 %v3994
      %v4046 = vunpack.c.l.b16 %v3995
      %v4047 = vunpack.c.h.b16 %v3995
      %v4048 = vunpack.c.l.b16 %v3996
      %v4049 = vunpack.c.h.b16 %v3996
      %v4050 = vunpack.c.l.b16 %v3997
      %v4051 = vunpack.c.h.b16 %v3997
      %v4052 = vpack.c.b16 %v4016, %v4016
      %v4053 = vpack.c.b16 %v4017, %v4017
      %v4054 = vpack.c.b16 %v4018, %v4018
      %v4055 = vpack.c.b16 %v4019, %v4019
      %v4056 = vpack.c.b16 %v4020, %v4020
      %v4057 = vpack.c.b16 %v4021, %v4021
      %v4058 = vpack.c.b16 %v4022, %v4022
      %v4059 = vpack.c.b16 %v4023, %v4023
      %v4060 = vpack.c.b16 %v4024, %v4024
      %v4061 = vpack.c.b16 %v4025, %v4025
      %v4062 = vpack.c.b16 %v4026, %v4026
      %v4063 = vpack.c.b16 %v4027, %v4027
      %v4064 = vpack.c.b16 %v4028, %v4028
      %v4065 = vpack.c.b16 %v4029, %v4029
      %v4066 = vpack.c.b16 %v4030, %v4030
      %v4067 = vpack.c.b16 %v4031, %v4031
      %v4068 = vpack.c.b16 %v4032, %v4032
      %v4069 = vpack.c.b16 %v4033, %v4033
      %v4070 = vpack.c.b16 %v4034, %v4034
      %v4071 = vpack.c.b16 %v4035, %v4035
      %v4072 = vpack.c.b16 %v4036, %v4036
      %v4073 = vpack.c.b16 %v4037, %v4037
      %v4074 = vpack.c.b16 %v4038, %v4038
      %v4075 = vpack.c.b16 %v4039, %v4039
      %v4076 = vpack.c.b16 %v4040, %v4040
      %v4077 = vpack.c.b16 %v4041, %v4041
      %v4078 = vpack.c.b16 %v4042, %v4042
      %v4079 = vpack.c.b16 %v4043, %v4043
      %v4080 = vpack.c.b16 %v4044, %v4044
      %v4081 = vpack.c.b16 %v4045, %v4045
      %v4082 = vpack.c.b16 %v4046, %v4046
      %v4083 = vpack.c.b16 %v4047, %v4047
      %v4084 = vpack.c.b16 %v4048, %v4048
      %v4085 = vpack.c.b16 %v4049, %v4049
      %v4086 = vpack.c.b16 %v4050, %v4050
      %v4087 = vpack.c.b16 %v4051, %v4051
      %4124 = vst [vmem:[%s255] sm:$0xf] %v4052
      %4125 = vst [vmem:[%s255 + $0x4] sm:$0xf] %v4053
      %4126 = vst [vmem:[%s255 + $0x8] sm:$0xf] %v4054
      %4127 = vst [vmem:[%s255 + $0xc] sm:$0xf] %v4055
      %4128 = vst [vmem:[%s255 + $0x10] sm:$0xf] %v4056
      %4129 = vst [vmem:[%s255 + $0x14] sm:$0xf] %v4057
      %4130 = vst [vmem:[%s255 + $0x18] sm:$0xf] %v4058
      %4131 = vst [vmem:[%s255 + $0x1c] sm:$0xf] %v4059
      %4132 = vst [vmem:[%s255 + $0x20] sm:$0xf] %v4060
      %4133 = vst [vmem:[%s255 + $0x24] sm:$0xf] %v4061
      %4134 = vst [vmem:[%s255 + $0x28] sm:$0xf] %v4062
      %4135 = vst [vmem:[%s255 + $0x2c] sm:$0xf] %v4063
      %4136 = vst [vmem:[%s255 + $0x30] sm:$0xf] %v4064
      %4137 = vst [vmem:[%s255 + $0x34] sm:$0xf] %v4065
      %4138 = vst [vmem:[%s255 + $0x38] sm:$0xf] %v4066
      %4139 = vst [vmem:[%s255 + $0x3c] sm:$0xf] %v4067
      %4140 = vst [vmem:[%s255 + $0x40] sm:$0xf] %v4068
      %4141 = vst [vmem:[%s255 + $0x44] sm:$0xf] %v4069
      %4142 = vst [vmem:[%s255 + $0x48] sm:$0xf] %v4070
      %4143 = vst [vmem:[%s255 + $0x4c] sm:$0xf] %v4071
      %4144 = vst [vmem:[%s255 + $0x50] sm:$0xf] %v4072
      %4145 = vst [vmem:[%s255 + $0x54] sm:$0xf] %v4073
      %4146 = vst [vmem:[%s255 + $0x58] sm:$0xf] %v4074
      %4147 = vst [vmem:[%s255 + $0x5c] sm:$0xf] %v4075
      %4148 = vst [vmem:[%s255 + $0x60] sm:$0xf] %v4076
      %4149 = vst [vmem:[%s255 + $0x64] sm:$0xf] %v4077
      %4150 = vst [vmem:[%s255 + $0x68] sm:$0xf] %v4078
      %4151 = vst [vmem:[%s255 + $0x6c] sm:$0xf] %v4079
      %4152 = vst [vmem:[%s255 + $0x70] sm:$0xf] %v4080
      %4153 = vst [vmem:[%s255 + $0x74] sm:$0xf] %v4081
      %4154 = vst [vmem:[%s255 + $0x78] sm:$0xf] %v4082
      %4155 = vst [vmem:[%s255 + $0x7c] sm:$0xf] %v4083
      %4156 = vst [vmem:[%s255 + $0x80] sm:$0xf] %v4084
      %4157 = vst [vmem:[%s255 + $0x84] sm:$0xf] %v4085
      %4158 = vst [vmem:[%s255 + $0x88] sm:$0xf] %v4086
      %4159 = vst [vmem:[%s255 + $0x8c] sm:$0xf] %v4087
      %p4160 = scmp.lt.s32.totalorder %s19, 1
      %s4161 = scalar_select %p4160, %s19, 1
      %p4162 = scmp.lt.s32.totalorder %s20, 0
      %s4163 = scalar_select %p4162, %s20, 0
      %s4164 = smul.addr %s4161, 36
      %s4165 = sadd.s32 %s4163, %s4164
      %s4166 = smul.addr %s4165, 4
      %s4167 = scalar_lea.vmem %s3, %s4166
      // Predicated region
      $region33: #{clip_with_lora_forward.10} parent=31 // pred_check
        %p4168 = pneg %p135
      $region34: #{clip_with_lora_forward.10} parent=31 // pred_check_branch
        %4170 = sbr.rel (%p4168) target = $region36
      $region35: #{clip_with_lora_forward.10} parent=31 // pred_region
        _
      $region36: #{clip_with_lora_forward.10} parent=31 // pred_fallthru
        _
    $region32: #{clip_with_lora_forward.10} parent=5 // pred_fallthru
      _
    %p4171 = scmp.le.s32.totalorder 2, %s9
    // Predicated region
    $region37: #{clip_with_lora_forward.10} parent=5 // pred_check
      %p4172 = pneg %p4171
    $region38: #{clip_with_lora_forward.10} parent=5 // pred_check_branch
      %4174 = sbr.rel (%p4172) target = $region40
    $region39: #{clip_with_lora_forward.10} parent=5 // pred_region
      %s4175 = ssub.s32 %s9, 2
      // Predicated region
      $region41: #{clip_with_lora_forward.10} parent=39 // pred_check
        %p4176 = pneg %p141
      $region42: #{clip_with_lora_forward.10} parent=39 // pred_check_branch
        %4178 = sbr.rel (%p4176) target = $region44
      $region43: #{clip_with_lora_forward.10} parent=39 // pred_region
        %p4179 = scmp.lt.s32.totalorder %s22, 1
        %s4180 = scalar_select %p4179, %s22, 1
        %p4181 = scmp.lt.s32.totalorder %s23, 0
        %s4182 = scalar_select %p4181, %s23, 0
        %s4183 = smul.addr %s4180, 36
        %s4184 = sadd.s32 %s4182, %s4183
        %s4185 = smul.addr %s4184, 4
        %s4186 = scalar_lea.vmem %s3, %s4185
      $region44: #{clip_with_lora_forward.10} parent=39 // pred_fallthru
        _
    $region40: #{clip_with_lora_forward.10} parent=5 // pred_fallthru
      _
  $region6: #{clip_with_lora_forward.10} parent=0 // loop_footer
    %s13 = sadd.s32 1, %s9
  $region7: #{clip_with_lora_forward.10} parent=0 // loop_footer_branch
    %8 = sbr.rel target = $region3
  $region8: #{clip_with_lora_forward.10} parent=0 // loop_exit
    _

</llo_original>
